<compile_context>
chip_gen: v5e
topology: v5e:2x2
jax: 0.10.0
libtpu: 0.0.40
codegen_flags: <defaults>
</compile_context>

<pallas_src>
import functools
import numpy as np
import jax
import jax.numpy as jnp
from jax.experimental import pallas as pl
from jax.experimental.pallas import tpu as pltpu

EPS = 1e-5


def _round_up(x, m):
    return ((x + m - 1) // m) * m


def _pick_tm(m, c, target_bytes=2 << 20):
    """Row-tile size chosen by bytes (~2 MiB per input buffer), multiple of 8;
    full extent (single block, no per-step overhead) when the array is small."""
    tm = max((target_bytes // (4 * c)) // 8 * 8, 8)
    return m if tm >= m else int(tm)


# ----------------------------------------------------------------------------
# Kernel 1: standalone per-channel BatchNorm statistics (only for activations
#           without a Pallas producer: the block input x and the pyramid sum).
# ----------------------------------------------------------------------------
def _bn_stats_kernel(x_ref, sum_ref, sq_ref, *, nsteps, tm, m_total):
    x = x_ref[...]
    if m_total % tm != 0:            # static: masking only emitted for ragged grids
        row = jax.lax.broadcasted_iota(jnp.int32, x.shape, 0) + pl.program_id(0) * tm
        x = jnp.where(row < m_total, x, 0.0)
    ps = jnp.sum(x, axis=0, keepdims=True)
    pq = jnp.sum(x * x, axis=0, keepdims=True)
    if nsteps == 1:
        sum_ref[...] = ps
        sq_ref[...] = pq
    else:
        @pl.when(pl.program_id(0) == 0)
        def _():
            sum_ref[...] = jnp.zeros_like(sum_ref)
            sq_ref[...] = jnp.zeros_like(sq_ref)
        sum_ref[...] += ps
        sq_ref[...] += pq


def pallas_bn_stats(x2):
    m, c = x2.shape
    tm = _pick_tm(m, c)
    nsteps = pl.cdiv(m, tm)
    kern = functools.partial(_bn_stats_kernel, nsteps=nsteps, tm=tm, m_total=m)
    return pl.pallas_call(
        kern,
        out_shape=(jax.ShapeDtypeStruct((1, c), jnp.float32),
                   jax.ShapeDtypeStruct((1, c), jnp.float32)),
        grid=(nsteps,),
        in_specs=[pl.BlockSpec((tm, c), lambda i: (i, 0))],
        out_specs=(pl.BlockSpec((1, c), lambda i: (0, 0)),
                   pl.BlockSpec((1, c), lambda i: (0, 0))),
        compiler_params=pltpu.CompilerParams(dimension_semantics=("arbitrary",)),
    )(x2)


def _scale_shift_from_sums(s, sq, m, gamma, beta):
    """Fold training-mode BatchNorm (batch stats, biased var) into scale/shift."""
    mean = s / m
    var = jnp.maximum(sq / m - mean * mean, 0.0)
    inv = jax.lax.rsqrt(var + EPS)
    scale = gamma.reshape(1, -1) * inv
    shift = beta.reshape(1, -1) - mean * scale
    return scale, shift


# ----------------------------------------------------------------------------
# Kernel 2: fused  BN-affine + ReLU -> bf16 MXU matmul -> bias (+residual),
#           optionally emitting the per-channel sum / sum-of-squares of its
#           own output (the next layer's BN stats) from the same epilogue.
# ----------------------------------------------------------------------------
def _bnrelu_gemm_kernel(*refs, nsteps, tm, m_total, with_res, with_stats):
    x_ref, s_ref, t_ref, w_ref, b_ref = refs[0:5]
    idx = 5
    r_ref = None
    if with_res:
        r_ref = refs[idx]; idx += 1
    o_ref = refs[idx]; idx += 1

    a = jnp.maximum(x_ref[...] * s_ref[...] + t_ref[...], 0.0)       # f32 prologue
    acc = jnp.dot(a.astype(jnp.bfloat16), w_ref[...],
                  preferred_element_type=jnp.float32) + b_ref[...]
    if with_res:
        acc = acc + r_ref[...]                                        # fused branch add
    o_ref[...] = acc

    if with_stats:
        sum_ref, sq_ref = refs[idx], refs[idx + 1]
        if m_total % tm != 0:        # static: only for ragged grids
            row = jax.lax.broadcasted_iota(jnp.int32, acc.shape, 0) + pl.program_id(0) * tm
            acc = jnp.where(row < m_total, acc, 0.0)
        ps = jnp.sum(acc, axis=0, keepdims=True)
        pq = jnp.sum(acc * acc, axis=0, keepdims=True)
        if nsteps == 1:
            sum_ref[...] = ps
            sq_ref[...] = pq
        else:
            @pl.when(pl.program_id(0) == 0)
            def _():
                sum_ref[...] = jnp.zeros_like(sum_ref)
                sq_ref[...] = jnp.zeros_like(sq_ref)
            sum_ref[...] += ps
            sq_ref[...] += pq


def fused_bnrelu_conv1x1(x2, scale, shift, w, b, res=None, want_stats=False):
    m, cin = x2.shape
    cout = w.shape[1]
    tm = _pick_tm(m, cin)
    nsteps = pl.cdiv(m, tm)

    in_specs = [pl.BlockSpec((tm, cin), lambda i: (i, 0)),
                pl.BlockSpec((1, cin), lambda i: (0, 0)),
                pl.BlockSpec((1, cin), lambda i: (0, 0)),
                pl.BlockSpec((cin, cout), lambda i: (0, 0)),
                pl.BlockSpec((1, cout), lambda i: (0, 0))]
    args = [x2, scale, shift, w.astype(jnp.bfloat16),
            b.reshape(1, cout).astype(jnp.float32)]
    if res is not None:
        in_specs.append(pl.BlockSpec((tm, cout), lambda i: (i, 0)))
        args.append(res)

    kern = functools.partial(_bnrelu_gemm_kernel, nsteps=nsteps, tm=tm, m_total=m,
                             with_res=res is not None, with_stats=want_stats)
    if want_stats:
        out_shape = (jax.ShapeDtypeStruct((m, cout), jnp.float32),
                     jax.ShapeDtypeStruct((1, cout), jnp.float32),
                     jax.ShapeDtypeStruct((1, cout), jnp.float32))
        out_specs = (pl.BlockSpec((tm, cout), lambda i: (i, 0)),
                     pl.BlockSpec((1, cout), lambda i: (0, 0)),
                     pl.BlockSpec((1, cout), lambda i: (0, 0)))
        sem = ("arbitrary",)     # stats blocks stay resident across the row grid
    else:
        out_shape = jax.ShapeDtypeStruct((m, cout), jnp.float32)
        out_specs = pl.BlockSpec((tm, cout), lambda i: (i, 0))
        sem = ("parallel",)
    # TODO(synk): cout <= 64 here, so stores are lane-sparse; a transposed GEMM
    # (out^T = W^T @ a^T, lane dim = M) would give lane-dense stores at scale.
    return pl.pallas_call(
        kern,
        out_shape=out_shape,
        grid=(nsteps,),
        in_specs=in_specs,
        out_specs=out_specs,
        compiler_params=pltpu.CompilerParams(dimension_semantics=sem),
    )(*args)


# ----------------------------------------------------------------------------
# Kernel 3: 3x3 / stride-1 / pad-1 conv.  The 16-aligned padded image is
#           flattened to rows; the three column shifts are lane-concatenated
#           once (single bf16 cast) and the conv becomes 3 MXU matmuls with
#           K = 3*Cin, accumulated in f32.  Optional fused BN+ReLU prologue.
# ----------------------------------------------------------------------------
def _conv3x3_kernel(*refs, Wp, rout, fuse_bn):
    if fuse_bn:
        x_ref, m_ref, s_ref, t_ref, w_ref, b_ref, o_ref = refs
    else:
        x_ref, w_ref, b_ref, o_ref = refs
    xv = x_ref[0]                                        # (rin, Cin) f32
    if fuse_bn:
        # BN + ReLU prologue; the mask re-zeros the conv padding ring (the BN
        # shift would otherwise leak into the zero padding).
        xv = jnp.maximum(xv * s_ref[...] + t_ref[...], 0.0) * m_ref[...]
    # Lane-concat the three dj (column) shifts once, cast to bf16 once.
    rows = 2 * Wp + rout
    xcat = jnp.concatenate([xv[0:rows, :], xv[1:rows + 1, :], xv[2:rows + 2, :]],
                           axis=1).astype(jnp.bfloat16)  # (rows, 3*Cin)
    acc = None
    for di in range(3):
        off = di * Wp                                    # Wp % 16 == 0 -> aligned slice
        c = jnp.dot(xcat[off:off + rout, :], w_ref[di],
                    preferred_element_type=jnp.float32)
        acc = c if acc is None else acc + c
    o_ref[0] = acc + b_ref[...]


def conv3x3(x_img, w9, b, scale=None, shift=None):
    """NHWC 3x3 / stride-1 / pad-1 conv with optional fused BN+ReLU prologue.

    The padded image is flattened to (Hp*Wp, Cin) rows with Wp a multiple of
    16 so every row-tap offset stays sublane-aligned after the bf16 cast.  The
    extra "wrap-around" output columns (j >= W) are garbage and sliced off on
    the way out.
    # TODO(synk): for batch < 4 on v7x also tile the output-row axis (2-row
    # halo) so each TensorCore gets >= 2 pipelined grid steps.
    """
    n, h, wdt, cin = x_img.shape
    cout = w9.shape[-1]
    wp = _round_up(wdt + 2, 16)          # left pad 1, right pad >= 1, 16-aligned
    hp = h + 3                           # top pad 1, bottom pad 2 (slack rows)
    xp = jnp.pad(x_img, ((0, 0), (1, 2), (1, wp - 1 - wdt), (0, 0)))
    r_in, r_out = hp * wp, h * wp
    xflat = xp.reshape(n, r_in, cin)

    fuse_bn = scale is not None
    kern = functools.partial(_conv3x3_kernel, Wp=wp, rout=r_out, fuse_bn=fuse_bn)
    in_specs = [pl.BlockSpec((1, r_in, cin), lambda i: (i, 0, 0))]
    args = [xflat]
    if fuse_bn:
        mask = np.zeros((hp, wp, 1), np.float32)
        mask[1:h + 1, 1:wdt + 1, :] = 1.0
        args += [jnp.asarray(mask.reshape(r_in, 1)), scale, shift]
        in_specs += [pl.BlockSpec((r_in, 1), lambda i: (0, 0)),
                     pl.BlockSpec((1, cin), lambda i: (0, 0)),
                     pl.BlockSpec((1, cin), lambda i: (0, 0))]
    # w9 is (9, Cin, Cout) indexed di*3+dj; reshape groups the 3 dj taps of
    # each di into one (3*Cin, Cout) slab matching the lane-concat order.
    w_cat = w9.reshape(3, 3 * cin, cout).astype(jnp.bfloat16)
    args += [w_cat, b.reshape(1, cout).astype(jnp.float32)]
    in_specs += [pl.BlockSpec((3, 3 * cin, cout), lambda i: (0, 0, 0)),
                 pl.BlockSpec((1, cout), lambda i: (0, 0))]
    out = pl.pallas_call(
        kern,
        out_shape=jax.ShapeDtypeStruct((n, r_out, cout), jnp.float32),
        grid=(n,),
        in_specs=in_specs,
        out_specs=pl.BlockSpec((1, r_out, cout), lambda i: (i, 0, 0)),
        compiler_params=pltpu.CompilerParams(dimension_semantics=("parallel",)),
    )(*args)
    return out.reshape(n, h, wp, cout)[:, :, :wdt, :]


# ----------------------------------------------------------------------------
# Pooling / upsampling glue (XLA gathers with trace-time constant indices;
# the 4-way max fuses with the gathers, no stacked tensor / extra dispatch)
# ----------------------------------------------------------------------------
def _frac_indices(in_size, out_size):
    if out_size <= 1:
        return np.zeros((max(out_size, 1),), np.int32)
    return np.floor(np.arange(out_size) * (in_size - 2) / (out_size - 1)).astype(np.int32)


def frac_maxpool2x2(x, oh, ow):
    # TODO(synk): PyTorch FractionalMaxPool2d samples random pooling-region
    # offsets; deterministic, evenly spaced 2x2 windows are used instead.
    n, h, w, c = x.shape
    ih = _frac_indices(h, oh)
    iw = _frac_indices(w, ow)
    r0 = x[:, ih, :, :]
    r1 = x[:, ih + 1, :, :]
    m0 = jnp.maximum(r0[:, :, iw, :], r0[:, :, iw + 1, :])
    m1 = jnp.maximum(r1[:, :, iw, :], r1[:, :, iw + 1, :])
    return jnp.maximum(m0, m1)


def upsample_nearest(x, out_h, out_w):
    """nn.Upsample(size=..., mode='nearest') on NHWC."""
    n, h, w, c = x.shape
    ih = np.floor(np.arange(out_h) * (h / out_h)).astype(np.int32)
    iw = np.floor(np.arange(out_w) * (w / out_w)).astype(np.int32)
    return x[:, ih, :, :][:, :, iw, :]


# ----------------------------------------------------------------------------
# PyraConvBlock: parameters + forward
# ----------------------------------------------------------------------------
def init_pyraconvblock(key, in_c, out_c, base_width, cardinality):
    o2 = out_c // 2
    d = out_c // base_width
    keys = jax.random.split(key, 12)

    def conv_w(k, kk, cin, cout):
        fan_in = cin * kk * kk
        bound = 1.0 / np.sqrt(fan_in)
        kw_, kb_ = jax.random.split(k)
        shape = (cin, cout) if kk == 1 else (kk * kk, cin, cout)
        w = jax.random.uniform(kw_, shape, jnp.float32, -bound, bound)
        b = jax.random.uniform(kb_, (cout,), jnp.float32, -bound, bound)
        return w, b

    p = {}
    # branch1[0] and branch2[0] both BatchNorm the same x; training-mode batch
    # stats are identical, and with default (gamma=1, beta=0) affine a single
    # shared scale/shift is exact.
    p['bn0_g'], p['bn0_b'] = jnp.ones((in_c,), jnp.float32), jnp.zeros((in_c,), jnp.float32)
    p['w_b1_1'], p['b_b1_1'] = conv_w(keys[0], 1, in_c, o2)
    p['w_b2_1'], p['b_b2_1'] = conv_w(keys[1], 1, in_c, d)
    p['bn1_g'], p['bn1_b'] = jnp.ones((o2,), jnp.float32), jnp.zeros((o2,), jnp.float32)
    p['w_b1_2'], p['b_b1_2'] = conv_w(keys[2], 3, o2, o2)
    p['bn2_g'], p['bn2_b'] = jnp.ones((d,), jnp.float32), jnp.zeros((d,), jnp.float32)
    p['w_pyr'], p['b_pyr'] = [], []
    for c in range(cardinality):
        w_, b_ = conv_w(keys[3 + c], 3, d, d)
        p['w_pyr'].append(w_)
        p['b_pyr'].append(b_)
    p['bn3_g'], p['bn3_b'] = jnp.ones((d,), jnp.float32), jnp.zeros((d,), jnp.float32)
    p['w_b2_3'], p['b_b2_3'] = conv_w(keys[9], 1, d, o2)
    p['bn4_g'], p['bn4_b'] = jnp.ones((o2,), jnp.float32), jnp.zeros((o2,), jnp.float32)
    p['w_after'], p['b_after'] = conv_w(keys[10], 1, o2, out_c)
    return p


def pyraconvblock_forward(params, x_nchw, *, out_c, input_res, base_width, cardinality):
    n, in_c, h, w = x_nchw.shape
    o2 = out_c // 2
    d = out_c // base_width
    m = n * h * w

    x = jnp.transpose(x_nchw, (0, 2, 3, 1)).astype(jnp.float32)       # NHWC
    x2 = x.reshape(m, in_c)

    # --- stem: branch1[0] and branch2[0] share bn(x); both 1x1 convs run as
    #     one wider fused BN+ReLU GEMM whose epilogue also emits the BN stats
    #     of u1 and u2 (no separate stats pass over either activation).
    # TODO(synk): exact only while both stem BN affines match (true at default
    # init); running mean/var are not tracked (training-mode BN only).
    s0, q0 = pallas_bn_stats(x2)              # block input has no Pallas producer
    sc0, sh0 = _scale_shift_from_sums(s0, q0, m, params['bn0_g'], params['bn0_b'])
    w_cat = jnp.concatenate([params['w_b1_1'], params['w_b2_1']], axis=1)
    b_cat = jnp.concatenate([params['b_b1_1'], params['b_b2_1']], axis=0)
    y_cat, s_cat, q_cat = fused_bnrelu_conv1x1(x2, sc0, sh0, w_cat, b_cat,
                                               want_stats=True)
    u1, u2 = y_cat[:, :o2], y_cat[:, o2:]     # branch1 (M,o2) / branch2 (M,D)
    sc1, sh1 = _scale_shift_from_sums(s_cat[:, :o2], q_cat[:, :o2], m,
                                      params['bn1_g'], params['bn1_b'])
    sc2, sh2 = _scale_shift_from_sums(s_cat[:, o2:], q_cat[:, o2:], m,
                                      params['bn2_g'], params['bn2_b'])

    # --- branch1[1]: BnReluConv 3x3 (BN+ReLU prologue fused into the conv)
    b1 = conv3x3(u1.reshape(n, h, w, o2), params['w_b1_2'], params['b_b1_2'],
                 scale=sc1, shift=sh1)                           # (N, H, W, o2)

    # --- branch2[1]: BnReluPyra (BN+ReLU, then pyramid of pooled 3x3 convs)
    a2 = jnp.maximum(u2 * sc2 + sh2, 0.0).reshape(n, h, w, d)    # tiny, XLA-fused
    pyr = jnp.zeros((n, h, w, d), jnp.float32)
    for card in range(cardinality):
        ratio = 2.0 ** (-(card + 1) / cardinality)
        oh = max(int(h * ratio), 1)
        ow = max(int(w * ratio), 1)
        pooled = frac_maxpool2x2(a2, oh, ow)                     # (N, oh, ow, D)
        conv = conv3x3(pooled, params['w_pyr'][card], params['b_pyr'][card])
        pyr = pyr + upsample_nearest(conv, input_res, input_res)

    # --- branch2[2]: 1x1 D->o2 with the branch1 add fused as epilogue; the
    #     same epilogue emits the BN stats of the sum for the afteradd layer.
    p2 = pyr.reshape(m, d)
    s3, q3 = pallas_bn_stats(p2)  # pyramid sum is produced by fused XLA gather+add
    sc3, sh3 = _scale_shift_from_sums(s3, q3, m, params['bn3_g'], params['bn3_b'])
    s12, s4, q4 = fused_bnrelu_conv1x1(p2, sc3, sh3, params['w_b2_3'],
                                       params['b_b2_3'], res=b1.reshape(m, o2),
                                       want_stats=True)
    sc4, sh4 = _scale_shift_from_sums(s4, q4, m, params['bn4_g'], params['bn4_b'])

    # --- afteradd: BnReluConv 1x1 o2 -> out_c
    out2 = fused_bnrelu_conv1x1(s12, sc4, sh4, params['w_after'], params['b_after'])
    return out2.reshape(n, h, w, out_c).transpose(0, 3, 1, 2)    # back to NCHW


# ----------------------------------------------------------------------------
# Main
# ----------------------------------------------------------------------------
if __name__ == "__main__":
    in_c, out_c, input_res, base_width, cardinality = 32, 64, 16, 4, 2
    batch = 2

    key = jax.random.PRNGKey(0)
    kx, kp = jax.random.split(key)
    x = jax.random.normal(kx, (batch, in_c, input_res, input_res), jnp.float32)
    params = init_pyraconvblock(kp, in_c, out_c, base_width, cardinality)

    fwd = jax.jit(functools.partial(pyraconvblock_forward,
                                    out_c=out_c, input_res=input_res,
                                    base_width=base_width, cardinality=cardinality))
    out = jax.block_until_ready(fwd(params, x))

    assert out.shape == (batch, out_c, input_res, input_res), out.shape
    assert bool(jnp.all(jnp.isfinite(out)))
    print("KERNEL_OK")
</pallas_src>

<mosaic_0001>
module attributes {stable_mosaic.version = 11 : i64} {
  func.func @_bn_stats_kernel(%arg0: i32, %arg1: memref<512x32xf32, #tpu.memory_space<vmem>>, %arg2: memref<1x32xf32, #tpu.memory_space<vmem>>, %arg3: memref<1x32xf32, #tpu.memory_space<vmem>>) attributes {dimension_semantics = [#tpu.dimension_semantics<arbitrary>], iteration_bounds = array<i64: 1>, scalar_prefetch = 0 : i64, scratch_operands = 0 : i64, tpu.core_type = #tpu.core_type<tc>, window_params = [{transform_indices = @transform_0, window_bounds = array<i64: 512, 32>}, {pipeline_mode = #tpu.pipeline_mode<synchronous>, transform_indices = @transform_1, window_bounds = array<i64: 1, 32>}, {pipeline_mode = #tpu.pipeline_mode<synchronous>, transform_indices = @transform_2, window_bounds = array<i64: 1, 32>}]} {
    %c0 = arith.constant 0 : index
    %c0_0 = arith.constant 0 : index
    %0 = vector.load %arg1[%c0, %c0_0] : memref<512x32xf32, #tpu.memory_space<vmem>>, vector<512x32xf32>
    %cst = arith.constant dense<0.000000e+00> : vector<32xf32>
    %1 = vector.multi_reduction <add>, %0, %cst [0] : vector<512x32xf32> to vector<32xf32>
    %2 = vector.shape_cast %1 : vector<32xf32> to vector<1x32xf32>
    %3 = arith.mulf %0, %0 : vector<512x32xf32>
    %cst_1 = arith.constant dense<0.000000e+00> : vector<32xf32>
    %4 = vector.multi_reduction <add>, %3, %cst_1 [0] : vector<512x32xf32> to vector<32xf32>
    %5 = vector.shape_cast %4 : vector<32xf32> to vector<1x32xf32>
    %c0_2 = arith.constant 0 : index
    %c0_3 = arith.constant 0 : index
    %6 = vector.load %arg2[%c0_2, %c0_3] : memref<1x32xf32, #tpu.memory_space<vmem>>, vector<1x32xf32>
    tpu.vector_store %arg2[%c0_2, %c0_3], %2 {strides = array<i32>} : memref<1x32xf32, #tpu.memory_space<vmem>>, vector<1x32xf32>,
    %c0_4 = arith.constant 0 : index
    %c0_5 = arith.constant 0 : index
    %7 = vector.load %arg3[%c0_4, %c0_5] : memref<1x32xf32, #tpu.memory_space<vmem>>, vector<1x32xf32>
    tpu.vector_store %arg3[%c0_4, %c0_5], %5 {strides = array<i32>} : memref<1x32xf32, #tpu.memory_space<vmem>>, vector<1x32xf32>,
    return
  }
  func.func @transform_0(%arg0: i32) -> (i32, i32) {
    %c0_i32 = arith.constant 0 : i32
    %c0_i32_0 = arith.constant 0 : i32
    return %arg0, %c0_i32 : i32, i32
  }
  func.func @transform_1(%arg0: i32) -> (i32, i32) {
    %c0_i32 = arith.constant 0 : i32
    %c0_i32_0 = arith.constant 0 : i32
    %c0_i32_1 = arith.constant 0 : i32
    return %c0_i32, %c0_i32_0 : i32, i32
  }
  func.func @transform_2(%arg0: i32) -> (i32, i32) {
    %c0_i32 = arith.constant 0 : i32
    %c0_i32_0 = arith.constant 0 : i32
    %c0_i32_1 = arith.constant 0 : i32
    return %c0_i32, %c0_i32_0 : i32, i32
  }
}

module attributes {stable_mosaic.version = 11 : i64} {
  func.func @_bnrelu_gemm_kernel(%arg0: i32, %arg1: memref<512x32xf32, #tpu.memory_space<vmem>>, %arg2: memref<1x32xf32, #tpu.memory_space<vmem>>, %arg3: memref<1x32xf32, #tpu.memory_space<vmem>>, %arg4: memref<32x48xbf16, #tpu.memory_space<vmem>>, %arg5: memref<1x48xf32, #tpu.memory_space<vmem>>, %arg6: memref<512x48xf32, #tpu.memory_space<vmem>>, %arg7: memref<1x48xf32, #tpu.memory_space<vmem>>, %arg8: memref<1x48xf32, #tpu.memory_space<vmem>>) attributes {dimension_semantics = [#tpu.dimension_semantics<arbitrary>], iteration_bounds = array<i64: 1>, scalar_prefetch = 0 : i64, scratch_operands = 0 : i64, tpu.core_type = #tpu.core_type<tc>, window_params = [{transform_indices = @transform_0, window_bounds = array<i64: 512, 32>}, {pipeline_mode = #tpu.pipeline_mode<synchronous>, transform_indices = @transform_1, window_bounds = array<i64: 1, 32>}, {pipeline_mode = #tpu.pipeline_mode<synchronous>, transform_indices = @transform_2, window_bounds = array<i64: 1, 32>}, {pipeline_mode = #tpu.pipeline_mode<synchronous>, transform_indices = @transform_3, window_bounds = array<i64: 32, 48>}, {pipeline_mode = #tpu.pipeline_mode<synchronous>, transform_indices = @transform_4, window_bounds = array<i64: 1, 48>}, {transform_indices = @transform_5, window_bounds = array<i64: 512, 48>}, {pipeline_mode = #tpu.pipeline_mode<synchronous>, transform_indices = @transform_6, window_bounds = array<i64: 1, 48>}, {pipeline_mode = #tpu.pipeline_mode<synchronous>, transform_indices = @transform_7, window_bounds = array<i64: 1, 48>}]} {
    %c0 = arith.constant 0 : index
    %c0_0 = arith.constant 0 : index
    %0 = vector.load %arg1[%c0, %c0_0] : memref<512x32xf32, #tpu.memory_space<vmem>>, vector<512x32xf32>
    %c0_1 = arith.constant 0 : index
    %c0_2 = arith.constant 0 : index
    %1 = vector.load %arg2[%c0_1, %c0_2] : memref<1x32xf32, #tpu.memory_space<vmem>>, vector<1x32xf32>
    %2 = vector.broadcast %1 : vector<1x32xf32> to vector<512x32xf32>
    %3 = arith.mulf %0, %2 : vector<512x32xf32>
    %c0_3 = arith.constant 0 : index
    %c0_4 = arith.constant 0 : index
    %4 = vector.load %arg3[%c0_3, %c0_4] : memref<1x32xf32, #tpu.memory_space<vmem>>, vector<1x32xf32>
    %5 = vector.broadcast %4 : vector<1x32xf32> to vector<512x32xf32>
    %6 = arith.addf %3, %5 : vector<512x32xf32>
    %cst = arith.constant 0.000000e+00 : f32
    %7 = vector.broadcast %cst : f32 to vector<512x32xf32>
    %8 = arith.maximumf %6, %7 : vector<512x32xf32>
    %9 = arith.truncf %8 : vector<512x32xf32> to vector<512x32xbf16>
    %c0_5 = arith.constant 0 : index
    %c0_6 = arith.constant 0 : index
    %10 = vector.load %arg4[%c0_5, %c0_6] : memref<32x48xbf16, #tpu.memory_space<vmem>>, vector<32x48xbf16>
    %cst_7 = arith.constant dense<0.000000e+00> : vector<512x48xf32>
    %11 = tpu.matmul %9, %10, %cst_7 {dimension_numbers = #tpu.dot_dimension_numbers<[1], [0], [0], [1], [0, 0, 1, 1], [], []>} : vector<512x32xbf16>, vector<32x48xbf16>, vector<512x48xf32> -> vector<512x48xf32>
    %c0_8 = arith.constant 0 : index
    %c0_9 = arith.constant 0 : index
    %12 = vector.load %arg5[%c0_8, %c0_9] : memref<1x48xf32, #tpu.memory_space<vmem>>, vector<1x48xf32>
    %13 = vector.broadcast %12 : vector<1x48xf32> to vector<512x48xf32>
    %14 = arith.addf %11, %13 : vector<512x48xf32>
    %c0_10 = arith.constant 0 : index
    %c0_11 = arith.constant 0 : index
    %15 = vector.load %arg6[%c0_10, %c0_11] : memref<512x48xf32, #tpu.memory_space<vmem>>, vector<512x48xf32>
    tpu.vector_store %arg6[%c0_10, %c0_11], %14 {strides = array<i32>} : memref<512x48xf32, #tpu.memory_space<vmem>>, vector<512x48xf32>,
    %cst_12 = arith.constant dense<0.000000e+00> : vector<48xf32>
    %16 = vector.multi_reduction <add>, %14, %cst_12 [0] : vector<512x48xf32> to vector<48xf32>
    %17 = vector.shape_cast %16 : vector<48xf32> to vector<1x48xf32>
    %18 = arith.mulf %14, %14 : vector<512x48xf32>
    %cst_13 = arith.constant dense<0.000000e+00> : vector<48xf32>
    %19 = vector.multi_reduction <add>, %18, %cst_13 [0] : vector<512x48xf32> to vector<48xf32>
    %20 = vector.shape_cast %19 : vector<48xf32> to vector<1x48xf32>
    %c0_14 = arith.constant 0 : index
    %c0_15 = arith.constant 0 : index
    %21 = vector.load %arg7[%c0_14, %c0_15] : memref<1x48xf32, #tpu.memory_space<vmem>>, vector<1x48xf32>
    tpu.vector_store %arg7[%c0_14, %c0_15], %17 {strides = array<i32>} : memref<1x48xf32, #tpu.memory_space<vmem>>, vector<1x48xf32>,
    %c0_16 = arith.constant 0 : index
    %c0_17 = arith.constant 0 : index
    %22 = vector.load %arg8[%c0_16, %c0_17] : memref<1x48xf32, #tpu.memory_space<vmem>>, vector<1x48xf32>
    tpu.vector_store %arg8[%c0_16, %c0_17], %20 {strides = array<i32>} : memref<1x48xf32, #tpu.memory_space<vmem>>, vector<1x48xf32>,
    return
  }
  func.func @transform_0(%arg0: i32) -> (i32, i32) {
    %c0_i32 = arith.constant 0 : i32
    %c0_i32_0 = arith.constant 0 : i32
    return %arg0, %c0_i32 : i32, i32
  }
  func.func @transform_1(%arg0: i32) -> (i32, i32) {
    %c0_i32 = arith.constant 0 : i32
    %c0_i32_0 = arith.constant 0 : i32
    %c0_i32_1 = arith.constant 0 : i32
    return %c0_i32, %c0_i32_0 : i32, i32
  }
  func.func @transform_2(%arg0: i32) -> (i32, i32) {
    %c0_i32 = arith.constant 0 : i32
    %c0_i32_0 = arith.constant 0 : i32
    %c0_i32_1 = arith.constant 0 : i32
    return %c0_i32, %c0_i32_0 : i32, i32
  }
  func.func @transform_3(%arg0: i32) -> (i32, i32) {
    %c0_i32 = arith.constant 0 : i32
    %c0_i32_0 = arith.constant 0 : i32
    %c0_i32_1 = arith.constant 0 : i32
    return %c0_i32, %c0_i32_0 : i32, i32
  }
  func.func @transform_4(%arg0: i32) -> (i32, i32) {
    %c0_i32 = arith.constant 0 : i32
    %c0_i32_0 = arith.constant 0 : i32
    %c0_i32_1 = arith.constant 0 : i32
    return %c0_i32, %c0_i32_0 : i32, i32
  }
  func.func @transform_5(%arg0: i32) -> (i32, i32) {
    %c0_i32 = arith.constant 0 : i32
    %c0_i32_0 = arith.constant 0 : i32
    return %arg0, %c0_i32 : i32, i32
  }
  func.func @transform_6(%arg0: i32) -> (i32, i32) {
    %c0_i32 = arith.constant 0 : i32
    %c0_i32_0 = arith.constant 0 : i32
    %c0_i32_1 = arith.constant 0 : i32
    return %c0_i32, %c0_i32_0 : i32, i32
  }
  func.func @transform_7(%arg0: i32) -> (i32, i32) {
    %c0_i32 = arith.constant 0 : i32
    %c0_i32_0 = arith.constant 0 : i32
    %c0_i32_1 = arith.constant 0 : i32
    return %c0_i32, %c0_i32_0 : i32, i32
  }
}

module attributes {stable_mosaic.version = 11 : i64} {
  func.func @_conv3x3_kernel(%arg0: i32, %arg1: memref<1x176x16xf32, #tpu.memory_space<vmem>>, %arg2: memref<3x48x16xbf16, #tpu.memory_space<vmem>>, %arg3: memref<1x16xf32, #tpu.memory_space<vmem>>, %arg4: memref<1x128x16xf32, #tpu.memory_space<vmem>>) attributes {dimension_semantics = [#tpu.dimension_semantics<parallel>], iteration_bounds = array<i64: 2>, scalar_prefetch = 0 : i64, scratch_operands = 0 : i64, tpu.core_type = #tpu.core_type<tc>, window_params = [{transform_indices = @transform_0, window_bounds = array<i64: 1, 176, 16>}, {pipeline_mode = #tpu.pipeline_mode<synchronous>, transform_indices = @transform_1, window_bounds = array<i64: 3, 48, 16>}, {pipeline_mode = #tpu.pipeline_mode<synchronous>, transform_indices = @transform_2, window_bounds = array<i64: 1, 16>}, {transform_indices = @transform_3, window_bounds = array<i64: 1, 128, 16>}]} {
    %c0 = arith.constant 0 : index
    %c0_0 = arith.constant 0 : index
    %c0_1 = arith.constant 0 : index
    %0 = vector.load %arg1[%c0, %c0_0, %c0_1] : memref<1x176x16xf32, #tpu.memory_space<vmem>>, vector<1x176x16xf32>
    %1 = vector.shape_cast %0 : vector<1x176x16xf32> to vector<176x16xf32>
    %2 = vector.extract_strided_slice %1 {offsets = [0, 0], sizes = [160, 16], strides = [1, 1]} : vector<176x16xf32> to vector<160x16xf32>
    %3 = vector.extract_strided_slice %1 {offsets = [1, 0], sizes = [160, 16], strides = [1, 1]} : vector<176x16xf32> to vector<160x16xf32>
    %4 = vector.extract_strided_slice %1 {offsets = [2, 0], sizes = [160, 16], strides = [1, 1]} : vector<176x16xf32> to vector<160x16xf32>
    %5 = tpu.concatenate %2, %3, %4 in 1 : vector<160x16xf32>, vector<160x16xf32>, vector<160x16xf32> -> vector<160x48xf32>
    %6 = arith.truncf %5 : vector<160x48xf32> to vector<160x48xbf16>
    %7 = vector.extract_strided_slice %6 {offsets = [0, 0], sizes = [128, 48], strides = [1, 1]} : vector<160x48xbf16> to vector<128x48xbf16>
    %c0_2 = arith.constant 0 : index
    %c0_3 = arith.constant 0 : index
    %c0_4 = arith.constant 0 : index
    %8 = vector.load %arg2[%c0_2, %c0_3, %c0_4] : memref<3x48x16xbf16, #tpu.memory_space<vmem>>, vector<1x48x16xbf16>
    %9 = vector.shape_cast %8 : vector<1x48x16xbf16> to vector<48x16xbf16>
    %cst = arith.constant dense<0.000000e+00> : vector<128x16xf32>
    %10 = tpu.matmul %7, %9, %cst {dimension_numbers = #tpu.dot_dimension_numbers<[1], [0], [0], [1], [0, 0, 1, 1], [], []>} : vector<128x48xbf16>, vector<48x16xbf16>, vector<128x16xf32> -> vector<128x16xf32>
    %11 = vector.extract_strided_slice %6 {offsets = [16, 0], sizes = [128, 48], strides = [1, 1]} : vector<160x48xbf16> to vector<128x48xbf16>
    %c1 = arith.constant 1 : index
    %c0_5 = arith.constant 0 : index
    %c0_6 = arith.constant 0 : index
    %12 = vector.load %arg2[%c1, %c0_5, %c0_6] : memref<3x48x16xbf16, #tpu.memory_space<vmem>>, vector<1x48x16xbf16>
    %13 = vector.shape_cast %12 : vector<1x48x16xbf16> to vector<48x16xbf16>
    %cst_7 = arith.constant dense<0.000000e+00> : vector<128x16xf32>
    %14 = tpu.matmul %11, %13, %cst_7 {dimension_numbers = #tpu.dot_dimension_numbers<[1], [0], [0], [1], [0, 0, 1, 1], [], []>} : vector<128x48xbf16>, vector<48x16xbf16>, vector<128x16xf32> -> vector<128x16xf32>
    %15 = arith.addf %10, %14 : vector<128x16xf32>
    %16 = vector.extract_strided_slice %6 {offsets = [32, 0], sizes = [128, 48], strides = [1, 1]} : vector<160x48xbf16> to vector<128x48xbf16>
    %c2 = arith.constant 2 : index
    %c0_8 = arith.constant 0 : index
    %c0_9 = arith.constant 0 : index
    %17 = vector.load %arg2[%c2, %c0_8, %c0_9] : memref<3x48x16xbf16, #tpu.memory_space<vmem>>, vector<1x48x16xbf16>
    %18 = vector.shape_cast %17 : vector<1x48x16xbf16> to vector<48x16xbf16>
    %cst_10 = arith.constant dense<0.000000e+00> : vector<128x16xf32>
    %19 = tpu.matmul %16, %18, %cst_10 {dimension_numbers = #tpu.dot_dimension_numbers<[1], [0], [0], [1], [0, 0, 1, 1], [], []>} : vector<128x48xbf16>, vector<48x16xbf16>, vector<128x16xf32> -> vector<128x16xf32>
    %20 = arith.addf %15, %19 : vector<128x16xf32>
    %c0_11 = arith.constant 0 : index
    %c0_12 = arith.constant 0 : index
    %21 = vector.load %arg3[%c0_11, %c0_12] : memref<1x16xf32, #tpu.memory_space<vmem>>, vector<1x16xf32>
    %22 = vector.broadcast %21 : vector<1x16xf32> to vector<128x16xf32>
    %23 = arith.addf %20, %22 : vector<128x16xf32>
    %c0_13 = arith.constant 0 : index
    %c0_14 = arith.constant 0 : index
    %c0_15 = arith.constant 0 : index
    %24 = vector.load %arg4[%c0_13, %c0_14, %c0_15] : memref<1x128x16xf32, #tpu.memory_space<vmem>>, vector<1x128x16xf32>
    %25 = vector.shape_cast %24 : vector<1x128x16xf32> to vector<128x16xf32>
    %26 = vector.shape_cast %23 : vector<128x16xf32> to vector<1x128x16xf32>
    tpu.vector_store %arg4[%c0_13, %c0_14, %c0_15], %26 {strides = array<i32>} : memref<1x128x16xf32, #tpu.memory_space<vmem>>, vector<1x128x16xf32>,
    return
  }
  func.func @transform_0(%arg0: i32) -> (i32, i32, i32) {
    %c0_i32 = arith.constant 0 : i32
    %c0_i32_0 = arith.constant 0 : i32
    %c0_i32_1 = arith.constant 0 : i32
    return %arg0, %c0_i32, %c0_i32_0 : i32, i32, i32
  }
  func.func @transform_1(%arg0: i32) -> (i32, i32, i32) {
    %c0_i32 = arith.constant 0 : i32
    %c0_i32_0 = arith.constant 0 : i32
    %c0_i32_1 = arith.constant 0 : i32
    %c0_i32_2 = arith.constant 0 : i32
    return %c0_i32, %c0_i32_0, %c0_i32_1 : i32, i32, i32
  }
  func.func @transform_2(%arg0: i32) -> (i32, i32) {
    %c0_i32 = arith.constant 0 : i32
    %c0_i32_0 = arith.constant 0 : i32
    %c0_i32_1 = arith.constant 0 : i32
    return %c0_i32, %c0_i32_0 : i32, i32
  }
  func.func @transform_3(%arg0: i32) -> (i32, i32, i32) {
    %c0_i32 = arith.constant 0 : i32
    %c0_i32_0 = arith.constant 0 : i32
    %c0_i32_1 = arith.constant 0 : i32
    return %arg0, %c0_i32, %c0_i32_0 : i32, i32, i32
  }
}

module attributes {stable_mosaic.version = 11 : i64} {
  func.func @_conv3x3_kernel(%arg0: i32, %arg1: memref<1x224x16xf32, #tpu.memory_space<vmem>>, %arg2: memref<3x48x16xbf16, #tpu.memory_space<vmem>>, %arg3: memref<1x16xf32, #tpu.memory_space<vmem>>, %arg4: memref<1x176x16xf32, #tpu.memory_space<vmem>>) attributes {dimension_semantics = [#tpu.dimension_semantics<parallel>], iteration_bounds = array<i64: 2>, scalar_prefetch = 0 : i64, scratch_operands = 0 : i64, tpu.core_type = #tpu.core_type<tc>, window_params = [{transform_indices = @transform_0, window_bounds = array<i64: 1, 224, 16>}, {pipeline_mode = #tpu.pipeline_mode<synchronous>, transform_indices = @transform_1, window_bounds = array<i64: 3, 48, 16>}, {pipeline_mode = #tpu.pipeline_mode<synchronous>, transform_indices = @transform_2, window_bounds = array<i64: 1, 16>}, {transform_indices = @transform_3, window_bounds = array<i64: 1, 176, 16>}]} {
    %c0 = arith.constant 0 : index
    %c0_0 = arith.constant 0 : index
    %c0_1 = arith.constant 0 : index
    %0 = vector.load %arg1[%c0, %c0_0, %c0_1] : memref<1x224x16xf32, #tpu.memory_space<vmem>>, vector<1x224x16xf32>
    %1 = vector.shape_cast %0 : vector<1x224x16xf32> to vector<224x16xf32>
    %2 = vector.extract_strided_slice %1 {offsets = [0, 0], sizes = [208, 16], strides = [1, 1]} : vector<224x16xf32> to vector<208x16xf32>
    %3 = vector.extract_strided_slice %1 {offsets = [1, 0], sizes = [208, 16], strides = [1, 1]} : vector<224x16xf32> to vector<208x16xf32>
    %4 = vector.extract_strided_slice %1 {offsets = [2, 0], sizes = [208, 16], strides = [1, 1]} : vector<224x16xf32> to vector<208x16xf32>
    %5 = tpu.concatenate %2, %3, %4 in 1 : vector<208x16xf32>, vector<208x16xf32>, vector<208x16xf32> -> vector<208x48xf32>
    %6 = arith.truncf %5 : vector<208x48xf32> to vector<208x48xbf16>
    %7 = vector.extract_strided_slice %6 {offsets = [0, 0], sizes = [176, 48], strides = [1, 1]} : vector<208x48xbf16> to vector<176x48xbf16>
    %c0_2 = arith.constant 0 : index
    %c0_3 = arith.constant 0 : index
    %c0_4 = arith.constant 0 : index
    %8 = vector.load %arg2[%c0_2, %c0_3, %c0_4] : memref<3x48x16xbf16, #tpu.memory_space<vmem>>, vector<1x48x16xbf16>
    %9 = vector.shape_cast %8 : vector<1x48x16xbf16> to vector<48x16xbf16>
    %cst = arith.constant dense<0.000000e+00> : vector<176x16xf32>
    %10 = tpu.matmul %7, %9, %cst {dimension_numbers = #tpu.dot_dimension_numbers<[1], [0], [0], [1], [0, 0, 1, 1], [], []>} : vector<176x48xbf16>, vector<48x16xbf16>, vector<176x16xf32> -> vector<176x16xf32>
    %11 = vector.extract_strided_slice %6 {offsets = [16, 0], sizes = [176, 48], strides = [1, 1]} : vector<208x48xbf16> to vector<176x48xbf16>
    %c1 = arith.constant 1 : index
    %c0_5 = arith.constant 0 : index
    %c0_6 = arith.constant 0 : index
    %12 = vector.load %arg2[%c1, %c0_5, %c0_6] : memref<3x48x16xbf16, #tpu.memory_space<vmem>>, vector<1x48x16xbf16>
    %13 = vector.shape_cast %12 : vector<1x48x16xbf16> to vector<48x16xbf16>
    %cst_7 = arith.constant dense<0.000000e+00> : vector<176x16xf32>
    %14 = tpu.matmul %11, %13, %cst_7 {dimension_numbers = #tpu.dot_dimension_numbers<[1], [0], [0], [1], [0, 0, 1, 1], [], []>} : vector<176x48xbf16>, vector<48x16xbf16>, vector<176x16xf32> -> vector<176x16xf32>
    %15 = arith.addf %10, %14 : vector<176x16xf32>
    %16 = vector.extract_strided_slice %6 {offsets = [32, 0], sizes = [176, 48], strides = [1, 1]} : vector<208x48xbf16> to vector<176x48xbf16>
    %c2 = arith.constant 2 : index
    %c0_8 = arith.constant 0 : index
    %c0_9 = arith.constant 0 : index
    %17 = vector.load %arg2[%c2, %c0_8, %c0_9] : memref<3x48x16xbf16, #tpu.memory_space<vmem>>, vector<1x48x16xbf16>
    %18 = vector.shape_cast %17 : vector<1x48x16xbf16> to vector<48x16xbf16>
    %cst_10 = arith.constant dense<0.000000e+00> : vector<176x16xf32>
    %19 = tpu.matmul %16, %18, %cst_10 {dimension_numbers = #tpu.dot_dimension_numbers<[1], [0], [0], [1], [0, 0, 1, 1], [], []>} : vector<176x48xbf16>, vector<48x16xbf16>, vector<176x16xf32> -> vector<176x16xf32>
    %20 = arith.addf %15, %19 : vector<176x16xf32>
    %c0_11 = arith.constant 0 : index
    %c0_12 = arith.constant 0 : index
    %21 = vector.load %arg3[%c0_11, %c0_12] : memref<1x16xf32, #tpu.memory_space<vmem>>, vector<1x16xf32>
    %22 = vector.broadcast %21 : vector<1x16xf32> to vector<176x16xf32>
    %23 = arith.addf %20, %22 : vector<176x16xf32>
    %c0_13 = arith.constant 0 : index
    %c0_14 = arith.constant 0 : index
    %c0_15 = arith.constant 0 : index
    %24 = vector.load %arg4[%c0_13, %c0_14, %c0_15] : memref<1x176x16xf32, #tpu.memory_space<vmem>>, vector<1x176x16xf32>
    %25 = vector.shape_cast %24 : vector<1x176x16xf32> to vector<176x16xf32>
    %26 = vector.shape_cast %23 : vector<176x16xf32> to vector<1x176x16xf32>
    tpu.vector_store %arg4[%c0_13, %c0_14, %c0_15], %26 {strides = array<i32>} : memref<1x176x16xf32, #tpu.memory_space<vmem>>, vector<1x176x16xf32>,
    return
  }
  func.func @transform_0(%arg0: i32) -> (i32, i32, i32) {
    %c0_i32 = arith.constant 0 : i32
    %c0_i32_0 = arith.constant 0 : i32
    %c0_i32_1 = arith.constant 0 : i32
    return %arg0, %c0_i32, %c0_i32_0 : i32, i32, i32
  }
  func.func @transform_1(%arg0: i32) -> (i32, i32, i32) {
    %c0_i32 = arith.constant 0 : i32
    %c0_i32_0 = arith.constant 0 : i32
    %c0_i32_1 = arith.constant 0 : i32
    %c0_i32_2 = arith.constant 0 : i32
    return %c0_i32, %c0_i32_0, %c0_i32_1 : i32, i32, i32
  }
  func.func @transform_2(%arg0: i32) -> (i32, i32) {
    %c0_i32 = arith.constant 0 : i32
    %c0_i32_0 = arith.constant 0 : i32
    %c0_i32_1 = arith.constant 0 : i32
    return %c0_i32, %c0_i32_0 : i32, i32
  }
  func.func @transform_3(%arg0: i32) -> (i32, i32, i32) {
    %c0_i32 = arith.constant 0 : i32
    %c0_i32_0 = arith.constant 0 : i32
    %c0_i32_1 = arith.constant 0 : i32
    return %arg0, %c0_i32, %c0_i32_0 : i32, i32, i32
  }
}

module attributes {stable_mosaic.version = 11 : i64} {
  func.func @_bn_stats_kernel(%arg0: i32, %arg1: memref<512x16xf32, #tpu.memory_space<vmem>>, %arg2: memref<1x16xf32, #tpu.memory_space<vmem>>, %arg3: memref<1x16xf32, #tpu.memory_space<vmem>>) attributes {dimension_semantics = [#tpu.dimension_semantics<arbitrary>], iteration_bounds = array<i64: 1>, scalar_prefetch = 0 : i64, scratch_operands = 0 : i64, tpu.core_type = #tpu.core_type<tc>, window_params = [{transform_indices = @transform_0, window_bounds = array<i64: 512, 16>}, {pipeline_mode = #tpu.pipeline_mode<synchronous>, transform_indices = @transform_1, window_bounds = array<i64: 1, 16>}, {pipeline_mode = #tpu.pipeline_mode<synchronous>, transform_indices = @transform_2, window_bounds = array<i64: 1, 16>}]} {
    %c0 = arith.constant 0 : index
    %c0_0 = arith.constant 0 : index
    %0 = vector.load %arg1[%c0, %c0_0] : memref<512x16xf32, #tpu.memory_space<vmem>>, vector<512x16xf32>
    %cst = arith.constant dense<0.000000e+00> : vector<16xf32>
    %1 = vector.multi_reduction <add>, %0, %cst [0] : vector<512x16xf32> to vector<16xf32>
    %2 = vector.shape_cast %1 : vector<16xf32> to vector<1x16xf32>
    %3 = arith.mulf %0, %0 : vector<512x16xf32>
    %cst_1 = arith.constant dense<0.000000e+00> : vector<16xf32>
    %4 = vector.multi_reduction <add>, %3, %cst_1 [0] : vector<512x16xf32> to vector<16xf32>
    %5 = vector.shape_cast %4 : vector<16xf32> to vector<1x16xf32>
    %c0_2 = arith.constant 0 : index
    %c0_3 = arith.constant 0 : index
    %6 = vector.load %arg2[%c0_2, %c0_3] : memref<1x16xf32, #tpu.memory_space<vmem>>, vector<1x16xf32>
    tpu.vector_store %arg2[%c0_2, %c0_3], %2 {strides = array<i32>} : memref<1x16xf32, #tpu.memory_space<vmem>>, vector<1x16xf32>,
    %c0_4 = arith.constant 0 : index
    %c0_5 = arith.constant 0 : index
    %7 = vector.load %arg3[%c0_4, %c0_5] : memref<1x16xf32, #tpu.memory_space<vmem>>, vector<1x16xf32>
    tpu.vector_store %arg3[%c0_4, %c0_5], %5 {strides = array<i32>} : memref<1x16xf32, #tpu.memory_space<vmem>>, vector<1x16xf32>,
    return
  }
  func.func @transform_0(%arg0: i32) -> (i32, i32) {
    %c0_i32 = arith.constant 0 : i32
    %c0_i32_0 = arith.constant 0 : i32
    return %arg0, %c0_i32 : i32, i32
  }
  func.func @transform_1(%arg0: i32) -> (i32, i32) {
    %c0_i32 = arith.constant 0 : i32
    %c0_i32_0 = arith.constant 0 : i32
    %c0_i32_1 = arith.constant 0 : i32
    return %c0_i32, %c0_i32_0 : i32, i32
  }
  func.func @transform_2(%arg0: i32) -> (i32, i32) {
    %c0_i32 = arith.constant 0 : i32
    %c0_i32_0 = arith.constant 0 : i32
    %c0_i32_1 = arith.constant 0 : i32
    return %c0_i32, %c0_i32_0 : i32, i32
  }
}

module attributes {stable_mosaic.version = 11 : i64} {
  func.func @_conv3x3_kernel(%arg0: i32, %arg1: memref<1x608x32xf32, #tpu.memory_space<vmem>>, %arg2: memref<608x1xf32, #tpu.memory_space<vmem>>, %arg3: memref<1x32xf32, #tpu.memory_space<vmem>>, %arg4: memref<1x32xf32, #tpu.memory_space<vmem>>, %arg5: memref<3x96x32xbf16, #tpu.memory_space<vmem>>, %arg6: memref<1x32xf32, #tpu.memory_space<vmem>>, %arg7: memref<1x512x32xf32, #tpu.memory_space<vmem>>) attributes {dimension_semantics = [#tpu.dimension_semantics<parallel>], iteration_bounds = array<i64: 2>, scalar_prefetch = 0 : i64, scratch_operands = 0 : i64, tpu.core_type = #tpu.core_type<tc>, window_params = [{transform_indices = @transform_0, window_bounds = array<i64: 1, 608, 32>}, {pipeline_mode = #tpu.pipeline_mode<synchronous>, transform_indices = @transform_1, window_bounds = array<i64: 608, 1>}, {pipeline_mode = #tpu.pipeline_mode<synchronous>, transform_indices = @transform_2, window_bounds = array<i64: 1, 32>}, {pipeline_mode = #tpu.pipeline_mode<synchronous>, transform_indices = @transform_3, window_bounds = array<i64: 1, 32>}, {pipeline_mode = #tpu.pipeline_mode<synchronous>, transform_indices = @transform_4, window_bounds = array<i64: 3, 96, 32>}, {pipeline_mode = #tpu.pipeline_mode<synchronous>, transform_indices = @transform_5, window_bounds = array<i64: 1, 32>}, {transform_indices = @transform_6, window_bounds = array<i64: 1, 512, 32>}]} {
    %c0 = arith.constant 0 : index
    %c0_0 = arith.constant 0 : index
    %c0_1 = arith.constant 0 : index
    %0 = vector.load %arg1[%c0, %c0_0, %c0_1] : memref<1x608x32xf32, #tpu.memory_space<vmem>>, vector<1x608x32xf32>
    %1 = vector.shape_cast %0 : vector<1x608x32xf32> to vector<608x32xf32>
    %c0_2 = arith.constant 0 : index
    %c0_3 = arith.constant 0 : index
    %2 = vector.load %arg3[%c0_2, %c0_3] : memref<1x32xf32, #tpu.memory_space<vmem>>, vector<1x32xf32>
    %3 = vector.broadcast %2 : vector<1x32xf32> to vector<608x32xf32>
    %4 = arith.mulf %1, %3 : vector<608x32xf32>
    %c0_4 = arith.constant 0 : index
    %c0_5 = arith.constant 0 : index
    %5 = vector.load %arg4[%c0_4, %c0_5] : memref<1x32xf32, #tpu.memory_space<vmem>>, vector<1x32xf32>
    %6 = vector.broadcast %5 : vector<1x32xf32> to vector<608x32xf32>
    %7 = arith.addf %4, %6 : vector<608x32xf32>
    %cst = arith.constant 0.000000e+00 : f32
    %8 = vector.broadcast %cst : f32 to vector<608x32xf32>
    %9 = arith.maximumf %7, %8 : vector<608x32xf32>
    %c0_6 = arith.constant 0 : index
    %c0_7 = arith.constant 0 : index
    %10 = vector.load %arg2[%c0_6, %c0_7] : memref<608x1xf32, #tpu.memory_space<vmem>>, vector<608x1xf32>
    %11 = vector.broadcast %10 : vector<608x1xf32> to vector<608x32xf32>
    %12 = arith.mulf %9, %11 : vector<608x32xf32>
    %13 = vector.extract_strided_slice %12 {offsets = [0, 0], sizes = [576, 32], strides = [1, 1]} : vector<608x32xf32> to vector<576x32xf32>
    %14 = vector.extract_strided_slice %12 {offsets = [1, 0], sizes = [576, 32], strides = [1, 1]} : vector<608x32xf32> to vector<576x32xf32>
    %15 = vector.extract_strided_slice %12 {offsets = [2, 0], sizes = [576, 32], strides = [1, 1]} : vector<608x32xf32> to vector<576x32xf32>
    %16 = tpu.concatenate %13, %14, %15 in 1 : vector<576x32xf32>, vector<576x32xf32>, vector<576x32xf32> -> vector<576x96xf32>
    %17 = arith.truncf %16 : vector<576x96xf32> to vector<576x96xbf16>
    %18 = vector.extract_strided_slice %17 {offsets = [0, 0], sizes = [512, 96], strides = [1, 1]} : vector<576x96xbf16> to vector<512x96xbf16>
    %c0_8 = arith.constant 0 : index
    %c0_9 = arith.constant 0 : index
    %c0_10 = arith.constant 0 : index
    %19 = vector.load %arg5[%c0_8, %c0_9, %c0_10] : memref<3x96x32xbf16, #tpu.memory_space<vmem>>, vector<1x96x32xbf16>
    %20 = vector.shape_cast %19 : vector<1x96x32xbf16> to vector<96x32xbf16>
    %cst_11 = arith.constant dense<0.000000e+00> : vector<512x32xf32>
    %21 = tpu.matmul %18, %20, %cst_11 {dimension_numbers = #tpu.dot_dimension_numbers<[1], [0], [0], [1], [0, 0, 1, 1], [], []>} : vector<512x96xbf16>, vector<96x32xbf16>, vector<512x32xf32> -> vector<512x32xf32>
    %22 = vector.extract_strided_slice %17 {offsets = [32, 0], sizes = [512, 96], strides = [1, 1]} : vector<576x96xbf16> to vector<512x96xbf16>
    %c1 = arith.constant 1 : index
    %c0_12 = arith.constant 0 : index
    %c0_13 = arith.constant 0 : index
    %23 = vector.load %arg5[%c1, %c0_12, %c0_13] : memref<3x96x32xbf16, #tpu.memory_space<vmem>>, vector<1x96x32xbf16>
    %24 = vector.shape_cast %23 : vector<1x96x32xbf16> to vector<96x32xbf16>
    %cst_14 = arith.constant dense<0.000000e+00> : vector<512x32xf32>
    %25 = tpu.matmul %22, %24, %cst_14 {dimension_numbers = #tpu.dot_dimension_numbers<[1], [0], [0], [1], [0, 0, 1, 1], [], []>} : vector<512x96xbf16>, vector<96x32xbf16>, vector<512x32xf32> -> vector<512x32xf32>
    %26 = arith.addf %21, %25 : vector<512x32xf32>
    %27 = vector.extract_strided_slice %17 {offsets = [64, 0], sizes = [512, 96], strides = [1, 1]} : vector<576x96xbf16> to vector<512x96xbf16>
    %c2 = arith.constant 2 : index
    %c0_15 = arith.constant 0 : index
    %c0_16 = arith.constant 0 : index
    %28 = vector.load %arg5[%c2, %c0_15, %c0_16] : memref<3x96x32xbf16, #tpu.memory_space<vmem>>, vector<1x96x32xbf16>
    %29 = vector.shape_cast %28 : vector<1x96x32xbf16> to vector<96x32xbf16>
    %cst_17 = arith.constant dense<0.000000e+00> : vector<512x32xf32>
    %30 = tpu.matmul %27, %29, %cst_17 {dimension_numbers = #tpu.dot_dimension_numbers<[1], [0], [0], [1], [0, 0, 1, 1], [], []>} : vector<512x96xbf16>, vector<96x32xbf16>, vector<512x32xf32> -> vector<512x32xf32>
    %31 = arith.addf %26, %30 : vector<512x32xf32>
    %c0_18 = arith.constant 0 : index
    %c0_19 = arith.constant 0 : index
    %32 = vector.load %arg6[%c0_18, %c0_19] : memref<1x32xf32, #tpu.memory_space<vmem>>, vector<1x32xf32>
    %33 = vector.broadcast %32 : vector<1x32xf32> to vector<512x32xf32>
    %34 = arith.addf %31, %33 : vector<512x32xf32>
    %c0_20 = arith.constant 0 : index
    %c0_21 = arith.constant 0 : index
    %c0_22 = arith.constant 0 : index
    %35 = vector.load %arg7[%c0_20, %c0_21, %c0_22] : memref<1x512x32xf32, #tpu.memory_space<vmem>>, vector<1x512x32xf32>
    %36 = vector.shape_cast %35 : vector<1x512x32xf32> to vector<512x32xf32>
    %37 = vector.shape_cast %34 : vector<512x32xf32> to vector<1x512x32xf32>
    tpu.vector_store %arg7[%c0_20, %c0_21, %c0_22], %37 {strides = array<i32>} : memref<1x512x32xf32, #tpu.memory_space<vmem>>, vector<1x512x32xf32>,
    return
  }
  func.func @transform_0(%arg0: i32) -> (i32, i32, i32) {
    %c0_i32 = arith.constant 0 : i32
    %c0_i32_0 = arith.constant 0 : i32
    %c0_i32_1 = arith.constant 0 : i32
    return %arg0, %c0_i32, %c0_i32_0 : i32, i32, i32
  }
  func.func @transform_1(%arg0: i32) -> (i32, i32) {
    %c0_i32 = arith.constant 0 : i32
    %c0_i32_0 = arith.constant 0 : i32
    %c0_i32_1 = arith.constant 0 : i32
    return %c0_i32, %c0_i32_0 : i32, i32
  }
  func.func @transform_2(%arg0: i32) -> (i32, i32) {
    %c0_i32 = arith.constant 0 : i32
    %c0_i32_0 = arith.constant 0 : i32
    %c0_i32_1 = arith.constant 0 : i32
    return %c0_i32, %c0_i32_0 : i32, i32
  }
  func.func @transform_3(%arg0: i32) -> (i32, i32) {
    %c0_i32 = arith.constant 0 : i32
    %c0_i32_0 = arith.constant 0 : i32
    %c0_i32_1 = arith.constant 0 : i32
    return %c0_i32, %c0_i32_0 : i32, i32
  }
  func.func @transform_4(%arg0: i32) -> (i32, i32, i32) {
    %c0_i32 = arith.constant 0 : i32
    %c0_i32_0 = arith.constant 0 : i32
    %c0_i32_1 = arith.constant 0 : i32
    %c0_i32_2 = arith.constant 0 : i32
    return %c0_i32, %c0_i32_0, %c0_i32_1 : i32, i32, i32
  }
  func.func @transform_5(%arg0: i32) -> (i32, i32) {
    %c0_i32 = arith.constant 0 : i32
    %c0_i32_0 = arith.constant 0 : i32
    %c0_i32_1 = arith.constant 0 : i32
    return %c0_i32, %c0_i32_0 : i32, i32
  }
  func.func @transform_6(%arg0: i32) -> (i32, i32, i32) {
    %c0_i32 = arith.constant 0 : i32
    %c0_i32_0 = arith.constant 0 : i32
    %c0_i32_1 = arith.constant 0 : i32
    return %arg0, %c0_i32, %c0_i32_0 : i32, i32, i32
  }
}

module attributes {stable_mosaic.version = 11 : i64} {
  func.func @_bnrelu_gemm_kernel(%arg0: i32, %arg1: memref<512x16xf32, #tpu.memory_space<vmem>>, %arg2: memref<1x16xf32, #tpu.memory_space<vmem>>, %arg3: memref<1x16xf32, #tpu.memory_space<vmem>>, %arg4: memref<16x32xbf16, #tpu.memory_space<vmem>>, %arg5: memref<1x32xf32, #tpu.memory_space<vmem>>, %arg6: memref<512x32xf32, #tpu.memory_space<vmem>>, %arg7: memref<512x32xf32, #tpu.memory_space<vmem>>, %arg8: memref<1x32xf32, #tpu.memory_space<vmem>>, %arg9: memref<1x32xf32, #tpu.memory_space<vmem>>) attributes {dimension_semantics = [#tpu.dimension_semantics<arbitrary>], iteration_bounds = array<i64: 1>, scalar_prefetch = 0 : i64, scratch_operands = 0 : i64, tpu.core_type = #tpu.core_type<tc>, window_params = [{transform_indices = @transform_0, window_bounds = array<i64: 512, 16>}, {pipeline_mode = #tpu.pipeline_mode<synchronous>, transform_indices = @transform_1, window_bounds = array<i64: 1, 16>}, {pipeline_mode = #tpu.pipeline_mode<synchronous>, transform_indices = @transform_2, window_bounds = array<i64: 1, 16>}, {pipeline_mode = #tpu.pipeline_mode<synchronous>, transform_indices = @transform_3, window_bounds = array<i64: 16, 32>}, {pipeline_mode = #tpu.pipeline_mode<synchronous>, transform_indices = @transform_4, window_bounds = array<i64: 1, 32>}, {transform_indices = @transform_5, window_bounds = array<i64: 512, 32>}, {transform_indices = @transform_6, window_bounds = array<i64: 512, 32>}, {pipeline_mode = #tpu.pipeline_mode<synchronous>, transform_indices = @transform_7, window_bounds = array<i64: 1, 32>}, {pipeline_mode = #tpu.pipeline_mode<synchronous>, transform_indices = @transform_8, window_bounds = array<i64: 1, 32>}]} {
    %c0 = arith.constant 0 : index
    %c0_0 = arith.constant 0 : index
    %0 = vector.load %arg1[%c0, %c0_0] : memref<512x16xf32, #tpu.memory_space<vmem>>, vector<512x16xf32>
    %c0_1 = arith.constant 0 : index
    %c0_2 = arith.constant 0 : index
    %1 = vector.load %arg2[%c0_1, %c0_2] : memref<1x16xf32, #tpu.memory_space<vmem>>, vector<1x16xf32>
    %2 = vector.broadcast %1 : vector<1x16xf32> to vector<512x16xf32>
    %3 = arith.mulf %0, %2 : vector<512x16xf32>
    %c0_3 = arith.constant 0 : index
    %c0_4 = arith.constant 0 : index
    %4 = vector.load %arg3[%c0_3, %c0_4] : memref<1x16xf32, #tpu.memory_space<vmem>>, vector<1x16xf32>
    %5 = vector.broadcast %4 : vector<1x16xf32> to vector<512x16xf32>
    %6 = arith.addf %3, %5 : vector<512x16xf32>
    %cst = arith.constant 0.000000e+00 : f32
    %7 = vector.broadcast %cst : f32 to vector<512x16xf32>
    %8 = arith.maximumf %6, %7 : vector<512x16xf32>
    %9 = arith.truncf %8 : vector<512x16xf32> to vector<512x16xbf16>
    %c0_5 = arith.constant 0 : index
    %c0_6 = arith.constant 0 : index
    %10 = vector.load %arg4[%c0_5, %c0_6] : memref<16x32xbf16, #tpu.memory_space<vmem>>, vector<16x32xbf16>
    %cst_7 = arith.constant dense<0.000000e+00> : vector<512x32xf32>
    %11 = tpu.matmul %9, %10, %cst_7 {dimension_numbers = #tpu.dot_dimension_numbers<[1], [0], [0], [1], [0, 0, 1, 1], [], []>} : vector<512x16xbf16>, vector<16x32xbf16>, vector<512x32xf32> -> vector<512x32xf32>
    %c0_8 = arith.constant 0 : index
    %c0_9 = arith.constant 0 : index
    %12 = vector.load %arg5[%c0_8, %c0_9] : memref<1x32xf32, #tpu.memory_space<vmem>>, vector<1x32xf32>
    %13 = vector.broadcast %12 : vector<1x32xf32> to vector<512x32xf32>
    %14 = arith.addf %11, %13 : vector<512x32xf32>
    %c0_10 = arith.constant 0 : index
    %c0_11 = arith.constant 0 : index
    %15 = vector.load %arg6[%c0_10, %c0_11] : memref<512x32xf32, #tpu.memory_space<vmem>>, vector<512x32xf32>
    %16 = arith.addf %14, %15 : vector<512x32xf32>
    %c0_12 = arith.constant 0 : index
    %c0_13 = arith.constant 0 : index
    %17 = vector.load %arg7[%c0_12, %c0_13] : memref<512x32xf32, #tpu.memory_space<vmem>>, vector<512x32xf32>
    tpu.vector_store %arg7[%c0_12, %c0_13], %16 {strides = array<i32>} : memref<512x32xf32, #tpu.memory_space<vmem>>, vector<512x32xf32>,
    %cst_14 = arith.constant dense<0.000000e+00> : vector<32xf32>
    %18 = vector.multi_reduction <add>, %16, %cst_14 [0] : vector<512x32xf32> to vector<32xf32>
    %19 = vector.shape_cast %18 : vector<32xf32> to vector<1x32xf32>
    %20 = arith.mulf %16, %16 : vector<512x32xf32>
    %cst_15 = arith.constant dense<0.000000e+00> : vector<32xf32>
    %21 = vector.multi_reduction <add>, %20, %cst_15 [0] : vector<512x32xf32> to vector<32xf32>
    %22 = vector.shape_cast %21 : vector<32xf32> to vector<1x32xf32>
    %c0_16 = arith.constant 0 : index
    %c0_17 = arith.constant 0 : index
    %23 = vector.load %arg8[%c0_16, %c0_17] : memref<1x32xf32, #tpu.memory_space<vmem>>, vector<1x32xf32>
    tpu.vector_store %arg8[%c0_16, %c0_17], %19 {strides = array<i32>} : memref<1x32xf32, #tpu.memory_space<vmem>>, vector<1x32xf32>,
    %c0_18 = arith.constant 0 : index
    %c0_19 = arith.constant 0 : index
    %24 = vector.load %arg9[%c0_18, %c0_19] : memref<1x32xf32, #tpu.memory_space<vmem>>, vector<1x32xf32>
    tpu.vector_store %arg9[%c0_18, %c0_19], %22 {strides = array<i32>} : memref<1x32xf32, #tpu.memory_space<vmem>>, vector<1x32xf32>,
    return
  }
  func.func @transform_0(%arg0: i32) -> (i32, i32) {
    %c0_i32 = arith.constant 0 : i32
    %c0_i32_0 = arith.constant 0 : i32
    return %arg0, %c0_i32 : i32, i32
  }
  func.func @transform_1(%arg0: i32) -> (i32, i32) {
    %c0_i32 = arith.constant 0 : i32
    %c0_i32_0 = arith.constant 0 : i32
    %c0_i32_1 = arith.constant 0 : i32
    return %c0_i32, %c0_i32_0 : i32, i32
  }
  func.func @transform_2(%arg0: i32) -> (i32, i32) {
    %c0_i32 = arith.constant 0 : i32
    %c0_i32_0 = arith.constant 0 : i32
    %c0_i32_1 = arith.constant 0 : i32
    return %c0_i32, %c0_i32_0 : i32, i32
  }
  func.func @transform_3(%arg0: i32) -> (i32, i32) {
    %c0_i32 = arith.constant 0 : i32
    %c0_i32_0 = arith.constant 0 : i32
    %c0_i32_1 = arith.constant 0 : i32
    return %c0_i32, %c0_i32_0 : i32, i32
  }
  func.func @transform_4(%arg0: i32) -> (i32, i32) {
    %c0_i32 = arith.constant 0 : i32
    %c0_i32_0 = arith.constant 0 : i32
    %c0_i32_1 = arith.constant 0 : i32
    return %c0_i32, %c0_i32_0 : i32, i32
  }
  func.func @transform_5(%arg0: i32) -> (i32, i32) {
    %c0_i32 = arith.constant 0 : i32
    %c0_i32_0 = arith.constant 0 : i32
    return %arg0, %c0_i32 : i32, i32
  }
  func.func @transform_6(%arg0: i32) -> (i32, i32) {
    %c0_i32 = arith.constant 0 : i32
    %c0_i32_0 = arith.constant 0 : i32
    return %arg0, %c0_i32 : i32, i32
  }
  func.func @transform_7(%arg0: i32) -> (i32, i32) {
    %c0_i32 = arith.constant 0 : i32
    %c0_i32_0 = arith.constant 0 : i32
    %c0_i32_1 = arith.constant 0 : i32
    return %c0_i32, %c0_i32_0 : i32, i32
  }
  func.func @transform_8(%arg0: i32) -> (i32, i32) {
    %c0_i32 = arith.constant 0 : i32
    %c0_i32_0 = arith.constant 0 : i32
    %c0_i32_1 = arith.constant 0 : i32
    return %c0_i32, %c0_i32_0 : i32, i32
  }
}

module attributes {stable_mosaic.version = 11 : i64} {
  func.func @_bnrelu_gemm_kernel(%arg0: i32, %arg1: memref<512x32xf32, #tpu.memory_space<vmem>>, %arg2: memref<1x32xf32, #tpu.memory_space<vmem>>, %arg3: memref<1x32xf32, #tpu.memory_space<vmem>>, %arg4: memref<32x64xbf16, #tpu.memory_space<vmem>>, %arg5: memref<1x64xf32, #tpu.memory_space<vmem>>, %arg6: memref<512x64xf32, #tpu.memory_space<vmem>>) attributes {dimension_semantics = [#tpu.dimension_semantics<parallel>], iteration_bounds = array<i64: 1>, scalar_prefetch = 0 : i64, scratch_operands = 0 : i64, tpu.core_type = #tpu.core_type<tc>, window_params = [{transform_indices = @transform_0, window_bounds = array<i64: 512, 32>}, {pipeline_mode = #tpu.pipeline_mode<synchronous>, transform_indices = @transform_1, window_bounds = array<i64: 1, 32>}, {pipeline_mode = #tpu.pipeline_mode<synchronous>, transform_indices = @transform_2, window_bounds = array<i64: 1, 32>}, {pipeline_mode = #tpu.pipeline_mode<synchronous>, transform_indices = @transform_3, window_bounds = array<i64: 32, 64>}, {pipeline_mode = #tpu.pipeline_mode<synchronous>, transform_indices = @transform_4, window_bounds = array<i64: 1, 64>}, {transform_indices = @transform_5, window_bounds = array<i64: 512, 64>}]} {
    %c0 = arith.constant 0 : index
    %c0_0 = arith.constant 0 : index
    %0 = vector.load %arg1[%c0, %c0_0] : memref<512x32xf32, #tpu.memory_space<vmem>>, vector<512x32xf32>
    %c0_1 = arith.constant 0 : index
    %c0_2 = arith.constant 0 : index
    %1 = vector.load %arg2[%c0_1, %c0_2] : memref<1x32xf32, #tpu.memory_space<vmem>>, vector<1x32xf32>
    %2 = vector.broadcast %1 : vector<1x32xf32> to vector<512x32xf32>
    %3 = arith.mulf %0, %2 : vector<512x32xf32>
    %c0_3 = arith.constant 0 : index
    %c0_4 = arith.constant 0 : index
    %4 = vector.load %arg3[%c0_3, %c0_4] : memref<1x32xf32, #tpu.memory_space<vmem>>, vector<1x32xf32>
    %5 = vector.broadcast %4 : vector<1x32xf32> to vector<512x32xf32>
    %6 = arith.addf %3, %5 : vector<512x32xf32>
    %cst = arith.constant 0.000000e+00 : f32
    %7 = vector.broadcast %cst : f32 to vector<512x32xf32>
    %8 = arith.maximumf %6, %7 : vector<512x32xf32>
    %9 = arith.truncf %8 : vector<512x32xf32> to vector<512x32xbf16>
    %c0_5 = arith.constant 0 : index
    %c0_6 = arith.constant 0 : index
    %10 = vector.load %arg4[%c0_5, %c0_6] : memref<32x64xbf16, #tpu.memory_space<vmem>>, vector<32x64xbf16>
    %cst_7 = arith.constant dense<0.000000e+00> : vector<512x64xf32>
    %11 = tpu.matmul %9, %10, %cst_7 {dimension_numbers = #tpu.dot_dimension_numbers<[1], [0], [0], [1], [0, 0, 1, 1], [], []>} : vector<512x32xbf16>, vector<32x64xbf16>, vector<512x64xf32> -> vector<512x64xf32>
    %c0_8 = arith.constant 0 : index
    %c0_9 = arith.constant 0 : index
    %12 = vector.load %arg5[%c0_8, %c0_9] : memref<1x64xf32, #tpu.memory_space<vmem>>, vector<1x64xf32>
    %13 = vector.broadcast %12 : vector<1x64xf32> to vector<512x64xf32>
    %14 = arith.addf %11, %13 : vector<512x64xf32>
    %c0_10 = arith.constant 0 : index
    %c0_11 = arith.constant 0 : index
    %15 = vector.load %arg6[%c0_10, %c0_11] : memref<512x64xf32, #tpu.memory_space<vmem>>, vector<512x64xf32>
    tpu.vector_store %arg6[%c0_10, %c0_11], %14 {strides = array<i32>} : memref<512x64xf32, #tpu.memory_space<vmem>>, vector<512x64xf32>,
    return
  }
  func.func @transform_0(%arg0: i32) -> (i32, i32) {
    %c0_i32 = arith.constant 0 : i32
    %c0_i32_0 = arith.constant 0 : i32
    return %arg0, %c0_i32 : i32, i32
  }
  func.func @transform_1(%arg0: i32) -> (i32, i32) {
    %c0_i32 = arith.constant 0 : i32
    %c0_i32_0 = arith.constant 0 : i32
    %c0_i32_1 = arith.constant 0 : i32
    return %c0_i32, %c0_i32_0 : i32, i32
  }
  func.func @transform_2(%arg0: i32) -> (i32, i32) {
    %c0_i32 = arith.constant 0 : i32
    %c0_i32_0 = arith.constant 0 : i32
    %c0_i32_1 = arith.constant 0 : i32
    return %c0_i32, %c0_i32_0 : i32, i32
  }
  func.func @transform_3(%arg0: i32) -> (i32, i32) {
    %c0_i32 = arith.constant 0 : i32
    %c0_i32_0 = arith.constant 0 : i32
    %c0_i32_1 = arith.constant 0 : i32
    return %c0_i32, %c0_i32_0 : i32, i32
  }
  func.func @transform_4(%arg0: i32) -> (i32, i32) {
    %c0_i32 = arith.constant 0 : i32
    %c0_i32_0 = arith.constant 0 : i32
    %c0_i32_1 = arith.constant 0 : i32
    return %c0_i32, %c0_i32_0 : i32, i32
  }
  func.func @transform_5(%arg0: i32) -> (i32, i32) {
    %c0_i32 = arith.constant 0 : i32
    %c0_i32_0 = arith.constant 0 : i32
    return %arg0, %c0_i32 : i32, i32
  }
}

</mosaic_0001>

<llo_original>
// kernel: pyraconvblock_forward.8
$region0: #{pyraconvblock_forward.8}
  #allocation0 [shape = 'u32[]', space=smem, size = 0x4, offset = 0x4, fixed_abs, tag = 'smem constant byte address 0x4 - core index']
  #allocation1 [shape = 'u32[72,128]{1,0:T(1,128)}', space=vmem, size = 0x9000, scoped, tag = 'internal scratch']
  %s0 = inlined_call_operand.hbm [shape: f32[512,32], index: 0, kind: input, shape index: {}]
  %s1 = inlined_call_operand.vmem [shape: f32[1,32], index: 1, kind: output, shape index: {0}]
  %s2 = inlined_call_operand.vmem [shape: f32[1,32], index: 2, kind: output, shape index: {1}]
  %3 = xla_tuple %s1, %s2
  %s4 = sld [smem:[#allocation0]]
  $region26: #{pyraconvblock_forward.8} parent=0
    _
  %s6 = ssub.s32 1, %s4
  %s7 = scalar_select 0, %s6, %s4
  $region1: #{pyraconvblock_forward.8} parent=0
    #allocation2 [shape = 'u8[262144]{0}', space=vmem, size = 0x40000, scoped, tag = 'input window, operand 0, single buffered']
    #allocation3 [shape = 's32[1]{0}', space=sflag, size = 0x4, scoped, tag = 'scoped memory for pyraconvblock_forward.8']
    %8 = vsyncpa [#allocation3], 0
    // Predicated region
    $region2: #{pyraconvblock_forward.8} parent=1 // pred_check
      _
    $region3: #{pyraconvblock_forward.8} parent=1 // pred_check_branch
      %10 = sbr.rel (0) target = $region5
    $region4: #{pyraconvblock_forward.8} parent=1 // pred_region
      %12 = vsyncadd [#allocation3], 0
      %s13 = sshll.u32 %s0, 4
      %s14 = int_to_ptr.hbm [resolvable:$true] %s13
      %s15 = sshll.u32 [#allocation2], 4
      %s16 = int_to_ptr.vmem [resolvable:$true] %s15
      %21 = dma.hbm_to_vmem [thread:$0]  %s14, 8192, %s16, [#allocation3], 128, 128, 8
    $region5: #{pyraconvblock_forward.8} parent=1 // pred_fallthru
      _
    // Predicated region
    $region6: #{pyraconvblock_forward.8} parent=1 // pred_check
      _
    $region7: #{pyraconvblock_forward.8} parent=1 // pred_check_branch
      %23 = sbr.rel (0) target = $region9
    $region8: #{pyraconvblock_forward.8} parent=1 // pred_region
      %25 = dma.done [#allocation3], 8192
    $region9: #{pyraconvblock_forward.8} parent=1 // pred_fallthru
      _
    %v26 = vld [vmem:[#allocation2] sm:$0xff]
    %v27 = vld [vmem:[#allocation2 + $0x8] sm:$0xff]
    %v28 = vld [vmem:[#allocation2 + $0x10] sm:$0xff]
    %v29 = vld [vmem:[#allocation2 + $0x18] sm:$0xff]
    %v30 = vld [vmem:[#allocation2 + $0x20] sm:$0xff]
    %v31 = vld [vmem:[#allocation2 + $0x28] sm:$0xff]
    %v32 = vld [vmem:[#allocation2 + $0x30] sm:$0xff]
    %v33 = vld [vmem:[#allocation2 + $0x38] sm:$0xff]
    %v34 = vld [vmem:[#allocation2 + $0x40] sm:$0xff]
    %v35 = vld [vmem:[#allocation2 + $0x48] sm:$0xff]
    %v36 = vld [vmem:[#allocation2 + $0x50] sm:$0xff]
    %v37 = vld [vmem:[#allocation2 + $0x58] sm:$0xff]
    %v38 = vld [vmem:[#allocation2 + $0x60] sm:$0xff]
    %v39 = vld [vmem:[#allocation2 + $0x68] sm:$0xff]
    %v40 = vld [vmem:[#allocation2 + $0x70] sm:$0xff]
    %v41 = vld [vmem:[#allocation2 + $0x78] sm:$0xff]
    %v42 = vld [vmem:[#allocation2 + $0x80] sm:$0xff]
    %v43 = vld [vmem:[#allocation2 + $0x88] sm:$0xff]
    %v44 = vld [vmem:[#allocation2 + $0x90] sm:$0xff]
    %v45 = vld [vmem:[#allocation2 + $0x98] sm:$0xff]
    %v46 = vld [vmem:[#allocation2 + $0xa0] sm:$0xff]
    %v47 = vld [vmem:[#allocation2 + $0xa8] sm:$0xff]
    %v48 = vld [vmem:[#allocation2 + $0xb0] sm:$0xff]
    %v49 = vld [vmem:[#allocation2 + $0xb8] sm:$0xff]
    %v50 = vld [vmem:[#allocation2 + $0xc0] sm:$0xff]
    %v51 = vld [vmem:[#allocation2 + $0xc8] sm:$0xff]
    %v52 = vld [vmem:[#allocation2 + $0xd0] sm:$0xff]
    %v53 = vld [vmem:[#allocation2 + $0xd8] sm:$0xff]
    %v54 = vld [vmem:[#allocation2 + $0xe0] sm:$0xff]
    %v55 = vld [vmem:[#allocation2 + $0xe8] sm:$0xff]
    %v56 = vld [vmem:[#allocation2 + $0xf0] sm:$0xff]
    %v57 = vld [vmem:[#allocation2 + $0xf8] sm:$0xff]
    %v58 = vld [vmem:[#allocation2 + $0x100] sm:$0xff]
    %v59 = vld [vmem:[#allocation2 + $0x108] sm:$0xff]
    %v60 = vld [vmem:[#allocation2 + $0x110] sm:$0xff]
    %v61 = vld [vmem:[#allocation2 + $0x118] sm:$0xff]
    %v62 = vld [vmem:[#allocation2 + $0x120] sm:$0xff]
    %v63 = vld [vmem:[#allocation2 + $0x128] sm:$0xff]
    %v64 = vld [vmem:[#allocation2 + $0x130] sm:$0xff]
    %v65 = vld [vmem:[#allocation2 + $0x138] sm:$0xff]
    %v66 = vld [vmem:[#allocation2 + $0x140] sm:$0xff]
    %v67 = vld [vmem:[#allocation2 + $0x148] sm:$0xff]
    %v68 = vld [vmem:[#allocation2 + $0x150] sm:$0xff]
    %v69 = vld [vmem:[#allocation2 + $0x158] sm:$0xff]
    %v70 = vld [vmem:[#allocation2 + $0x160] sm:$0xff]
    %v71 = vld [vmem:[#allocation2 + $0x168] sm:$0xff]
    %v72 = vld [vmem:[#allocation2 + $0x170] sm:$0xff]
    %v73 = vld [vmem:[#allocation2 + $0x178] sm:$0xff]
    %v74 = vld [vmem:[#allocation2 + $0x180] sm:$0xff]
    %v75 = vld [vmem:[#allocation2 + $0x188] sm:$0xff]
    %v76 = vld [vmem:[#allocation2 + $0x190] sm:$0xff]
    %v77 = vld [vmem:[#allocation2 + $0x198] sm:$0xff]
    %v78 = vld [vmem:[#allocation2 + $0x1a0] sm:$0xff]
    %v79 = vld [vmem:[#allocation2 + $0x1a8] sm:$0xff]
    %v80 = vld [vmem:[#allocation2 + $0x1b0] sm:$0xff]
    %v81 = vld [vmem:[#allocation2 + $0x1b8] sm:$0xff]
    %v82 = vld [vmem:[#allocation2 + $0x1c0] sm:$0xff]
    %v83 = vld [vmem:[#allocation2 + $0x1c8] sm:$0xff]
    %v84 = vld [vmem:[#allocation2 + $0x1d0] sm:$0xff]
    %v85 = vld [vmem:[#allocation2 + $0x1d8] sm:$0xff]
    %v86 = vld [vmem:[#allocation2 + $0x1e0] sm:$0xff]
    %v87 = vld [vmem:[#allocation2 + $0x1e8] sm:$0xff]
    %v88 = vld [vmem:[#allocation2 + $0x1f0] sm:$0xff]
    %v89 = vld [vmem:[#allocation2 + $0x1f8] sm:$0xff]
    %vm90 = vcmask 261120
    %v91 = vsel %vm90, %v26, 0.0
    %v92 = vsel %vm90, %v27, 0.0
    %v93 = vadd.f32 %v91, %v92
    %v94 = vsel %vm90, %v28, 0.0
    %v95 = vadd.f32 %v93, %v94
    %v96 = vsel %vm90, %v29, 0.0
    %v97 = vadd.f32 %v95, %v96
    %v98 = vsel %vm90, %v30, 0.0
    %v99 = vadd.f32 %v97, %v98
    %v100 = vsel %vm90, %v31, 0.0
    %v101 = vadd.f32 %v99, %v100
    %v102 = vsel %vm90, %v32, 0.0
    %v103 = vadd.f32 %v101, %v102
    %v104 = vsel %vm90, %v33, 0.0
    %v105 = vadd.f32 %v103, %v104
    %v106 = vsel %vm90, %v34, 0.0
    %v107 = vadd.f32 %v105, %v106
    %v108 = vsel %vm90, %v35, 0.0
    %v109 = vadd.f32 %v107, %v108
    %v110 = vsel %vm90, %v36, 0.0
    %v111 = vadd.f32 %v109, %v110
    %v112 = vsel %vm90, %v37, 0.0
    %v113 = vadd.f32 %v111, %v112
    %v114 = vsel %vm90, %v38, 0.0
    %v115 = vadd.f32 %v113, %v114
    %v116 = vsel %vm90, %v39, 0.0
    %v117 = vadd.f32 %v115, %v116
    %v118 = vsel %vm90, %v40, 0.0
    %v119 = vadd.f32 %v117, %v118
    %v120 = vsel %vm90, %v41, 0.0
    %v121 = vadd.f32 %v119, %v120
    %v122 = vsel %vm90, %v42, 0.0
    %v123 = vadd.f32 %v121, %v122
    %v124 = vsel %vm90, %v43, 0.0
    %v125 = vadd.f32 %v123, %v124
    %v126 = vsel %vm90, %v44, 0.0
    %v127 = vadd.f32 %v125, %v126
    %v128 = vsel %vm90, %v45, 0.0
    %v129 = vadd.f32 %v127, %v128
    %v130 = vsel %vm90, %v46, 0.0
    %v131 = vadd.f32 %v129, %v130
    %v132 = vsel %vm90, %v47, 0.0
    %v133 = vadd.f32 %v131, %v132
    %v134 = vsel %vm90, %v48, 0.0
    %v135 = vadd.f32 %v133, %v134
    %v136 = vsel %vm90, %v49, 0.0
    %v137 = vadd.f32 %v135, %v136
    %v138 = vsel %vm90, %v50, 0.0
    %v139 = vadd.f32 %v137, %v138
    %v140 = vsel %vm90, %v51, 0.0
    %v141 = vadd.f32 %v139, %v140
    %v142 = vsel %vm90, %v52, 0.0
    %v143 = vadd.f32 %v141, %v142
    %v144 = vsel %vm90, %v53, 0.0
    %v145 = vadd.f32 %v143, %v144
    %v146 = vsel %vm90, %v54, 0.0
    %v147 = vadd.f32 %v145, %v146
    %v148 = vsel %vm90, %v55, 0.0
    %v149 = vadd.f32 %v147, %v148
    %v150 = vsel %vm90, %v56, 0.0
    %v151 = vadd.f32 %v149, %v150
    %v152 = vsel %vm90, %v57, 0.0
    %v153 = vadd.f32 %v151, %v152
    %v154 = vsel %vm90, %v58, 0.0
    %v155 = vadd.f32 %v153, %v154
    %v156 = vsel %vm90, %v59, 0.0
    %v157 = vadd.f32 %v155, %v156
    %v158 = vsel %vm90, %v60, 0.0
    %v159 = vadd.f32 %v157, %v158
    %v160 = vsel %vm90, %v61, 0.0
    %v161 = vadd.f32 %v159, %v160
    %v162 = vsel %vm90, %v62, 0.0
    %v163 = vadd.f32 %v161, %v162
    %v164 = vsel %vm90, %v63, 0.0
    %v165 = vadd.f32 %v163, %v164
    %v166 = vsel %vm90, %v64, 0.0
    %v167 = vadd.f32 %v165, %v166
    %v168 = vsel %vm90, %v65, 0.0
    %v169 = vadd.f32 %v167, %v168
    %v170 = vsel %vm90, %v66, 0.0
    %v171 = vadd.f32 %v169, %v170
    %v172 = vsel %vm90, %v67, 0.0
    %v173 = vadd.f32 %v171, %v172
    %v174 = vsel %vm90, %v68, 0.0
    %v175 = vadd.f32 %v173, %v174
    %v176 = vsel %vm90, %v69, 0.0
    %v177 = vadd.f32 %v175, %v176
    %v178 = vsel %vm90, %v70, 0.0
    %v179 = vadd.f32 %v177, %v178
    %v180 = vsel %vm90, %v71, 0.0
    %v181 = vadd.f32 %v179, %v180
    %v182 = vsel %vm90, %v72, 0.0
    %v183 = vadd.f32 %v181, %v182
    %v184 = vsel %vm90, %v73, 0.0
    %v185 = vadd.f32 %v183, %v184
    %v186 = vsel %vm90, %v74, 0.0
    %v187 = vadd.f32 %v185, %v186
    %v188 = vsel %vm90, %v75, 0.0
    %v189 = vadd.f32 %v187, %v188
    %v190 = vsel %vm90, %v76, 0.0
    %v191 = vadd.f32 %v189, %v190
    %v192 = vsel %vm90, %v77, 0.0
    %v193 = vadd.f32 %v191, %v192
    %v194 = vsel %vm90, %v78, 0.0
    %v195 = vadd.f32 %v193, %v194
    %v196 = vsel %vm90, %v79, 0.0
    %v197 = vadd.f32 %v195, %v196
    %v198 = vsel %vm90, %v80, 0.0
    %v199 = vadd.f32 %v197, %v198
    %v200 = vsel %vm90, %v81, 0.0
    %v201 = vadd.f32 %v199, %v200
    %v202 = vsel %vm90, %v82, 0.0
    %v203 = vadd.f32 %v201, %v202
    %v204 = vsel %vm90, %v83, 0.0
    %v205 = vadd.f32 %v203, %v204
    %v206 = vsel %vm90, %v84, 0.0
    %v207 = vadd.f32 %v205, %v206
    %v208 = vsel %vm90, %v85, 0.0
    %v209 = vadd.f32 %v207, %v208
    %v210 = vsel %vm90, %v86, 0.0
    %v211 = vadd.f32 %v209, %v210
    %v212 = vsel %vm90, %v87, 0.0
    %v213 = vadd.f32 %v211, %v212
    %v214 = vsel %vm90, %v88, 0.0
    %v215 = vadd.f32 %v213, %v214
    %v216 = vsel %vm90, %v89, 0.0
    %v217 = vadd.f32 %v215, %v216
    %v218 = vrot.slane %v217, 4
    %v219 = vadd.f32 %v217, %v218
    %v220 = vrot.slane %v219, 2
    %v221 = vadd.f32 %v219, %v220
    %v222 = vrot.slane %v221, 1
    %v223 = vadd.f32 %v221, %v222
    %v224 = vmul.f32 %v26, %v26
    %v225 = vmul.f32 %v27, %v27
    %v226 = vmul.f32 %v28, %v28
    %v227 = vmul.f32 %v29, %v29
    %v228 = vmul.f32 %v30, %v30
    %v229 = vmul.f32 %v31, %v31
    %v230 = vmul.f32 %v32, %v32
    %v231 = vmul.f32 %v33, %v33
    %v232 = vmul.f32 %v34, %v34
    %v233 = vmul.f32 %v35, %v35
    %v234 = vmul.f32 %v36, %v36
    %v235 = vmul.f32 %v37, %v37
    %v236 = vmul.f32 %v38, %v38
    %v237 = vmul.f32 %v39, %v39
    %v238 = vmul.f32 %v40, %v40
    %v239 = vmul.f32 %v41, %v41
    %v240 = vmul.f32 %v42, %v42
    %v241 = vmul.f32 %v43, %v43
    %v242 = vmul.f32 %v44, %v44
    %v243 = vmul.f32 %v45, %v45
    %v244 = vmul.f32 %v46, %v46
    %v245 = vmul.f32 %v47, %v47
    %v246 = vmul.f32 %v48, %v48
    %v247 = vmul.f32 %v49, %v49
    %v248 = vmul.f32 %v50, %v50
    %v249 = vmul.f32 %v51, %v51
    %v250 = vmul.f32 %v52, %v52
    %v251 = vmul.f32 %v53, %v53
    %v252 = vmul.f32 %v54, %v54
    %v253 = vmul.f32 %v55, %v55
    %v254 = vmul.f32 %v56, %v56
    %v255 = vmul.f32 %v57, %v57
    %v256 = vmul.f32 %v58, %v58
    %v257 = vmul.f32 %v59, %v59
    %v258 = vmul.f32 %v60, %v60
    %v259 = vmul.f32 %v61, %v61
    %v260 = vmul.f32 %v62, %v62
    %v261 = vmul.f32 %v63, %v63
    %v262 = vmul.f32 %v64, %v64
    %v263 = vmul.f32 %v65, %v65
    %v264 = vmul.f32 %v66, %v66
    %v265 = vmul.f32 %v67, %v67
    %v266 = vmul.f32 %v68, %v68
    %v267 = vmul.f32 %v69, %v69
    %v268 = vmul.f32 %v70, %v70
    %v269 = vmul.f32 %v71, %v71
    %v270 = vmul.f32 %v72, %v72
    %v271 = vmul.f32 %v73, %v73
    %v272 = vmul.f32 %v74, %v74
    %v273 = vmul.f32 %v75, %v75
    %v274 = vmul.f32 %v76, %v76
    %v275 = vmul.f32 %v77, %v77
    %v276 = vmul.f32 %v78, %v78
    %v277 = vmul.f32 %v79, %v79
    %v278 = vmul.f32 %v80, %v80
    %v279 = vmul.f32 %v81, %v81
    %v280 = vmul.f32 %v82, %v82
    %v281 = vmul.f32 %v83, %v83
    %v282 = vmul.f32 %v84, %v84
    %v283 = vmul.f32 %v85, %v85
    %v284 = vmul.f32 %v86, %v86
    %v285 = vmul.f32 %v87, %v87
    %v286 = vmul.f32 %v88, %v88
    %v287 = vmul.f32 %v89, %v89
    %v288 = vsel %vm90, %v224, 0.0
    %v289 = vsel %vm90, %v225, 0.0
    %v290 = vadd.f32 %v288, %v289
    %v291 = vsel %vm90, %v226, 0.0
    %v292 = vadd.f32 %v290, %v291
    %v293 = vsel %vm90, %v227, 0.0
    %v294 = vadd.f32 %v292, %v293
    %v295 = vsel %vm90, %v228, 0.0
    %v296 = vadd.f32 %v294, %v295
    %v297 = vsel %vm90, %v229, 0.0
    %v298 = vadd.f32 %v296, %v297
    %v299 = vsel %vm90, %v230, 0.0
    %v300 = vadd.f32 %v298, %v299
    %v301 = vsel %vm90, %v231, 0.0
    %v302 = vadd.f32 %v300, %v301
    %v303 = vsel %vm90, %v232, 0.0
    %v304 = vadd.f32 %v302, %v303
    %v305 = vsel %vm90, %v233, 0.0
    %v306 = vadd.f32 %v304, %v305
    %v307 = vsel %vm90, %v234, 0.0
    %v308 = vadd.f32 %v306, %v307
    %v309 = vsel %vm90, %v235, 0.0
    %v310 = vadd.f32 %v308, %v309
    %v311 = vsel %vm90, %v236, 0.0
    %v312 = vadd.f32 %v310, %v311
    %v313 = vsel %vm90, %v237, 0.0
    %v314 = vadd.f32 %v312, %v313
    %v315 = vsel %vm90, %v238, 0.0
    %v316 = vadd.f32 %v314, %v315
    %v317 = vsel %vm90, %v239, 0.0
    %v318 = vadd.f32 %v316, %v317
    %v319 = vsel %vm90, %v240, 0.0
    %v320 = vadd.f32 %v318, %v319
    %v321 = vsel %vm90, %v241, 0.0
    %v322 = vadd.f32 %v320, %v321
    %v323 = vsel %vm90, %v242, 0.0
    %v324 = vadd.f32 %v322, %v323
    %v325 = vsel %vm90, %v243, 0.0
    %v326 = vadd.f32 %v324, %v325
    %v327 = vsel %vm90, %v244, 0.0
    %v328 = vadd.f32 %v326, %v327
    %v329 = vsel %vm90, %v245, 0.0
    %v330 = vadd.f32 %v328, %v329
    %v331 = vsel %vm90, %v246, 0.0
    %v332 = vadd.f32 %v330, %v331
    %v333 = vsel %vm90, %v247, 0.0
    %v334 = vadd.f32 %v332, %v333
    %v335 = vsel %vm90, %v248, 0.0
    %v336 = vadd.f32 %v334, %v335
    %v337 = vsel %vm90, %v249, 0.0
    %v338 = vadd.f32 %v336, %v337
    %v339 = vsel %vm90, %v250, 0.0
    %v340 = vadd.f32 %v338, %v339
    %v341 = vsel %vm90, %v251, 0.0
    %v342 = vadd.f32 %v340, %v341
    %v343 = vsel %vm90, %v252, 0.0
    %v344 = vadd.f32 %v342, %v343
    %v345 = vsel %vm90, %v253, 0.0
    %v346 = vadd.f32 %v344, %v345
    %v347 = vsel %vm90, %v254, 0.0
    %v348 = vadd.f32 %v346, %v347
    %v349 = vsel %vm90, %v255, 0.0
    %v350 = vadd.f32 %v348, %v349
    %v351 = vsel %vm90, %v256, 0.0
    %v352 = vadd.f32 %v350, %v351
    %v353 = vsel %vm90, %v257, 0.0
    %v354 = vadd.f32 %v352, %v353
    %v355 = vsel %vm90, %v258, 0.0
    %v356 = vadd.f32 %v354, %v355
    %v357 = vsel %vm90, %v259, 0.0
    %v358 = vadd.f32 %v356, %v357
    %v359 = vsel %vm90, %v260, 0.0
    %v360 = vadd.f32 %v358, %v359
    %v361 = vsel %vm90, %v261, 0.0
    %v362 = vadd.f32 %v360, %v361
    %v363 = vsel %vm90, %v262, 0.0
    %v364 = vadd.f32 %v362, %v363
    %v365 = vsel %vm90, %v263, 0.0
    %v366 = vadd.f32 %v364, %v365
    %v367 = vsel %vm90, %v264, 0.0
    %v368 = vadd.f32 %v366, %v367
    %v369 = vsel %vm90, %v265, 0.0
    %v370 = vadd.f32 %v368, %v369
    %v371 = vsel %vm90, %v266, 0.0
    %v372 = vadd.f32 %v370, %v371
    %v373 = vsel %vm90, %v267, 0.0
    %v374 = vadd.f32 %v372, %v373
    %v375 = vsel %vm90, %v268, 0.0
    %v376 = vadd.f32 %v374, %v375
    %v377 = vsel %vm90, %v269, 0.0
    %v378 = vadd.f32 %v376, %v377
    %v379 = vsel %vm90, %v270, 0.0
    %v380 = vadd.f32 %v378, %v379
    %v381 = vsel %vm90, %v271, 0.0
    %v382 = vadd.f32 %v380, %v381
    %v383 = vsel %vm90, %v272, 0.0
    %v384 = vadd.f32 %v382, %v383
    %v385 = vsel %vm90, %v273, 0.0
    %v386 = vadd.f32 %v384, %v385
    %v387 = vsel %vm90, %v274, 0.0
    %v388 = vadd.f32 %v386, %v387
    %v389 = vsel %vm90, %v275, 0.0
    %v390 = vadd.f32 %v388, %v389
    %v391 = vsel %vm90, %v276, 0.0
    %v392 = vadd.f32 %v390, %v391
    %v393 = vsel %vm90, %v277, 0.0
    %v394 = vadd.f32 %v392, %v393
    %v395 = vsel %vm90, %v278, 0.0
    %v396 = vadd.f32 %v394, %v395
    %v397 = vsel %vm90, %v279, 0.0
    %v398 = vadd.f32 %v396, %v397
    %v399 = vsel %vm90, %v280, 0.0
    %v400 = vadd.f32 %v398, %v399
    %v401 = vsel %vm90, %v281, 0.0
    %v402 = vadd.f32 %v400, %v401
    %v403 = vsel %vm90, %v282, 0.0
    %v404 = vadd.f32 %v402, %v403
    %v405 = vsel %vm90, %v283, 0.0
    %v406 = vadd.f32 %v404, %v405
    %v407 = vsel %vm90, %v284, 0.0
    %v408 = vadd.f32 %v406, %v407
    %v409 = vsel %vm90, %v285, 0.0
    %v410 = vadd.f32 %v408, %v409
    %v411 = vsel %vm90, %v286, 0.0
    %v412 = vadd.f32 %v410, %v411
    %v413 = vsel %vm90, %v287, 0.0
    %v414 = vadd.f32 %v412, %v413
    %v415 = vrot.slane %v414, 4
    %v416 = vadd.f32 %v414, %v415
    %v417 = vrot.slane %v416, 2
    %v418 = vadd.f32 %v416, %v417
    %v419 = vrot.slane %v418, 1
    %v420 = vadd.f32 %v418, %v419
    %vm421 = vcmask 253952
    %422 = vst.msk [vmem:[%s1] sm:$0x1] %vm421, %v223
    %423 = vst.msk [vmem:[%s2] sm:$0x1] %vm421, %v420
    // Predicated region
    $region10: #{pyraconvblock_forward.8} parent=1 // pred_check
      _
    $region11: #{pyraconvblock_forward.8} parent=1 // pred_check_branch
      %425 = sbr.rel (0) target = $region13
    $region12: #{pyraconvblock_forward.8} parent=1 // pred_region
      _
    $region13: #{pyraconvblock_forward.8} parent=1 // pred_fallthru
      _
    // Predicated region
    $region14: #{pyraconvblock_forward.8} parent=1 // pred_check
      _
    $region15: #{pyraconvblock_forward.8} parent=1 // pred_check_branch
      %427 = sbr.rel (0) target = $region17
    $region16: #{pyraconvblock_forward.8} parent=1 // pred_region
      _
    $region17: #{pyraconvblock_forward.8} parent=1 // pred_fallthru
      _
    // Predicated region
    $region18: #{pyraconvblock_forward.8} parent=1 // pred_check
      _
    $region19: #{pyraconvblock_forward.8} parent=1 // pred_check_branch
      %429 = sbr.rel (0) target = $region21
    $region20: #{pyraconvblock_forward.8} parent=1 // pred_region
      _
    $region21: #{pyraconvblock_forward.8} parent=1 // pred_fallthru
      _
    // Predicated region
    $region22: #{pyraconvblock_forward.8} parent=1 // pred_check
      _
    $region23: #{pyraconvblock_forward.8} parent=1 // pred_check_branch
      %431 = sbr.rel (0) target = $region25
    $region24: #{pyraconvblock_forward.8} parent=1 // pred_region
      _
    $region25: #{pyraconvblock_forward.8} parent=1 // pred_fallthru
      _
    %432 = vsyncpa [#allocation3], 1

// kernel: pyraconvblock_forward.9
$region0: #{pyraconvblock_forward.9}
  #allocation0 [shape = 'u32[]', space=smem, size = 0x4, offset = 0x4, fixed_abs, tag = 'smem constant byte address 0x4 - core index']
  #allocation1 [shape = 'u32[72,128]{1,0:T(1,128)}', space=vmem, size = 0x9000, scoped, tag = 'internal scratch']
  %s0 = inlined_call_operand.hbm [shape: f32[512,32], index: 0, kind: input, shape index: {}]
  %s1 = inlined_call_operand.vmem [shape: f32[1,32], index: 1, kind: input, shape index: {}]
  %s2 = inlined_call_operand.vmem [shape: f32[1,32], index: 2, kind: input, shape index: {}]
  %s3 = inlined_call_operand.vmem [shape: bf16[32,48], index: 3, kind: input, shape index: {}]
  %s4 = inlined_call_operand.vmem [shape: f32[1,48], index: 4, kind: input, shape index: {}]
  %s5 = inlined_call_operand.vmem [shape: f32[512,48], index: 5, kind: output, shape index: {0}]
  %s6 = inlined_call_operand.vmem [shape: f32[1,48], index: 6, kind: output, shape index: {1}]
  %s7 = inlined_call_operand.vmem [shape: f32[1,48], index: 7, kind: output, shape index: {2}]
  %8 = xla_tuple %s5, %s6, %s7
  %s9 = sld [smem:[#allocation0]]
  $region50: #{pyraconvblock_forward.9} parent=0
    _
  %s11 = ssub.s32 1, %s9
  %s12 = scalar_select 0, %s11, %s9
  $region1: #{pyraconvblock_forward.9} parent=0
    #allocation2 [shape = 'u8[262144]{0}', space=vmem, size = 0x40000, scoped, tag = 'input window, operand 0, single buffered']
    #allocation3 [shape = 's32[1]{0}', space=sflag, size = 0x4, scoped, tag = 'scoped memory for pyraconvblock_forward.9']
    %13 = vsyncpa [#allocation3], 0
    // Predicated region
    $region2: #{pyraconvblock_forward.9} parent=1 // pred_check
      _
    $region3: #{pyraconvblock_forward.9} parent=1 // pred_check_branch
      %15 = sbr.rel (0) target = $region5
    $region4: #{pyraconvblock_forward.9} parent=1 // pred_region
      %17 = vsyncadd [#allocation3], 0
      %s18 = sshll.u32 %s0, 4
      %s19 = int_to_ptr.hbm [resolvable:$true] %s18
      %s20 = sshll.u32 [#allocation2], 4
      %s21 = int_to_ptr.vmem [resolvable:$true] %s20
      %26 = dma.hbm_to_vmem [thread:$0]  %s19, 8192, %s21, [#allocation3], 128, 128, 8
    $region5: #{pyraconvblock_forward.9} parent=1 // pred_fallthru
      _
    // Predicated region
    $region6: #{pyraconvblock_forward.9} parent=1 // pred_check
      _
    $region7: #{pyraconvblock_forward.9} parent=1 // pred_check_branch
      %28 = sbr.rel (0) target = $region9
    $region8: #{pyraconvblock_forward.9} parent=1 // pred_region
      _
    $region9: #{pyraconvblock_forward.9} parent=1 // pred_fallthru
      _
    // Predicated region
    $region10: #{pyraconvblock_forward.9} parent=1 // pred_check
      _
    $region11: #{pyraconvblock_forward.9} parent=1 // pred_check_branch
      %30 = sbr.rel (0) target = $region13
    $region12: #{pyraconvblock_forward.9} parent=1 // pred_region
      _
    $region13: #{pyraconvblock_forward.9} parent=1 // pred_fallthru
      _
    // Predicated region
    $region14: #{pyraconvblock_forward.9} parent=1 // pred_check
      _
    $region15: #{pyraconvblock_forward.9} parent=1 // pred_check_branch
      %32 = sbr.rel (0) target = $region17
    $region16: #{pyraconvblock_forward.9} parent=1 // pred_region
      _
    $region17: #{pyraconvblock_forward.9} parent=1 // pred_fallthru
      _
    // Predicated region
    $region18: #{pyraconvblock_forward.9} parent=1 // pred_check
      _
    $region19: #{pyraconvblock_forward.9} parent=1 // pred_check_branch
      %34 = sbr.rel (0) target = $region21
    $region20: #{pyraconvblock_forward.9} parent=1 // pred_region
      _
    $region21: #{pyraconvblock_forward.9} parent=1 // pred_fallthru
      _
    // Predicated region
    $region22: #{pyraconvblock_forward.9} parent=1 // pred_check
      _
    $region23: #{pyraconvblock_forward.9} parent=1 // pred_check_branch
      %36 = sbr.rel (0) target = $region25
    $region24: #{pyraconvblock_forward.9} parent=1 // pred_region
      %38 = dma.done [#allocation3], 8192
    $region25: #{pyraconvblock_forward.9} parent=1 // pred_fallthru
      _
    %v40 = vld [vmem:[#allocation2] sm:$0xff]
    %v41 = vld [vmem:[#allocation2 + $0x8] sm:$0xff]
    %v42 = vld [vmem:[#allocation2 + $0x10] sm:$0xff]
    %v43 = vld [vmem:[#allocation2 + $0x18] sm:$0xff]
    %v44 = vld [vmem:[#allocation2 + $0x20] sm:$0xff]
    %v45 = vld [vmem:[#allocation2 + $0x28] sm:$0xff]
    %v46 = vld [vmem:[#allocation2 + $0x30] sm:$0xff]
    %v47 = vld [vmem:[#allocation2 + $0x38] sm:$0xff]
    %v48 = vld [vmem:[#allocation2 + $0x40] sm:$0xff]
    %v49 = vld [vmem:[#allocation2 + $0x48] sm:$0xff]
    %v50 = vld [vmem:[#allocation2 + $0x50] sm:$0xff]
    %v51 = vld [vmem:[#allocation2 + $0x58] sm:$0xff]
    %v52 = vld [vmem:[#allocation2 + $0x60] sm:$0xff]
    %v53 = vld [vmem:[#allocation2 + $0x68] sm:$0xff]
    %v54 = vld [vmem:[#allocation2 + $0x70] sm:$0xff]
    %v55 = vld [vmem:[#allocation2 + $0x78] sm:$0xff]
    %v56 = vld [vmem:[#allocation2 + $0x80] sm:$0xff]
    %v57 = vld [vmem:[#allocation2 + $0x88] sm:$0xff]
    %v58 = vld [vmem:[#allocation2 + $0x90] sm:$0xff]
    %v59 = vld [vmem:[#allocation2 + $0x98] sm:$0xff]
    %v60 = vld [vmem:[#allocation2 + $0xa0] sm:$0xff]
    %v61 = vld [vmem:[#allocation2 + $0xa8] sm:$0xff]
    %v62 = vld [vmem:[#allocation2 + $0xb0] sm:$0xff]
    %v63 = vld [vmem:[#allocation2 + $0xb8] sm:$0xff]
    %v64 = vld [vmem:[#allocation2 + $0xc0] sm:$0xff]
    %v65 = vld [vmem:[#allocation2 + $0xc8] sm:$0xff]
    %v66 = vld [vmem:[#allocation2 + $0xd0] sm:$0xff]
    %v67 = vld [vmem:[#allocation2 + $0xd8] sm:$0xff]
    %v68 = vld [vmem:[#allocation2 + $0xe0] sm:$0xff]
    %v69 = vld [vmem:[#allocation2 + $0xe8] sm:$0xff]
    %v70 = vld [vmem:[#allocation2 + $0xf0] sm:$0xff]
    %v71 = vld [vmem:[#allocation2 + $0xf8] sm:$0xff]
    %v72 = vld [vmem:[#allocation2 + $0x100] sm:$0xff]
    %v73 = vld [vmem:[#allocation2 + $0x108] sm:$0xff]
    %v74 = vld [vmem:[#allocation2 + $0x110] sm:$0xff]
    %v75 = vld [vmem:[#allocation2 + $0x118] sm:$0xff]
    %v76 = vld [vmem:[#allocation2 + $0x120] sm:$0xff]
    %v77 = vld [vmem:[#allocation2 + $0x128] sm:$0xff]
    %v78 = vld [vmem:[#allocation2 + $0x130] sm:$0xff]
    %v79 = vld [vmem:[#allocation2 + $0x138] sm:$0xff]
    %v80 = vld [vmem:[#allocation2 + $0x140] sm:$0xff]
    %v81 = vld [vmem:[#allocation2 + $0x148] sm:$0xff]
    %v82 = vld [vmem:[#allocation2 + $0x150] sm:$0xff]
    %v83 = vld [vmem:[#allocation2 + $0x158] sm:$0xff]
    %v84 = vld [vmem:[#allocation2 + $0x160] sm:$0xff]
    %v85 = vld [vmem:[#allocation2 + $0x168] sm:$0xff]
    %v86 = vld [vmem:[#allocation2 + $0x170] sm:$0xff]
    %v87 = vld [vmem:[#allocation2 + $0x178] sm:$0xff]
    %v88 = vld [vmem:[#allocation2 + $0x180] sm:$0xff]
    %v89 = vld [vmem:[#allocation2 + $0x188] sm:$0xff]
    %v90 = vld [vmem:[#allocation2 + $0x190] sm:$0xff]
    %v91 = vld [vmem:[#allocation2 + $0x198] sm:$0xff]
    %v92 = vld [vmem:[#allocation2 + $0x1a0] sm:$0xff]
    %v93 = vld [vmem:[#allocation2 + $0x1a8] sm:$0xff]
    %v94 = vld [vmem:[#allocation2 + $0x1b0] sm:$0xff]
    %v95 = vld [vmem:[#allocation2 + $0x1b8] sm:$0xff]
    %v96 = vld [vmem:[#allocation2 + $0x1c0] sm:$0xff]
    %v97 = vld [vmem:[#allocation2 + $0x1c8] sm:$0xff]
    %v98 = vld [vmem:[#allocation2 + $0x1d0] sm:$0xff]
    %v99 = vld [vmem:[#allocation2 + $0x1d8] sm:$0xff]
    %v100 = vld [vmem:[#allocation2 + $0x1e0] sm:$0xff]
    %v101 = vld [vmem:[#allocation2 + $0x1e8] sm:$0xff]
    %v102 = vld [vmem:[#allocation2 + $0x1f0] sm:$0xff]
    %v103 = vld [vmem:[#allocation2 + $0x1f8] sm:$0xff]
    %v104 = vld [vmem:[%s1] sm:$0x1]
    %v106 = vperm.slane %v104, 0
    %v108 = vmul.f32 %v40, %v106
    %v109 = vmul.f32 %v41, %v106
    %v110 = vmul.f32 %v42, %v106
    %v111 = vmul.f32 %v43, %v106
    %v112 = vmul.f32 %v44, %v106
    %v113 = vmul.f32 %v45, %v106
    %v114 = vmul.f32 %v46, %v106
    %v115 = vmul.f32 %v47, %v106
    %v116 = vmul.f32 %v48, %v106
    %v117 = vmul.f32 %v49, %v106
    %v118 = vmul.f32 %v50, %v106
    %v119 = vmul.f32 %v51, %v106
    %v120 = vmul.f32 %v52, %v106
    %v121 = vmul.f32 %v53, %v106
    %v122 = vmul.f32 %v54, %v106
    %v123 = vmul.f32 %v55, %v106
    %v124 = vmul.f32 %v56, %v106
    %v125 = vmul.f32 %v57, %v106
    %v126 = vmul.f32 %v58, %v106
    %v127 = vmul.f32 %v59, %v106
    %v128 = vmul.f32 %v60, %v106
    %v129 = vmul.f32 %v61, %v106
    %v130 = vmul.f32 %v62, %v106
    %v131 = vmul.f32 %v63, %v106
    %v132 = vmul.f32 %v64, %v106
    %v133 = vmul.f32 %v65, %v106
    %v134 = vmul.f32 %v66, %v106
    %v135 = vmul.f32 %v67, %v106
    %v136 = vmul.f32 %v68, %v106
    %v137 = vmul.f32 %v69, %v106
    %v138 = vmul.f32 %v70, %v106
    %v139 = vmul.f32 %v71, %v106
    %v140 = vmul.f32 %v72, %v106
    %v141 = vmul.f32 %v73, %v106
    %v142 = vmul.f32 %v74, %v106
    %v143 = vmul.f32 %v75, %v106
    %v144 = vmul.f32 %v76, %v106
    %v145 = vmul.f32 %v77, %v106
    %v146 = vmul.f32 %v78, %v106
    %v147 = vmul.f32 %v79, %v106
    %v148 = vmul.f32 %v80, %v106
    %v149 = vmul.f32 %v81, %v106
    %v150 = vmul.f32 %v82, %v106
    %v151 = vmul.f32 %v83, %v106
    %v152 = vmul.f32 %v84, %v106
    %v153 = vmul.f32 %v85, %v106
    %v154 = vmul.f32 %v86, %v106
    %v155 = vmul.f32 %v87, %v106
    %v156 = vmul.f32 %v88, %v106
    %v157 = vmul.f32 %v89, %v106
    %v158 = vmul.f32 %v90, %v106
    %v159 = vmul.f32 %v91, %v106
    %v160 = vmul.f32 %v92, %v106
    %v161 = vmul.f32 %v93, %v106
    %v162 = vmul.f32 %v94, %v106
    %v163 = vmul.f32 %v95, %v106
    %v164 = vmul.f32 %v96, %v106
    %v165 = vmul.f32 %v97, %v106
    %v166 = vmul.f32 %v98, %v106
    %v167 = vmul.f32 %v99, %v106
    %v168 = vmul.f32 %v100, %v106
    %v169 = vmul.f32 %v101, %v106
    %v170 = vmul.f32 %v102, %v106
    %v171 = vmul.f32 %v103, %v106
    %v172 = vld [vmem:[%s2] sm:$0x1]
    %v174 = vperm.slane %v172, 0
    %v176 = vadd.f32 %v108, %v174
    %v177 = vadd.f32 %v109, %v174
    %v178 = vadd.f32 %v110, %v174
    %v179 = vadd.f32 %v111, %v174
    %v180 = vadd.f32 %v112, %v174
    %v181 = vadd.f32 %v113, %v174
    %v182 = vadd.f32 %v114, %v174
    %v183 = vadd.f32 %v115, %v174
    %v184 = vadd.f32 %v116, %v174
    %v185 = vadd.f32 %v117, %v174
    %v186 = vadd.f32 %v118, %v174
    %v187 = vadd.f32 %v119, %v174
    %v188 = vadd.f32 %v120, %v174
    %v189 = vadd.f32 %v121, %v174
    %v190 = vadd.f32 %v122, %v174
    %v191 = vadd.f32 %v123, %v174
    %v192 = vadd.f32 %v124, %v174
    %v193 = vadd.f32 %v125, %v174
    %v194 = vadd.f32 %v126, %v174
    %v195 = vadd.f32 %v127, %v174
    %v196 = vadd.f32 %v128, %v174
    %v197 = vadd.f32 %v129, %v174
    %v198 = vadd.f32 %v130, %v174
    %v199 = vadd.f32 %v131, %v174
    %v200 = vadd.f32 %v132, %v174
    %v201 = vadd.f32 %v133, %v174
    %v202 = vadd.f32 %v134, %v174
    %v203 = vadd.f32 %v135, %v174
    %v204 = vadd.f32 %v136, %v174
    %v205 = vadd.f32 %v137, %v174
    %v206 = vadd.f32 %v138, %v174
    %v207 = vadd.f32 %v139, %v174
    %v208 = vadd.f32 %v140, %v174
    %v209 = vadd.f32 %v141, %v174
    %v210 = vadd.f32 %v142, %v174
    %v211 = vadd.f32 %v143, %v174
    %v212 = vadd.f32 %v144, %v174
    %v213 = vadd.f32 %v145, %v174
    %v214 = vadd.f32 %v146, %v174
    %v215 = vadd.f32 %v147, %v174
    %v216 = vadd.f32 %v148, %v174
    %v217 = vadd.f32 %v149, %v174
    %v218 = vadd.f32 %v150, %v174
    %v219 = vadd.f32 %v151, %v174
    %v220 = vadd.f32 %v152, %v174
    %v221 = vadd.f32 %v153, %v174
    %v222 = vadd.f32 %v154, %v174
    %v223 = vadd.f32 %v155, %v174
    %v224 = vadd.f32 %v156, %v174
    %v225 = vadd.f32 %v157, %v174
    %v226 = vadd.f32 %v158, %v174
    %v227 = vadd.f32 %v159, %v174
    %v228 = vadd.f32 %v160, %v174
    %v229 = vadd.f32 %v161, %v174
    %v230 = vadd.f32 %v162, %v174
    %v231 = vadd.f32 %v163, %v174
    %v232 = vadd.f32 %v164, %v174
    %v233 = vadd.f32 %v165, %v174
    %v234 = vadd.f32 %v166, %v174
    %v235 = vadd.f32 %v167, %v174
    %v236 = vadd.f32 %v168, %v174
    %v237 = vadd.f32 %v169, %v174
    %v238 = vadd.f32 %v170, %v174
    %v239 = vadd.f32 %v171, %v174
    %v240 = vmax.f32 %v176, 0.0
    %v241 = vmax.f32 %v177, 0.0
    %v242 = vmax.f32 %v178, 0.0
    %v243 = vmax.f32 %v179, 0.0
    %v244 = vmax.f32 %v180, 0.0
    %v245 = vmax.f32 %v181, 0.0
    %v246 = vmax.f32 %v182, 0.0
    %v247 = vmax.f32 %v183, 0.0
    %v248 = vmax.f32 %v184, 0.0
    %v249 = vmax.f32 %v185, 0.0
    %v250 = vmax.f32 %v186, 0.0
    %v251 = vmax.f32 %v187, 0.0
    %v252 = vmax.f32 %v188, 0.0
    %v253 = vmax.f32 %v189, 0.0
    %v254 = vmax.f32 %v190, 0.0
    %v255 = vmax.f32 %v191, 0.0
    %v256 = vmax.f32 %v192, 0.0
    %v257 = vmax.f32 %v193, 0.0
    %v258 = vmax.f32 %v194, 0.0
    %v259 = vmax.f32 %v195, 0.0
    %v260 = vmax.f32 %v196, 0.0
    %v261 = vmax.f32 %v197, 0.0
    %v262 = vmax.f32 %v198, 0.0
    %v263 = vmax.f32 %v199, 0.0
    %v264 = vmax.f32 %v200, 0.0
    %v265 = vmax.f32 %v201, 0.0
    %v266 = vmax.f32 %v202, 0.0
    %v267 = vmax.f32 %v203, 0.0
    %v268 = vmax.f32 %v204, 0.0
    %v269 = vmax.f32 %v205, 0.0
    %v270 = vmax.f32 %v206, 0.0
    %v271 = vmax.f32 %v207, 0.0
    %v272 = vmax.f32 %v208, 0.0
    %v273 = vmax.f32 %v209, 0.0
    %v274 = vmax.f32 %v210, 0.0
    %v275 = vmax.f32 %v211, 0.0
    %v276 = vmax.f32 %v212, 0.0
    %v277 = vmax.f32 %v213, 0.0
    %v278 = vmax.f32 %v214, 0.0
    %v279 = vmax.f32 %v215, 0.0
    %v280 = vmax.f32 %v216, 0.0
    %v281 = vmax.f32 %v217, 0.0
    %v282 = vmax.f32 %v218, 0.0
    %v283 = vmax.f32 %v219, 0.0
    %v284 = vmax.f32 %v220, 0.0
    %v285 = vmax.f32 %v221, 0.0
    %v286 = vmax.f32 %v222, 0.0
    %v287 = vmax.f32 %v223, 0.0
    %v288 = vmax.f32 %v224, 0.0
    %v289 = vmax.f32 %v225, 0.0
    %v290 = vmax.f32 %v226, 0.0
    %v291 = vmax.f32 %v227, 0.0
    %v292 = vmax.f32 %v228, 0.0
    %v293 = vmax.f32 %v229, 0.0
    %v294 = vmax.f32 %v230, 0.0
    %v295 = vmax.f32 %v231, 0.0
    %v296 = vmax.f32 %v232, 0.0
    %v297 = vmax.f32 %v233, 0.0
    %v298 = vmax.f32 %v234, 0.0
    %v299 = vmax.f32 %v235, 0.0
    %v300 = vmax.f32 %v236, 0.0
    %v301 = vmax.f32 %v237, 0.0
    %v302 = vmax.f32 %v238, 0.0
    %v303 = vmax.f32 %v239, 0.0
    %v304 = vpack.c.bf16 %v241, %v240
    %v305 = vpack.c.bf16 %v243, %v242
    %v306 = vpack.c.bf16 %v245, %v244
    %v307 = vpack.c.bf16 %v247, %v246
    %v308 = vpack.c.bf16 %v249, %v248
    %v309 = vpack.c.bf16 %v251, %v250
    %v310 = vpack.c.bf16 %v253, %v252
    %v311 = vpack.c.bf16 %v255, %v254
    %v312 = vpack.c.bf16 %v257, %v256
    %v313 = vpack.c.bf16 %v259, %v258
    %v314 = vpack.c.bf16 %v261, %v260
    %v315 = vpack.c.bf16 %v263, %v262
    %v316 = vpack.c.bf16 %v265, %v264
    %v317 = vpack.c.bf16 %v267, %v266
    %v318 = vpack.c.bf16 %v269, %v268
    %v319 = vpack.c.bf16 %v271, %v270
    %v320 = vpack.c.bf16 %v273, %v272
    %v321 = vpack.c.bf16 %v275, %v274
    %v322 = vpack.c.bf16 %v277, %v276
    %v323 = vpack.c.bf16 %v279, %v278
    %v324 = vpack.c.bf16 %v281, %v280
    %v325 = vpack.c.bf16 %v283, %v282
    %v326 = vpack.c.bf16 %v285, %v284
    %v327 = vpack.c.bf16 %v287, %v286
    %v328 = vpack.c.bf16 %v289, %v288
    %v329 = vpack.c.bf16 %v291, %v290
    %v330 = vpack.c.bf16 %v293, %v292
    %v331 = vpack.c.bf16 %v295, %v294
    %v332 = vpack.c.bf16 %v297, %v296
    %v333 = vpack.c.bf16 %v299, %v298
    %v334 = vpack.c.bf16 %v301, %v300
    %v335 = vpack.c.bf16 %v303, %v302
    %v336 = vld [vmem:[%s3] sm:$0xf]
    %v337 = vld [vmem:[%s3 + $0x4] sm:$0xf]
    %v338 = vld [vmem:[%s3 + $0x8] sm:$0xf]
    %v339 = vld [vmem:[%s3 + $0xc] sm:$0xf]
    %v340 = vld [vmem:[%s4] sm:$0x1]
    %v342 = vperm.slane %v340, 0
    %v348 = vunpack.c.l.b16 %v336
    %v349 = vunpack.c.l.b16 %v337
    %v350 = vunpack.c.l.b16 %v338
    %v351 = vunpack.c.l.b16 %v339
    %v352 = vpack.c.b16 %v349, %v348
    %v353 = vpack.c.b16 %v351, %v350
    %vm356 = vcmask 261120
    %v358 = vsel %vm356, %v304, 0
    %v361 = vsel %vm356, %v305, 0
    %v364 = vsel %vm356, %v306, 0
    %v367 = vsel %vm356, %v307, 0
    %v370 = vsel %vm356, %v308, 0
    %v373 = vsel %vm356, %v309, 0
    %v376 = vsel %vm356, %v310, 0
    %v379 = vsel %vm356, %v311, 0
    %v382 = vsel %vm356, %v312, 0
    %v385 = vsel %vm356, %v313, 0
    %v388 = vsel %vm356, %v314, 0
    %v391 = vsel %vm356, %v315, 0
    %v394 = vsel %vm356, %v316, 0
    %v397 = vsel %vm356, %v317, 0
    %v400 = vsel %vm356, %v318, 0
    %v403 = vsel %vm356, %v319, 0
    %v406 = vsel %vm356, %v320, 0
    %v409 = vsel %vm356, %v321, 0
    %v412 = vsel %vm356, %v322, 0
    %v415 = vsel %vm356, %v323, 0
    %v418 = vsel %vm356, %v324, 0
    %v421 = vsel %vm356, %v325, 0
    %v424 = vsel %vm356, %v326, 0
    %v427 = vsel %vm356, %v327, 0
    %v430 = vsel %vm356, %v328, 0
    %v433 = vsel %vm356, %v329, 0
    %v436 = vsel %vm356, %v330, 0
    %v439 = vsel %vm356, %v331, 0
    %v442 = vsel %vm356, %v332, 0
    %v445 = vsel %vm356, %v333, 0
    %v448 = vsel %vm356, %v334, 0
    %v451 = vsel %vm356, %v335, 0
    %453 = vmatpush.bf16.msra.mxu0 0
    %454 = vmatpush.bf16.msra.mxu0 0
    %455 = vmatpush.bf16.msra.mxu0 0
    %456 = vmatpush.bf16.msra.mxu0 0
    %457 = vmatpush.bf16.msra.mxu0 0
    %458 = vmatpush.bf16.msra.mxu0 0
    %459 = vmatpush.bf16.msra.mxu0 %v353
    %460 = vmatpush.bf16.msra.mxu0 %v352
    %461 = vmatmul.bf16.gmra.mxu0 %v358
    %v462 = vpop.f32.mrf.mxu0
    %v463 = vadd.f32 %v342, %v462
    %v464 = vpop.f32.mrf.mxu0
    %v465 = vadd.f32 %v342, %v464
    %466 = vmatmul.bf16.gmra.mxu0 %v361
    %v467 = vpop.f32.mrf.mxu0
    %v468 = vadd.f32 %v342, %v467
    %v469 = vpop.f32.mrf.mxu0
    %v470 = vadd.f32 %v342, %v469
    %471 = vmatmul.bf16.gmra.mxu0 %v364
    %v472 = vpop.f32.mrf.mxu0
    %v473 = vadd.f32 %v342, %v472
    %v474 = vpop.f32.mrf.mxu0
    %v475 = vadd.f32 %v342, %v474
    %476 = vmatmul.bf16.gmra.mxu0 %v367
    %v477 = vpop.f32.mrf.mxu0
    %v478 = vadd.f32 %v342, %v477
    %v479 = vpop.f32.mrf.mxu0
    %v480 = vadd.f32 %v342, %v479
    %481 = vmatmul.bf16.gmra.mxu0 %v370
    %v482 = vpop.f32.mrf.mxu0
    %v483 = vadd.f32 %v342, %v482
    %v484 = vpop.f32.mrf.mxu0
    %v485 = vadd.f32 %v342, %v484
    %486 = vmatmul.bf16.gmra.mxu0 %v373
    %v487 = vpop.f32.mrf.mxu0
    %v488 = vadd.f32 %v342, %v487
    %v489 = vpop.f32.mrf.mxu0
    %v490 = vadd.f32 %v342, %v489
    %491 = vmatmul.bf16.gmra.mxu0 %v376
    %v492 = vpop.f32.mrf.mxu0
    %v493 = vadd.f32 %v342, %v492
    %v494 = vpop.f32.mrf.mxu0
    %v495 = vadd.f32 %v342, %v494
    %496 = vmatmul.bf16.gmra.mxu0 %v379
    %v497 = vpop.f32.mrf.mxu0
    %v498 = vadd.f32 %v342, %v497
    %v499 = vpop.f32.mrf.mxu0
    %v500 = vadd.f32 %v342, %v499
    %501 = vmatmul.bf16.gmra.mxu0 %v382
    %v502 = vpop.f32.mrf.mxu0
    %v503 = vadd.f32 %v342, %v502
    %v504 = vpop.f32.mrf.mxu0
    %v505 = vadd.f32 %v342, %v504
    %506 = vmatmul.bf16.gmra.mxu0 %v385
    %v507 = vpop.f32.mrf.mxu0
    %v508 = vadd.f32 %v342, %v507
    %v509 = vpop.f32.mrf.mxu0
    %v510 = vadd.f32 %v342, %v509
    %511 = vmatmul.bf16.gmra.mxu0 %v388
    %v512 = vpop.f32.mrf.mxu0
    %v513 = vadd.f32 %v342, %v512
    %v514 = vpop.f32.mrf.mxu0
    %v515 = vadd.f32 %v342, %v514
    %516 = vmatmul.bf16.gmra.mxu0 %v391
    %v517 = vpop.f32.mrf.mxu0
    %v518 = vadd.f32 %v342, %v517
    %v519 = vpop.f32.mrf.mxu0
    %v520 = vadd.f32 %v342, %v519
    %521 = vmatmul.bf16.gmra.mxu0 %v394
    %v522 = vpop.f32.mrf.mxu0
    %v523 = vadd.f32 %v342, %v522
    %v524 = vpop.f32.mrf.mxu0
    %v525 = vadd.f32 %v342, %v524
    %526 = vmatmul.bf16.gmra.mxu0 %v397
    %v527 = vpop.f32.mrf.mxu0
    %v528 = vadd.f32 %v342, %v527
    %v529 = vpop.f32.mrf.mxu0
    %v530 = vadd.f32 %v342, %v529
    %531 = vmatmul.bf16.gmra.mxu0 %v400
    %v532 = vpop.f32.mrf.mxu0
    %v533 = vadd.f32 %v342, %v532
    %v534 = vpop.f32.mrf.mxu0
    %v535 = vadd.f32 %v342, %v534
    %536 = vmatmul.bf16.gmra.mxu0 %v403
    %v537 = vpop.f32.mrf.mxu0
    %v538 = vadd.f32 %v342, %v537
    %v539 = vpop.f32.mrf.mxu0
    %v540 = vadd.f32 %v342, %v539
    %541 = vmatmul.bf16.gmra.mxu0 %v406
    %v542 = vpop.f32.mrf.mxu0
    %v543 = vadd.f32 %v342, %v542
    %v544 = vpop.f32.mrf.mxu0
    %v545 = vadd.f32 %v342, %v544
    %546 = vmatmul.bf16.gmra.mxu0 %v409
    %v547 = vpop.f32.mrf.mxu0
    %v548 = vadd.f32 %v342, %v547
    %v549 = vpop.f32.mrf.mxu0
    %v550 = vadd.f32 %v342, %v549
    %551 = vmatmul.bf16.gmra.mxu0 %v412
    %v552 = vpop.f32.mrf.mxu0
    %v553 = vadd.f32 %v342, %v552
    %v554 = vpop.f32.mrf.mxu0
    %v555 = vadd.f32 %v342, %v554
    %556 = vmatmul.bf16.gmra.mxu0 %v415
    %v557 = vpop.f32.mrf.mxu0
    %v558 = vadd.f32 %v342, %v557
    %v559 = vpop.f32.mrf.mxu0
    %v560 = vadd.f32 %v342, %v559
    %561 = vmatmul.bf16.gmra.mxu0 %v418
    %v562 = vpop.f32.mrf.mxu0
    %v563 = vadd.f32 %v342, %v562
    %v564 = vpop.f32.mrf.mxu0
    %v565 = vadd.f32 %v342, %v564
    %566 = vmatmul.bf16.gmra.mxu0 %v421
    %v567 = vpop.f32.mrf.mxu0
    %v568 = vadd.f32 %v342, %v567
    %v569 = vpop.f32.mrf.mxu0
    %v570 = vadd.f32 %v342, %v569
    %571 = vmatmul.bf16.gmra.mxu0 %v424
    %v572 = vpop.f32.mrf.mxu0
    %v573 = vadd.f32 %v342, %v572
    %v574 = vpop.f32.mrf.mxu0
    %v575 = vadd.f32 %v342, %v574
    %576 = vmatmul.bf16.gmra.mxu0 %v427
    %v577 = vpop.f32.mrf.mxu0
    %v578 = vadd.f32 %v342, %v577
    %v579 = vpop.f32.mrf.mxu0
    %v580 = vadd.f32 %v342, %v579
    %581 = vmatmul.bf16.gmra.mxu0 %v430
    %v582 = vpop.f32.mrf.mxu0
    %v583 = vadd.f32 %v342, %v582
    %v584 = vpop.f32.mrf.mxu0
    %v585 = vadd.f32 %v342, %v584
    %586 = vmatmul.bf16.gmra.mxu0 %v433
    %v587 = vpop.f32.mrf.mxu0
    %v588 = vadd.f32 %v342, %v587
    %v589 = vpop.f32.mrf.mxu0
    %v590 = vadd.f32 %v342, %v589
    %591 = vmatmul.bf16.gmra.mxu0 %v436
    %v592 = vpop.f32.mrf.mxu0
    %v593 = vadd.f32 %v342, %v592
    %v594 = vpop.f32.mrf.mxu0
    %v595 = vadd.f32 %v342, %v594
    %596 = vmatmul.bf16.gmra.mxu0 %v439
    %v597 = vpop.f32.mrf.mxu0
    %v598 = vadd.f32 %v342, %v597
    %v599 = vpop.f32.mrf.mxu0
    %v600 = vadd.f32 %v342, %v599
    %601 = vmatmul.bf16.gmra.mxu0 %v442
    %v602 = vpop.f32.mrf.mxu0
    %v603 = vadd.f32 %v342, %v602
    %v604 = vpop.f32.mrf.mxu0
    %v605 = vadd.f32 %v342, %v604
    %606 = vmatmul.bf16.gmra.mxu0 %v445
    %v607 = vpop.f32.mrf.mxu0
    %v608 = vadd.f32 %v342, %v607
    %v609 = vpop.f32.mrf.mxu0
    %v610 = vadd.f32 %v342, %v609
    %611 = vmatmul.bf16.gmra.mxu0 %v448
    %v612 = vpop.f32.mrf.mxu0
    %v613 = vadd.f32 %v342, %v612
    %v614 = vpop.f32.mrf.mxu0
    %v615 = vadd.f32 %v342, %v614
    %616 = vmatmul.bf16.gmra.mxu0 %v451
    %v617 = vpop.f32.mrf.mxu0
    %v618 = vadd.f32 %v342, %v617
    %v619 = vpop.f32.mrf.mxu0
    %v620 = vadd.f32 %v342, %v619
    %621 = vdwg.mxu0
    %vm622 = vcmask 392192
    %623 = vst.msk [vmem:[%s5] sm:$0xff] %vm622, %v463
    %624 = vst.msk [vmem:[%s5 + $0x8] sm:$0xff] %vm622, %v465
    %625 = vst.msk [vmem:[%s5 + $0x10] sm:$0xff] %vm622, %v468
    %626 = vst.msk [vmem:[%s5 + $0x18] sm:$0xff] %vm622, %v470
    %627 = vst.msk [vmem:[%s5 + $0x20] sm:$0xff] %vm622, %v473
    %628 = vst.msk [vmem:[%s5 + $0x28] sm:$0xff] %vm622, %v475
    %629 = vst.msk [vmem:[%s5 + $0x30] sm:$0xff] %vm622, %v478
    %630 = vst.msk [vmem:[%s5 + $0x38] sm:$0xff] %vm622, %v480
    %631 = vst.msk [vmem:[%s5 + $0x40] sm:$0xff] %vm622, %v483
    %632 = vst.msk [vmem:[%s5 + $0x48] sm:$0xff] %vm622, %v485
    %633 = vst.msk [vmem:[%s5 + $0x50] sm:$0xff] %vm622, %v488
    %634 = vst.msk [vmem:[%s5 + $0x58] sm:$0xff] %vm622, %v490
    %635 = vst.msk [vmem:[%s5 + $0x60] sm:$0xff] %vm622, %v493
    %636 = vst.msk [vmem:[%s5 + $0x68] sm:$0xff] %vm622, %v495
    %637 = vst.msk [vmem:[%s5 + $0x70] sm:$0xff] %vm622, %v498
    %638 = vst.msk [vmem:[%s5 + $0x78] sm:$0xff] %vm622, %v500
    %639 = vst.msk [vmem:[%s5 + $0x80] sm:$0xff] %vm622, %v503
    %640 = vst.msk [vmem:[%s5 + $0x88] sm:$0xff] %vm622, %v505
    %641 = vst.msk [vmem:[%s5 + $0x90] sm:$0xff] %vm622, %v508
    %642 = vst.msk [vmem:[%s5 + $0x98] sm:$0xff] %vm622, %v510
    %643 = vst.msk [vmem:[%s5 + $0xa0] sm:$0xff] %vm622, %v513
    %644 = vst.msk [vmem:[%s5 + $0xa8] sm:$0xff] %vm622, %v515
    %645 = vst.msk [vmem:[%s5 + $0xb0] sm:$0xff] %vm622, %v518
    %646 = vst.msk [vmem:[%s5 + $0xb8] sm:$0xff] %vm622, %v520
    %647 = vst.msk [vmem:[%s5 + $0xc0] sm:$0xff] %vm622, %v523
    %648 = vst.msk [vmem:[%s5 + $0xc8] sm:$0xff] %vm622, %v525
    %649 = vst.msk [vmem:[%s5 + $0xd0] sm:$0xff] %vm622, %v528
    %650 = vst.msk [vmem:[%s5 + $0xd8] sm:$0xff] %vm622, %v530
    %651 = vst.msk [vmem:[%s5 + $0xe0] sm:$0xff] %vm622, %v533
    %652 = vst.msk [vmem:[%s5 + $0xe8] sm:$0xff] %vm622, %v535
    %653 = vst.msk [vmem:[%s5 + $0xf0] sm:$0xff] %vm622, %v538
    %654 = vst.msk [vmem:[%s5 + $0xf8] sm:$0xff] %vm622, %v540
    %655 = vst.msk [vmem:[%s5 + $0x100] sm:$0xff] %vm622, %v543
    %656 = vst.msk [vmem:[%s5 + $0x108] sm:$0xff] %vm622, %v545
    %657 = vst.msk [vmem:[%s5 + $0x110] sm:$0xff] %vm622, %v548
    %658 = vst.msk [vmem:[%s5 + $0x118] sm:$0xff] %vm622, %v550
    %659 = vst.msk [vmem:[%s5 + $0x120] sm:$0xff] %vm622, %v553
    %660 = vst.msk [vmem:[%s5 + $0x128] sm:$0xff] %vm622, %v555
    %661 = vst.msk [vmem:[%s5 + $0x130] sm:$0xff] %vm622, %v558
    %662 = vst.msk [vmem:[%s5 + $0x138] sm:$0xff] %vm622, %v560
    %663 = vst.msk [vmem:[%s5 + $0x140] sm:$0xff] %vm622, %v563
    %664 = vst.msk [vmem:[%s5 + $0x148] sm:$0xff] %vm622, %v565
    %665 = vst.msk [vmem:[%s5 + $0x150] sm:$0xff] %vm622, %v568
    %666 = vst.msk [vmem:[%s5 + $0x158] sm:$0xff] %vm622, %v570
    %667 = vst.msk [vmem:[%s5 + $0x160] sm:$0xff] %vm622, %v573
    %668 = vst.msk [vmem:[%s5 + $0x168] sm:$0xff] %vm622, %v575
    %669 = vst.msk [vmem:[%s5 + $0x170] sm:$0xff] %vm622, %v578
    %670 = vst.msk [vmem:[%s5 + $0x178] sm:$0xff] %vm622, %v580
    %671 = vst.msk [vmem:[%s5 + $0x180] sm:$0xff] %vm622, %v583
    %672 = vst.msk [vmem:[%s5 + $0x188] sm:$0xff] %vm622, %v585
    %673 = vst.msk [vmem:[%s5 + $0x190] sm:$0xff] %vm622, %v588
    %674 = vst.msk [vmem:[%s5 + $0x198] sm:$0xff] %vm622, %v590
    %675 = vst.msk [vmem:[%s5 + $0x1a0] sm:$0xff] %vm622, %v593
    %676 = vst.msk [vmem:[%s5 + $0x1a8] sm:$0xff] %vm622, %v595
    %677 = vst.msk [vmem:[%s5 + $0x1b0] sm:$0xff] %vm622, %v598
    %678 = vst.msk [vmem:[%s5 + $0x1b8] sm:$0xff] %vm622, %v600
    %679 = vst.msk [vmem:[%s5 + $0x1c0] sm:$0xff] %vm622, %v603
    %680 = vst.msk [vmem:[%s5 + $0x1c8] sm:$0xff] %vm622, %v605
    %681 = vst.msk [vmem:[%s5 + $0x1d0] sm:$0xff] %vm622, %v608
    %682 = vst.msk [vmem:[%s5 + $0x1d8] sm:$0xff] %vm622, %v610
    %683 = vst.msk [vmem:[%s5 + $0x1e0] sm:$0xff] %vm622, %v613
    %684 = vst.msk [vmem:[%s5 + $0x1e8] sm:$0xff] %vm622, %v615
    %685 = vst.msk [vmem:[%s5 + $0x1f0] sm:$0xff] %vm622, %v618
    %686 = vst.msk [vmem:[%s5 + $0x1f8] sm:$0xff] %vm622, %v620
    %v687 = vsel %vm622, %v463, 0.0
    %v688 = vsel %vm622, %v465, 0.0
    %v689 = vadd.f32 %v687, %v688
    %v690 = vsel %vm622, %v468, 0.0
    %v691 = vadd.f32 %v689, %v690
    %v692 = vsel %vm622, %v470, 0.0
    %v693 = vadd.f32 %v691, %v692
    %v694 = vsel %vm622, %v473, 0.0
    %v695 = vadd.f32 %v693, %v694
    %v696 = vsel %vm622, %v475, 0.0
    %v697 = vadd.f32 %v695, %v696
    %v698 = vsel %vm622, %v478, 0.0
    %v699 = vadd.f32 %v697, %v698
    %v700 = vsel %vm622, %v480, 0.0
    %v701 = vadd.f32 %v699, %v700
    %v702 = vsel %vm622, %v483, 0.0
    %v703 = vadd.f32 %v701, %v702
    %v704 = vsel %vm622, %v485, 0.0
    %v705 = vadd.f32 %v703, %v704
    %v706 = vsel %vm622, %v488, 0.0
    %v707 = vadd.f32 %v705, %v706
    %v708 = vsel %vm622, %v490, 0.0
    %v709 = vadd.f32 %v707, %v708
    %v710 = vsel %vm622, %v493, 0.0
    %v711 = vadd.f32 %v709, %v710
    %v712 = vsel %vm622, %v495, 0.0
    %v713 = vadd.f32 %v711, %v712
    %v714 = vsel %vm622, %v498, 0.0
    %v715 = vadd.f32 %v713, %v714
    %v716 = vsel %vm622, %v500, 0.0
    %v717 = vadd.f32 %v715, %v716
    %v718 = vsel %vm622, %v503, 0.0
    %v719 = vadd.f32 %v717, %v718
    %v720 = vsel %vm622, %v505, 0.0
    %v721 = vadd.f32 %v719, %v720
    %v722 = vsel %vm622, %v508, 0.0
    %v723 = vadd.f32 %v721, %v722
    %v724 = vsel %vm622, %v510, 0.0
    %v725 = vadd.f32 %v723, %v724
    %v726 = vsel %vm622, %v513, 0.0
    %v727 = vadd.f32 %v725, %v726
    %v728 = vsel %vm622, %v515, 0.0
    %v729 = vadd.f32 %v727, %v728
    %v730 = vsel %vm622, %v518, 0.0
    %v731 = vadd.f32 %v729, %v730
    %v732 = vsel %vm622, %v520, 0.0
    %v733 = vadd.f32 %v731, %v732
    %v734 = vsel %vm622, %v523, 0.0
    %v735 = vadd.f32 %v733, %v734
    %v736 = vsel %vm622, %v525, 0.0
    %v737 = vadd.f32 %v735, %v736
    %v738 = vsel %vm622, %v528, 0.0
    %v739 = vadd.f32 %v737, %v738
    %v740 = vsel %vm622, %v530, 0.0
    %v741 = vadd.f32 %v739, %v740
    %v742 = vsel %vm622, %v533, 0.0
    %v743 = vadd.f32 %v741, %v742
    %v744 = vsel %vm622, %v535, 0.0
    %v745 = vadd.f32 %v743, %v744
    %v746 = vsel %vm622, %v538, 0.0
    %v747 = vadd.f32 %v745, %v746
    %v748 = vsel %vm622, %v540, 0.0
    %v749 = vadd.f32 %v747, %v748
    %v750 = vsel %vm622, %v543, 0.0
    %v751 = vadd.f32 %v749, %v750
    %v752 = vsel %vm622, %v545, 0.0
    %v753 = vadd.f32 %v751, %v752
    %v754 = vsel %vm622, %v548, 0.0
    %v755 = vadd.f32 %v753, %v754
    %v756 = vsel %vm622, %v550, 0.0
    %v757 = vadd.f32 %v755, %v756
    %v758 = vsel %vm622, %v553, 0.0
    %v759 = vadd.f32 %v757, %v758
    %v760 = vsel %vm622, %v555, 0.0
    %v761 = vadd.f32 %v759, %v760
    %v762 = vsel %vm622, %v558, 0.0
    %v763 = vadd.f32 %v761, %v762
    %v764 = vsel %vm622, %v560, 0.0
    %v765 = vadd.f32 %v763, %v764
    %v766 = vsel %vm622, %v563, 0.0
    %v767 = vadd.f32 %v765, %v766
    %v768 = vsel %vm622, %v565, 0.0
    %v769 = vadd.f32 %v767, %v768
    %v770 = vsel %vm622, %v568, 0.0
    %v771 = vadd.f32 %v769, %v770
    %v772 = vsel %vm622, %v570, 0.0
    %v773 = vadd.f32 %v771, %v772
    %v774 = vsel %vm622, %v573, 0.0
    %v775 = vadd.f32 %v773, %v774
    %v776 = vsel %vm622, %v575, 0.0
    %v777 = vadd.f32 %v775, %v776
    %v778 = vsel %vm622, %v578, 0.0
    %v779 = vadd.f32 %v777, %v778
    %v780 = vsel %vm622, %v580, 0.0
    %v781 = vadd.f32 %v779, %v780
    %v782 = vsel %vm622, %v583, 0.0
    %v783 = vadd.f32 %v781, %v782
    %v784 = vsel %vm622, %v585, 0.0
    %v785 = vadd.f32 %v783, %v784
    %v786 = vsel %vm622, %v588, 0.0
    %v787 = vadd.f32 %v785, %v786
    %v788 = vsel %vm622, %v590, 0.0
    %v789 = vadd.f32 %v787, %v788
    %v790 = vsel %vm622, %v593, 0.0
    %v791 = vadd.f32 %v789, %v790
    %v792 = vsel %vm622, %v595, 0.0
    %v793 = vadd.f32 %v791, %v792
    %v794 = vsel %vm622, %v598, 0.0
    %v795 = vadd.f32 %v793, %v794
    %v796 = vsel %vm622, %v600, 0.0
    %v797 = vadd.f32 %v795, %v796
    %v798 = vsel %vm622, %v603, 0.0
    %v799 = vadd.f32 %v797, %v798
    %v800 = vsel %vm622, %v605, 0.0
    %v801 = vadd.f32 %v799, %v800
    %v802 = vsel %vm622, %v608, 0.0
    %v803 = vadd.f32 %v801, %v802
    %v804 = vsel %vm622, %v610, 0.0
    %v805 = vadd.f32 %v803, %v804
    %v806 = vsel %vm622, %v613, 0.0
    %v807 = vadd.f32 %v805, %v806
    %v808 = vsel %vm622, %v615, 0.0
    %v809 = vadd.f32 %v807, %v808
    %v810 = vsel %vm622, %v618, 0.0
    %v811 = vadd.f32 %v809, %v810
    %v812 = vsel %vm622, %v620, 0.0
    %v813 = vadd.f32 %v811, %v812
    %v814 = vrot.slane %v813, 4
    %v815 = vadd.f32 %v813, %v814
    %v816 = vrot.slane %v815, 2
    %v817 = vadd.f32 %v815, %v816
    %v818 = vrot.slane %v817, 1
    %v819 = vadd.f32 %v817, %v818
    %v820 = vmul.f32 %v463, %v463
    %v821 = vmul.f32 %v465, %v465
    %v822 = vmul.f32 %v468, %v468
    %v823 = vmul.f32 %v470, %v470
    %v824 = vmul.f32 %v473, %v473
    %v825 = vmul.f32 %v475, %v475
    %v826 = vmul.f32 %v478, %v478
    %v827 = vmul.f32 %v480, %v480
    %v828 = vmul.f32 %v483, %v483
    %v829 = vmul.f32 %v485, %v485
    %v830 = vmul.f32 %v488, %v488
    %v831 = vmul.f32 %v490, %v490
    %v832 = vmul.f32 %v493, %v493
    %v833 = vmul.f32 %v495, %v495
    %v834 = vmul.f32 %v498, %v498
    %v835 = vmul.f32 %v500, %v500
    %v836 = vmul.f32 %v503, %v503
    %v837 = vmul.f32 %v505, %v505
    %v838 = vmul.f32 %v508, %v508
    %v839 = vmul.f32 %v510, %v510
    %v840 = vmul.f32 %v513, %v513
    %v841 = vmul.f32 %v515, %v515
    %v842 = vmul.f32 %v518, %v518
    %v843 = vmul.f32 %v520, %v520
    %v844 = vmul.f32 %v523, %v523
    %v845 = vmul.f32 %v525, %v525
    %v846 = vmul.f32 %v528, %v528
    %v847 = vmul.f32 %v530, %v530
    %v848 = vmul.f32 %v533, %v533
    %v849 = vmul.f32 %v535, %v535
    %v850 = vmul.f32 %v538, %v538
    %v851 = vmul.f32 %v540, %v540
    %v852 = vmul.f32 %v543, %v543
    %v853 = vmul.f32 %v545, %v545
    %v854 = vmul.f32 %v548, %v548
    %v855 = vmul.f32 %v550, %v550
    %v856 = vmul.f32 %v553, %v553
    %v857 = vmul.f32 %v555, %v555
    %v858 = vmul.f32 %v558, %v558
    %v859 = vmul.f32 %v560, %v560
    %v860 = vmul.f32 %v563, %v563
    %v861 = vmul.f32 %v565, %v565
    %v862 = vmul.f32 %v568, %v568
    %v863 = vmul.f32 %v570, %v570
    %v864 = vmul.f32 %v573, %v573
    %v865 = vmul.f32 %v575, %v575
    %v866 = vmul.f32 %v578, %v578
    %v867 = vmul.f32 %v580, %v580
    %v868 = vmul.f32 %v583, %v583
    %v869 = vmul.f32 %v585, %v585
    %v870 = vmul.f32 %v588, %v588
    %v871 = vmul.f32 %v590, %v590
    %v872 = vmul.f32 %v593, %v593
    %v873 = vmul.f32 %v595, %v595
    %v874 = vmul.f32 %v598, %v598
    %v875 = vmul.f32 %v600, %v600
    %v876 = vmul.f32 %v603, %v603
    %v877 = vmul.f32 %v605, %v605
    %v878 = vmul.f32 %v608, %v608
    %v879 = vmul.f32 %v610, %v610
    %v880 = vmul.f32 %v613, %v613
    %v881 = vmul.f32 %v615, %v615
    %v882 = vmul.f32 %v618, %v618
    %v883 = vmul.f32 %v620, %v620
    %v884 = vsel %vm622, %v820, 0.0
    %v885 = vsel %vm622, %v821, 0.0
    %v886 = vadd.f32 %v884, %v885
    %v887 = vsel %vm622, %v822, 0.0
    %v888 = vadd.f32 %v886, %v887
    %v889 = vsel %vm622, %v823, 0.0
    %v890 = vadd.f32 %v888, %v889
    %v891 = vsel %vm622, %v824, 0.0
    %v892 = vadd.f32 %v890, %v891
    %v893 = vsel %vm622, %v825, 0.0
    %v894 = vadd.f32 %v892, %v893
    %v895 = vsel %vm622, %v826, 0.0
    %v896 = vadd.f32 %v894, %v895
    %v897 = vsel %vm622, %v827, 0.0
    %v898 = vadd.f32 %v896, %v897
    %v899 = vsel %vm622, %v828, 0.0
    %v900 = vadd.f32 %v898, %v899
    %v901 = vsel %vm622, %v829, 0.0
    %v902 = vadd.f32 %v900, %v901
    %v903 = vsel %vm622, %v830, 0.0
    %v904 = vadd.f32 %v902, %v903
    %v905 = vsel %vm622, %v831, 0.0
    %v906 = vadd.f32 %v904, %v905
    %v907 = vsel %vm622, %v832, 0.0
    %v908 = vadd.f32 %v906, %v907
    %v909 = vsel %vm622, %v833, 0.0
    %v910 = vadd.f32 %v908, %v909
    %v911 = vsel %vm622, %v834, 0.0
    %v912 = vadd.f32 %v910, %v911
    %v913 = vsel %vm622, %v835, 0.0
    %v914 = vadd.f32 %v912, %v913
    %v915 = vsel %vm622, %v836, 0.0
    %v916 = vadd.f32 %v914, %v915
    %v917 = vsel %vm622, %v837, 0.0
    %v918 = vadd.f32 %v916, %v917
    %v919 = vsel %vm622, %v838, 0.0
    %v920 = vadd.f32 %v918, %v919
    %v921 = vsel %vm622, %v839, 0.0
    %v922 = vadd.f32 %v920, %v921
    %v923 = vsel %vm622, %v840, 0.0
    %v924 = vadd.f32 %v922, %v923
    %v925 = vsel %vm622, %v841, 0.0
    %v926 = vadd.f32 %v924, %v925
    %v927 = vsel %vm622, %v842, 0.0
    %v928 = vadd.f32 %v926, %v927
    %v929 = vsel %vm622, %v843, 0.0
    %v930 = vadd.f32 %v928, %v929
    %v931 = vsel %vm622, %v844, 0.0
    %v932 = vadd.f32 %v930, %v931
    %v933 = vsel %vm622, %v845, 0.0
    %v934 = vadd.f32 %v932, %v933
    %v935 = vsel %vm622, %v846, 0.0
    %v936 = vadd.f32 %v934, %v935
    %v937 = vsel %vm622, %v847, 0.0
    %v938 = vadd.f32 %v936, %v937
    %v939 = vsel %vm622, %v848, 0.0
    %v940 = vadd.f32 %v938, %v939
    %v941 = vsel %vm622, %v849, 0.0
    %v942 = vadd.f32 %v940, %v941
    %v943 = vsel %vm622, %v850, 0.0
    %v944 = vadd.f32 %v942, %v943
    %v945 = vsel %vm622, %v851, 0.0
    %v946 = vadd.f32 %v944, %v945
    %v947 = vsel %vm622, %v852, 0.0
    %v948 = vadd.f32 %v946, %v947
    %v949 = vsel %vm622, %v853, 0.0
    %v950 = vadd.f32 %v948, %v949
    %v951 = vsel %vm622, %v854, 0.0
    %v952 = vadd.f32 %v950, %v951
    %v953 = vsel %vm622, %v855, 0.0
    %v954 = vadd.f32 %v952, %v953
    %v955 = vsel %vm622, %v856, 0.0
    %v956 = vadd.f32 %v954, %v955
    %v957 = vsel %vm622, %v857, 0.0
    %v958 = vadd.f32 %v956, %v957
    %v959 = vsel %vm622, %v858, 0.0
    %v960 = vadd.f32 %v958, %v959
    %v961 = vsel %vm622, %v859, 0.0
    %v962 = vadd.f32 %v960, %v961
    %v963 = vsel %vm622, %v860, 0.0
    %v964 = vadd.f32 %v962, %v963
    %v965 = vsel %vm622, %v861, 0.0
    %v966 = vadd.f32 %v964, %v965
    %v967 = vsel %vm622, %v862, 0.0
    %v968 = vadd.f32 %v966, %v967
    %v969 = vsel %vm622, %v863, 0.0
    %v970 = vadd.f32 %v968, %v969
    %v971 = vsel %vm622, %v864, 0.0
    %v972 = vadd.f32 %v970, %v971
    %v973 = vsel %vm622, %v865, 0.0
    %v974 = vadd.f32 %v972, %v973
    %v975 = vsel %vm622, %v866, 0.0
    %v976 = vadd.f32 %v974, %v975
    %v977 = vsel %vm622, %v867, 0.0
    %v978 = vadd.f32 %v976, %v977
    %v979 = vsel %vm622, %v868, 0.0
    %v980 = vadd.f32 %v978, %v979
    %v981 = vsel %vm622, %v869, 0.0
    %v982 = vadd.f32 %v980, %v981
    %v983 = vsel %vm622, %v870, 0.0
    %v984 = vadd.f32 %v982, %v983
    %v985 = vsel %vm622, %v871, 0.0
    %v986 = vadd.f32 %v984, %v985
    %v987 = vsel %vm622, %v872, 0.0
    %v988 = vadd.f32 %v986, %v987
    %v989 = vsel %vm622, %v873, 0.0
    %v990 = vadd.f32 %v988, %v989
    %v991 = vsel %vm622, %v874, 0.0
    %v992 = vadd.f32 %v990, %v991
    %v993 = vsel %vm622, %v875, 0.0
    %v994 = vadd.f32 %v992, %v993
    %v995 = vsel %vm622, %v876, 0.0
    %v996 = vadd.f32 %v994, %v995
    %v997 = vsel %vm622, %v877, 0.0
    %v998 = vadd.f32 %v996, %v997
    %v999 = vsel %vm622, %v878, 0.0
    %v1000 = vadd.f32 %v998, %v999
    %v1001 = vsel %vm622, %v879, 0.0
    %v1002 = vadd.f32 %v1000, %v1001
    %v1003 = vsel %vm622, %v880, 0.0
    %v1004 = vadd.f32 %v1002, %v1003
    %v1005 = vsel %vm622, %v881, 0.0
    %v1006 = vadd.f32 %v1004, %v1005
    %v1007 = vsel %vm622, %v882, 0.0
    %v1008 = vadd.f32 %v1006, %v1007
    %v1009 = vsel %vm622, %v883, 0.0
    %v1010 = vadd.f32 %v1008, %v1009
    %v1011 = vrot.slane %v1010, 4
    %v1012 = vadd.f32 %v1010, %v1011
    %v1013 = vrot.slane %v1012, 2
    %v1014 = vadd.f32 %v1012, %v1013
    %v1015 = vrot.slane %v1014, 1
    %v1016 = vadd.f32 %v1014, %v1015
    %vm1017 = vcmask 385024
    %1018 = vst.msk [vmem:[%s6] sm:$0x1] %vm1017, %v819
    %1019 = vst.msk [vmem:[%s7] sm:$0x1] %vm1017, %v1016
    // Predicated region
    $region26: #{pyraconvblock_forward.9} parent=1 // pred_check
      _
    $region27: #{pyraconvblock_forward.9} parent=1 // pred_check_branch
      %1021 = sbr.rel (0) target = $region29
    $region28: #{pyraconvblock_forward.9} parent=1 // pred_region
      _
    $region29: #{pyraconvblock_forward.9} parent=1 // pred_fallthru
      _
    // Predicated region
    $region30: #{pyraconvblock_forward.9} parent=1 // pred_check
      _
    $region31: #{pyraconvblock_forward.9} parent=1 // pred_check_branch
      %1023 = sbr.rel (0) target = $region33
    $region32: #{pyraconvblock_forward.9} parent=1 // pred_region
      _
    $region33: #{pyraconvblock_forward.9} parent=1 // pred_fallthru
      _
    // Predicated region
    $region34: #{pyraconvblock_forward.9} parent=1 // pred_check
      _
    $region35: #{pyraconvblock_forward.9} parent=1 // pred_check_branch
      %1025 = sbr.rel (0) target = $region37
    $region36: #{pyraconvblock_forward.9} parent=1 // pred_region
      _
    $region37: #{pyraconvblock_forward.9} parent=1 // pred_fallthru
      _
    // Predicated region
    $region38: #{pyraconvblock_forward.9} parent=1 // pred_check
      _
    $region39: #{pyraconvblock_forward.9} parent=1 // pred_check_branch
      %1027 = sbr.rel (0) target = $region41
    $region40: #{pyraconvblock_forward.9} parent=1 // pred_region
      _
    $region41: #{pyraconvblock_forward.9} parent=1 // pred_fallthru
      _
    // Predicated region
    $region42: #{pyraconvblock_forward.9} parent=1 // pred_check
      _
    $region43: #{pyraconvblock_forward.9} parent=1 // pred_check_branch
      %1029 = sbr.rel (0) target = $region45
    $region44: #{pyraconvblock_forward.9} parent=1 // pred_region
      _
    $region45: #{pyraconvblock_forward.9} parent=1 // pred_fallthru
      _
    // Predicated region
    $region46: #{pyraconvblock_forward.9} parent=1 // pred_check
      _
    $region47: #{pyraconvblock_forward.9} parent=1 // pred_check_branch
      %1031 = sbr.rel (0) target = $region49
    $region48: #{pyraconvblock_forward.9} parent=1 // pred_region
      _
    $region49: #{pyraconvblock_forward.9} parent=1 // pred_fallthru
      _
    %1032 = vsyncpa [#allocation3], 1

// kernel: pyraconvblock_forward.12
$region0: #{pyraconvblock_forward.12}
  #allocation0 [shape = 'u32[]', space=smem, size = 0x4, offset = 0x4, fixed_abs, tag = 'smem constant byte address 0x4 - core index']
  #allocation1 [shape = 'u32[72,128]{1,0:T(1,128)}', space=vmem, size = 0x9000, scoped, tag = 'internal scratch']
  %s0 = inlined_call_operand.vmem [shape: f32[2,176,16], index: 0, kind: input, shape index: {}]
  %s1 = inlined_call_operand.vmem [shape: bf16[3,48,16], index: 1, kind: input, shape index: {}]
  %s2 = inlined_call_operand.vmem [shape: f32[1,16], index: 2, kind: input, shape index: {}]
  %s3 = inlined_call_operand.vmem [shape: f32[2,128,16], index: 3, kind: output, shape index: {}]
  %s4 = sld [smem:[#allocation0]]
  $region45: #{pyraconvblock_forward.12} parent=0
    _
  %s6 = ssub.s32 1, %s4
  %s7 = scalar_select 0, %s6, %s4
  loop: start=0, step=1, limit=4
  $region2: #{pyraconvblock_forward.12} parent=0 // loop_pre_header
    _
  $region3: #{pyraconvblock_forward.12} parent=0 // loop_header
    %s9 = sphi 0, %s13
    %p10 = scmp.ge.s32.totalorder %s9, 4
    %s19 = sphi 0, %s21
    %s22 = sphi 0, %s19
    %s23 = sphi 0, %s22
    %s39 = sphi 0, %s23
    %s43 = sphi 0, %s43
    %s45 = sphi 0, %s43
    %s46 = sphi 0, %s45
    %s60 = sphi 0, %s46
    %s64 = sphi 0, %s64
    %s66 = sphi 0, %s64
    %s67 = sphi 0, %s66
    %s81 = sphi 0, %s67
    %s87 = sphi 0, %s89
    %s90 = sphi 0, %s87
    %s91 = sphi 0, %s90
    %s107 = sphi 0, %s91
  $region4: #{pyraconvblock_forward.12} parent=0 // loop_header_branch
    %12 = sbr.rel (%p10) target = $region8
  $region5: #{pyraconvblock_forward.12} parent=0 // loop_body
    %s14 = ssub.s32 %s9, 1
    %s15 = ssub.s32 %s9, 2
    %s16 = sadd.s32 %s9, 1
    %s17 = ssub.s32 %s9, %s16
    %p18 = scmp.eq.s32.totalorder %s17, 0
    %s20 = sadd.s32 %s19, 1
    %s21 = scalar_select %p18, %s19, %s20
    %p24 = pneg %p18
    %p25 = scmp.eq.s32.totalorder %s9, 1
    %p26 = por %p24, %p25
    %p27 = scmp.ne.s32.totalorder %s19, %s22
    %p28 = scmp.eq.s32.totalorder %s9, 0
    %p29 = por %p27, %p28
    %p30 = scmp.ne.s32.totalorder %s19, %s22
    %p31 = scmp.eq.s32.totalorder %s14, 1
    %p32 = por %p30, %p31
    %p33 = scmp.ne.s32.totalorder %s22, %s23
    %p34 = scmp.eq.s32.totalorder %s14, 0
    %p35 = por %p33, %p34
    %p36 = scmp.ne.s32.totalorder %s22, %s23
    %p37 = scmp.eq.s32.totalorder %s15, 1
    %p38 = por %p36, %p37
    %p40 = scmp.ne.s32.totalorder %s23, %s39
    %p41 = scmp.eq.s32.totalorder %s15, 0
    %p42 = por %p40, %p41
    %s44 = sadd.s32 %s43, 1
    %p47 = scmp.eq.s32.totalorder %s9, 1
    %p48 = scmp.ne.s32.totalorder %s43, %s45
    %p49 = scmp.eq.s32.totalorder %s9, 0
    %p50 = por %p48, %p49
    %p51 = scmp.ne.s32.totalorder %s43, %s45
    %p52 = scmp.eq.s32.totalorder %s14, 1
    %p53 = por %p51, %p52
    %p54 = scmp.ne.s32.totalorder %s45, %s46
    %p55 = scmp.eq.s32.totalorder %s14, 0
    %p56 = por %p54, %p55
    %p57 = scmp.ne.s32.totalorder %s45, %s46
    %p58 = scmp.eq.s32.totalorder %s15, 1
    %p59 = por %p57, %p58
    %p61 = scmp.ne.s32.totalorder %s46, %s60
    %p62 = scmp.eq.s32.totalorder %s15, 0
    %p63 = por %p61, %p62
    %s65 = sadd.s32 %s64, 1
    %p68 = scmp.eq.s32.totalorder %s9, 1
    %p69 = scmp.ne.s32.totalorder %s64, %s66
    %p70 = scmp.eq.s32.totalorder %s9, 0
    %p71 = por %p69, %p70
    %p72 = scmp.ne.s32.totalorder %s64, %s66
    %p73 = scmp.eq.s32.totalorder %s14, 1
    %p74 = por %p72, %p73
    %p75 = scmp.ne.s32.totalorder %s66, %s67
    %p76 = scmp.eq.s32.totalorder %s14, 0
    %p77 = por %p75, %p76
    %p78 = scmp.ne.s32.totalorder %s66, %s67
    %p79 = scmp.eq.s32.totalorder %s15, 1
    %p80 = por %p78, %p79
    %p82 = scmp.ne.s32.totalorder %s67, %s81
    %p83 = scmp.eq.s32.totalorder %s15, 0
    %p84 = por %p82, %p83
    %s85 = ssub.s32 %s9, %s16
    %p86 = scmp.eq.s32.totalorder %s85, 0
    %s88 = sadd.s32 %s87, 1
    %s89 = scalar_select %p86, %s87, %s88
    %p92 = pneg %p86
    %p93 = scmp.eq.s32.totalorder %s9, 1
    %p94 = por %p92, %p93
    %p95 = scmp.ne.s32.totalorder %s87, %s90
    %p96 = scmp.eq.s32.totalorder %s9, 0
    %p97 = por %p95, %p96
    %p98 = scmp.ne.s32.totalorder %s87, %s90
    %p99 = scmp.eq.s32.totalorder %s14, 1
    %p100 = por %p98, %p99
    %p101 = scmp.ne.s32.totalorder %s90, %s91
    %p102 = scmp.eq.s32.totalorder %s14, 0
    %p103 = por %p101, %p102
    %p104 = scmp.ne.s32.totalorder %s90, %s91
    %p105 = scmp.eq.s32.totalorder %s15, 1
    %p106 = por %p104, %p105
    %p108 = scmp.ne.s32.totalorder %s91, %s107
    %p109 = scmp.eq.s32.totalorder %s15, 0
    %p110 = por %p108, %p109
    %p111 = scmp.le.s32.totalorder 1, %s9
    %p112 = scmp.lt.s32.totalorder %s9, 3
    %p113 = pnand %p111, %p112
    %p114 = pneg %p113
    // Predicated region
    $region9: #{pyraconvblock_forward.12} parent=5 // pred_check
      _
    $region10: #{pyraconvblock_forward.12} parent=5 // pred_check_branch
      %116 = sbr.rel (%p113) target = $region12
    $region11: #{pyraconvblock_forward.12} parent=5 // pred_region
      %s117 = ssub.s32 %s9, 1
      // Predicated region
      $region13: #{pyraconvblock_forward.12} parent=11 // pred_check
        %p118 = pneg %p56
      $region14: #{pyraconvblock_forward.12} parent=11 // pred_check_branch
        %120 = sbr.rel (%p118) target = $region16
      $region15: #{pyraconvblock_forward.12} parent=11 // pred_region
        _
      $region16: #{pyraconvblock_forward.12} parent=11 // pred_fallthru
        _
      // Predicated region
      $region17: #{pyraconvblock_forward.12} parent=11 // pred_check
        %p121 = pneg %p77
      $region18: #{pyraconvblock_forward.12} parent=11 // pred_check_branch
        %123 = sbr.rel (%p121) target = $region20
      $region19: #{pyraconvblock_forward.12} parent=11 // pred_region
        _
      $region20: #{pyraconvblock_forward.12} parent=11 // pred_fallthru
        _
    $region12: #{pyraconvblock_forward.12} parent=5 // pred_fallthru
      _
    %p124 = scmp.lt.s32.totalorder %s9, 2
    // Predicated region
    $region21: #{pyraconvblock_forward.12} parent=5 // pred_check
      %p125 = pneg %p124
    $region22: #{pyraconvblock_forward.12} parent=5 // pred_check_branch
      %127 = sbr.rel (%p125) target = $region24
    $region23: #{pyraconvblock_forward.12} parent=5 // pred_region
      // Predicated region
      $region25: #{pyraconvblock_forward.12} parent=23 // pred_check
        %p128 = pneg %p29
      $region26: #{pyraconvblock_forward.12} parent=23 // pred_check_branch
        %130 = sbr.rel (%p128) target = $region28
      $region27: #{pyraconvblock_forward.12} parent=23 // pred_region
        %p131 = scmp.lt.s32.totalorder %s9, 1
        %s132 = scalar_select %p131, %s9, 1
        %s133 = smul.addr %s132, 22
        %s134 = smul.addr %s133, 8
        %s135 = scalar_lea.vmem %s0, %s134
      $region28: #{pyraconvblock_forward.12} parent=23 // pred_fallthru
        _
    $region24: #{pyraconvblock_forward.12} parent=5 // pred_fallthru
      _
    %p136 = scmp.le.s32.totalorder 1, %s9
    %p137 = scmp.lt.s32.totalorder %s9, 3
    %p138 = pnand %p136, %p137
    %p139 = pneg %p138
    // Predicated region
    $region29: #{pyraconvblock_forward.12} parent=5 // pred_check
      _
    $region30: #{pyraconvblock_forward.12} parent=5 // pred_check_branch
      %141 = sbr.rel (%p138) target = $region32
    $region31: #{pyraconvblock_forward.12} parent=5 // pred_region
      %s142 = ssub.s32 %s9, 1
      %p143 = scmp.lt.s32.totalorder %s14, 1
      %s144 = scalar_select %p143, %s14, 1
      %s145 = smul.addr %s144, 22
      %s146 = smul.addr %s145, 8
      %s147 = scalar_lea.vmem %s0, %s146
      %p148 = pneg %p35
      %p149 = pneg %p32
      %p150 = pneg %p56
      %p151 = pneg %p53
      %p152 = pneg %p77
      %p153 = pneg %p74
      %p154 = pneg %p103
      %p155 = pneg %p100
      %p156 = scmp.lt.s32.totalorder %s14, 1
      %s157 = scalar_select %p156, %s14, 1
      %s158 = smul.addr %s157, 16
      %s159 = smul.addr %s158, 8
      %s160 = scalar_lea.vmem %s3, %s159
      %p161 = scmp.lt.s32.totalorder %s14, 1
      %s162 = scalar_select %p161, %s14, 1
      %s163 = smul.addr %s162, 22
      %s164 = smul.addr %s163, 8
      %s165 = scalar_lea.vmem %s0, %s164
      %p166 = scmp.lt.s32.totalorder %s14, 1
      %s167 = scalar_select %p166, %s14, 1
      %s168 = smul.addr %s167, 16
      %s169 = smul.addr %s168, 8
      %s170 = scalar_lea.vmem %s3, %s169
      %v172 = vld [vmem:[%s165] sm:$0xff]
      %v173 = vld [vmem:[%s165 + $0x8] sm:$0xff]
      %v174 = vld [vmem:[%s165 + $0x10] sm:$0xff]
      %v175 = vld [vmem:[%s165 + $0x18] sm:$0xff]
      %v176 = vld [vmem:[%s165 + $0x20] sm:$0xff]
      %v177 = vld [vmem:[%s165 + $0x28] sm:$0xff]
      %v178 = vld [vmem:[%s165 + $0x30] sm:$0xff]
      %v179 = vld [vmem:[%s165 + $0x38] sm:$0xff]
      %v180 = vld [vmem:[%s165 + $0x40] sm:$0xff]
      %v181 = vld [vmem:[%s165 + $0x48] sm:$0xff]
      %v182 = vld [vmem:[%s165 + $0x50] sm:$0xff]
      %v183 = vld [vmem:[%s165 + $0x58] sm:$0xff]
      %v184 = vld [vmem:[%s165 + $0x60] sm:$0xff]
      %v185 = vld [vmem:[%s165 + $0x68] sm:$0xff]
      %v186 = vld [vmem:[%s165 + $0x70] sm:$0xff]
      %v187 = vld [vmem:[%s165 + $0x78] sm:$0xff]
      %v188 = vld [vmem:[%s165 + $0x80] sm:$0xff]
      %v189 = vld [vmem:[%s165 + $0x88] sm:$0xff]
      %v190 = vld [vmem:[%s165 + $0x90] sm:$0xff]
      %v191 = vld [vmem:[%s165 + $0x98] sm:$0xff]
      %v192 = vld [vmem:[%s165 + $0xa0] sm:$0xff]
      %vm214 = vcmask 1046528
      %v215 = vrot.slane %v172, 1
      %v216 = vrot.slane %v173, 1
      %v217 = vsel %vm214, %v215, %v216
      %v218 = vrot.slane %v174, 1
      %v219 = vsel %vm214, %v216, %v218
      %v220 = vrot.slane %v175, 1
      %v221 = vsel %vm214, %v218, %v220
      %v222 = vrot.slane %v176, 1
      %v223 = vsel %vm214, %v220, %v222
      %v224 = vrot.slane %v177, 1
      %v225 = vsel %vm214, %v222, %v224
      %v226 = vrot.slane %v178, 1
      %v227 = vsel %vm214, %v224, %v226
      %v228 = vrot.slane %v179, 1
      %v229 = vsel %vm214, %v226, %v228
      %v230 = vrot.slane %v180, 1
      %v231 = vsel %vm214, %v228, %v230
      %v232 = vrot.slane %v181, 1
      %v233 = vsel %vm214, %v230, %v232
      %v234 = vrot.slane %v182, 1
      %v235 = vsel %vm214, %v232, %v234
      %v236 = vrot.slane %v183, 1
      %v237 = vsel %vm214, %v234, %v236
      %v238 = vrot.slane %v184, 1
      %v239 = vsel %vm214, %v236, %v238
      %v240 = vrot.slane %v185, 1
      %v241 = vsel %vm214, %v238, %v240
      %v242 = vrot.slane %v186, 1
      %v243 = vsel %vm214, %v240, %v242
      %v244 = vrot.slane %v187, 1
      %v245 = vsel %vm214, %v242, %v244
      %v246 = vrot.slane %v188, 1
      %v247 = vsel %vm214, %v244, %v246
      %v248 = vrot.slane %v189, 1
      %v249 = vsel %vm214, %v246, %v248
      %v250 = vrot.slane %v190, 1
      %v251 = vsel %vm214, %v248, %v250
      %v252 = vrot.slane %v191, 1
      %v253 = vsel %vm214, %v250, %v252
      %v254 = vrot.slane %v192, 1
      %v255 = vsel %vm214, %v252, %v254
      %256 = vrot.lane.b32.xlu0 %v217, 16
      %v257 = vpop.permute.xlu0 %256
      %258 = vrot.lane.b32.xlu0 %v219, 16
      %v259 = vpop.permute.xlu0 %258
      %260 = vrot.lane.b32.xlu0 %v221, 16
      %v261 = vpop.permute.xlu0 %260
      %262 = vrot.lane.b32.xlu0 %v223, 16
      %v263 = vpop.permute.xlu0 %262
      %264 = vrot.lane.b32.xlu0 %v225, 16
      %v265 = vpop.permute.xlu0 %264
      %266 = vrot.lane.b32.xlu0 %v227, 16
      %v267 = vpop.permute.xlu0 %266
      %268 = vrot.lane.b32.xlu0 %v229, 16
      %v269 = vpop.permute.xlu0 %268
      %270 = vrot.lane.b32.xlu0 %v231, 16
      %v271 = vpop.permute.xlu0 %270
      %272 = vrot.lane.b32.xlu0 %v233, 16
      %v273 = vpop.permute.xlu0 %272
      %274 = vrot.lane.b32.xlu0 %v235, 16
      %v275 = vpop.permute.xlu0 %274
      %276 = vrot.lane.b32.xlu0 %v237, 16
      %v277 = vpop.permute.xlu0 %276
      %278 = vrot.lane.b32.xlu0 %v239, 16
      %v279 = vpop.permute.xlu0 %278
      %280 = vrot.lane.b32.xlu0 %v241, 16
      %v281 = vpop.permute.xlu0 %280
      %282 = vrot.lane.b32.xlu0 %v243, 16
      %v283 = vpop.permute.xlu0 %282
      %284 = vrot.lane.b32.xlu0 %v245, 16
      %v285 = vpop.permute.xlu0 %284
      %286 = vrot.lane.b32.xlu0 %v247, 16
      %v287 = vpop.permute.xlu0 %286
      %288 = vrot.lane.b32.xlu0 %v249, 16
      %v289 = vpop.permute.xlu0 %288
      %290 = vrot.lane.b32.xlu0 %v251, 16
      %v291 = vpop.permute.xlu0 %290
      %292 = vrot.lane.b32.xlu0 %v253, 16
      %v293 = vpop.permute.xlu0 %292
      %294 = vrot.lane.b32.xlu0 %v255, 16
      %v295 = vpop.permute.xlu0 %294
      %vm316 = vcmask 1045504
      %v317 = vrot.slane %v172, 2
      %v318 = vrot.slane %v173, 2
      %v319 = vsel %vm316, %v317, %v318
      %v320 = vrot.slane %v174, 2
      %v321 = vsel %vm316, %v318, %v320
      %v322 = vrot.slane %v175, 2
      %v323 = vsel %vm316, %v320, %v322
      %v324 = vrot.slane %v176, 2
      %v325 = vsel %vm316, %v322, %v324
      %v326 = vrot.slane %v177, 2
      %v327 = vsel %vm316, %v324, %v326
      %v328 = vrot.slane %v178, 2
      %v329 = vsel %vm316, %v326, %v328
      %v330 = vrot.slane %v179, 2
      %v331 = vsel %vm316, %v328, %v330
      %v332 = vrot.slane %v180, 2
      %v333 = vsel %vm316, %v330, %v332
      %v334 = vrot.slane %v181, 2
      %v335 = vsel %vm316, %v332, %v334
      %v336 = vrot.slane %v182, 2
      %v337 = vsel %vm316, %v334, %v336
      %v338 = vrot.slane %v183, 2
      %v339 = vsel %vm316, %v336, %v338
      %v340 = vrot.slane %v184, 2
      %v341 = vsel %vm316, %v338, %v340
      %v342 = vrot.slane %v185, 2
      %v343 = vsel %vm316, %v340, %v342
      %v344 = vrot.slane %v186, 2
      %v345 = vsel %vm316, %v342, %v344
      %v346 = vrot.slane %v187, 2
      %v347 = vsel %vm316, %v344, %v346
      %v348 = vrot.slane %v188, 2
      %v349 = vsel %vm316, %v346, %v348
      %v350 = vrot.slane %v189, 2
      %v351 = vsel %vm316, %v348, %v350
      %v352 = vrot.slane %v190, 2
      %v353 = vsel %vm316, %v350, %v352
      %v354 = vrot.slane %v191, 2
      %v355 = vsel %vm316, %v352, %v354
      %v356 = vrot.slane %v192, 2
      %v357 = vsel %vm316, %v354, %v356
      %358 = vrot.lane.b32.xlu0 %v319, 32
      %v359 = vpop.permute.xlu0 %358
      %360 = vrot.lane.b32.xlu0 %v321, 32
      %v361 = vpop.permute.xlu0 %360
      %362 = vrot.lane.b32.xlu0 %v323, 32
      %v363 = vpop.permute.xlu0 %362
      %364 = vrot.lane.b32.xlu0 %v325, 32
      %v365 = vpop.permute.xlu0 %364
      %366 = vrot.lane.b32.xlu0 %v327, 32
      %v367 = vpop.permute.xlu0 %366
      %368 = vrot.lane.b32.xlu0 %v329, 32
      %v369 = vpop.permute.xlu0 %368
      %370 = vrot.lane.b32.xlu0 %v331, 32
      %v371 = vpop.permute.xlu0 %370
      %372 = vrot.lane.b32.xlu0 %v333, 32
      %v373 = vpop.permute.xlu0 %372
      %374 = vrot.lane.b32.xlu0 %v335, 32
      %v375 = vpop.permute.xlu0 %374
      %376 = vrot.lane.b32.xlu0 %v337, 32
      %v377 = vpop.permute.xlu0 %376
      %378 = vrot.lane.b32.xlu0 %v339, 32
      %v379 = vpop.permute.xlu0 %378
      %380 = vrot.lane.b32.xlu0 %v341, 32
      %v381 = vpop.permute.xlu0 %380
      %382 = vrot.lane.b32.xlu0 %v343, 32
      %v383 = vpop.permute.xlu0 %382
      %384 = vrot.lane.b32.xlu0 %v345, 32
      %v385 = vpop.permute.xlu0 %384
      %386 = vrot.lane.b32.xlu0 %v347, 32
      %v387 = vpop.permute.xlu0 %386
      %388 = vrot.lane.b32.xlu0 %v349, 32
      %v389 = vpop.permute.xlu0 %388
      %390 = vrot.lane.b32.xlu0 %v351, 32
      %v391 = vpop.permute.xlu0 %390
      %392 = vrot.lane.b32.xlu0 %v353, 32
      %v393 = vpop.permute.xlu0 %392
      %394 = vrot.lane.b32.xlu0 %v355, 32
      %v395 = vpop.permute.xlu0 %394
      %396 = vrot.lane.b32.xlu0 %v357, 32
      %v397 = vpop.permute.xlu0 %396
      %vm418 = vcmask 130048
      %v419 = vsel %vm418, %v172, %v257
      %v420 = vsel %vm418, %v173, %v259
      %v421 = vsel %vm418, %v174, %v261
      %v422 = vsel %vm418, %v175, %v263
      %v423 = vsel %vm418, %v176, %v265
      %v424 = vsel %vm418, %v177, %v267
      %v425 = vsel %vm418, %v178, %v269
      %v426 = vsel %vm418, %v179, %v271
      %v427 = vsel %vm418, %v180, %v273
      %v428 = vsel %vm418, %v181, %v275
      %v429 = vsel %vm418, %v182, %v277
      %v430 = vsel %vm418, %v183, %v279
      %v431 = vsel %vm418, %v184, %v281
      %v432 = vsel %vm418, %v185, %v283
      %v433 = vsel %vm418, %v186, %v285
      %v434 = vsel %vm418, %v187, %v287
      %v435 = vsel %vm418, %v188, %v289
      %v436 = vsel %vm418, %v189, %v291
      %v437 = vsel %vm418, %v190, %v293
      %v438 = vsel %vm418, %v191, %v295
      %vm439 = vcmask 261120
      %v440 = vsel %vm439, %v419, %v359
      %v441 = vsel %vm439, %v420, %v361
      %v442 = vsel %vm439, %v421, %v363
      %v443 = vsel %vm439, %v422, %v365
      %v444 = vsel %vm439, %v423, %v367
      %v445 = vsel %vm439, %v424, %v369
      %v446 = vsel %vm439, %v425, %v371
      %v447 = vsel %vm439, %v426, %v373
      %v448 = vsel %vm439, %v427, %v375
      %v449 = vsel %vm439, %v428, %v377
      %v450 = vsel %vm439, %v429, %v379
      %v451 = vsel %vm439, %v430, %v381
      %v452 = vsel %vm439, %v431, %v383
      %v453 = vsel %vm439, %v432, %v385
      %v454 = vsel %vm439, %v433, %v387
      %v455 = vsel %vm439, %v434, %v389
      %v456 = vsel %vm439, %v435, %v391
      %v457 = vsel %vm439, %v436, %v393
      %v458 = vsel %vm439, %v437, %v395
      %v459 = vsel %vm439, %v438, %v397
      %v460 = vpack.c.bf16 %v440, %v440
      %v461 = vpack.c.bf16 %v441, %v441
      %v462 = vpack.c.bf16 %v442, %v442
      %v463 = vpack.c.bf16 %v443, %v443
      %v464 = vpack.c.bf16 %v444, %v444
      %v465 = vpack.c.bf16 %v445, %v445
      %v466 = vpack.c.bf16 %v446, %v446
      %v467 = vpack.c.bf16 %v447, %v447
      %v468 = vpack.c.bf16 %v448, %v448
      %v469 = vpack.c.bf16 %v449, %v449
      %v470 = vpack.c.bf16 %v450, %v450
      %v471 = vpack.c.bf16 %v451, %v451
      %v472 = vpack.c.bf16 %v452, %v452
      %v473 = vpack.c.bf16 %v453, %v453
      %v474 = vpack.c.bf16 %v454, %v454
      %v475 = vpack.c.bf16 %v455, %v455
      %v476 = vpack.c.bf16 %v456, %v456
      %v477 = vpack.c.bf16 %v457, %v457
      %v478 = vpack.c.bf16 %v458, %v458
      %v479 = vpack.c.bf16 %v459, %v459
      %v480 = vld [vmem:[%s1] sm:$0xf]
      %v481 = vld [vmem:[%s1 + $0x4] sm:$0xf]
      %v482 = vld [vmem:[%s1 + $0x8] sm:$0xf]
      %v483 = vld [vmem:[%s1 + $0xc] sm:$0xf]
      %v484 = vld [vmem:[%s1 + $0x10] sm:$0xf]
      %v485 = vld [vmem:[%s1 + $0x14] sm:$0xf]
      %s486 = scalar_lea.vmem %s1, 24
      %v487 = vld [vmem:[%s486] sm:$0xf]
      %v488 = vld [vmem:[%s486 + $0x4] sm:$0xf]
      %v489 = vld [vmem:[%s486 + $0x8] sm:$0xf]
      %v490 = vld [vmem:[%s486 + $0xc] sm:$0xf]
      %v491 = vld [vmem:[%s486 + $0x10] sm:$0xf]
      %v492 = vld [vmem:[%s486 + $0x14] sm:$0xf]
      %v509 = vunpack.c.l.b16 %v462
      %v510 = vunpack.c.l.b16 %v463
      %v511 = vunpack.c.l.b16 %v464
      %v512 = vunpack.c.l.b16 %v465
      %v513 = vunpack.c.l.b16 %v466
      %v514 = vunpack.c.l.b16 %v467
      %v515 = vunpack.c.l.b16 %v468
      %v516 = vunpack.c.l.b16 %v469
      %v517 = vunpack.c.l.b16 %v470
      %v518 = vunpack.c.l.b16 %v471
      %v519 = vunpack.c.l.b16 %v472
      %v520 = vunpack.c.l.b16 %v473
      %v521 = vunpack.c.l.b16 %v474
      %v522 = vunpack.c.l.b16 %v475
      %v523 = vunpack.c.l.b16 %v476
      %v524 = vunpack.c.l.b16 %v477
      %v525 = vpack.c.b16 %v510, %v509
      %v526 = vpack.c.b16 %v512, %v511
      %v527 = vpack.c.b16 %v514, %v513
      %v528 = vpack.c.b16 %v516, %v515
      %v529 = vpack.c.b16 %v518, %v517
      %v530 = vpack.c.b16 %v520, %v519
      %v531 = vpack.c.b16 %v522, %v521
      %v532 = vpack.c.b16 %v524, %v523
      %v539 = vunpack.c.l.b16 %v487
      %v540 = vunpack.c.l.b16 %v488
      %v541 = vunpack.c.l.b16 %v489
      %v542 = vunpack.c.l.b16 %v490
      %v543 = vunpack.c.l.b16 %v491
      %v544 = vunpack.c.l.b16 %v492
      %v545 = vpack.c.b16 %v540, %v539
      %v546 = vpack.c.b16 %v542, %v541
      %v547 = vpack.c.b16 %v544, %v543
      %vm551 = vcmask 392192
      %v553 = vsel %vm551, %v525, 0
      %v556 = vsel %vm551, %v526, 0
      %v559 = vsel %vm551, %v527, 0
      %v562 = vsel %vm551, %v528, 0
      %v565 = vsel %vm551, %v529, 0
      %v568 = vsel %vm551, %v530, 0
      %v571 = vsel %vm551, %v531, 0
      %v574 = vsel %vm551, %v532, 0
      %576 = vmatpush.bf16.msra.mxu0 0
      %577 = vmatpush.bf16.msra.mxu0 0
      %578 = vmatpush.bf16.msra.mxu0 0
      %579 = vmatpush.bf16.msra.mxu0 0
      %580 = vmatpush.bf16.msra.mxu0 0
      %581 = vmatpush.bf16.msra.mxu0 %v547
      %582 = vmatpush.bf16.msra.mxu0 %v546
      %583 = vmatpush.bf16.msra.mxu0 %v545
      %584 = vmatmul.bf16.gmra.mxu0 %v553
      %v585 = vpop.f32.mrf.mxu0
      %v586 = vadd.f32 0.0, %v585
      %v587 = vpop.f32.mrf.mxu0
      %v588 = vadd.f32 0.0, %v587
      %589 = vmatmul.bf16.gmra.mxu0 %v556
      %v590 = vpop.f32.mrf.mxu0
      %v591 = vadd.f32 0.0, %v590
      %v592 = vpop.f32.mrf.mxu0
      %v593 = vadd.f32 0.0, %v592
      %594 = vmatmul.bf16.gmra.mxu0 %v559
      %v595 = vpop.f32.mrf.mxu0
      %v596 = vadd.f32 0.0, %v595
      %v597 = vpop.f32.mrf.mxu0
      %v598 = vadd.f32 0.0, %v597
      %599 = vmatmul.bf16.gmra.mxu0 %v562
      %v600 = vpop.f32.mrf.mxu0
      %v601 = vadd.f32 0.0, %v600
      %v602 = vpop.f32.mrf.mxu0
      %v603 = vadd.f32 0.0, %v602
      %604 = vmatmul.bf16.gmra.mxu0 %v565
      %v605 = vpop.f32.mrf.mxu0
      %v606 = vadd.f32 0.0, %v605
      %v607 = vpop.f32.mrf.mxu0
      %v608 = vadd.f32 0.0, %v607
      %609 = vmatmul.bf16.gmra.mxu0 %v568
      %v610 = vpop.f32.mrf.mxu0
      %v611 = vadd.f32 0.0, %v610
      %v612 = vpop.f32.mrf.mxu0
      %v613 = vadd.f32 0.0, %v612
      %614 = vmatmul.bf16.gmra.mxu0 %v571
      %v615 = vpop.f32.mrf.mxu0
      %v616 = vadd.f32 0.0, %v615
      %v617 = vpop.f32.mrf.mxu0
      %v618 = vadd.f32 0.0, %v617
      %619 = vmatmul.bf16.gmra.mxu0 %v574
      %v620 = vpop.f32.mrf.mxu0
      %v621 = vadd.f32 0.0, %v620
      %v622 = vpop.f32.mrf.mxu0
      %v623 = vadd.f32 0.0, %v622
      %624 = vdwg.mxu0
      %v627 = vunpack.c.l.b16 %v460
      %v628 = vunpack.c.l.b16 %v461
      %v629 = vpack.c.b16 %v628, %v627
      %v636 = vunpack.c.l.b16 %v480
      %v637 = vunpack.c.l.b16 %v481
      %v638 = vunpack.c.l.b16 %v482
      %v639 = vunpack.c.l.b16 %v483
      %v640 = vunpack.c.l.b16 %v484
      %v641 = vunpack.c.l.b16 %v485
      %v642 = vpack.c.b16 %v637, %v636
      %v643 = vpack.c.b16 %v639, %v638
      %v644 = vpack.c.b16 %v641, %v640
      %v649 = vsel %vm551, %v629, 0
      %651 = vmatpush.bf16.msra.mxu0 0
      %652 = vmatpush.bf16.msra.mxu0 0
      %653 = vmatpush.bf16.msra.mxu0 0
      %654 = vmatpush.bf16.msra.mxu0 0
      %655 = vmatpush.bf16.msra.mxu0 0
      %656 = vmatpush.bf16.msra.mxu0 %v644
      %657 = vmatpush.bf16.msra.mxu0 %v643
      %658 = vmatpush.bf16.msra.mxu0 %v642
      %659 = vmatmul.bf16.gmra.mxu0 %v649
      %v660 = vpop.f32.mrf.mxu0
      %v661 = vadd.f32 %v586, %v660
      %v662 = vpop.f32.mrf.mxu0
      %v663 = vadd.f32 %v588, %v662
      %664 = vmatmul.bf16.gmra.mxu0 %v553
      %v665 = vpop.f32.mrf.mxu0
      %v666 = vadd.f32 %v591, %v665
      %v667 = vpop.f32.mrf.mxu0
      %v668 = vadd.f32 %v593, %v667
      %669 = vmatmul.bf16.gmra.mxu0 %v556
      %v670 = vpop.f32.mrf.mxu0
      %v671 = vadd.f32 %v596, %v670
      %v672 = vpop.f32.mrf.mxu0
      %v673 = vadd.f32 %v598, %v672
      %674 = vmatmul.bf16.gmra.mxu0 %v559
      %v675 = vpop.f32.mrf.mxu0
      %v676 = vadd.f32 %v601, %v675
      %v677 = vpop.f32.mrf.mxu0
      %v678 = vadd.f32 %v603, %v677
      %679 = vmatmul.bf16.gmra.mxu0 %v562
      %v680 = vpop.f32.mrf.mxu0
      %v681 = vadd.f32 %v606, %v680
      %v682 = vpop.f32.mrf.mxu0
      %v683 = vadd.f32 %v608, %v682
      %684 = vmatmul.bf16.gmra.mxu0 %v565
      %v685 = vpop.f32.mrf.mxu0
      %v686 = vadd.f32 %v611, %v685
      %v687 = vpop.f32.mrf.mxu0
      %v688 = vadd.f32 %v613, %v687
      %689 = vmatmul.bf16.gmra.mxu0 %v568
      %v690 = vpop.f32.mrf.mxu0
      %v691 = vadd.f32 %v616, %v690
      %v692 = vpop.f32.mrf.mxu0
      %v693 = vadd.f32 %v618, %v692
      %694 = vmatmul.bf16.gmra.mxu0 %v571
      %v695 = vpop.f32.mrf.mxu0
      %v696 = vadd.f32 %v621, %v695
      %v697 = vpop.f32.mrf.mxu0
      %v698 = vadd.f32 %v623, %v697
      %699 = vdwg.mxu0
      %s700 = scalar_lea.vmem %s1, 48
      %v701 = vld [vmem:[%s700] sm:$0xf]
      %v702 = vld [vmem:[%s700 + $0x4] sm:$0xf]
      %v703 = vld [vmem:[%s700 + $0x8] sm:$0xf]
      %v704 = vld [vmem:[%s700 + $0xc] sm:$0xf]
      %v705 = vld [vmem:[%s700 + $0x10] sm:$0xf]
      %v706 = vld [vmem:[%s700 + $0x14] sm:$0xf]
      %v709 = vunpack.c.l.b16 %v478
      %v710 = vunpack.c.l.b16 %v479
      %v711 = vpack.c.b16 %v710, %v709
      %v718 = vunpack.c.l.b16 %v701
      %v719 = vunpack.c.l.b16 %v702
      %v720 = vunpack.c.l.b16 %v703
      %v721 = vunpack.c.l.b16 %v704
      %v722 = vunpack.c.l.b16 %v705
      %v723 = vunpack.c.l.b16 %v706
      %v724 = vpack.c.b16 %v719, %v718
      %v725 = vpack.c.b16 %v721, %v720
      %v726 = vpack.c.b16 %v723, %v722
      %v731 = vsel %vm551, %v711, 0
      %733 = vmatpush.bf16.msra.mxu0 0
      %734 = vmatpush.bf16.msra.mxu0 0
      %735 = vmatpush.bf16.msra.mxu0 0
      %736 = vmatpush.bf16.msra.mxu0 0
      %737 = vmatpush.bf16.msra.mxu0 0
      %738 = vmatpush.bf16.msra.mxu0 %v726
      %739 = vmatpush.bf16.msra.mxu0 %v725
      %740 = vmatpush.bf16.msra.mxu0 %v724
      %741 = vmatmul.bf16.gmra.mxu0 %v556
      %v742 = vpop.f32.mrf.mxu0
      %v743 = vadd.f32 0.0, %v742
      %v744 = vpop.f32.mrf.mxu0
      %v745 = vadd.f32 0.0, %v744
      %746 = vmatmul.bf16.gmra.mxu0 %v559
      %v747 = vpop.f32.mrf.mxu0
      %v748 = vadd.f32 0.0, %v747
      %v749 = vpop.f32.mrf.mxu0
      %v750 = vadd.f32 0.0, %v749
      %751 = vmatmul.bf16.gmra.mxu0 %v562
      %v752 = vpop.f32.mrf.mxu0
      %v753 = vadd.f32 0.0, %v752
      %v754 = vpop.f32.mrf.mxu0
      %v755 = vadd.f32 0.0, %v754
      %756 = vmatmul.bf16.gmra.mxu0 %v565
      %v757 = vpop.f32.mrf.mxu0
      %v758 = vadd.f32 0.0, %v757
      %v759 = vpop.f32.mrf.mxu0
      %v760 = vadd.f32 0.0, %v759
      %761 = vmatmul.bf16.gmra.mxu0 %v568
      %v762 = vpop.f32.mrf.mxu0
      %v763 = vadd.f32 0.0, %v762
      %v764 = vpop.f32.mrf.mxu0
      %v765 = vadd.f32 0.0, %v764
      %766 = vmatmul.bf16.gmra.mxu0 %v571
      %v767 = vpop.f32.mrf.mxu0
      %v768 = vadd.f32 0.0, %v767
      %v769 = vpop.f32.mrf.mxu0
      %v770 = vadd.f32 0.0, %v769
      %771 = vmatmul.bf16.gmra.mxu0 %v574
      %v772 = vpop.f32.mrf.mxu0
      %v773 = vadd.f32 0.0, %v772
      %v774 = vpop.f32.mrf.mxu0
      %v775 = vadd.f32 0.0, %v774
      %776 = vmatmul.bf16.gmra.mxu0 %v731
      %v777 = vpop.f32.mrf.mxu0
      %v778 = vadd.f32 0.0, %v777
      %v779 = vpop.f32.mrf.mxu0
      %v780 = vadd.f32 0.0, %v779
      %781 = vdwg.mxu0
      %v782 = vadd.f32 %v661, %v743
      %v783 = vadd.f32 %v663, %v745
      %v784 = vadd.f32 %v666, %v748
      %v785 = vadd.f32 %v668, %v750
      %v786 = vadd.f32 %v671, %v753
      %v787 = vadd.f32 %v673, %v755
      %v788 = vadd.f32 %v676, %v758
      %v789 = vadd.f32 %v678, %v760
      %v790 = vadd.f32 %v681, %v763
      %v791 = vadd.f32 %v683, %v765
      %v792 = vadd.f32 %v686, %v768
      %v793 = vadd.f32 %v688, %v770
      %v794 = vadd.f32 %v691, %v773
      %v795 = vadd.f32 %v693, %v775
      %v796 = vadd.f32 %v696, %v778
      %v797 = vadd.f32 %v698, %v780
      %v798 = vld [vmem:[%s2] sm:$0x1]
      %v800 = vperm.slane %v798, 0
      %v802 = vadd.f32 %v782, %v800
      %v803 = vadd.f32 %v783, %v800
      %v804 = vadd.f32 %v784, %v800
      %v805 = vadd.f32 %v785, %v800
      %v806 = vadd.f32 %v786, %v800
      %v807 = vadd.f32 %v787, %v800
      %v808 = vadd.f32 %v788, %v800
      %v809 = vadd.f32 %v789, %v800
      %v810 = vadd.f32 %v790, %v800
      %v811 = vadd.f32 %v791, %v800
      %v812 = vadd.f32 %v792, %v800
      %v813 = vadd.f32 %v793, %v800
      %v814 = vadd.f32 %v794, %v800
      %v815 = vadd.f32 %v795, %v800
      %v816 = vadd.f32 %v796, %v800
      %v817 = vadd.f32 %v797, %v800
      %818 = vst.msk [vmem:[%s170] sm:$0xff] %vm418, %v802
      %819 = vst.msk [vmem:[%s170 + $0x8] sm:$0xff] %vm418, %v803
      %820 = vst.msk [vmem:[%s170 + $0x10] sm:$0xff] %vm418, %v804
      %821 = vst.msk [vmem:[%s170 + $0x18] sm:$0xff] %vm418, %v805
      %822 = vst.msk [vmem:[%s170 + $0x20] sm:$0xff] %vm418, %v806
      %823 = vst.msk [vmem:[%s170 + $0x28] sm:$0xff] %vm418, %v807
      %824 = vst.msk [vmem:[%s170 + $0x30] sm:$0xff] %vm418, %v808
      %825 = vst.msk [vmem:[%s170 + $0x38] sm:$0xff] %vm418, %v809
      %826 = vst.msk [vmem:[%s170 + $0x40] sm:$0xff] %vm418, %v810
      %827 = vst.msk [vmem:[%s170 + $0x48] sm:$0xff] %vm418, %v811
      %828 = vst.msk [vmem:[%s170 + $0x50] sm:$0xff] %vm418, %v812
      %829 = vst.msk [vmem:[%s170 + $0x58] sm:$0xff] %vm418, %v813
      %830 = vst.msk [vmem:[%s170 + $0x60] sm:$0xff] %vm418, %v814
      %831 = vst.msk [vmem:[%s170 + $0x68] sm:$0xff] %vm418, %v815
      %832 = vst.msk [vmem:[%s170 + $0x70] sm:$0xff] %vm418, %v816
      %833 = vst.msk [vmem:[%s170 + $0x78] sm:$0xff] %vm418, %v817
      %p834 = scmp.lt.s32.totalorder %s14, 1
      %s835 = scalar_select %p834, %s14, 1
      %s836 = smul.addr %s835, 16
      %s837 = smul.addr %s836, 8
      %s838 = scalar_lea.vmem %s3, %s837
      // Predicated region
      $region33: #{pyraconvblock_forward.12} parent=31 // pred_check
        %p839 = pneg %p100
      $region34: #{pyraconvblock_forward.12} parent=31 // pred_check_branch
        %841 = sbr.rel (%p839) target = $region36
      $region35: #{pyraconvblock_forward.12} parent=31 // pred_region
        _
      $region36: #{pyraconvblock_forward.12} parent=31 // pred_fallthru
        _
    $region32: #{pyraconvblock_forward.12} parent=5 // pred_fallthru
      _
    %p842 = scmp.le.s32.totalorder 2, %s9
    // Predicated region
    $region37: #{pyraconvblock_forward.12} parent=5 // pred_check
      %p843 = pneg %p842
    $region38: #{pyraconvblock_forward.12} parent=5 // pred_check_branch
      %845 = sbr.rel (%p843) target = $region40
    $region39: #{pyraconvblock_forward.12} parent=5 // pred_region
      %s846 = ssub.s32 %s9, 2
      // Predicated region
      $region41: #{pyraconvblock_forward.12} parent=39 // pred_check
        %p847 = pneg %p106
      $region42: #{pyraconvblock_forward.12} parent=39 // pred_check_branch
        %849 = sbr.rel (%p847) target = $region44
      $region43: #{pyraconvblock_forward.12} parent=39 // pred_region
        %p850 = scmp.lt.s32.totalorder %s15, 1
        %s851 = scalar_select %p850, %s15, 1
        %s852 = smul.addr %s851, 16
        %s853 = smul.addr %s852, 8
        %s854 = scalar_lea.vmem %s3, %s853
      $region44: #{pyraconvblock_forward.12} parent=39 // pred_fallthru
        _
    $region40: #{pyraconvblock_forward.12} parent=5 // pred_fallthru
      _
  $region6: #{pyraconvblock_forward.12} parent=0 // loop_footer
    %s13 = sadd.s32 1, %s9
  $region7: #{pyraconvblock_forward.12} parent=0 // loop_footer_branch
    %8 = sbr.rel target = $region3
  $region8: #{pyraconvblock_forward.12} parent=0 // loop_exit
    _

// kernel: pyraconvblock_forward.11
$region0: #{pyraconvblock_forward.11}
  #allocation0 [shape = 'u32[]', space=smem, size = 0x4, offset = 0x4, fixed_abs, tag = 'smem constant byte address 0x4 - core index']
  #allocation1 [shape = 'u32[72,128]{1,0:T(1,128)}', space=vmem, size = 0x9000, scoped, tag = 'internal scratch']
  %s0 = inlined_call_operand.vmem [shape: f32[2,224,16], index: 0, kind: input, shape index: {}]
  %s1 = inlined_call_operand.vmem [shape: bf16[3,48,16], index: 1, kind: input, shape index: {}]
  %s2 = inlined_call_operand.vmem [shape: f32[1,16], index: 2, kind: input, shape index: {}]
  %s3 = inlined_call_operand.vmem [shape: f32[2,176,16], index: 3, kind: output, shape index: {}]
  %s4 = sld [smem:[#allocation0]]
  $region45: #{pyraconvblock_forward.11} parent=0
    _
  %s6 = ssub.s32 1, %s4
  %s7 = scalar_select 0, %s6, %s4
  loop: start=0, step=1, limit=4
  $region2: #{pyraconvblock_forward.11} parent=0 // loop_pre_header
    _
  $region3: #{pyraconvblock_forward.11} parent=0 // loop_header
    %s9 = sphi 0, %s13
    %p10 = scmp.ge.s32.totalorder %s9, 4
    %s19 = sphi 0, %s21
    %s22 = sphi 0, %s19
    %s23 = sphi 0, %s22
    %s39 = sphi 0, %s23
    %s43 = sphi 0, %s43
    %s45 = sphi 0, %s43
    %s46 = sphi 0, %s45
    %s60 = sphi 0, %s46
    %s64 = sphi 0, %s64
    %s66 = sphi 0, %s64
    %s67 = sphi 0, %s66
    %s81 = sphi 0, %s67
    %s87 = sphi 0, %s89
    %s90 = sphi 0, %s87
    %s91 = sphi 0, %s90
    %s107 = sphi 0, %s91
  $region4: #{pyraconvblock_forward.11} parent=0 // loop_header_branch
    %12 = sbr.rel (%p10) target = $region8
  $region5: #{pyraconvblock_forward.11} parent=0 // loop_body
    %s14 = ssub.s32 %s9, 1
    %s15 = ssub.s32 %s9, 2
    %s16 = sadd.s32 %s9, 1
    %s17 = ssub.s32 %s9, %s16
    %p18 = scmp.eq.s32.totalorder %s17, 0
    %s20 = sadd.s32 %s19, 1
    %s21 = scalar_select %p18, %s19, %s20
    %p24 = pneg %p18
    %p25 = scmp.eq.s32.totalorder %s9, 1
    %p26 = por %p24, %p25
    %p27 = scmp.ne.s32.totalorder %s19, %s22
    %p28 = scmp.eq.s32.totalorder %s9, 0
    %p29 = por %p27, %p28
    %p30 = scmp.ne.s32.totalorder %s19, %s22
    %p31 = scmp.eq.s32.totalorder %s14, 1
    %p32 = por %p30, %p31
    %p33 = scmp.ne.s32.totalorder %s22, %s23
    %p34 = scmp.eq.s32.totalorder %s14, 0
    %p35 = por %p33, %p34
    %p36 = scmp.ne.s32.totalorder %s22, %s23
    %p37 = scmp.eq.s32.totalorder %s15, 1
    %p38 = por %p36, %p37
    %p40 = scmp.ne.s32.totalorder %s23, %s39
    %p41 = scmp.eq.s32.totalorder %s15, 0
    %p42 = por %p40, %p41
    %s44 = sadd.s32 %s43, 1
    %p47 = scmp.eq.s32.totalorder %s9, 1
    %p48 = scmp.ne.s32.totalorder %s43, %s45
    %p49 = scmp.eq.s32.totalorder %s9, 0
    %p50 = por %p48, %p49
    %p51 = scmp.ne.s32.totalorder %s43, %s45
    %p52 = scmp.eq.s32.totalorder %s14, 1
    %p53 = por %p51, %p52
    %p54 = scmp.ne.s32.totalorder %s45, %s46
    %p55 = scmp.eq.s32.totalorder %s14, 0
    %p56 = por %p54, %p55
    %p57 = scmp.ne.s32.totalorder %s45, %s46
    %p58 = scmp.eq.s32.totalorder %s15, 1
    %p59 = por %p57, %p58
    %p61 = scmp.ne.s32.totalorder %s46, %s60
    %p62 = scmp.eq.s32.totalorder %s15, 0
    %p63 = por %p61, %p62
    %s65 = sadd.s32 %s64, 1
    %p68 = scmp.eq.s32.totalorder %s9, 1
    %p69 = scmp.ne.s32.totalorder %s64, %s66
    %p70 = scmp.eq.s32.totalorder %s9, 0
    %p71 = por %p69, %p70
    %p72 = scmp.ne.s32.totalorder %s64, %s66
    %p73 = scmp.eq.s32.totalorder %s14, 1
    %p74 = por %p72, %p73
    %p75 = scmp.ne.s32.totalorder %s66, %s67
    %p76 = scmp.eq.s32.totalorder %s14, 0
    %p77 = por %p75, %p76
    %p78 = scmp.ne.s32.totalorder %s66, %s67
    %p79 = scmp.eq.s32.totalorder %s15, 1
    %p80 = por %p78, %p79
    %p82 = scmp.ne.s32.totalorder %s67, %s81
    %p83 = scmp.eq.s32.totalorder %s15, 0
    %p84 = por %p82, %p83
    %s85 = ssub.s32 %s9, %s16
    %p86 = scmp.eq.s32.totalorder %s85, 0
    %s88 = sadd.s32 %s87, 1
    %s89 = scalar_select %p86, %s87, %s88
    %p92 = pneg %p86
    %p93 = scmp.eq.s32.totalorder %s9, 1
    %p94 = por %p92, %p93
    %p95 = scmp.ne.s32.totalorder %s87, %s90
    %p96 = scmp.eq.s32.totalorder %s9, 0
    %p97 = por %p95, %p96
    %p98 = scmp.ne.s32.totalorder %s87, %s90
    %p99 = scmp.eq.s32.totalorder %s14, 1
    %p100 = por %p98, %p99
    %p101 = scmp.ne.s32.totalorder %s90, %s91
    %p102 = scmp.eq.s32.totalorder %s14, 0
    %p103 = por %p101, %p102
    %p104 = scmp.ne.s32.totalorder %s90, %s91
    %p105 = scmp.eq.s32.totalorder %s15, 1
    %p106 = por %p104, %p105
    %p108 = scmp.ne.s32.totalorder %s91, %s107
    %p109 = scmp.eq.s32.totalorder %s15, 0
    %p110 = por %p108, %p109
    %p111 = scmp.le.s32.totalorder 1, %s9
    %p112 = scmp.lt.s32.totalorder %s9, 3
    %p113 = pnand %p111, %p112
    %p114 = pneg %p113
    // Predicated region
    $region9: #{pyraconvblock_forward.11} parent=5 // pred_check
      _
    $region10: #{pyraconvblock_forward.11} parent=5 // pred_check_branch
      %116 = sbr.rel (%p113) target = $region12
    $region11: #{pyraconvblock_forward.11} parent=5 // pred_region
      %s117 = ssub.s32 %s9, 1
      // Predicated region
      $region13: #{pyraconvblock_forward.11} parent=11 // pred_check
        %p118 = pneg %p56
      $region14: #{pyraconvblock_forward.11} parent=11 // pred_check_branch
        %120 = sbr.rel (%p118) target = $region16
      $region15: #{pyraconvblock_forward.11} parent=11 // pred_region
        _
      $region16: #{pyraconvblock_forward.11} parent=11 // pred_fallthru
        _
      // Predicated region
      $region17: #{pyraconvblock_forward.11} parent=11 // pred_check
        %p121 = pneg %p77
      $region18: #{pyraconvblock_forward.11} parent=11 // pred_check_branch
        %123 = sbr.rel (%p121) target = $region20
      $region19: #{pyraconvblock_forward.11} parent=11 // pred_region
        _
      $region20: #{pyraconvblock_forward.11} parent=11 // pred_fallthru
        _
    $region12: #{pyraconvblock_forward.11} parent=5 // pred_fallthru
      _
    %p124 = scmp.lt.s32.totalorder %s9, 2
    // Predicated region
    $region21: #{pyraconvblock_forward.11} parent=5 // pred_check
      %p125 = pneg %p124
    $region22: #{pyraconvblock_forward.11} parent=5 // pred_check_branch
      %127 = sbr.rel (%p125) target = $region24
    $region23: #{pyraconvblock_forward.11} parent=5 // pred_region
      // Predicated region
      $region25: #{pyraconvblock_forward.11} parent=23 // pred_check
        %p128 = pneg %p29
      $region26: #{pyraconvblock_forward.11} parent=23 // pred_check_branch
        %130 = sbr.rel (%p128) target = $region28
      $region27: #{pyraconvblock_forward.11} parent=23 // pred_region
        %p131 = scmp.lt.s32.totalorder %s9, 1
        %s132 = scalar_select %p131, %s9, 1
        %s133 = smul.addr %s132, 28
        %s134 = smul.addr %s133, 8
        %s135 = scalar_lea.vmem %s0, %s134
      $region28: #{pyraconvblock_forward.11} parent=23 // pred_fallthru
        _
    $region24: #{pyraconvblock_forward.11} parent=5 // pred_fallthru
      _
    %p136 = scmp.le.s32.totalorder 1, %s9
    %p137 = scmp.lt.s32.totalorder %s9, 3
    %p138 = pnand %p136, %p137
    %p139 = pneg %p138
    // Predicated region
    $region29: #{pyraconvblock_forward.11} parent=5 // pred_check
      _
    $region30: #{pyraconvblock_forward.11} parent=5 // pred_check_branch
      %141 = sbr.rel (%p138) target = $region32
    $region31: #{pyraconvblock_forward.11} parent=5 // pred_region
      %s142 = ssub.s32 %s9, 1
      %p143 = scmp.lt.s32.totalorder %s14, 1
      %s144 = scalar_select %p143, %s14, 1
      %s145 = smul.addr %s144, 28
      %s146 = smul.addr %s145, 8
      %s147 = scalar_lea.vmem %s0, %s146
      %p148 = pneg %p35
      %p149 = pneg %p32
      %p150 = pneg %p56
      %p151 = pneg %p53
      %p152 = pneg %p77
      %p153 = pneg %p74
      %p154 = pneg %p103
      %p155 = pneg %p100
      %p156 = scmp.lt.s32.totalorder %s14, 1
      %s157 = scalar_select %p156, %s14, 1
      %s158 = smul.addr %s157, 22
      %s159 = smul.addr %s158, 8
      %s160 = scalar_lea.vmem %s3, %s159
      %p161 = scmp.lt.s32.totalorder %s14, 1
      %s162 = scalar_select %p161, %s14, 1
      %s163 = smul.addr %s162, 28
      %s164 = smul.addr %s163, 8
      %s165 = scalar_lea.vmem %s0, %s164
      %p166 = scmp.lt.s32.totalorder %s14, 1
      %s167 = scalar_select %p166, %s14, 1
      %s168 = smul.addr %s167, 22
      %s169 = smul.addr %s168, 8
      %s170 = scalar_lea.vmem %s3, %s169
      %v172 = vld [vmem:[%s165] sm:$0xff]
      %v173 = vld [vmem:[%s165 + $0x8] sm:$0xff]
      %v174 = vld [vmem:[%s165 + $0x10] sm:$0xff]
      %v175 = vld [vmem:[%s165 + $0x18] sm:$0xff]
      %v176 = vld [vmem:[%s165 + $0x20] sm:$0xff]
      %v177 = vld [vmem:[%s165 + $0x28] sm:$0xff]
      %v178 = vld [vmem:[%s165 + $0x30] sm:$0xff]
      %v179 = vld [vmem:[%s165 + $0x38] sm:$0xff]
      %v180 = vld [vmem:[%s165 + $0x40] sm:$0xff]
      %v181 = vld [vmem:[%s165 + $0x48] sm:$0xff]
      %v182 = vld [vmem:[%s165 + $0x50] sm:$0xff]
      %v183 = vld [vmem:[%s165 + $0x58] sm:$0xff]
      %v184 = vld [vmem:[%s165 + $0x60] sm:$0xff]
      %v185 = vld [vmem:[%s165 + $0x68] sm:$0xff]
      %v186 = vld [vmem:[%s165 + $0x70] sm:$0xff]
      %v187 = vld [vmem:[%s165 + $0x78] sm:$0xff]
      %v188 = vld [vmem:[%s165 + $0x80] sm:$0xff]
      %v189 = vld [vmem:[%s165 + $0x88] sm:$0xff]
      %v190 = vld [vmem:[%s165 + $0x90] sm:$0xff]
      %v191 = vld [vmem:[%s165 + $0x98] sm:$0xff]
      %v192 = vld [vmem:[%s165 + $0xa0] sm:$0xff]
      %v193 = vld [vmem:[%s165 + $0xa8] sm:$0xff]
      %v194 = vld [vmem:[%s165 + $0xb0] sm:$0xff]
      %v195 = vld [vmem:[%s165 + $0xb8] sm:$0xff]
      %v196 = vld [vmem:[%s165 + $0xc0] sm:$0xff]
      %v197 = vld [vmem:[%s165 + $0xc8] sm:$0xff]
      %v198 = vld [vmem:[%s165 + $0xd0] sm:$0xff]
      %vm226 = vcmask 1046528
      %v227 = vrot.slane %v172, 1
      %v228 = vrot.slane %v173, 1
      %v229 = vsel %vm226, %v227, %v228
      %v230 = vrot.slane %v174, 1
      %v231 = vsel %vm226, %v228, %v230
      %v232 = vrot.slane %v175, 1
      %v233 = vsel %vm226, %v230, %v232
      %v234 = vrot.slane %v176, 1
      %v235 = vsel %vm226, %v232, %v234
      %v236 = vrot.slane %v177, 1
      %v237 = vsel %vm226, %v234, %v236
      %v238 = vrot.slane %v178, 1
      %v239 = vsel %vm226, %v236, %v238
      %v240 = vrot.slane %v179, 1
      %v241 = vsel %vm226, %v238, %v240
      %v242 = vrot.slane %v180, 1
      %v243 = vsel %vm226, %v240, %v242
      %v244 = vrot.slane %v181, 1
      %v245 = vsel %vm226, %v242, %v244
      %v246 = vrot.slane %v182, 1
      %v247 = vsel %vm226, %v244, %v246
      %v248 = vrot.slane %v183, 1
      %v249 = vsel %vm226, %v246, %v248
      %v250 = vrot.slane %v184, 1
      %v251 = vsel %vm226, %v248, %v250
      %v252 = vrot.slane %v185, 1
      %v253 = vsel %vm226, %v250, %v252
      %v254 = vrot.slane %v186, 1
      %v255 = vsel %vm226, %v252, %v254
      %v256 = vrot.slane %v187, 1
      %v257 = vsel %vm226, %v254, %v256
      %v258 = vrot.slane %v188, 1
      %v259 = vsel %vm226, %v256, %v258
      %v260 = vrot.slane %v189, 1
      %v261 = vsel %vm226, %v258, %v260
      %v262 = vrot.slane %v190, 1
      %v263 = vsel %vm226, %v260, %v262
      %v264 = vrot.slane %v191, 1
      %v265 = vsel %vm226, %v262, %v264
      %v266 = vrot.slane %v192, 1
      %v267 = vsel %vm226, %v264, %v266
      %v268 = vrot.slane %v193, 1
      %v269 = vsel %vm226, %v266, %v268
      %v270 = vrot.slane %v194, 1
      %v271 = vsel %vm226, %v268, %v270
      %v272 = vrot.slane %v195, 1
      %v273 = vsel %vm226, %v270, %v272
      %v274 = vrot.slane %v196, 1
      %v275 = vsel %vm226, %v272, %v274
      %v276 = vrot.slane %v197, 1
      %v277 = vsel %vm226, %v274, %v276
      %v278 = vrot.slane %v198, 1
      %v279 = vsel %vm226, %v276, %v278
      %280 = vrot.lane.b32.xlu0 %v229, 16
      %v281 = vpop.permute.xlu0 %280
      %282 = vrot.lane.b32.xlu0 %v231, 16
      %v283 = vpop.permute.xlu0 %282
      %284 = vrot.lane.b32.xlu0 %v233, 16
      %v285 = vpop.permute.xlu0 %284
      %286 = vrot.lane.b32.xlu0 %v235, 16
      %v287 = vpop.permute.xlu0 %286
      %288 = vrot.lane.b32.xlu0 %v237, 16
      %v289 = vpop.permute.xlu0 %288
      %290 = vrot.lane.b32.xlu0 %v239, 16
      %v291 = vpop.permute.xlu0 %290
      %292 = vrot.lane.b32.xlu0 %v241, 16
      %v293 = vpop.permute.xlu0 %292
      %294 = vrot.lane.b32.xlu0 %v243, 16
      %v295 = vpop.permute.xlu0 %294
      %296 = vrot.lane.b32.xlu0 %v245, 16
      %v297 = vpop.permute.xlu0 %296
      %298 = vrot.lane.b32.xlu0 %v247, 16
      %v299 = vpop.permute.xlu0 %298
      %300 = vrot.lane.b32.xlu0 %v249, 16
      %v301 = vpop.permute.xlu0 %300
      %302 = vrot.lane.b32.xlu0 %v251, 16
      %v303 = vpop.permute.xlu0 %302
      %304 = vrot.lane.b32.xlu0 %v253, 16
      %v305 = vpop.permute.xlu0 %304
      %306 = vrot.lane.b32.xlu0 %v255, 16
      %v307 = vpop.permute.xlu0 %306
      %308 = vrot.lane.b32.xlu0 %v257, 16
      %v309 = vpop.permute.xlu0 %308
      %310 = vrot.lane.b32.xlu0 %v259, 16
      %v311 = vpop.permute.xlu0 %310
      %312 = vrot.lane.b32.xlu0 %v261, 16
      %v313 = vpop.permute.xlu0 %312
      %314 = vrot.lane.b32.xlu0 %v263, 16
      %v315 = vpop.permute.xlu0 %314
      %316 = vrot.lane.b32.xlu0 %v265, 16
      %v317 = vpop.permute.xlu0 %316
      %318 = vrot.lane.b32.xlu0 %v267, 16
      %v319 = vpop.permute.xlu0 %318
      %320 = vrot.lane.b32.xlu0 %v269, 16
      %v321 = vpop.permute.xlu0 %320
      %322 = vrot.lane.b32.xlu0 %v271, 16
      %v323 = vpop.permute.xlu0 %322
      %324 = vrot.lane.b32.xlu0 %v273, 16
      %v325 = vpop.permute.xlu0 %324
      %326 = vrot.lane.b32.xlu0 %v275, 16
      %v327 = vpop.permute.xlu0 %326
      %328 = vrot.lane.b32.xlu0 %v277, 16
      %v329 = vpop.permute.xlu0 %328
      %330 = vrot.lane.b32.xlu0 %v279, 16
      %v331 = vpop.permute.xlu0 %330
      %vm358 = vcmask 1045504
      %v359 = vrot.slane %v172, 2
      %v360 = vrot.slane %v173, 2
      %v361 = vsel %vm358, %v359, %v360
      %v362 = vrot.slane %v174, 2
      %v363 = vsel %vm358, %v360, %v362
      %v364 = vrot.slane %v175, 2
      %v365 = vsel %vm358, %v362, %v364
      %v366 = vrot.slane %v176, 2
      %v367 = vsel %vm358, %v364, %v366
      %v368 = vrot.slane %v177, 2
      %v369 = vsel %vm358, %v366, %v368
      %v370 = vrot.slane %v178, 2
      %v371 = vsel %vm358, %v368, %v370
      %v372 = vrot.slane %v179, 2
      %v373 = vsel %vm358, %v370, %v372
      %v374 = vrot.slane %v180, 2
      %v375 = vsel %vm358, %v372, %v374
      %v376 = vrot.slane %v181, 2
      %v377 = vsel %vm358, %v374, %v376
      %v378 = vrot.slane %v182, 2
      %v379 = vsel %vm358, %v376, %v378
      %v380 = vrot.slane %v183, 2
      %v381 = vsel %vm358, %v378, %v380
      %v382 = vrot.slane %v184, 2
      %v383 = vsel %vm358, %v380, %v382
      %v384 = vrot.slane %v185, 2
      %v385 = vsel %vm358, %v382, %v384
      %v386 = vrot.slane %v186, 2
      %v387 = vsel %vm358, %v384, %v386
      %v388 = vrot.slane %v187, 2
      %v389 = vsel %vm358, %v386, %v388
      %v390 = vrot.slane %v188, 2
      %v391 = vsel %vm358, %v388, %v390
      %v392 = vrot.slane %v189, 2
      %v393 = vsel %vm358, %v390, %v392
      %v394 = vrot.slane %v190, 2
      %v395 = vsel %vm358, %v392, %v394
      %v396 = vrot.slane %v191, 2
      %v397 = vsel %vm358, %v394, %v396
      %v398 = vrot.slane %v192, 2
      %v399 = vsel %vm358, %v396, %v398
      %v400 = vrot.slane %v193, 2
      %v401 = vsel %vm358, %v398, %v400
      %v402 = vrot.slane %v194, 2
      %v403 = vsel %vm358, %v400, %v402
      %v404 = vrot.slane %v195, 2
      %v405 = vsel %vm358, %v402, %v404
      %v406 = vrot.slane %v196, 2
      %v407 = vsel %vm358, %v404, %v406
      %v408 = vrot.slane %v197, 2
      %v409 = vsel %vm358, %v406, %v408
      %v410 = vrot.slane %v198, 2
      %v411 = vsel %vm358, %v408, %v410
      %412 = vrot.lane.b32.xlu0 %v361, 32
      %v413 = vpop.permute.xlu0 %412
      %414 = vrot.lane.b32.xlu0 %v363, 32
      %v415 = vpop.permute.xlu0 %414
      %416 = vrot.lane.b32.xlu0 %v365, 32
      %v417 = vpop.permute.xlu0 %416
      %418 = vrot.lane.b32.xlu0 %v367, 32
      %v419 = vpop.permute.xlu0 %418
      %420 = vrot.lane.b32.xlu0 %v369, 32
      %v421 = vpop.permute.xlu0 %420
      %422 = vrot.lane.b32.xlu0 %v371, 32
      %v423 = vpop.permute.xlu0 %422
      %424 = vrot.lane.b32.xlu0 %v373, 32
      %v425 = vpop.permute.xlu0 %424
      %426 = vrot.lane.b32.xlu0 %v375, 32
      %v427 = vpop.permute.xlu0 %426
      %428 = vrot.lane.b32.xlu0 %v377, 32
      %v429 = vpop.permute.xlu0 %428
      %430 = vrot.lane.b32.xlu0 %v379, 32
      %v431 = vpop.permute.xlu0 %430
      %432 = vrot.lane.b32.xlu0 %v381, 32
      %v433 = vpop.permute.xlu0 %432
      %434 = vrot.lane.b32.xlu0 %v383, 32
      %v435 = vpop.permute.xlu0 %434
      %436 = vrot.lane.b32.xlu0 %v385, 32
      %v437 = vpop.permute.xlu0 %436
      %438 = vrot.lane.b32.xlu0 %v387, 32
      %v439 = vpop.permute.xlu0 %438
      %440 = vrot.lane.b32.xlu0 %v389, 32
      %v441 = vpop.permute.xlu0 %440
      %442 = vrot.lane.b32.xlu0 %v391, 32
      %v443 = vpop.permute.xlu0 %442
      %444 = vrot.lane.b32.xlu0 %v393, 32
      %v445 = vpop.permute.xlu0 %444
      %446 = vrot.lane.b32.xlu0 %v395, 32
      %v447 = vpop.permute.xlu0 %446
      %448 = vrot.lane.b32.xlu0 %v397, 32
      %v449 = vpop.permute.xlu0 %448
      %450 = vrot.lane.b32.xlu0 %v399, 32
      %v451 = vpop.permute.xlu0 %450
      %452 = vrot.lane.b32.xlu0 %v401, 32
      %v453 = vpop.permute.xlu0 %452
      %454 = vrot.lane.b32.xlu0 %v403, 32
      %v455 = vpop.permute.xlu0 %454
      %456 = vrot.lane.b32.xlu0 %v405, 32
      %v457 = vpop.permute.xlu0 %456
      %458 = vrot.lane.b32.xlu0 %v407, 32
      %v459 = vpop.permute.xlu0 %458
      %460 = vrot.lane.b32.xlu0 %v409, 32
      %v461 = vpop.permute.xlu0 %460
      %462 = vrot.lane.b32.xlu0 %v411, 32
      %v463 = vpop.permute.xlu0 %462
      %vm490 = vcmask 130048
      %v491 = vsel %vm490, %v172, %v281
      %v492 = vsel %vm490, %v173, %v283
      %v493 = vsel %vm490, %v174, %v285
      %v494 = vsel %vm490, %v175, %v287
      %v495 = vsel %vm490, %v176, %v289
      %v496 = vsel %vm490, %v177, %v291
      %v497 = vsel %vm490, %v178, %v293
      %v498 = vsel %vm490, %v179, %v295
      %v499 = vsel %vm490, %v180, %v297
      %v500 = vsel %vm490, %v181, %v299
      %v501 = vsel %vm490, %v182, %v301
      %v502 = vsel %vm490, %v183, %v303
      %v503 = vsel %vm490, %v184, %v305
      %v504 = vsel %vm490, %v185, %v307
      %v505 = vsel %vm490, %v186, %v309
      %v506 = vsel %vm490, %v187, %v311
      %v507 = vsel %vm490, %v188, %v313
      %v508 = vsel %vm490, %v189, %v315
      %v509 = vsel %vm490, %v190, %v317
      %v510 = vsel %vm490, %v191, %v319
      %v511 = vsel %vm490, %v192, %v321
      %v512 = vsel %vm490, %v193, %v323
      %v513 = vsel %vm490, %v194, %v325
      %v514 = vsel %vm490, %v195, %v327
      %v515 = vsel %vm490, %v196, %v329
      %v516 = vsel %vm490, %v197, %v331
      %vm517 = vcmask 261120
      %v518 = vsel %vm517, %v491, %v413
      %v519 = vsel %vm517, %v492, %v415
      %v520 = vsel %vm517, %v493, %v417
      %v521 = vsel %vm517, %v494, %v419
      %v522 = vsel %vm517, %v495, %v421
      %v523 = vsel %vm517, %v496, %v423
      %v524 = vsel %vm517, %v497, %v425
      %v525 = vsel %vm517, %v498, %v427
      %v526 = vsel %vm517, %v499, %v429
      %v527 = vsel %vm517, %v500, %v431
      %v528 = vsel %vm517, %v501, %v433
      %v529 = vsel %vm517, %v502, %v435
      %v530 = vsel %vm517, %v503, %v437
      %v531 = vsel %vm517, %v504, %v439
      %v532 = vsel %vm517, %v505, %v441
      %v533 = vsel %vm517, %v506, %v443
      %v534 = vsel %vm517, %v507, %v445
      %v535 = vsel %vm517, %v508, %v447
      %v536 = vsel %vm517, %v509, %v449
      %v537 = vsel %vm517, %v510, %v451
      %v538 = vsel %vm517, %v511, %v453
      %v539 = vsel %vm517, %v512, %v455
      %v540 = vsel %vm517, %v513, %v457
      %v541 = vsel %vm517, %v514, %v459
      %v542 = vsel %vm517, %v515, %v461
      %v543 = vsel %vm517, %v516, %v463
      %v544 = vpack.c.bf16 %v518, %v518
      %v545 = vpack.c.bf16 %v519, %v519
      %v546 = vpack.c.bf16 %v520, %v520
      %v547 = vpack.c.bf16 %v521, %v521
      %v548 = vpack.c.bf16 %v522, %v522
      %v549 = vpack.c.bf16 %v523, %v523
      %v550 = vpack.c.bf16 %v524, %v524
      %v551 = vpack.c.bf16 %v525, %v525
      %v552 = vpack.c.bf16 %v526, %v526
      %v553 = vpack.c.bf16 %v527, %v527
      %v554 = vpack.c.bf16 %v528, %v528
      %v555 = vpack.c.bf16 %v529, %v529
      %v556 = vpack.c.bf16 %v530, %v530
      %v557 = vpack.c.bf16 %v531, %v531
      %v558 = vpack.c.bf16 %v532, %v532
      %v559 = vpack.c.bf16 %v533, %v533
      %v560 = vpack.c.bf16 %v534, %v534
      %v561 = vpack.c.bf16 %v535, %v535
      %v562 = vpack.c.bf16 %v536, %v536
      %v563 = vpack.c.bf16 %v537, %v537
      %v564 = vpack.c.bf16 %v538, %v538
      %v565 = vpack.c.bf16 %v539, %v539
      %v566 = vpack.c.bf16 %v540, %v540
      %v567 = vpack.c.bf16 %v541, %v541
      %v568 = vpack.c.bf16 %v542, %v542
      %v569 = vpack.c.bf16 %v543, %v543
      %v570 = vld [vmem:[%s1] sm:$0xf]
      %v571 = vld [vmem:[%s1 + $0x4] sm:$0xf]
      %v572 = vld [vmem:[%s1 + $0x8] sm:$0xf]
      %v573 = vld [vmem:[%s1 + $0xc] sm:$0xf]
      %v574 = vld [vmem:[%s1 + $0x10] sm:$0xf]
      %v575 = vld [vmem:[%s1 + $0x14] sm:$0xf]
      %s576 = scalar_lea.vmem %s1, 24
      %v577 = vld [vmem:[%s576] sm:$0xf]
      %v578 = vld [vmem:[%s576 + $0x4] sm:$0xf]
      %v579 = vld [vmem:[%s576 + $0x8] sm:$0xf]
      %v580 = vld [vmem:[%s576 + $0xc] sm:$0xf]
      %v581 = vld [vmem:[%s576 + $0x10] sm:$0xf]
      %v582 = vld [vmem:[%s576 + $0x14] sm:$0xf]
      %v605 = vunpack.c.l.b16 %v546
      %v606 = vunpack.c.l.b16 %v547
      %v607 = vunpack.c.l.b16 %v548
      %v608 = vunpack.c.l.b16 %v549
      %v609 = vunpack.c.l.b16 %v550
      %v610 = vunpack.c.l.b16 %v551
      %v611 = vunpack.c.l.b16 %v552
      %v612 = vunpack.c.l.b16 %v553
      %v613 = vunpack.c.l.b16 %v554
      %v614 = vunpack.c.l.b16 %v555
      %v615 = vunpack.c.l.b16 %v556
      %v616 = vunpack.c.l.b16 %v557
      %v617 = vunpack.c.l.b16 %v558
      %v618 = vunpack.c.l.b16 %v559
      %v619 = vunpack.c.l.b16 %v560
      %v620 = vunpack.c.l.b16 %v561
      %v621 = vunpack.c.l.b16 %v562
      %v622 = vunpack.c.l.b16 %v563
      %v623 = vunpack.c.l.b16 %v564
      %v624 = vunpack.c.l.b16 %v565
      %v625 = vunpack.c.l.b16 %v566
      %v626 = vunpack.c.l.b16 %v567
      %v627 = vpack.c.b16 %v606, %v605
      %v628 = vpack.c.b16 %v608, %v607
      %v629 = vpack.c.b16 %v610, %v609
      %v630 = vpack.c.b16 %v612, %v611
      %v631 = vpack.c.b16 %v614, %v613
      %v632 = vpack.c.b16 %v616, %v615
      %v633 = vpack.c.b16 %v618, %v617
      %v634 = vpack.c.b16 %v620, %v619
      %v635 = vpack.c.b16 %v622, %v621
      %v636 = vpack.c.b16 %v624, %v623
      %v637 = vpack.c.b16 %v626, %v625
      %v644 = vunpack.c.l.b16 %v577
      %v645 = vunpack.c.l.b16 %v578
      %v646 = vunpack.c.l.b16 %v579
      %v647 = vunpack.c.l.b16 %v580
      %v648 = vunpack.c.l.b16 %v581
      %v649 = vunpack.c.l.b16 %v582
      %v650 = vpack.c.b16 %v645, %v644
      %v651 = vpack.c.b16 %v647, %v646
      %v652 = vpack.c.b16 %v649, %v648
      %vm656 = vcmask 392192
      %v658 = vsel %vm656, %v627, 0
      %v661 = vsel %vm656, %v628, 0
      %v664 = vsel %vm656, %v629, 0
      %v667 = vsel %vm656, %v630, 0
      %v670 = vsel %vm656, %v631, 0
      %v673 = vsel %vm656, %v632, 0
      %v676 = vsel %vm656, %v633, 0
      %v679 = vsel %vm656, %v634, 0
      %v682 = vsel %vm656, %v635, 0
      %v685 = vsel %vm656, %v636, 0
      %v688 = vsel %vm656, %v637, 0
      %690 = vmatpush.bf16.msra.mxu0 0
      %691 = vmatpush.bf16.msra.mxu0 0
      %692 = vmatpush.bf16.msra.mxu0 0
      %693 = vmatpush.bf16.msra.mxu0 0
      %694 = vmatpush.bf16.msra.mxu0 0
      %695 = vmatpush.bf16.msra.mxu0 %v652
      %696 = vmatpush.bf16.msra.mxu0 %v651
      %697 = vmatpush.bf16.msra.mxu0 %v650
      %698 = vmatmul.bf16.gmra.mxu0 %v658
      %v699 = vpop.f32.mrf.mxu0
      %v700 = vadd.f32 0.0, %v699
      %v701 = vpop.f32.mrf.mxu0
      %v702 = vadd.f32 0.0, %v701
      %703 = vmatmul.bf16.gmra.mxu0 %v661
      %v704 = vpop.f32.mrf.mxu0
      %v705 = vadd.f32 0.0, %v704
      %v706 = vpop.f32.mrf.mxu0
      %v707 = vadd.f32 0.0, %v706
      %708 = vmatmul.bf16.gmra.mxu0 %v664
      %v709 = vpop.f32.mrf.mxu0
      %v710 = vadd.f32 0.0, %v709
      %v711 = vpop.f32.mrf.mxu0
      %v712 = vadd.f32 0.0, %v711
      %713 = vmatmul.bf16.gmra.mxu0 %v667
      %v714 = vpop.f32.mrf.mxu0
      %v715 = vadd.f32 0.0, %v714
      %v716 = vpop.f32.mrf.mxu0
      %v717 = vadd.f32 0.0, %v716
      %718 = vmatmul.bf16.gmra.mxu0 %v670
      %v719 = vpop.f32.mrf.mxu0
      %v720 = vadd.f32 0.0, %v719
      %v721 = vpop.f32.mrf.mxu0
      %v722 = vadd.f32 0.0, %v721
      %723 = vmatmul.bf16.gmra.mxu0 %v673
      %v724 = vpop.f32.mrf.mxu0
      %v725 = vadd.f32 0.0, %v724
      %v726 = vpop.f32.mrf.mxu0
      %v727 = vadd.f32 0.0, %v726
      %728 = vmatmul.bf16.gmra.mxu0 %v676
      %v729 = vpop.f32.mrf.mxu0
      %v730 = vadd.f32 0.0, %v729
      %v731 = vpop.f32.mrf.mxu0
      %v732 = vadd.f32 0.0, %v731
      %733 = vmatmul.bf16.gmra.mxu0 %v679
      %v734 = vpop.f32.mrf.mxu0
      %v735 = vadd.f32 0.0, %v734
      %v736 = vpop.f32.mrf.mxu0
      %v737 = vadd.f32 0.0, %v736
      %738 = vmatmul.bf16.gmra.mxu0 %v682
      %v739 = vpop.f32.mrf.mxu0
      %v740 = vadd.f32 0.0, %v739
      %v741 = vpop.f32.mrf.mxu0
      %v742 = vadd.f32 0.0, %v741
      %743 = vmatmul.bf16.gmra.mxu0 %v685
      %v744 = vpop.f32.mrf.mxu0
      %v745 = vadd.f32 0.0, %v744
      %v746 = vpop.f32.mrf.mxu0
      %v747 = vadd.f32 0.0, %v746
      %748 = vmatmul.bf16.gmra.mxu0 %v688
      %v749 = vpop.f32.mrf.mxu0
      %v750 = vadd.f32 0.0, %v749
      %v751 = vpop.f32.mrf.mxu0
      %v752 = vadd.f32 0.0, %v751
      %753 = vdwg.mxu0
      %v756 = vunpack.c.l.b16 %v544
      %v757 = vunpack.c.l.b16 %v545
      %v758 = vpack.c.b16 %v757, %v756
      %v765 = vunpack.c.l.b16 %v570
      %v766 = vunpack.c.l.b16 %v571
      %v767 = vunpack.c.l.b16 %v572
      %v768 = vunpack.c.l.b16 %v573
      %v769 = vunpack.c.l.b16 %v574
      %v770 = vunpack.c.l.b16 %v575
      %v771 = vpack.c.b16 %v766, %v765
      %v772 = vpack.c.b16 %v768, %v767
      %v773 = vpack.c.b16 %v770, %v769
      %v778 = vsel %vm656, %v758, 0
      %780 = vmatpush.bf16.msra.mxu0 0
      %781 = vmatpush.bf16.msra.mxu0 0
      %782 = vmatpush.bf16.msra.mxu0 0
      %783 = vmatpush.bf16.msra.mxu0 0
      %784 = vmatpush.bf16.msra.mxu0 0
      %785 = vmatpush.bf16.msra.mxu0 %v773
      %786 = vmatpush.bf16.msra.mxu0 %v772
      %787 = vmatpush.bf16.msra.mxu0 %v771
      %788 = vmatmul.bf16.gmra.mxu0 %v778
      %v789 = vpop.f32.mrf.mxu0
      %v790 = vadd.f32 %v700, %v789
      %v791 = vpop.f32.mrf.mxu0
      %v792 = vadd.f32 %v702, %v791
      %793 = vmatmul.bf16.gmra.mxu0 %v658
      %v794 = vpop.f32.mrf.mxu0
      %v795 = vadd.f32 %v705, %v794
      %v796 = vpop.f32.mrf.mxu0
      %v797 = vadd.f32 %v707, %v796
      %798 = vmatmul.bf16.gmra.mxu0 %v661
      %v799 = vpop.f32.mrf.mxu0
      %v800 = vadd.f32 %v710, %v799
      %v801 = vpop.f32.mrf.mxu0
      %v802 = vadd.f32 %v712, %v801
      %803 = vmatmul.bf16.gmra.mxu0 %v664
      %v804 = vpop.f32.mrf.mxu0
      %v805 = vadd.f32 %v715, %v804
      %v806 = vpop.f32.mrf.mxu0
      %v807 = vadd.f32 %v717, %v806
      %808 = vmatmul.bf16.gmra.mxu0 %v667
      %v809 = vpop.f32.mrf.mxu0
      %v810 = vadd.f32 %v720, %v809
      %v811 = vpop.f32.mrf.mxu0
      %v812 = vadd.f32 %v722, %v811
      %813 = vmatmul.bf16.gmra.mxu0 %v670
      %v814 = vpop.f32.mrf.mxu0
      %v815 = vadd.f32 %v725, %v814
      %v816 = vpop.f32.mrf.mxu0
      %v817 = vadd.f32 %v727, %v816
      %818 = vmatmul.bf16.gmra.mxu0 %v673
      %v819 = vpop.f32.mrf.mxu0
      %v820 = vadd.f32 %v730, %v819
      %v821 = vpop.f32.mrf.mxu0
      %v822 = vadd.f32 %v732, %v821
      %823 = vmatmul.bf16.gmra.mxu0 %v676
      %v824 = vpop.f32.mrf.mxu0
      %v825 = vadd.f32 %v735, %v824
      %v826 = vpop.f32.mrf.mxu0
      %v827 = vadd.f32 %v737, %v826
      %828 = vmatmul.bf16.gmra.mxu0 %v679
      %v829 = vpop.f32.mrf.mxu0
      %v830 = vadd.f32 %v740, %v829
      %v831 = vpop.f32.mrf.mxu0
      %v832 = vadd.f32 %v742, %v831
      %833 = vmatmul.bf16.gmra.mxu0 %v682
      %v834 = vpop.f32.mrf.mxu0
      %v835 = vadd.f32 %v745, %v834
      %v836 = vpop.f32.mrf.mxu0
      %v837 = vadd.f32 %v747, %v836
      %838 = vmatmul.bf16.gmra.mxu0 %v685
      %v839 = vpop.f32.mrf.mxu0
      %v840 = vadd.f32 %v750, %v839
      %v841 = vpop.f32.mrf.mxu0
      %v842 = vadd.f32 %v752, %v841
      %843 = vdwg.mxu0
      %s844 = scalar_lea.vmem %s1, 48
      %v845 = vld [vmem:[%s844] sm:$0xf]
      %v846 = vld [vmem:[%s844 + $0x4] sm:$0xf]
      %v847 = vld [vmem:[%s844 + $0x8] sm:$0xf]
      %v848 = vld [vmem:[%s844 + $0xc] sm:$0xf]
      %v849 = vld [vmem:[%s844 + $0x10] sm:$0xf]
      %v850 = vld [vmem:[%s844 + $0x14] sm:$0xf]
      %v853 = vunpack.c.l.b16 %v568
      %v854 = vunpack.c.l.b16 %v569
      %v855 = vpack.c.b16 %v854, %v853
      %v862 = vunpack.c.l.b16 %v845
      %v863 = vunpack.c.l.b16 %v846
      %v864 = vunpack.c.l.b16 %v847
      %v865 = vunpack.c.l.b16 %v848
      %v866 = vunpack.c.l.b16 %v849
      %v867 = vunpack.c.l.b16 %v850
      %v868 = vpack.c.b16 %v863, %v862
      %v869 = vpack.c.b16 %v865, %v864
      %v870 = vpack.c.b16 %v867, %v866
      %v875 = vsel %vm656, %v855, 0
      %877 = vmatpush.bf16.msra.mxu0 0
      %878 = vmatpush.bf16.msra.mxu0 0
      %879 = vmatpush.bf16.msra.mxu0 0
      %880 = vmatpush.bf16.msra.mxu0 0
      %881 = vmatpush.bf16.msra.mxu0 0
      %882 = vmatpush.bf16.msra.mxu0 %v870
      %883 = vmatpush.bf16.msra.mxu0 %v869
      %884 = vmatpush.bf16.msra.mxu0 %v868
      %885 = vmatmul.bf16.gmra.mxu0 %v661
      %v886 = vpop.f32.mrf.mxu0
      %v887 = vadd.f32 0.0, %v886
      %v888 = vpop.f32.mrf.mxu0
      %v889 = vadd.f32 0.0, %v888
      %890 = vmatmul.bf16.gmra.mxu0 %v664
      %v891 = vpop.f32.mrf.mxu0
      %v892 = vadd.f32 0.0, %v891
      %v893 = vpop.f32.mrf.mxu0
      %v894 = vadd.f32 0.0, %v893
      %895 = vmatmul.bf16.gmra.mxu0 %v667
      %v896 = vpop.f32.mrf.mxu0
      %v897 = vadd.f32 0.0, %v896
      %v898 = vpop.f32.mrf.mxu0
      %v899 = vadd.f32 0.0, %v898
      %900 = vmatmul.bf16.gmra.mxu0 %v670
      %v901 = vpop.f32.mrf.mxu0
      %v902 = vadd.f32 0.0, %v901
      %v903 = vpop.f32.mrf.mxu0
      %v904 = vadd.f32 0.0, %v903
      %905 = vmatmul.bf16.gmra.mxu0 %v673
      %v906 = vpop.f32.mrf.mxu0
      %v907 = vadd.f32 0.0, %v906
      %v908 = vpop.f32.mrf.mxu0
      %v909 = vadd.f32 0.0, %v908
      %910 = vmatmul.bf16.gmra.mxu0 %v676
      %v911 = vpop.f32.mrf.mxu0
      %v912 = vadd.f32 0.0, %v911
      %v913 = vpop.f32.mrf.mxu0
      %v914 = vadd.f32 0.0, %v913
      %915 = vmatmul.bf16.gmra.mxu0 %v679
      %v916 = vpop.f32.mrf.mxu0
      %v917 = vadd.f32 0.0, %v916
      %v918 = vpop.f32.mrf.mxu0
      %v919 = vadd.f32 0.0, %v918
      %920 = vmatmul.bf16.gmra.mxu0 %v682
      %v921 = vpop.f32.mrf.mxu0
      %v922 = vadd.f32 0.0, %v921
      %v923 = vpop.f32.mrf.mxu0
      %v924 = vadd.f32 0.0, %v923
      %925 = vmatmul.bf16.gmra.mxu0 %v685
      %v926 = vpop.f32.mrf.mxu0
      %v927 = vadd.f32 0.0, %v926
      %v928 = vpop.f32.mrf.mxu0
      %v929 = vadd.f32 0.0, %v928
      %930 = vmatmul.bf16.gmra.mxu0 %v688
      %v931 = vpop.f32.mrf.mxu0
      %v932 = vadd.f32 0.0, %v931
      %v933 = vpop.f32.mrf.mxu0
      %v934 = vadd.f32 0.0, %v933
      %935 = vmatmul.bf16.gmra.mxu0 %v875
      %v936 = vpop.f32.mrf.mxu0
      %v937 = vadd.f32 0.0, %v936
      %v938 = vpop.f32.mrf.mxu0
      %v939 = vadd.f32 0.0, %v938
      %940 = vdwg.mxu0
      %v941 = vadd.f32 %v790, %v887
      %v942 = vadd.f32 %v792, %v889
      %v943 = vadd.f32 %v795, %v892
      %v944 = vadd.f32 %v797, %v894
      %v945 = vadd.f32 %v800, %v897
      %v946 = vadd.f32 %v802, %v899
      %v947 = vadd.f32 %v805, %v902
      %v948 = vadd.f32 %v807, %v904
      %v949 = vadd.f32 %v810, %v907
      %v950 = vadd.f32 %v812, %v909
      %v951 = vadd.f32 %v815, %v912
      %v952 = vadd.f32 %v817, %v914
      %v953 = vadd.f32 %v820, %v917
      %v954 = vadd.f32 %v822, %v919
      %v955 = vadd.f32 %v825, %v922
      %v956 = vadd.f32 %v827, %v924
      %v957 = vadd.f32 %v830, %v927
      %v958 = vadd.f32 %v832, %v929
      %v959 = vadd.f32 %v835, %v932
      %v960 = vadd.f32 %v837, %v934
      %v961 = vadd.f32 %v840, %v937
      %v962 = vadd.f32 %v842, %v939
      %v963 = vld [vmem:[%s2] sm:$0x1]
      %v965 = vperm.slane %v963, 0
      %v967 = vadd.f32 %v941, %v965
      %v968 = vadd.f32 %v942, %v965
      %v969 = vadd.f32 %v943, %v965
      %v970 = vadd.f32 %v944, %v965
      %v971 = vadd.f32 %v945, %v965
      %v972 = vadd.f32 %v946, %v965
      %v973 = vadd.f32 %v947, %v965
      %v974 = vadd.f32 %v948, %v965
      %v975 = vadd.f32 %v949, %v965
      %v976 = vadd.f32 %v950, %v965
      %v977 = vadd.f32 %v951, %v965
      %v978 = vadd.f32 %v952, %v965
      %v979 = vadd.f32 %v953, %v965
      %v980 = vadd.f32 %v954, %v965
      %v981 = vadd.f32 %v955, %v965
      %v982 = vadd.f32 %v956, %v965
      %v983 = vadd.f32 %v957, %v965
      %v984 = vadd.f32 %v958, %v965
      %v985 = vadd.f32 %v959, %v965
      %v986 = vadd.f32 %v960, %v965
      %v987 = vadd.f32 %v961, %v965
      %v988 = vadd.f32 %v962, %v965
      %989 = vst.msk [vmem:[%s170] sm:$0xff] %vm490, %v967
      %990 = vst.msk [vmem:[%s170 + $0x8] sm:$0xff] %vm490, %v968
      %991 = vst.msk [vmem:[%s170 + $0x10] sm:$0xff] %vm490, %v969
      %992 = vst.msk [vmem:[%s170 + $0x18] sm:$0xff] %vm490, %v970
      %993 = vst.msk [vmem:[%s170 + $0x20] sm:$0xff] %vm490, %v971
      %994 = vst.msk [vmem:[%s170 + $0x28] sm:$0xff] %vm490, %v972
      %995 = vst.msk [vmem:[%s170 + $0x30] sm:$0xff] %vm490, %v973
      %996 = vst.msk [vmem:[%s170 + $0x38] sm:$0xff] %vm490, %v974
      %997 = vst.msk [vmem:[%s170 + $0x40] sm:$0xff] %vm490, %v975
      %998 = vst.msk [vmem:[%s170 + $0x48] sm:$0xff] %vm490, %v976
      %999 = vst.msk [vmem:[%s170 + $0x50] sm:$0xff] %vm490, %v977
      %1000 = vst.msk [vmem:[%s170 + $0x58] sm:$0xff] %vm490, %v978
      %1001 = vst.msk [vmem:[%s170 + $0x60] sm:$0xff] %vm490, %v979
      %1002 = vst.msk [vmem:[%s170 + $0x68] sm:$0xff] %vm490, %v980
      %1003 = vst.msk [vmem:[%s170 + $0x70] sm:$0xff] %vm490, %v981
      %1004 = vst.msk [vmem:[%s170 + $0x78] sm:$0xff] %vm490, %v982
      %1005 = vst.msk [vmem:[%s170 + $0x80] sm:$0xff] %vm490, %v983
      %1006 = vst.msk [vmem:[%s170 + $0x88] sm:$0xff] %vm490, %v984
      %1007 = vst.msk [vmem:[%s170 + $0x90] sm:$0xff] %vm490, %v985
      %1008 = vst.msk [vmem:[%s170 + $0x98] sm:$0xff] %vm490, %v986
      %1009 = vst.msk [vmem:[%s170 + $0xa0] sm:$0xff] %vm490, %v987
      %1010 = vst.msk [vmem:[%s170 + $0xa8] sm:$0xff] %vm490, %v988
      %p1011 = scmp.lt.s32.totalorder %s14, 1
      %s1012 = scalar_select %p1011, %s14, 1
      %s1013 = smul.addr %s1012, 22
      %s1014 = smul.addr %s1013, 8
      %s1015 = scalar_lea.vmem %s3, %s1014
      // Predicated region
      $region33: #{pyraconvblock_forward.11} parent=31 // pred_check
        %p1016 = pneg %p100
      $region34: #{pyraconvblock_forward.11} parent=31 // pred_check_branch
        %1018 = sbr.rel (%p1016) target = $region36
      $region35: #{pyraconvblock_forward.11} parent=31 // pred_region
        _
      $region36: #{pyraconvblock_forward.11} parent=31 // pred_fallthru
        _
    $region32: #{pyraconvblock_forward.11} parent=5 // pred_fallthru
      _
    %p1019 = scmp.le.s32.totalorder 2, %s9
    // Predicated region
    $region37: #{pyraconvblock_forward.11} parent=5 // pred_check
      %p1020 = pneg %p1019
    $region38: #{pyraconvblock_forward.11} parent=5 // pred_check_branch
      %1022 = sbr.rel (%p1020) target = $region40
    $region39: #{pyraconvblock_forward.11} parent=5 // pred_region
      %s1023 = ssub.s32 %s9, 2
      // Predicated region
      $region41: #{pyraconvblock_forward.11} parent=39 // pred_check
        %p1024 = pneg %p106
      $region42: #{pyraconvblock_forward.11} parent=39 // pred_check_branch
        %1026 = sbr.rel (%p1024) target = $region44
      $region43: #{pyraconvblock_forward.11} parent=39 // pred_region
        %p1027 = scmp.lt.s32.totalorder %s15, 1
        %s1028 = scalar_select %p1027, %s15, 1
        %s1029 = smul.addr %s1028, 22
        %s1030 = smul.addr %s1029, 8
        %s1031 = scalar_lea.vmem %s3, %s1030
      $region44: #{pyraconvblock_forward.11} parent=39 // pred_fallthru
        _
    $region40: #{pyraconvblock_forward.11} parent=5 // pred_fallthru
      _
  $region6: #{pyraconvblock_forward.11} parent=0 // loop_footer
    %s13 = sadd.s32 1, %s9
  $region7: #{pyraconvblock_forward.11} parent=0 // loop_footer_branch
    %8 = sbr.rel target = $region3
  $region8: #{pyraconvblock_forward.11} parent=0 // loop_exit
    _

// kernel: pyraconvblock_forward.13
$region0: #{pyraconvblock_forward.13}
  #allocation0 [shape = 'u32[]', space=smem, size = 0x4, offset = 0x4, fixed_abs, tag = 'smem constant byte address 0x4 - core index']
  #allocation1 [shape = 'u32[72,128]{1,0:T(1,128)}', space=vmem, size = 0x9000, scoped, tag = 'internal scratch']
  %s0 = inlined_call_operand.vmem [shape: f32[512,16], index: 0, kind: input, shape index: {}]
  %s1 = inlined_call_operand.vmem [shape: f32[1,16], index: 1, kind: output, shape index: {0}]
  %s2 = inlined_call_operand.vmem [shape: f32[1,16], index: 2, kind: output, shape index: {1}]
  %3 = xla_tuple %s1, %s2
  %s4 = sld [smem:[#allocation0]]
  $region22: #{pyraconvblock_forward.13} parent=0
    _
  %s6 = ssub.s32 1, %s4
  %s7 = scalar_select 0, %s6, %s4
  // Predicated region
  $region2: #{pyraconvblock_forward.13} parent=0 // pred_check
    _
  $region3: #{pyraconvblock_forward.13} parent=0 // pred_check_branch
    %9 = sbr.rel (0) target = $region5
  $region4: #{pyraconvblock_forward.13} parent=0 // pred_region
    _
  $region5: #{pyraconvblock_forward.13} parent=0 // pred_fallthru
    _
  %v10 = vld [vmem:[%s0] sm:$0xff]
  %v11 = vld [vmem:[%s0 + $0x8] sm:$0xff]
  %v12 = vld [vmem:[%s0 + $0x10] sm:$0xff]
  %v13 = vld [vmem:[%s0 + $0x18] sm:$0xff]
  %v14 = vld [vmem:[%s0 + $0x20] sm:$0xff]
  %v15 = vld [vmem:[%s0 + $0x28] sm:$0xff]
  %v16 = vld [vmem:[%s0 + $0x30] sm:$0xff]
  %v17 = vld [vmem:[%s0 + $0x38] sm:$0xff]
  %v18 = vld [vmem:[%s0 + $0x40] sm:$0xff]
  %v19 = vld [vmem:[%s0 + $0x48] sm:$0xff]
  %v20 = vld [vmem:[%s0 + $0x50] sm:$0xff]
  %v21 = vld [vmem:[%s0 + $0x58] sm:$0xff]
  %v22 = vld [vmem:[%s0 + $0x60] sm:$0xff]
  %v23 = vld [vmem:[%s0 + $0x68] sm:$0xff]
  %v24 = vld [vmem:[%s0 + $0x70] sm:$0xff]
  %v25 = vld [vmem:[%s0 + $0x78] sm:$0xff]
  %v26 = vld [vmem:[%s0 + $0x80] sm:$0xff]
  %v27 = vld [vmem:[%s0 + $0x88] sm:$0xff]
  %v28 = vld [vmem:[%s0 + $0x90] sm:$0xff]
  %v29 = vld [vmem:[%s0 + $0x98] sm:$0xff]
  %v30 = vld [vmem:[%s0 + $0xa0] sm:$0xff]
  %v31 = vld [vmem:[%s0 + $0xa8] sm:$0xff]
  %v32 = vld [vmem:[%s0 + $0xb0] sm:$0xff]
  %v33 = vld [vmem:[%s0 + $0xb8] sm:$0xff]
  %v34 = vld [vmem:[%s0 + $0xc0] sm:$0xff]
  %v35 = vld [vmem:[%s0 + $0xc8] sm:$0xff]
  %v36 = vld [vmem:[%s0 + $0xd0] sm:$0xff]
  %v37 = vld [vmem:[%s0 + $0xd8] sm:$0xff]
  %v38 = vld [vmem:[%s0 + $0xe0] sm:$0xff]
  %v39 = vld [vmem:[%s0 + $0xe8] sm:$0xff]
  %v40 = vld [vmem:[%s0 + $0xf0] sm:$0xff]
  %v41 = vld [vmem:[%s0 + $0xf8] sm:$0xff]
  %v42 = vld [vmem:[%s0 + $0x100] sm:$0xff]
  %v43 = vld [vmem:[%s0 + $0x108] sm:$0xff]
  %v44 = vld [vmem:[%s0 + $0x110] sm:$0xff]
  %v45 = vld [vmem:[%s0 + $0x118] sm:$0xff]
  %v46 = vld [vmem:[%s0 + $0x120] sm:$0xff]
  %v47 = vld [vmem:[%s0 + $0x128] sm:$0xff]
  %v48 = vld [vmem:[%s0 + $0x130] sm:$0xff]
  %v49 = vld [vmem:[%s0 + $0x138] sm:$0xff]
  %v50 = vld [vmem:[%s0 + $0x140] sm:$0xff]
  %v51 = vld [vmem:[%s0 + $0x148] sm:$0xff]
  %v52 = vld [vmem:[%s0 + $0x150] sm:$0xff]
  %v53 = vld [vmem:[%s0 + $0x158] sm:$0xff]
  %v54 = vld [vmem:[%s0 + $0x160] sm:$0xff]
  %v55 = vld [vmem:[%s0 + $0x168] sm:$0xff]
  %v56 = vld [vmem:[%s0 + $0x170] sm:$0xff]
  %v57 = vld [vmem:[%s0 + $0x178] sm:$0xff]
  %v58 = vld [vmem:[%s0 + $0x180] sm:$0xff]
  %v59 = vld [vmem:[%s0 + $0x188] sm:$0xff]
  %v60 = vld [vmem:[%s0 + $0x190] sm:$0xff]
  %v61 = vld [vmem:[%s0 + $0x198] sm:$0xff]
  %v62 = vld [vmem:[%s0 + $0x1a0] sm:$0xff]
  %v63 = vld [vmem:[%s0 + $0x1a8] sm:$0xff]
  %v64 = vld [vmem:[%s0 + $0x1b0] sm:$0xff]
  %v65 = vld [vmem:[%s0 + $0x1b8] sm:$0xff]
  %v66 = vld [vmem:[%s0 + $0x1c0] sm:$0xff]
  %v67 = vld [vmem:[%s0 + $0x1c8] sm:$0xff]
  %v68 = vld [vmem:[%s0 + $0x1d0] sm:$0xff]
  %v69 = vld [vmem:[%s0 + $0x1d8] sm:$0xff]
  %v70 = vld [vmem:[%s0 + $0x1e0] sm:$0xff]
  %v71 = vld [vmem:[%s0 + $0x1e8] sm:$0xff]
  %v72 = vld [vmem:[%s0 + $0x1f0] sm:$0xff]
  %v73 = vld [vmem:[%s0 + $0x1f8] sm:$0xff]
  %vm74 = vcmask 130048
  %v75 = vsel %vm74, %v10, 0.0
  %v76 = vsel %vm74, %v11, 0.0
  %v77 = vadd.f32 %v75, %v76
  %v78 = vsel %vm74, %v12, 0.0
  %v79 = vadd.f32 %v77, %v78
  %v80 = vsel %vm74, %v13, 0.0
  %v81 = vadd.f32 %v79, %v80
  %v82 = vsel %vm74, %v14, 0.0
  %v83 = vadd.f32 %v81, %v82
  %v84 = vsel %vm74, %v15, 0.0
  %v85 = vadd.f32 %v83, %v84
  %v86 = vsel %vm74, %v16, 0.0
  %v87 = vadd.f32 %v85, %v86
  %v88 = vsel %vm74, %v17, 0.0
  %v89 = vadd.f32 %v87, %v88
  %v90 = vsel %vm74, %v18, 0.0
  %v91 = vadd.f32 %v89, %v90
  %v92 = vsel %vm74, %v19, 0.0
  %v93 = vadd.f32 %v91, %v92
  %v94 = vsel %vm74, %v20, 0.0
  %v95 = vadd.f32 %v93, %v94
  %v96 = vsel %vm74, %v21, 0.0
  %v97 = vadd.f32 %v95, %v96
  %v98 = vsel %vm74, %v22, 0.0
  %v99 = vadd.f32 %v97, %v98
  %v100 = vsel %vm74, %v23, 0.0
  %v101 = vadd.f32 %v99, %v100
  %v102 = vsel %vm74, %v24, 0.0
  %v103 = vadd.f32 %v101, %v102
  %v104 = vsel %vm74, %v25, 0.0
  %v105 = vadd.f32 %v103, %v104
  %v106 = vsel %vm74, %v26, 0.0
  %v107 = vadd.f32 %v105, %v106
  %v108 = vsel %vm74, %v27, 0.0
  %v109 = vadd.f32 %v107, %v108
  %v110 = vsel %vm74, %v28, 0.0
  %v111 = vadd.f32 %v109, %v110
  %v112 = vsel %vm74, %v29, 0.0
  %v113 = vadd.f32 %v111, %v112
  %v114 = vsel %vm74, %v30, 0.0
  %v115 = vadd.f32 %v113, %v114
  %v116 = vsel %vm74, %v31, 0.0
  %v117 = vadd.f32 %v115, %v116
  %v118 = vsel %vm74, %v32, 0.0
  %v119 = vadd.f32 %v117, %v118
  %v120 = vsel %vm74, %v33, 0.0
  %v121 = vadd.f32 %v119, %v120
  %v122 = vsel %vm74, %v34, 0.0
  %v123 = vadd.f32 %v121, %v122
  %v124 = vsel %vm74, %v35, 0.0
  %v125 = vadd.f32 %v123, %v124
  %v126 = vsel %vm74, %v36, 0.0
  %v127 = vadd.f32 %v125, %v126
  %v128 = vsel %vm74, %v37, 0.0
  %v129 = vadd.f32 %v127, %v128
  %v130 = vsel %vm74, %v38, 0.0
  %v131 = vadd.f32 %v129, %v130
  %v132 = vsel %vm74, %v39, 0.0
  %v133 = vadd.f32 %v131, %v132
  %v134 = vsel %vm74, %v40, 0.0
  %v135 = vadd.f32 %v133, %v134
  %v136 = vsel %vm74, %v41, 0.0
  %v137 = vadd.f32 %v135, %v136
  %v138 = vsel %vm74, %v42, 0.0
  %v139 = vadd.f32 %v137, %v138
  %v140 = vsel %vm74, %v43, 0.0
  %v141 = vadd.f32 %v139, %v140
  %v142 = vsel %vm74, %v44, 0.0
  %v143 = vadd.f32 %v141, %v142
  %v144 = vsel %vm74, %v45, 0.0
  %v145 = vadd.f32 %v143, %v144
  %v146 = vsel %vm74, %v46, 0.0
  %v147 = vadd.f32 %v145, %v146
  %v148 = vsel %vm74, %v47, 0.0
  %v149 = vadd.f32 %v147, %v148
  %v150 = vsel %vm74, %v48, 0.0
  %v151 = vadd.f32 %v149, %v150
  %v152 = vsel %vm74, %v49, 0.0
  %v153 = vadd.f32 %v151, %v152
  %v154 = vsel %vm74, %v50, 0.0
  %v155 = vadd.f32 %v153, %v154
  %v156 = vsel %vm74, %v51, 0.0
  %v157 = vadd.f32 %v155, %v156
  %v158 = vsel %vm74, %v52, 0.0
  %v159 = vadd.f32 %v157, %v158
  %v160 = vsel %vm74, %v53, 0.0
  %v161 = vadd.f32 %v159, %v160
  %v162 = vsel %vm74, %v54, 0.0
  %v163 = vadd.f32 %v161, %v162
  %v164 = vsel %vm74, %v55, 0.0
  %v165 = vadd.f32 %v163, %v164
  %v166 = vsel %vm74, %v56, 0.0
  %v167 = vadd.f32 %v165, %v166
  %v168 = vsel %vm74, %v57, 0.0
  %v169 = vadd.f32 %v167, %v168
  %v170 = vsel %vm74, %v58, 0.0
  %v171 = vadd.f32 %v169, %v170
  %v172 = vsel %vm74, %v59, 0.0
  %v173 = vadd.f32 %v171, %v172
  %v174 = vsel %vm74, %v60, 0.0
  %v175 = vadd.f32 %v173, %v174
  %v176 = vsel %vm74, %v61, 0.0
  %v177 = vadd.f32 %v175, %v176
  %v178 = vsel %vm74, %v62, 0.0
  %v179 = vadd.f32 %v177, %v178
  %v180 = vsel %vm74, %v63, 0.0
  %v181 = vadd.f32 %v179, %v180
  %v182 = vsel %vm74, %v64, 0.0
  %v183 = vadd.f32 %v181, %v182
  %v184 = vsel %vm74, %v65, 0.0
  %v185 = vadd.f32 %v183, %v184
  %v186 = vsel %vm74, %v66, 0.0
  %v187 = vadd.f32 %v185, %v186
  %v188 = vsel %vm74, %v67, 0.0
  %v189 = vadd.f32 %v187, %v188
  %v190 = vsel %vm74, %v68, 0.0
  %v191 = vadd.f32 %v189, %v190
  %v192 = vsel %vm74, %v69, 0.0
  %v193 = vadd.f32 %v191, %v192
  %v194 = vsel %vm74, %v70, 0.0
  %v195 = vadd.f32 %v193, %v194
  %v196 = vsel %vm74, %v71, 0.0
  %v197 = vadd.f32 %v195, %v196
  %v198 = vsel %vm74, %v72, 0.0
  %v199 = vadd.f32 %v197, %v198
  %v200 = vsel %vm74, %v73, 0.0
  %v201 = vadd.f32 %v199, %v200
  %v202 = vrot.slane %v201, 4
  %v203 = vadd.f32 %v201, %v202
  %v204 = vrot.slane %v203, 2
  %v205 = vadd.f32 %v203, %v204
  %v206 = vrot.slane %v205, 1
  %v207 = vadd.f32 %v205, %v206
  %v208 = vmul.f32 %v10, %v10
  %v209 = vmul.f32 %v11, %v11
  %v210 = vmul.f32 %v12, %v12
  %v211 = vmul.f32 %v13, %v13
  %v212 = vmul.f32 %v14, %v14
  %v213 = vmul.f32 %v15, %v15
  %v214 = vmul.f32 %v16, %v16
  %v215 = vmul.f32 %v17, %v17
  %v216 = vmul.f32 %v18, %v18
  %v217 = vmul.f32 %v19, %v19
  %v218 = vmul.f32 %v20, %v20
  %v219 = vmul.f32 %v21, %v21
  %v220 = vmul.f32 %v22, %v22
  %v221 = vmul.f32 %v23, %v23
  %v222 = vmul.f32 %v24, %v24
  %v223 = vmul.f32 %v25, %v25
  %v224 = vmul.f32 %v26, %v26
  %v225 = vmul.f32 %v27, %v27
  %v226 = vmul.f32 %v28, %v28
  %v227 = vmul.f32 %v29, %v29
  %v228 = vmul.f32 %v30, %v30
  %v229 = vmul.f32 %v31, %v31
  %v230 = vmul.f32 %v32, %v32
  %v231 = vmul.f32 %v33, %v33
  %v232 = vmul.f32 %v34, %v34
  %v233 = vmul.f32 %v35, %v35
  %v234 = vmul.f32 %v36, %v36
  %v235 = vmul.f32 %v37, %v37
  %v236 = vmul.f32 %v38, %v38
  %v237 = vmul.f32 %v39, %v39
  %v238 = vmul.f32 %v40, %v40
  %v239 = vmul.f32 %v41, %v41
  %v240 = vmul.f32 %v42, %v42
  %v241 = vmul.f32 %v43, %v43
  %v242 = vmul.f32 %v44, %v44
  %v243 = vmul.f32 %v45, %v45
  %v244 = vmul.f32 %v46, %v46
  %v245 = vmul.f32 %v47, %v47
  %v246 = vmul.f32 %v48, %v48
  %v247 = vmul.f32 %v49, %v49
  %v248 = vmul.f32 %v50, %v50
  %v249 = vmul.f32 %v51, %v51
  %v250 = vmul.f32 %v52, %v52
  %v251 = vmul.f32 %v53, %v53
  %v252 = vmul.f32 %v54, %v54
  %v253 = vmul.f32 %v55, %v55
  %v254 = vmul.f32 %v56, %v56
  %v255 = vmul.f32 %v57, %v57
  %v256 = vmul.f32 %v58, %v58
  %v257 = vmul.f32 %v59, %v59
  %v258 = vmul.f32 %v60, %v60
  %v259 = vmul.f32 %v61, %v61
  %v260 = vmul.f32 %v62, %v62
  %v261 = vmul.f32 %v63, %v63
  %v262 = vmul.f32 %v64, %v64
  %v263 = vmul.f32 %v65, %v65
  %v264 = vmul.f32 %v66, %v66
  %v265 = vmul.f32 %v67, %v67
  %v266 = vmul.f32 %v68, %v68
  %v267 = vmul.f32 %v69, %v69
  %v268 = vmul.f32 %v70, %v70
  %v269 = vmul.f32 %v71, %v71
  %v270 = vmul.f32 %v72, %v72
  %v271 = vmul.f32 %v73, %v73
  %v272 = vsel %vm74, %v208, 0.0
  %v273 = vsel %vm74, %v209, 0.0
  %v274 = vadd.f32 %v272, %v273
  %v275 = vsel %vm74, %v210, 0.0
  %v276 = vadd.f32 %v274, %v275
  %v277 = vsel %vm74, %v211, 0.0
  %v278 = vadd.f32 %v276, %v277
  %v279 = vsel %vm74, %v212, 0.0
  %v280 = vadd.f32 %v278, %v279
  %v281 = vsel %vm74, %v213, 0.0
  %v282 = vadd.f32 %v280, %v281
  %v283 = vsel %vm74, %v214, 0.0
  %v284 = vadd.f32 %v282, %v283
  %v285 = vsel %vm74, %v215, 0.0
  %v286 = vadd.f32 %v284, %v285
  %v287 = vsel %vm74, %v216, 0.0
  %v288 = vadd.f32 %v286, %v287
  %v289 = vsel %vm74, %v217, 0.0
  %v290 = vadd.f32 %v288, %v289
  %v291 = vsel %vm74, %v218, 0.0
  %v292 = vadd.f32 %v290, %v291
  %v293 = vsel %vm74, %v219, 0.0
  %v294 = vadd.f32 %v292, %v293
  %v295 = vsel %vm74, %v220, 0.0
  %v296 = vadd.f32 %v294, %v295
  %v297 = vsel %vm74, %v221, 0.0
  %v298 = vadd.f32 %v296, %v297
  %v299 = vsel %vm74, %v222, 0.0
  %v300 = vadd.f32 %v298, %v299
  %v301 = vsel %vm74, %v223, 0.0
  %v302 = vadd.f32 %v300, %v301
  %v303 = vsel %vm74, %v224, 0.0
  %v304 = vadd.f32 %v302, %v303
  %v305 = vsel %vm74, %v225, 0.0
  %v306 = vadd.f32 %v304, %v305
  %v307 = vsel %vm74, %v226, 0.0
  %v308 = vadd.f32 %v306, %v307
  %v309 = vsel %vm74, %v227, 0.0
  %v310 = vadd.f32 %v308, %v309
  %v311 = vsel %vm74, %v228, 0.0
  %v312 = vadd.f32 %v310, %v311
  %v313 = vsel %vm74, %v229, 0.0
  %v314 = vadd.f32 %v312, %v313
  %v315 = vsel %vm74, %v230, 0.0
  %v316 = vadd.f32 %v314, %v315
  %v317 = vsel %vm74, %v231, 0.0
  %v318 = vadd.f32 %v316, %v317
  %v319 = vsel %vm74, %v232, 0.0
  %v320 = vadd.f32 %v318, %v319
  %v321 = vsel %vm74, %v233, 0.0
  %v322 = vadd.f32 %v320, %v321
  %v323 = vsel %vm74, %v234, 0.0
  %v324 = vadd.f32 %v322, %v323
  %v325 = vsel %vm74, %v235, 0.0
  %v326 = vadd.f32 %v324, %v325
  %v327 = vsel %vm74, %v236, 0.0
  %v328 = vadd.f32 %v326, %v327
  %v329 = vsel %vm74, %v237, 0.0
  %v330 = vadd.f32 %v328, %v329
  %v331 = vsel %vm74, %v238, 0.0
  %v332 = vadd.f32 %v330, %v331
  %v333 = vsel %vm74, %v239, 0.0
  %v334 = vadd.f32 %v332, %v333
  %v335 = vsel %vm74, %v240, 0.0
  %v336 = vadd.f32 %v334, %v335
  %v337 = vsel %vm74, %v241, 0.0
  %v338 = vadd.f32 %v336, %v337
  %v339 = vsel %vm74, %v242, 0.0
  %v340 = vadd.f32 %v338, %v339
  %v341 = vsel %vm74, %v243, 0.0
  %v342 = vadd.f32 %v340, %v341
  %v343 = vsel %vm74, %v244, 0.0
  %v344 = vadd.f32 %v342, %v343
  %v345 = vsel %vm74, %v245, 0.0
  %v346 = vadd.f32 %v344, %v345
  %v347 = vsel %vm74, %v246, 0.0
  %v348 = vadd.f32 %v346, %v347
  %v349 = vsel %vm74, %v247, 0.0
  %v350 = vadd.f32 %v348, %v349
  %v351 = vsel %vm74, %v248, 0.0
  %v352 = vadd.f32 %v350, %v351
  %v353 = vsel %vm74, %v249, 0.0
  %v354 = vadd.f32 %v352, %v353
  %v355 = vsel %vm74, %v250, 0.0
  %v356 = vadd.f32 %v354, %v355
  %v357 = vsel %vm74, %v251, 0.0
  %v358 = vadd.f32 %v356, %v357
  %v359 = vsel %vm74, %v252, 0.0
  %v360 = vadd.f32 %v358, %v359
  %v361 = vsel %vm74, %v253, 0.0
  %v362 = vadd.f32 %v360, %v361
  %v363 = vsel %vm74, %v254, 0.0
  %v364 = vadd.f32 %v362, %v363
  %v365 = vsel %vm74, %v255, 0.0
  %v366 = vadd.f32 %v364, %v365
  %v367 = vsel %vm74, %v256, 0.0
  %v368 = vadd.f32 %v366, %v367
  %v369 = vsel %vm74, %v257, 0.0
  %v370 = vadd.f32 %v368, %v369
  %v371 = vsel %vm74, %v258, 0.0
  %v372 = vadd.f32 %v370, %v371
  %v373 = vsel %vm74, %v259, 0.0
  %v374 = vadd.f32 %v372, %v373
  %v375 = vsel %vm74, %v260, 0.0
  %v376 = vadd.f32 %v374, %v375
  %v377 = vsel %vm74, %v261, 0.0
  %v378 = vadd.f32 %v376, %v377
  %v379 = vsel %vm74, %v262, 0.0
  %v380 = vadd.f32 %v378, %v379
  %v381 = vsel %vm74, %v263, 0.0
  %v382 = vadd.f32 %v380, %v381
  %v383 = vsel %vm74, %v264, 0.0
  %v384 = vadd.f32 %v382, %v383
  %v385 = vsel %vm74, %v265, 0.0
  %v386 = vadd.f32 %v384, %v385
  %v387 = vsel %vm74, %v266, 0.0
  %v388 = vadd.f32 %v386, %v387
  %v389 = vsel %vm74, %v267, 0.0
  %v390 = vadd.f32 %v388, %v389
  %v391 = vsel %vm74, %v268, 0.0
  %v392 = vadd.f32 %v390, %v391
  %v393 = vsel %vm74, %v269, 0.0
  %v394 = vadd.f32 %v392, %v393
  %v395 = vsel %vm74, %v270, 0.0
  %v396 = vadd.f32 %v394, %v395
  %v397 = vsel %vm74, %v271, 0.0
  %v398 = vadd.f32 %v396, %v397
  %v399 = vrot.slane %v398, 4
  %v400 = vadd.f32 %v398, %v399
  %v401 = vrot.slane %v400, 2
  %v402 = vadd.f32 %v400, %v401
  %v403 = vrot.slane %v402, 1
  %v404 = vadd.f32 %v402, %v403
  %vm405 = vcmask 122880
  %406 = vst.msk [vmem:[%s1] sm:$0x1] %vm405, %v207
  %407 = vst.msk [vmem:[%s2] sm:$0x1] %vm405, %v404
  // Predicated region
  $region6: #{pyraconvblock_forward.13} parent=0 // pred_check
    _
  $region7: #{pyraconvblock_forward.13} parent=0 // pred_check_branch
    %409 = sbr.rel (0) target = $region9
  $region8: #{pyraconvblock_forward.13} parent=0 // pred_region
    _
  $region9: #{pyraconvblock_forward.13} parent=0 // pred_fallthru
    _
  // Predicated region
  $region10: #{pyraconvblock_forward.13} parent=0 // pred_check
    _
  $region11: #{pyraconvblock_forward.13} parent=0 // pred_check_branch
    %411 = sbr.rel (0) target = $region13
  $region12: #{pyraconvblock_forward.13} parent=0 // pred_region
    _
  $region13: #{pyraconvblock_forward.13} parent=0 // pred_fallthru
    _
  // Predicated region
  $region14: #{pyraconvblock_forward.13} parent=0 // pred_check
    _
  $region15: #{pyraconvblock_forward.13} parent=0 // pred_check_branch
    %413 = sbr.rel (0) target = $region17
  $region16: #{pyraconvblock_forward.13} parent=0 // pred_region
    _
  $region17: #{pyraconvblock_forward.13} parent=0 // pred_fallthru
    _
  // Predicated region
  $region18: #{pyraconvblock_forward.13} parent=0 // pred_check
    _
  $region19: #{pyraconvblock_forward.13} parent=0 // pred_check_branch
    %415 = sbr.rel (0) target = $region21
  $region20: #{pyraconvblock_forward.13} parent=0 // pred_region
    _
  $region21: #{pyraconvblock_forward.13} parent=0 // pred_fallthru
    _

// kernel: pyraconvblock_forward.15
$region0: #{pyraconvblock_forward.15}
  #allocation0 [shape = 'u32[]', space=smem, size = 0x4, offset = 0x4, fixed_abs, tag = 'smem constant byte address 0x4 - core index']
  #allocation1 [shape = 'u32[72,128]{1,0:T(1,128)}', space=vmem, size = 0x9000, scoped, tag = 'internal scratch']
  %s0 = inlined_call_operand.vmem [shape: f32[512,32], index: 0, kind: input, shape index: {}]
  %s1 = inlined_call_operand.vmem [shape: f32[1,32], index: 1, kind: input, shape index: {}]
  %s2 = inlined_call_operand.vmem [shape: f32[1,32], index: 2, kind: input, shape index: {}]
  %s3 = inlined_call_operand.vmem [shape: bf16[32,64], index: 3, kind: input, shape index: {}]
  %s4 = inlined_call_operand.vmem [shape: f32[1,64], index: 4, kind: input, shape index: {}]
  %s5 = inlined_call_operand.hbm [shape: f32[512,64], index: 5, kind: output, shape index: {}]
  %s6 = sld [smem:[#allocation0]]
  $region30: #{pyraconvblock_forward.15} parent=0
    _
  %s8 = ssub.s32 1, %s6
  %s9 = scalar_select 0, %s8, %s6
  $region1: #{pyraconvblock_forward.15} parent=0
    #allocation2 [shape = 'u8[262144]{0}', space=vmem, size = 0x40000, scoped, tag = 'output window, operand 0, single buffered']
    #allocation3 [shape = 's32[1]{0}', space=sflag, size = 0x4, scoped, tag = 'scoped memory for pyraconvblock_forward.15']
    %10 = vsyncpa [#allocation3], 0
    // Predicated region
    $region2: #{pyraconvblock_forward.15} parent=1 // pred_check
      _
    $region3: #{pyraconvblock_forward.15} parent=1 // pred_check_branch
      %12 = sbr.rel (0) target = $region5
    $region4: #{pyraconvblock_forward.15} parent=1 // pred_region
      _
    $region5: #{pyraconvblock_forward.15} parent=1 // pred_fallthru
      _
    // Predicated region
    $region6: #{pyraconvblock_forward.15} parent=1 // pred_check
      _
    $region7: #{pyraconvblock_forward.15} parent=1 // pred_check_branch
      %14 = sbr.rel (0) target = $region9
    $region8: #{pyraconvblock_forward.15} parent=1 // pred_region
      _
    $region9: #{pyraconvblock_forward.15} parent=1 // pred_fallthru
      _
    // Predicated region
    $region10: #{pyraconvblock_forward.15} parent=1 // pred_check
      _
    $region11: #{pyraconvblock_forward.15} parent=1 // pred_check_branch
      %16 = sbr.rel (0) target = $region13
    $region12: #{pyraconvblock_forward.15} parent=1 // pred_region
      _
    $region13: #{pyraconvblock_forward.15} parent=1 // pred_fallthru
      _
    // Predicated region
    $region14: #{pyraconvblock_forward.15} parent=1 // pred_check
      _
    $region15: #{pyraconvblock_forward.15} parent=1 // pred_check_branch
      %18 = sbr.rel (0) target = $region17
    $region16: #{pyraconvblock_forward.15} parent=1 // pred_region
      _
    $region17: #{pyraconvblock_forward.15} parent=1 // pred_fallthru
      _
    // Predicated region
    $region18: #{pyraconvblock_forward.15} parent=1 // pred_check
      _
    $region19: #{pyraconvblock_forward.15} parent=1 // pred_check_branch
      %20 = sbr.rel (0) target = $region21
    $region20: #{pyraconvblock_forward.15} parent=1 // pred_region
      _
    $region21: #{pyraconvblock_forward.15} parent=1 // pred_fallthru
      _
    %v22 = vld [vmem:[%s0] sm:$0xff]
    %v23 = vld [vmem:[%s0 + $0x8] sm:$0xff]
    %v24 = vld [vmem:[%s0 + $0x10] sm:$0xff]
    %v25 = vld [vmem:[%s0 + $0x18] sm:$0xff]
    %v26 = vld [vmem:[%s0 + $0x20] sm:$0xff]
    %v27 = vld [vmem:[%s0 + $0x28] sm:$0xff]
    %v28 = vld [vmem:[%s0 + $0x30] sm:$0xff]
    %v29 = vld [vmem:[%s0 + $0x38] sm:$0xff]
    %v30 = vld [vmem:[%s0 + $0x40] sm:$0xff]
    %v31 = vld [vmem:[%s0 + $0x48] sm:$0xff]
    %v32 = vld [vmem:[%s0 + $0x50] sm:$0xff]
    %v33 = vld [vmem:[%s0 + $0x58] sm:$0xff]
    %v34 = vld [vmem:[%s0 + $0x60] sm:$0xff]
    %v35 = vld [vmem:[%s0 + $0x68] sm:$0xff]
    %v36 = vld [vmem:[%s0 + $0x70] sm:$0xff]
    %v37 = vld [vmem:[%s0 + $0x78] sm:$0xff]
    %v38 = vld [vmem:[%s0 + $0x80] sm:$0xff]
    %v39 = vld [vmem:[%s0 + $0x88] sm:$0xff]
    %v40 = vld [vmem:[%s0 + $0x90] sm:$0xff]
    %v41 = vld [vmem:[%s0 + $0x98] sm:$0xff]
    %v42 = vld [vmem:[%s0 + $0xa0] sm:$0xff]
    %v43 = vld [vmem:[%s0 + $0xa8] sm:$0xff]
    %v44 = vld [vmem:[%s0 + $0xb0] sm:$0xff]
    %v45 = vld [vmem:[%s0 + $0xb8] sm:$0xff]
    %v46 = vld [vmem:[%s0 + $0xc0] sm:$0xff]
    %v47 = vld [vmem:[%s0 + $0xc8] sm:$0xff]
    %v48 = vld [vmem:[%s0 + $0xd0] sm:$0xff]
    %v49 = vld [vmem:[%s0 + $0xd8] sm:$0xff]
    %v50 = vld [vmem:[%s0 + $0xe0] sm:$0xff]
    %v51 = vld [vmem:[%s0 + $0xe8] sm:$0xff]
    %v52 = vld [vmem:[%s0 + $0xf0] sm:$0xff]
    %v53 = vld [vmem:[%s0 + $0xf8] sm:$0xff]
    %v54 = vld [vmem:[%s0 + $0x100] sm:$0xff]
    %v55 = vld [vmem:[%s0 + $0x108] sm:$0xff]
    %v56 = vld [vmem:[%s0 + $0x110] sm:$0xff]
    %v57 = vld [vmem:[%s0 + $0x118] sm:$0xff]
    %v58 = vld [vmem:[%s0 + $0x120] sm:$0xff]
    %v59 = vld [vmem:[%s0 + $0x128] sm:$0xff]
    %v60 = vld [vmem:[%s0 + $0x130] sm:$0xff]
    %v61 = vld [vmem:[%s0 + $0x138] sm:$0xff]
    %v62 = vld [vmem:[%s0 + $0x140] sm:$0xff]
    %v63 = vld [vmem:[%s0 + $0x148] sm:$0xff]
    %v64 = vld [vmem:[%s0 + $0x150] sm:$0xff]
    %v65 = vld [vmem:[%s0 + $0x158] sm:$0xff]
    %v66 = vld [vmem:[%s0 + $0x160] sm:$0xff]
    %v67 = vld [vmem:[%s0 + $0x168] sm:$0xff]
    %v68 = vld [vmem:[%s0 + $0x170] sm:$0xff]
    %v69 = vld [vmem:[%s0 + $0x178] sm:$0xff]
    %v70 = vld [vmem:[%s0 + $0x180] sm:$0xff]
    %v71 = vld [vmem:[%s0 + $0x188] sm:$0xff]
    %v72 = vld [vmem:[%s0 + $0x190] sm:$0xff]
    %v73 = vld [vmem:[%s0 + $0x198] sm:$0xff]
    %v74 = vld [vmem:[%s0 + $0x1a0] sm:$0xff]
    %v75 = vld [vmem:[%s0 + $0x1a8] sm:$0xff]
    %v76 = vld [vmem:[%s0 + $0x1b0] sm:$0xff]
    %v77 = vld [vmem:[%s0 + $0x1b8] sm:$0xff]
    %v78 = vld [vmem:[%s0 + $0x1c0] sm:$0xff]
    %v79 = vld [vmem:[%s0 + $0x1c8] sm:$0xff]
    %v80 = vld [vmem:[%s0 + $0x1d0] sm:$0xff]
    %v81 = vld [vmem:[%s0 + $0x1d8] sm:$0xff]
    %v82 = vld [vmem:[%s0 + $0x1e0] sm:$0xff]
    %v83 = vld [vmem:[%s0 + $0x1e8] sm:$0xff]
    %v84 = vld [vmem:[%s0 + $0x1f0] sm:$0xff]
    %v85 = vld [vmem:[%s0 + $0x1f8] sm:$0xff]
    %v86 = vld [vmem:[%s1] sm:$0x1]
    %v88 = vperm.slane %v86, 0
    %v90 = vmul.f32 %v22, %v88
    %v91 = vmul.f32 %v23, %v88
    %v92 = vmul.f32 %v24, %v88
    %v93 = vmul.f32 %v25, %v88
    %v94 = vmul.f32 %v26, %v88
    %v95 = vmul.f32 %v27, %v88
    %v96 = vmul.f32 %v28, %v88
    %v97 = vmul.f32 %v29, %v88
    %v98 = vmul.f32 %v30, %v88
    %v99 = vmul.f32 %v31, %v88
    %v100 = vmul.f32 %v32, %v88
    %v101 = vmul.f32 %v33, %v88
    %v102 = vmul.f32 %v34, %v88
    %v103 = vmul.f32 %v35, %v88
    %v104 = vmul.f32 %v36, %v88
    %v105 = vmul.f32 %v37, %v88
    %v106 = vmul.f32 %v38, %v88
    %v107 = vmul.f32 %v39, %v88
    %v108 = vmul.f32 %v40, %v88
    %v109 = vmul.f32 %v41, %v88
    %v110 = vmul.f32 %v42, %v88
    %v111 = vmul.f32 %v43, %v88
    %v112 = vmul.f32 %v44, %v88
    %v113 = vmul.f32 %v45, %v88
    %v114 = vmul.f32 %v46, %v88
    %v115 = vmul.f32 %v47, %v88
    %v116 = vmul.f32 %v48, %v88
    %v117 = vmul.f32 %v49, %v88
    %v118 = vmul.f32 %v50, %v88
    %v119 = vmul.f32 %v51, %v88
    %v120 = vmul.f32 %v52, %v88
    %v121 = vmul.f32 %v53, %v88
    %v122 = vmul.f32 %v54, %v88
    %v123 = vmul.f32 %v55, %v88
    %v124 = vmul.f32 %v56, %v88
    %v125 = vmul.f32 %v57, %v88
    %v126 = vmul.f32 %v58, %v88
    %v127 = vmul.f32 %v59, %v88
    %v128 = vmul.f32 %v60, %v88
    %v129 = vmul.f32 %v61, %v88
    %v130 = vmul.f32 %v62, %v88
    %v131 = vmul.f32 %v63, %v88
    %v132 = vmul.f32 %v64, %v88
    %v133 = vmul.f32 %v65, %v88
    %v134 = vmul.f32 %v66, %v88
    %v135 = vmul.f32 %v67, %v88
    %v136 = vmul.f32 %v68, %v88
    %v137 = vmul.f32 %v69, %v88
    %v138 = vmul.f32 %v70, %v88
    %v139 = vmul.f32 %v71, %v88
    %v140 = vmul.f32 %v72, %v88
    %v141 = vmul.f32 %v73, %v88
    %v142 = vmul.f32 %v74, %v88
    %v143 = vmul.f32 %v75, %v88
    %v144 = vmul.f32 %v76, %v88
    %v145 = vmul.f32 %v77, %v88
    %v146 = vmul.f32 %v78, %v88
    %v147 = vmul.f32 %v79, %v88
    %v148 = vmul.f32 %v80, %v88
    %v149 = vmul.f32 %v81, %v88
    %v150 = vmul.f32 %v82, %v88
    %v151 = vmul.f32 %v83, %v88
    %v152 = vmul.f32 %v84, %v88
    %v153 = vmul.f32 %v85, %v88
    %v154 = vld [vmem:[%s2] sm:$0x1]
    %v156 = vperm.slane %v154, 0
    %v158 = vadd.f32 %v90, %v156
    %v159 = vadd.f32 %v91, %v156
    %v160 = vadd.f32 %v92, %v156
    %v161 = vadd.f32 %v93, %v156
    %v162 = vadd.f32 %v94, %v156
    %v163 = vadd.f32 %v95, %v156
    %v164 = vadd.f32 %v96, %v156
    %v165 = vadd.f32 %v97, %v156
    %v166 = vadd.f32 %v98, %v156
    %v167 = vadd.f32 %v99, %v156
    %v168 = vadd.f32 %v100, %v156
    %v169 = vadd.f32 %v101, %v156
    %v170 = vadd.f32 %v102, %v156
    %v171 = vadd.f32 %v103, %v156
    %v172 = vadd.f32 %v104, %v156
    %v173 = vadd.f32 %v105, %v156
    %v174 = vadd.f32 %v106, %v156
    %v175 = vadd.f32 %v107, %v156
    %v176 = vadd.f32 %v108, %v156
    %v177 = vadd.f32 %v109, %v156
    %v178 = vadd.f32 %v110, %v156
    %v179 = vadd.f32 %v111, %v156
    %v180 = vadd.f32 %v112, %v156
    %v181 = vadd.f32 %v113, %v156
    %v182 = vadd.f32 %v114, %v156
    %v183 = vadd.f32 %v115, %v156
    %v184 = vadd.f32 %v116, %v156
    %v185 = vadd.f32 %v117, %v156
    %v186 = vadd.f32 %v118, %v156
    %v187 = vadd.f32 %v119, %v156
    %v188 = vadd.f32 %v120, %v156
    %v189 = vadd.f32 %v121, %v156
    %v190 = vadd.f32 %v122, %v156
    %v191 = vadd.f32 %v123, %v156
    %v192 = vadd.f32 %v124, %v156
    %v193 = vadd.f32 %v125, %v156
    %v194 = vadd.f32 %v126, %v156
    %v195 = vadd.f32 %v127, %v156
    %v196 = vadd.f32 %v128, %v156
    %v197 = vadd.f32 %v129, %v156
    %v198 = vadd.f32 %v130, %v156
    %v199 = vadd.f32 %v131, %v156
    %v200 = vadd.f32 %v132, %v156
    %v201 = vadd.f32 %v133, %v156
    %v202 = vadd.f32 %v134, %v156
    %v203 = vadd.f32 %v135, %v156
    %v204 = vadd.f32 %v136, %v156
    %v205 = vadd.f32 %v137, %v156
    %v206 = vadd.f32 %v138, %v156
    %v207 = vadd.f32 %v139, %v156
    %v208 = vadd.f32 %v140, %v156
    %v209 = vadd.f32 %v141, %v156
    %v210 = vadd.f32 %v142, %v156
    %v211 = vadd.f32 %v143, %v156
    %v212 = vadd.f32 %v144, %v156
    %v213 = vadd.f32 %v145, %v156
    %v214 = vadd.f32 %v146, %v156
    %v215 = vadd.f32 %v147, %v156
    %v216 = vadd.f32 %v148, %v156
    %v217 = vadd.f32 %v149, %v156
    %v218 = vadd.f32 %v150, %v156
    %v219 = vadd.f32 %v151, %v156
    %v220 = vadd.f32 %v152, %v156
    %v221 = vadd.f32 %v153, %v156
    %v222 = vmax.f32 %v158, 0.0
    %v223 = vmax.f32 %v159, 0.0
    %v224 = vmax.f32 %v160, 0.0
    %v225 = vmax.f32 %v161, 0.0
    %v226 = vmax.f32 %v162, 0.0
    %v227 = vmax.f32 %v163, 0.0
    %v228 = vmax.f32 %v164, 0.0
    %v229 = vmax.f32 %v165, 0.0
    %v230 = vmax.f32 %v166, 0.0
    %v231 = vmax.f32 %v167, 0.0
    %v232 = vmax.f32 %v168, 0.0
    %v233 = vmax.f32 %v169, 0.0
    %v234 = vmax.f32 %v170, 0.0
    %v235 = vmax.f32 %v171, 0.0
    %v236 = vmax.f32 %v172, 0.0
    %v237 = vmax.f32 %v173, 0.0
    %v238 = vmax.f32 %v174, 0.0
    %v239 = vmax.f32 %v175, 0.0
    %v240 = vmax.f32 %v176, 0.0
    %v241 = vmax.f32 %v177, 0.0
    %v242 = vmax.f32 %v178, 0.0
    %v243 = vmax.f32 %v179, 0.0
    %v244 = vmax.f32 %v180, 0.0
    %v245 = vmax.f32 %v181, 0.0
    %v246 = vmax.f32 %v182, 0.0
    %v247 = vmax.f32 %v183, 0.0
    %v248 = vmax.f32 %v184, 0.0
    %v249 = vmax.f32 %v185, 0.0
    %v250 = vmax.f32 %v186, 0.0
    %v251 = vmax.f32 %v187, 0.0
    %v252 = vmax.f32 %v188, 0.0
    %v253 = vmax.f32 %v189, 0.0
    %v254 = vmax.f32 %v190, 0.0
    %v255 = vmax.f32 %v191, 0.0
    %v256 = vmax.f32 %v192, 0.0
    %v257 = vmax.f32 %v193, 0.0
    %v258 = vmax.f32 %v194, 0.0
    %v259 = vmax.f32 %v195, 0.0
    %v260 = vmax.f32 %v196, 0.0
    %v261 = vmax.f32 %v197, 0.0
    %v262 = vmax.f32 %v198, 0.0
    %v263 = vmax.f32 %v199, 0.0
    %v264 = vmax.f32 %v200, 0.0
    %v265 = vmax.f32 %v201, 0.0
    %v266 = vmax.f32 %v202, 0.0
    %v267 = vmax.f32 %v203, 0.0
    %v268 = vmax.f32 %v204, 0.0
    %v269 = vmax.f32 %v205, 0.0
    %v270 = vmax.f32 %v206, 0.0
    %v271 = vmax.f32 %v207, 0.0
    %v272 = vmax.f32 %v208, 0.0
    %v273 = vmax.f32 %v209, 0.0
    %v274 = vmax.f32 %v210, 0.0
    %v275 = vmax.f32 %v211, 0.0
    %v276 = vmax.f32 %v212, 0.0
    %v277 = vmax.f32 %v213, 0.0
    %v278 = vmax.f32 %v214, 0.0
    %v279 = vmax.f32 %v215, 0.0
    %v280 = vmax.f32 %v216, 0.0
    %v281 = vmax.f32 %v217, 0.0
    %v282 = vmax.f32 %v218, 0.0
    %v283 = vmax.f32 %v219, 0.0
    %v284 = vmax.f32 %v220, 0.0
    %v285 = vmax.f32 %v221, 0.0
    %v286 = vpack.c.bf16 %v223, %v222
    %v287 = vpack.c.bf16 %v225, %v224
    %v288 = vpack.c.bf16 %v227, %v226
    %v289 = vpack.c.bf16 %v229, %v228
    %v290 = vpack.c.bf16 %v231, %v230
    %v291 = vpack.c.bf16 %v233, %v232
    %v292 = vpack.c.bf16 %v235, %v234
    %v293 = vpack.c.bf16 %v237, %v236
    %v294 = vpack.c.bf16 %v239, %v238
    %v295 = vpack.c.bf16 %v241, %v240
    %v296 = vpack.c.bf16 %v243, %v242
    %v297 = vpack.c.bf16 %v245, %v244
    %v298 = vpack.c.bf16 %v247, %v246
    %v299 = vpack.c.bf16 %v249, %v248
    %v300 = vpack.c.bf16 %v251, %v250
    %v301 = vpack.c.bf16 %v253, %v252
    %v302 = vpack.c.bf16 %v255, %v254
    %v303 = vpack.c.bf16 %v257, %v256
    %v304 = vpack.c.bf16 %v259, %v258
    %v305 = vpack.c.bf16 %v261, %v260
    %v306 = vpack.c.bf16 %v263, %v262
    %v307 = vpack.c.bf16 %v265, %v264
    %v308 = vpack.c.bf16 %v267, %v266
    %v309 = vpack.c.bf16 %v269, %v268
    %v310 = vpack.c.bf16 %v271, %v270
    %v311 = vpack.c.bf16 %v273, %v272
    %v312 = vpack.c.bf16 %v275, %v274
    %v313 = vpack.c.bf16 %v277, %v276
    %v314 = vpack.c.bf16 %v279, %v278
    %v315 = vpack.c.bf16 %v281, %v280
    %v316 = vpack.c.bf16 %v283, %v282
    %v317 = vpack.c.bf16 %v285, %v284
    %v318 = vld [vmem:[%s3] sm:$0xf]
    %v319 = vld [vmem:[%s3 + $0x4] sm:$0xf]
    %v320 = vld [vmem:[%s3 + $0x8] sm:$0xf]
    %v321 = vld [vmem:[%s3 + $0xc] sm:$0xf]
    %v322 = vld [vmem:[%s4] sm:$0x1]
    %v324 = vperm.slane %v322, 0
    %v330 = vunpack.c.l.b16 %v318
    %v331 = vunpack.c.l.b16 %v319
    %v332 = vunpack.c.l.b16 %v320
    %v333 = vunpack.c.l.b16 %v321
    %v334 = vpack.c.b16 %v331, %v330
    %v335 = vpack.c.b16 %v333, %v332
    %vm338 = vcmask 261120
    %v340 = vsel %vm338, %v286, 0
    %v343 = vsel %vm338, %v287, 0
    %v346 = vsel %vm338, %v288, 0
    %v349 = vsel %vm338, %v289, 0
    %v352 = vsel %vm338, %v290, 0
    %v355 = vsel %vm338, %v291, 0
    %v358 = vsel %vm338, %v292, 0
    %v361 = vsel %vm338, %v293, 0
    %v364 = vsel %vm338, %v294, 0
    %v367 = vsel %vm338, %v295, 0
    %v370 = vsel %vm338, %v296, 0
    %v373 = vsel %vm338, %v297, 0
    %v376 = vsel %vm338, %v298, 0
    %v379 = vsel %vm338, %v299, 0
    %v382 = vsel %vm338, %v300, 0
    %v385 = vsel %vm338, %v301, 0
    %v388 = vsel %vm338, %v302, 0
    %v391 = vsel %vm338, %v303, 0
    %v394 = vsel %vm338, %v304, 0
    %v397 = vsel %vm338, %v305, 0
    %v400 = vsel %vm338, %v306, 0
    %v403 = vsel %vm338, %v307, 0
    %v406 = vsel %vm338, %v308, 0
    %v409 = vsel %vm338, %v309, 0
    %v412 = vsel %vm338, %v310, 0
    %v415 = vsel %vm338, %v311, 0
    %v418 = vsel %vm338, %v312, 0
    %v421 = vsel %vm338, %v313, 0
    %v424 = vsel %vm338, %v314, 0
    %v427 = vsel %vm338, %v315, 0
    %v430 = vsel %vm338, %v316, 0
    %v433 = vsel %vm338, %v317, 0
    %435 = vmatpush.bf16.msra.mxu0 0
    %436 = vmatpush.bf16.msra.mxu0 0
    %437 = vmatpush.bf16.msra.mxu0 0
    %438 = vmatpush.bf16.msra.mxu0 0
    %439 = vmatpush.bf16.msra.mxu0 0
    %440 = vmatpush.bf16.msra.mxu0 0
    %441 = vmatpush.bf16.msra.mxu0 %v335
    %442 = vmatpush.bf16.msra.mxu0 %v334
    %443 = vmatmul.bf16.gmra.mxu0 %v340
    %v444 = vpop.f32.mrf.mxu0
    %v445 = vadd.f32 %v324, %v444
    %v446 = vpop.f32.mrf.mxu0
    %v447 = vadd.f32 %v324, %v446
    %448 = vmatmul.bf16.gmra.mxu0 %v343
    %v449 = vpop.f32.mrf.mxu0
    %v450 = vadd.f32 %v324, %v449
    %v451 = vpop.f32.mrf.mxu0
    %v452 = vadd.f32 %v324, %v451
    %453 = vmatmul.bf16.gmra.mxu0 %v346
    %v454 = vpop.f32.mrf.mxu0
    %v455 = vadd.f32 %v324, %v454
    %v456 = vpop.f32.mrf.mxu0
    %v457 = vadd.f32 %v324, %v456
    %458 = vmatmul.bf16.gmra.mxu0 %v349
    %v459 = vpop.f32.mrf.mxu0
    %v460 = vadd.f32 %v324, %v459
    %v461 = vpop.f32.mrf.mxu0
    %v462 = vadd.f32 %v324, %v461
    %463 = vmatmul.bf16.gmra.mxu0 %v352
    %v464 = vpop.f32.mrf.mxu0
    %v465 = vadd.f32 %v324, %v464
    %v466 = vpop.f32.mrf.mxu0
    %v467 = vadd.f32 %v324, %v466
    %468 = vmatmul.bf16.gmra.mxu0 %v355
    %v469 = vpop.f32.mrf.mxu0
    %v470 = vadd.f32 %v324, %v469
    %v471 = vpop.f32.mrf.mxu0
    %v472 = vadd.f32 %v324, %v471
    %473 = vmatmul.bf16.gmra.mxu0 %v358
    %v474 = vpop.f32.mrf.mxu0
    %v475 = vadd.f32 %v324, %v474
    %v476 = vpop.f32.mrf.mxu0
    %v477 = vadd.f32 %v324, %v476
    %478 = vmatmul.bf16.gmra.mxu0 %v361
    %v479 = vpop.f32.mrf.mxu0
    %v480 = vadd.f32 %v324, %v479
    %v481 = vpop.f32.mrf.mxu0
    %v482 = vadd.f32 %v324, %v481
    %483 = vmatmul.bf16.gmra.mxu0 %v364
    %v484 = vpop.f32.mrf.mxu0
    %v485 = vadd.f32 %v324, %v484
    %v486 = vpop.f32.mrf.mxu0
    %v487 = vadd.f32 %v324, %v486
    %488 = vmatmul.bf16.gmra.mxu0 %v367
    %v489 = vpop.f32.mrf.mxu0
    %v490 = vadd.f32 %v324, %v489
    %v491 = vpop.f32.mrf.mxu0
    %v492 = vadd.f32 %v324, %v491
    %493 = vmatmul.bf16.gmra.mxu0 %v370
    %v494 = vpop.f32.mrf.mxu0
    %v495 = vadd.f32 %v324, %v494
    %v496 = vpop.f32.mrf.mxu0
    %v497 = vadd.f32 %v324, %v496
    %498 = vmatmul.bf16.gmra.mxu0 %v373
    %v499 = vpop.f32.mrf.mxu0
    %v500 = vadd.f32 %v324, %v499
    %v501 = vpop.f32.mrf.mxu0
    %v502 = vadd.f32 %v324, %v501
    %503 = vmatmul.bf16.gmra.mxu0 %v376
    %v504 = vpop.f32.mrf.mxu0
    %v505 = vadd.f32 %v324, %v504
    %v506 = vpop.f32.mrf.mxu0
    %v507 = vadd.f32 %v324, %v506
    %508 = vmatmul.bf16.gmra.mxu0 %v379
    %v509 = vpop.f32.mrf.mxu0
    %v510 = vadd.f32 %v324, %v509
    %v511 = vpop.f32.mrf.mxu0
    %v512 = vadd.f32 %v324, %v511
    %513 = vmatmul.bf16.gmra.mxu0 %v382
    %v514 = vpop.f32.mrf.mxu0
    %v515 = vadd.f32 %v324, %v514
    %v516 = vpop.f32.mrf.mxu0
    %v517 = vadd.f32 %v324, %v516
    %518 = vmatmul.bf16.gmra.mxu0 %v385
    %v519 = vpop.f32.mrf.mxu0
    %v520 = vadd.f32 %v324, %v519
    %v521 = vpop.f32.mrf.mxu0
    %v522 = vadd.f32 %v324, %v521
    %523 = vmatmul.bf16.gmra.mxu0 %v388
    %v524 = vpop.f32.mrf.mxu0
    %v525 = vadd.f32 %v324, %v524
    %v526 = vpop.f32.mrf.mxu0
    %v527 = vadd.f32 %v324, %v526
    %528 = vmatmul.bf16.gmra.mxu0 %v391
    %v529 = vpop.f32.mrf.mxu0
    %v530 = vadd.f32 %v324, %v529
    %v531 = vpop.f32.mrf.mxu0
    %v532 = vadd.f32 %v324, %v531
    %533 = vmatmul.bf16.gmra.mxu0 %v394
    %v534 = vpop.f32.mrf.mxu0
    %v535 = vadd.f32 %v324, %v534
    %v536 = vpop.f32.mrf.mxu0
    %v537 = vadd.f32 %v324, %v536
    %538 = vmatmul.bf16.gmra.mxu0 %v397
    %v539 = vpop.f32.mrf.mxu0
    %v540 = vadd.f32 %v324, %v539
    %v541 = vpop.f32.mrf.mxu0
    %v542 = vadd.f32 %v324, %v541
    %543 = vmatmul.bf16.gmra.mxu0 %v400
    %v544 = vpop.f32.mrf.mxu0
    %v545 = vadd.f32 %v324, %v544
    %v546 = vpop.f32.mrf.mxu0
    %v547 = vadd.f32 %v324, %v546
    %548 = vmatmul.bf16.gmra.mxu0 %v403
    %v549 = vpop.f32.mrf.mxu0
    %v550 = vadd.f32 %v324, %v549
    %v551 = vpop.f32.mrf.mxu0
    %v552 = vadd.f32 %v324, %v551
    %553 = vmatmul.bf16.gmra.mxu0 %v406
    %v554 = vpop.f32.mrf.mxu0
    %v555 = vadd.f32 %v324, %v554
    %v556 = vpop.f32.mrf.mxu0
    %v557 = vadd.f32 %v324, %v556
    %558 = vmatmul.bf16.gmra.mxu0 %v409
    %v559 = vpop.f32.mrf.mxu0
    %v560 = vadd.f32 %v324, %v559
    %v561 = vpop.f32.mrf.mxu0
    %v562 = vadd.f32 %v324, %v561
    %563 = vmatmul.bf16.gmra.mxu0 %v412
    %v564 = vpop.f32.mrf.mxu0
    %v565 = vadd.f32 %v324, %v564
    %v566 = vpop.f32.mrf.mxu0
    %v567 = vadd.f32 %v324, %v566
    %568 = vmatmul.bf16.gmra.mxu0 %v415
    %v569 = vpop.f32.mrf.mxu0
    %v570 = vadd.f32 %v324, %v569
    %v571 = vpop.f32.mrf.mxu0
    %v572 = vadd.f32 %v324, %v571
    %573 = vmatmul.bf16.gmra.mxu0 %v418
    %v574 = vpop.f32.mrf.mxu0
    %v575 = vadd.f32 %v324, %v574
    %v576 = vpop.f32.mrf.mxu0
    %v577 = vadd.f32 %v324, %v576
    %578 = vmatmul.bf16.gmra.mxu0 %v421
    %v579 = vpop.f32.mrf.mxu0
    %v580 = vadd.f32 %v324, %v579
    %v581 = vpop.f32.mrf.mxu0
    %v582 = vadd.f32 %v324, %v581
    %583 = vmatmul.bf16.gmra.mxu0 %v424
    %v584 = vpop.f32.mrf.mxu0
    %v585 = vadd.f32 %v324, %v584
    %v586 = vpop.f32.mrf.mxu0
    %v587 = vadd.f32 %v324, %v586
    %588 = vmatmul.bf16.gmra.mxu0 %v427
    %v589 = vpop.f32.mrf.mxu0
    %v590 = vadd.f32 %v324, %v589
    %v591 = vpop.f32.mrf.mxu0
    %v592 = vadd.f32 %v324, %v591
    %593 = vmatmul.bf16.gmra.mxu0 %v430
    %v594 = vpop.f32.mrf.mxu0
    %v595 = vadd.f32 %v324, %v594
    %v596 = vpop.f32.mrf.mxu0
    %v597 = vadd.f32 %v324, %v596
    %598 = vmatmul.bf16.gmra.mxu0 %v433
    %v599 = vpop.f32.mrf.mxu0
    %v600 = vadd.f32 %v324, %v599
    %v601 = vpop.f32.mrf.mxu0
    %v602 = vadd.f32 %v324, %v601
    %603 = vdwg.mxu0
    %vm604 = vcmask 523264
    %605 = vst.msk [vmem:[#allocation2] sm:$0xff] %vm604, %v445
    %606 = vst.msk [vmem:[#allocation2 + $0x8] sm:$0xff] %vm604, %v447
    %607 = vst.msk [vmem:[#allocation2 + $0x10] sm:$0xff] %vm604, %v450
    %608 = vst.msk [vmem:[#allocation2 + $0x18] sm:$0xff] %vm604, %v452
    %609 = vst.msk [vmem:[#allocation2 + $0x20] sm:$0xff] %vm604, %v455
    %610 = vst.msk [vmem:[#allocation2 + $0x28] sm:$0xff] %vm604, %v457
    %611 = vst.msk [vmem:[#allocation2 + $0x30] sm:$0xff] %vm604, %v460
    %612 = vst.msk [vmem:[#allocation2 + $0x38] sm:$0xff] %vm604, %v462
    %613 = vst.msk [vmem:[#allocation2 + $0x40] sm:$0xff] %vm604, %v465
    %614 = vst.msk [vmem:[#allocation2 + $0x48] sm:$0xff] %vm604, %v467
    %615 = vst.msk [vmem:[#allocation2 + $0x50] sm:$0xff] %vm604, %v470
    %616 = vst.msk [vmem:[#allocation2 + $0x58] sm:$0xff] %vm604, %v472
    %617 = vst.msk [vmem:[#allocation2 + $0x60] sm:$0xff] %vm604, %v475
    %618 = vst.msk [vmem:[#allocation2 + $0x68] sm:$0xff] %vm604, %v477
    %619 = vst.msk [vmem:[#allocation2 + $0x70] sm:$0xff] %vm604, %v480
    %620 = vst.msk [vmem:[#allocation2 + $0x78] sm:$0xff] %vm604, %v482
    %621 = vst.msk [vmem:[#allocation2 + $0x80] sm:$0xff] %vm604, %v485
    %622 = vst.msk [vmem:[#allocation2 + $0x88] sm:$0xff] %vm604, %v487
    %623 = vst.msk [vmem:[#allocation2 + $0x90] sm:$0xff] %vm604, %v490
    %624 = vst.msk [vmem:[#allocation2 + $0x98] sm:$0xff] %vm604, %v492
    %625 = vst.msk [vmem:[#allocation2 + $0xa0] sm:$0xff] %vm604, %v495
    %626 = vst.msk [vmem:[#allocation2 + $0xa8] sm:$0xff] %vm604, %v497
    %627 = vst.msk [vmem:[#allocation2 + $0xb0] sm:$0xff] %vm604, %v500
    %628 = vst.msk [vmem:[#allocation2 + $0xb8] sm:$0xff] %vm604, %v502
    %629 = vst.msk [vmem:[#allocation2 + $0xc0] sm:$0xff] %vm604, %v505
    %630 = vst.msk [vmem:[#allocation2 + $0xc8] sm:$0xff] %vm604, %v507
    %631 = vst.msk [vmem:[#allocation2 + $0xd0] sm:$0xff] %vm604, %v510
    %632 = vst.msk [vmem:[#allocation2 + $0xd8] sm:$0xff] %vm604, %v512
    %633 = vst.msk [vmem:[#allocation2 + $0xe0] sm:$0xff] %vm604, %v515
    %634 = vst.msk [vmem:[#allocation2 + $0xe8] sm:$0xff] %vm604, %v517
    %635 = vst.msk [vmem:[#allocation2 + $0xf0] sm:$0xff] %vm604, %v520
    %636 = vst.msk [vmem:[#allocation2 + $0xf8] sm:$0xff] %vm604, %v522
    %637 = vst.msk [vmem:[#allocation2 + $0x100] sm:$0xff] %vm604, %v525
    %638 = vst.msk [vmem:[#allocation2 + $0x108] sm:$0xff] %vm604, %v527
    %639 = vst.msk [vmem:[#allocation2 + $0x110] sm:$0xff] %vm604, %v530
    %640 = vst.msk [vmem:[#allocation2 + $0x118] sm:$0xff] %vm604, %v532
    %641 = vst.msk [vmem:[#allocation2 + $0x120] sm:$0xff] %vm604, %v535
    %642 = vst.msk [vmem:[#allocation2 + $0x128] sm:$0xff] %vm604, %v537
    %643 = vst.msk [vmem:[#allocation2 + $0x130] sm:$0xff] %vm604, %v540
    %644 = vst.msk [vmem:[#allocation2 + $0x138] sm:$0xff] %vm604, %v542
    %645 = vst.msk [vmem:[#allocation2 + $0x140] sm:$0xff] %vm604, %v545
    %646 = vst.msk [vmem:[#allocation2 + $0x148] sm:$0xff] %vm604, %v547
    %647 = vst.msk [vmem:[#allocation2 + $0x150] sm:$0xff] %vm604, %v550
    %648 = vst.msk [vmem:[#allocation2 + $0x158] sm:$0xff] %vm604, %v552
    %649 = vst.msk [vmem:[#allocation2 + $0x160] sm:$0xff] %vm604, %v555
    %650 = vst.msk [vmem:[#allocation2 + $0x168] sm:$0xff] %vm604, %v557
    %651 = vst.msk [vmem:[#allocation2 + $0x170] sm:$0xff] %vm604, %v560
    %652 = vst.msk [vmem:[#allocation2 + $0x178] sm:$0xff] %vm604, %v562
    %653 = vst.msk [vmem:[#allocation2 + $0x180] sm:$0xff] %vm604, %v565
    %654 = vst.msk [vmem:[#allocation2 + $0x188] sm:$0xff] %vm604, %v567
    %655 = vst.msk [vmem:[#allocation2 + $0x190] sm:$0xff] %vm604, %v570
    %656 = vst.msk [vmem:[#allocation2 + $0x198] sm:$0xff] %vm604, %v572
    %657 = vst.msk [vmem:[#allocation2 + $0x1a0] sm:$0xff] %vm604, %v575
    %658 = vst.msk [vmem:[#allocation2 + $0x1a8] sm:$0xff] %vm604, %v577
    %659 = vst.msk [vmem:[#allocation2 + $0x1b0] sm:$0xff] %vm604, %v580
    %660 = vst.msk [vmem:[#allocation2 + $0x1b8] sm:$0xff] %vm604, %v582
    %661 = vst.msk [vmem:[#allocation2 + $0x1c0] sm:$0xff] %vm604, %v585
    %662 = vst.msk [vmem:[#allocation2 + $0x1c8] sm:$0xff] %vm604, %v587
    %663 = vst.msk [vmem:[#allocation2 + $0x1d0] sm:$0xff] %vm604, %v590
    %664 = vst.msk [vmem:[#allocation2 + $0x1d8] sm:$0xff] %vm604, %v592
    %665 = vst.msk [vmem:[#allocation2 + $0x1e0] sm:$0xff] %vm604, %v595
    %666 = vst.msk [vmem:[#allocation2 + $0x1e8] sm:$0xff] %vm604, %v597
    %667 = vst.msk [vmem:[#allocation2 + $0x1f0] sm:$0xff] %vm604, %v600
    %668 = vst.msk [vmem:[#allocation2 + $0x1f8] sm:$0xff] %vm604, %v602
    // Predicated region
    $region22: #{pyraconvblock_forward.15} parent=1 // pred_check
      _
    $region23: #{pyraconvblock_forward.15} parent=1 // pred_check_branch
      %670 = sbr.rel (0) target = $region25
    $region24: #{pyraconvblock_forward.15} parent=1 // pred_region
      %672 = vsyncadd [#allocation3], 0
      %s673 = sshll.u32 [#allocation2], 4
      %s674 = int_to_ptr.vmem [resolvable:$true] %s673
      %s675 = sshll.u32 %s5, 4
      %s676 = int_to_ptr.hbm [resolvable:$true] %s675
      %681 = dma.vmem_to_hbm [thread:$0]  %s674, 8192, %s676, [#allocation3], 128, 128, 8
    $region25: #{pyraconvblock_forward.15} parent=1 // pred_fallthru
      _
    // Predicated region
    $region26: #{pyraconvblock_forward.15} parent=1 // pred_check
      _
    $region27: #{pyraconvblock_forward.15} parent=1 // pred_check_branch
      %683 = sbr.rel (0) target = $region29
    $region28: #{pyraconvblock_forward.15} parent=1 // pred_region
      %685 = dma.done [#allocation3], 8192
    $region29: #{pyraconvblock_forward.15} parent=1 // pred_fallthru
      _
    %686 = vsyncpa [#allocation3], 1

// kernel: pyraconvblock_forward.14
$region0: #{pyraconvblock_forward.14}
  #allocation0 [shape = 'u32[]', space=smem, size = 0x4, offset = 0x4, fixed_abs, tag = 'smem constant byte address 0x4 - core index']
  #allocation1 [shape = 'u32[72,128]{1,0:T(1,128)}', space=vmem, size = 0x9000, scoped, tag = 'internal scratch']
  %s0 = inlined_call_operand.vmem [shape: f32[512,16], index: 0, kind: input, shape index: {}]
  %s1 = inlined_call_operand.vmem [shape: f32[1,16], index: 1, kind: input, shape index: {}]
  %s2 = inlined_call_operand.vmem [shape: f32[1,16], index: 2, kind: input, shape index: {}]
  %s3 = inlined_call_operand.vmem [shape: bf16[16,32], index: 3, kind: input, shape index: {}]
  %s4 = inlined_call_operand.vmem [shape: f32[1,32], index: 4, kind: input, shape index: {}]
  %s5 = inlined_call_operand.vmem [shape: f32[512,32], index: 5, kind: input, shape index: {}]
  %s6 = inlined_call_operand.vmem [shape: f32[512,32], index: 6, kind: output, shape index: {0}]
  %s7 = inlined_call_operand.vmem [shape: f32[1,32], index: 7, kind: output, shape index: {1}]
  %s8 = inlined_call_operand.vmem [shape: f32[1,32], index: 8, kind: output, shape index: {2}]
  %9 = xla_tuple %s6, %s7, %s8
  %s10 = sld [smem:[#allocation0]]
  $region50: #{pyraconvblock_forward.14} parent=0
    _
  %s12 = ssub.s32 1, %s10
  %s13 = scalar_select 0, %s12, %s10
  // Predicated region
  $region2: #{pyraconvblock_forward.14} parent=0 // pred_check
    _
  $region3: #{pyraconvblock_forward.14} parent=0 // pred_check_branch
    %15 = sbr.rel (0) target = $region5
  $region4: #{pyraconvblock_forward.14} parent=0 // pred_region
    _
  $region5: #{pyraconvblock_forward.14} parent=0 // pred_fallthru
    _
  // Predicated region
  $region6: #{pyraconvblock_forward.14} parent=0 // pred_check
    _
  $region7: #{pyraconvblock_forward.14} parent=0 // pred_check_branch
    %17 = sbr.rel (0) target = $region9
  $region8: #{pyraconvblock_forward.14} parent=0 // pred_region
    _
  $region9: #{pyraconvblock_forward.14} parent=0 // pred_fallthru
    _
  // Predicated region
  $region10: #{pyraconvblock_forward.14} parent=0 // pred_check
    _
  $region11: #{pyraconvblock_forward.14} parent=0 // pred_check_branch
    %19 = sbr.rel (0) target = $region13
  $region12: #{pyraconvblock_forward.14} parent=0 // pred_region
    _
  $region13: #{pyraconvblock_forward.14} parent=0 // pred_fallthru
    _
  // Predicated region
  $region14: #{pyraconvblock_forward.14} parent=0 // pred_check
    _
  $region15: #{pyraconvblock_forward.14} parent=0 // pred_check_branch
    %21 = sbr.rel (0) target = $region17
  $region16: #{pyraconvblock_forward.14} parent=0 // pred_region
    _
  $region17: #{pyraconvblock_forward.14} parent=0 // pred_fallthru
    _
  // Predicated region
  $region18: #{pyraconvblock_forward.14} parent=0 // pred_check
    _
  $region19: #{pyraconvblock_forward.14} parent=0 // pred_check_branch
    %23 = sbr.rel (0) target = $region21
  $region20: #{pyraconvblock_forward.14} parent=0 // pred_region
    _
  $region21: #{pyraconvblock_forward.14} parent=0 // pred_fallthru
    _
  // Predicated region
  $region22: #{pyraconvblock_forward.14} parent=0 // pred_check
    _
  $region23: #{pyraconvblock_forward.14} parent=0 // pred_check_branch
    %25 = sbr.rel (0) target = $region25
  $region24: #{pyraconvblock_forward.14} parent=0 // pred_region
    _
  $region25: #{pyraconvblock_forward.14} parent=0 // pred_fallthru
    _
  %v27 = vld [vmem:[%s0] sm:$0xff]
  %v28 = vld [vmem:[%s0 + $0x8] sm:$0xff]
  %v29 = vld [vmem:[%s0 + $0x10] sm:$0xff]
  %v30 = vld [vmem:[%s0 + $0x18] sm:$0xff]
  %v31 = vld [vmem:[%s0 + $0x20] sm:$0xff]
  %v32 = vld [vmem:[%s0 + $0x28] sm:$0xff]
  %v33 = vld [vmem:[%s0 + $0x30] sm:$0xff]
  %v34 = vld [vmem:[%s0 + $0x38] sm:$0xff]
  %v35 = vld [vmem:[%s0 + $0x40] sm:$0xff]
  %v36 = vld [vmem:[%s0 + $0x48] sm:$0xff]
  %v37 = vld [vmem:[%s0 + $0x50] sm:$0xff]
  %v38 = vld [vmem:[%s0 + $0x58] sm:$0xff]
  %v39 = vld [vmem:[%s0 + $0x60] sm:$0xff]
  %v40 = vld [vmem:[%s0 + $0x68] sm:$0xff]
  %v41 = vld [vmem:[%s0 + $0x70] sm:$0xff]
  %v42 = vld [vmem:[%s0 + $0x78] sm:$0xff]
  %v43 = vld [vmem:[%s0 + $0x80] sm:$0xff]
  %v44 = vld [vmem:[%s0 + $0x88] sm:$0xff]
  %v45 = vld [vmem:[%s0 + $0x90] sm:$0xff]
  %v46 = vld [vmem:[%s0 + $0x98] sm:$0xff]
  %v47 = vld [vmem:[%s0 + $0xa0] sm:$0xff]
  %v48 = vld [vmem:[%s0 + $0xa8] sm:$0xff]
  %v49 = vld [vmem:[%s0 + $0xb0] sm:$0xff]
  %v50 = vld [vmem:[%s0 + $0xb8] sm:$0xff]
  %v51 = vld [vmem:[%s0 + $0xc0] sm:$0xff]
  %v52 = vld [vmem:[%s0 + $0xc8] sm:$0xff]
  %v53 = vld [vmem:[%s0 + $0xd0] sm:$0xff]
  %v54 = vld [vmem:[%s0 + $0xd8] sm:$0xff]
  %v55 = vld [vmem:[%s0 + $0xe0] sm:$0xff]
  %v56 = vld [vmem:[%s0 + $0xe8] sm:$0xff]
  %v57 = vld [vmem:[%s0 + $0xf0] sm:$0xff]
  %v58 = vld [vmem:[%s0 + $0xf8] sm:$0xff]
  %v59 = vld [vmem:[%s0 + $0x100] sm:$0xff]
  %v60 = vld [vmem:[%s0 + $0x108] sm:$0xff]
  %v61 = vld [vmem:[%s0 + $0x110] sm:$0xff]
  %v62 = vld [vmem:[%s0 + $0x118] sm:$0xff]
  %v63 = vld [vmem:[%s0 + $0x120] sm:$0xff]
  %v64 = vld [vmem:[%s0 + $0x128] sm:$0xff]
  %v65 = vld [vmem:[%s0 + $0x130] sm:$0xff]
  %v66 = vld [vmem:[%s0 + $0x138] sm:$0xff]
  %v67 = vld [vmem:[%s0 + $0x140] sm:$0xff]
  %v68 = vld [vmem:[%s0 + $0x148] sm:$0xff]
  %v69 = vld [vmem:[%s0 + $0x150] sm:$0xff]
  %v70 = vld [vmem:[%s0 + $0x158] sm:$0xff]
  %v71 = vld [vmem:[%s0 + $0x160] sm:$0xff]
  %v72 = vld [vmem:[%s0 + $0x168] sm:$0xff]
  %v73 = vld [vmem:[%s0 + $0x170] sm:$0xff]
  %v74 = vld [vmem:[%s0 + $0x178] sm:$0xff]
  %v75 = vld [vmem:[%s0 + $0x180] sm:$0xff]
  %v76 = vld [vmem:[%s0 + $0x188] sm:$0xff]
  %v77 = vld [vmem:[%s0 + $0x190] sm:$0xff]
  %v78 = vld [vmem:[%s0 + $0x198] sm:$0xff]
  %v79 = vld [vmem:[%s0 + $0x1a0] sm:$0xff]
  %v80 = vld [vmem:[%s0 + $0x1a8] sm:$0xff]
  %v81 = vld [vmem:[%s0 + $0x1b0] sm:$0xff]
  %v82 = vld [vmem:[%s0 + $0x1b8] sm:$0xff]
  %v83 = vld [vmem:[%s0 + $0x1c0] sm:$0xff]
  %v84 = vld [vmem:[%s0 + $0x1c8] sm:$0xff]
  %v85 = vld [vmem:[%s0 + $0x1d0] sm:$0xff]
  %v86 = vld [vmem:[%s0 + $0x1d8] sm:$0xff]
  %v87 = vld [vmem:[%s0 + $0x1e0] sm:$0xff]
  %v88 = vld [vmem:[%s0 + $0x1e8] sm:$0xff]
  %v89 = vld [vmem:[%s0 + $0x1f0] sm:$0xff]
  %v90 = vld [vmem:[%s0 + $0x1f8] sm:$0xff]
  %v91 = vld [vmem:[%s1] sm:$0x1]
  %v93 = vperm.slane %v91, 0
  %v95 = vmul.f32 %v27, %v93
  %v96 = vmul.f32 %v28, %v93
  %v97 = vmul.f32 %v29, %v93
  %v98 = vmul.f32 %v30, %v93
  %v99 = vmul.f32 %v31, %v93
  %v100 = vmul.f32 %v32, %v93
  %v101 = vmul.f32 %v33, %v93
  %v102 = vmul.f32 %v34, %v93
  %v103 = vmul.f32 %v35, %v93
  %v104 = vmul.f32 %v36, %v93
  %v105 = vmul.f32 %v37, %v93
  %v106 = vmul.f32 %v38, %v93
  %v107 = vmul.f32 %v39, %v93
  %v108 = vmul.f32 %v40, %v93
  %v109 = vmul.f32 %v41, %v93
  %v110 = vmul.f32 %v42, %v93
  %v111 = vmul.f32 %v43, %v93
  %v112 = vmul.f32 %v44, %v93
  %v113 = vmul.f32 %v45, %v93
  %v114 = vmul.f32 %v46, %v93
  %v115 = vmul.f32 %v47, %v93
  %v116 = vmul.f32 %v48, %v93
  %v117 = vmul.f32 %v49, %v93
  %v118 = vmul.f32 %v50, %v93
  %v119 = vmul.f32 %v51, %v93
  %v120 = vmul.f32 %v52, %v93
  %v121 = vmul.f32 %v53, %v93
  %v122 = vmul.f32 %v54, %v93
  %v123 = vmul.f32 %v55, %v93
  %v124 = vmul.f32 %v56, %v93
  %v125 = vmul.f32 %v57, %v93
  %v126 = vmul.f32 %v58, %v93
  %v127 = vmul.f32 %v59, %v93
  %v128 = vmul.f32 %v60, %v93
  %v129 = vmul.f32 %v61, %v93
  %v130 = vmul.f32 %v62, %v93
  %v131 = vmul.f32 %v63, %v93
  %v132 = vmul.f32 %v64, %v93
  %v133 = vmul.f32 %v65, %v93
  %v134 = vmul.f32 %v66, %v93
  %v135 = vmul.f32 %v67, %v93
  %v136 = vmul.f32 %v68, %v93
  %v137 = vmul.f32 %v69, %v93
  %v138 = vmul.f32 %v70, %v93
  %v139 = vmul.f32 %v71, %v93
  %v140 = vmul.f32 %v72, %v93
  %v141 = vmul.f32 %v73, %v93
  %v142 = vmul.f32 %v74, %v93
  %v143 = vmul.f32 %v75, %v93
  %v144 = vmul.f32 %v76, %v93
  %v145 = vmul.f32 %v77, %v93
  %v146 = vmul.f32 %v78, %v93
  %v147 = vmul.f32 %v79, %v93
  %v148 = vmul.f32 %v80, %v93
  %v149 = vmul.f32 %v81, %v93
  %v150 = vmul.f32 %v82, %v93
  %v151 = vmul.f32 %v83, %v93
  %v152 = vmul.f32 %v84, %v93
  %v153 = vmul.f32 %v85, %v93
  %v154 = vmul.f32 %v86, %v93
  %v155 = vmul.f32 %v87, %v93
  %v156 = vmul.f32 %v88, %v93
  %v157 = vmul.f32 %v89, %v93
  %v158 = vmul.f32 %v90, %v93
  %v159 = vld [vmem:[%s2] sm:$0x1]
  %v161 = vperm.slane %v159, 0
  %v163 = vadd.f32 %v95, %v161
  %v164 = vadd.f32 %v96, %v161
  %v165 = vadd.f32 %v97, %v161
  %v166 = vadd.f32 %v98, %v161
  %v167 = vadd.f32 %v99, %v161
  %v168 = vadd.f32 %v100, %v161
  %v169 = vadd.f32 %v101, %v161
  %v170 = vadd.f32 %v102, %v161
  %v171 = vadd.f32 %v103, %v161
  %v172 = vadd.f32 %v104, %v161
  %v173 = vadd.f32 %v105, %v161
  %v174 = vadd.f32 %v106, %v161
  %v175 = vadd.f32 %v107, %v161
  %v176 = vadd.f32 %v108, %v161
  %v177 = vadd.f32 %v109, %v161
  %v178 = vadd.f32 %v110, %v161
  %v179 = vadd.f32 %v111, %v161
  %v180 = vadd.f32 %v112, %v161
  %v181 = vadd.f32 %v113, %v161
  %v182 = vadd.f32 %v114, %v161
  %v183 = vadd.f32 %v115, %v161
  %v184 = vadd.f32 %v116, %v161
  %v185 = vadd.f32 %v117, %v161
  %v186 = vadd.f32 %v118, %v161
  %v187 = vadd.f32 %v119, %v161
  %v188 = vadd.f32 %v120, %v161
  %v189 = vadd.f32 %v121, %v161
  %v190 = vadd.f32 %v122, %v161
  %v191 = vadd.f32 %v123, %v161
  %v192 = vadd.f32 %v124, %v161
  %v193 = vadd.f32 %v125, %v161
  %v194 = vadd.f32 %v126, %v161
  %v195 = vadd.f32 %v127, %v161
  %v196 = vadd.f32 %v128, %v161
  %v197 = vadd.f32 %v129, %v161
  %v198 = vadd.f32 %v130, %v161
  %v199 = vadd.f32 %v131, %v161
  %v200 = vadd.f32 %v132, %v161
  %v201 = vadd.f32 %v133, %v161
  %v202 = vadd.f32 %v134, %v161
  %v203 = vadd.f32 %v135, %v161
  %v204 = vadd.f32 %v136, %v161
  %v205 = vadd.f32 %v137, %v161
  %v206 = vadd.f32 %v138, %v161
  %v207 = vadd.f32 %v139, %v161
  %v208 = vadd.f32 %v140, %v161
  %v209 = vadd.f32 %v141, %v161
  %v210 = vadd.f32 %v142, %v161
  %v211 = vadd.f32 %v143, %v161
  %v212 = vadd.f32 %v144, %v161
  %v213 = vadd.f32 %v145, %v161
  %v214 = vadd.f32 %v146, %v161
  %v215 = vadd.f32 %v147, %v161
  %v216 = vadd.f32 %v148, %v161
  %v217 = vadd.f32 %v149, %v161
  %v218 = vadd.f32 %v150, %v161
  %v219 = vadd.f32 %v151, %v161
  %v220 = vadd.f32 %v152, %v161
  %v221 = vadd.f32 %v153, %v161
  %v222 = vadd.f32 %v154, %v161
  %v223 = vadd.f32 %v155, %v161
  %v224 = vadd.f32 %v156, %v161
  %v225 = vadd.f32 %v157, %v161
  %v226 = vadd.f32 %v158, %v161
  %v227 = vmax.f32 %v163, 0.0
  %v228 = vmax.f32 %v164, 0.0
  %v229 = vmax.f32 %v165, 0.0
  %v230 = vmax.f32 %v166, 0.0
  %v231 = vmax.f32 %v167, 0.0
  %v232 = vmax.f32 %v168, 0.0
  %v233 = vmax.f32 %v169, 0.0
  %v234 = vmax.f32 %v170, 0.0
  %v235 = vmax.f32 %v171, 0.0
  %v236 = vmax.f32 %v172, 0.0
  %v237 = vmax.f32 %v173, 0.0
  %v238 = vmax.f32 %v174, 0.0
  %v239 = vmax.f32 %v175, 0.0
  %v240 = vmax.f32 %v176, 0.0
  %v241 = vmax.f32 %v177, 0.0
  %v242 = vmax.f32 %v178, 0.0
  %v243 = vmax.f32 %v179, 0.0
  %v244 = vmax.f32 %v180, 0.0
  %v245 = vmax.f32 %v181, 0.0
  %v246 = vmax.f32 %v182, 0.0
  %v247 = vmax.f32 %v183, 0.0
  %v248 = vmax.f32 %v184, 0.0
  %v249 = vmax.f32 %v185, 0.0
  %v250 = vmax.f32 %v186, 0.0
  %v251 = vmax.f32 %v187, 0.0
  %v252 = vmax.f32 %v188, 0.0
  %v253 = vmax.f32 %v189, 0.0
  %v254 = vmax.f32 %v190, 0.0
  %v255 = vmax.f32 %v191, 0.0
  %v256 = vmax.f32 %v192, 0.0
  %v257 = vmax.f32 %v193, 0.0
  %v258 = vmax.f32 %v194, 0.0
  %v259 = vmax.f32 %v195, 0.0
  %v260 = vmax.f32 %v196, 0.0
  %v261 = vmax.f32 %v197, 0.0
  %v262 = vmax.f32 %v198, 0.0
  %v263 = vmax.f32 %v199, 0.0
  %v264 = vmax.f32 %v200, 0.0
  %v265 = vmax.f32 %v201, 0.0
  %v266 = vmax.f32 %v202, 0.0
  %v267 = vmax.f32 %v203, 0.0
  %v268 = vmax.f32 %v204, 0.0
  %v269 = vmax.f32 %v205, 0.0
  %v270 = vmax.f32 %v206, 0.0
  %v271 = vmax.f32 %v207, 0.0
  %v272 = vmax.f32 %v208, 0.0
  %v273 = vmax.f32 %v209, 0.0
  %v274 = vmax.f32 %v210, 0.0
  %v275 = vmax.f32 %v211, 0.0
  %v276 = vmax.f32 %v212, 0.0
  %v277 = vmax.f32 %v213, 0.0
  %v278 = vmax.f32 %v214, 0.0
  %v279 = vmax.f32 %v215, 0.0
  %v280 = vmax.f32 %v216, 0.0
  %v281 = vmax.f32 %v217, 0.0
  %v282 = vmax.f32 %v218, 0.0
  %v283 = vmax.f32 %v219, 0.0
  %v284 = vmax.f32 %v220, 0.0
  %v285 = vmax.f32 %v221, 0.0
  %v286 = vmax.f32 %v222, 0.0
  %v287 = vmax.f32 %v223, 0.0
  %v288 = vmax.f32 %v224, 0.0
  %v289 = vmax.f32 %v225, 0.0
  %v290 = vmax.f32 %v226, 0.0
  %v291 = vpack.c.bf16 %v228, %v227
  %v292 = vpack.c.bf16 %v230, %v229
  %v293 = vpack.c.bf16 %v232, %v231
  %v294 = vpack.c.bf16 %v234, %v233
  %v295 = vpack.c.bf16 %v236, %v235
  %v296 = vpack.c.bf16 %v238, %v237
  %v297 = vpack.c.bf16 %v240, %v239
  %v298 = vpack.c.bf16 %v242, %v241
  %v299 = vpack.c.bf16 %v244, %v243
  %v300 = vpack.c.bf16 %v246, %v245
  %v301 = vpack.c.bf16 %v248, %v247
  %v302 = vpack.c.bf16 %v250, %v249
  %v303 = vpack.c.bf16 %v252, %v251
  %v304 = vpack.c.bf16 %v254, %v253
  %v305 = vpack.c.bf16 %v256, %v255
  %v306 = vpack.c.bf16 %v258, %v257
  %v307 = vpack.c.bf16 %v260, %v259
  %v308 = vpack.c.bf16 %v262, %v261
  %v309 = vpack.c.bf16 %v264, %v263
  %v310 = vpack.c.bf16 %v266, %v265
  %v311 = vpack.c.bf16 %v268, %v267
  %v312 = vpack.c.bf16 %v270, %v269
  %v313 = vpack.c.bf16 %v272, %v271
  %v314 = vpack.c.bf16 %v274, %v273
  %v315 = vpack.c.bf16 %v276, %v275
  %v316 = vpack.c.bf16 %v278, %v277
  %v317 = vpack.c.bf16 %v280, %v279
  %v318 = vpack.c.bf16 %v282, %v281
  %v319 = vpack.c.bf16 %v284, %v283
  %v320 = vpack.c.bf16 %v286, %v285
  %v321 = vpack.c.bf16 %v288, %v287
  %v322 = vpack.c.bf16 %v290, %v289
  %v323 = vld [vmem:[%s3] sm:$0xf]
  %v324 = vld [vmem:[%s3 + $0x4] sm:$0xf]
  %v325 = vld [vmem:[%s4] sm:$0x1]
  %v327 = vperm.slane %v325, 0
  %v331 = vunpack.c.l.b16 %v323
  %v332 = vunpack.c.l.b16 %v324
  %v333 = vpack.c.b16 %v332, %v331
  %vm335 = vcmask 130048
  %v337 = vsel %vm335, %v291, 0
  %v340 = vsel %vm335, %v292, 0
  %v343 = vsel %vm335, %v293, 0
  %v346 = vsel %vm335, %v294, 0
  %v349 = vsel %vm335, %v295, 0
  %v352 = vsel %vm335, %v296, 0
  %v355 = vsel %vm335, %v297, 0
  %v358 = vsel %vm335, %v298, 0
  %v361 = vsel %vm335, %v299, 0
  %v364 = vsel %vm335, %v300, 0
  %v367 = vsel %vm335, %v301, 0
  %v370 = vsel %vm335, %v302, 0
  %v373 = vsel %vm335, %v303, 0
  %v376 = vsel %vm335, %v304, 0
  %v379 = vsel %vm335, %v305, 0
  %v382 = vsel %vm335, %v306, 0
  %v385 = vsel %vm335, %v307, 0
  %v388 = vsel %vm335, %v308, 0
  %v391 = vsel %vm335, %v309, 0
  %v394 = vsel %vm335, %v310, 0
  %v397 = vsel %vm335, %v311, 0
  %v400 = vsel %vm335, %v312, 0
  %v403 = vsel %vm335, %v313, 0
  %v406 = vsel %vm335, %v314, 0
  %v409 = vsel %vm335, %v315, 0
  %v412 = vsel %vm335, %v316, 0
  %v415 = vsel %vm335, %v317, 0
  %v418 = vsel %vm335, %v318, 0
  %v421 = vsel %vm335, %v319, 0
  %v424 = vsel %vm335, %v320, 0
  %v427 = vsel %vm335, %v321, 0
  %v430 = vsel %vm335, %v322, 0
  %432 = vmatpush.bf16.msra.mxu0 0
  %433 = vmatpush.bf16.msra.mxu0 0
  %434 = vmatpush.bf16.msra.mxu0 0
  %435 = vmatpush.bf16.msra.mxu0 0
  %436 = vmatpush.bf16.msra.mxu0 0
  %437 = vmatpush.bf16.msra.mxu0 0
  %438 = vmatpush.bf16.msra.mxu0 0
  %439 = vmatpush.bf16.msra.mxu0 %v333
  %440 = vmatmul.bf16.gmra.mxu0 %v337
  %v441 = vpop.f32.mrf.mxu0
  %v442 = vadd.f32 %v327, %v441
  %v443 = vpop.f32.mrf.mxu0
  %v444 = vadd.f32 %v327, %v443
  %445 = vmatmul.bf16.gmra.mxu0 %v340
  %v446 = vpop.f32.mrf.mxu0
  %v447 = vadd.f32 %v327, %v446
  %v448 = vpop.f32.mrf.mxu0
  %v449 = vadd.f32 %v327, %v448
  %450 = vmatmul.bf16.gmra.mxu0 %v343
  %v451 = vpop.f32.mrf.mxu0
  %v452 = vadd.f32 %v327, %v451
  %v453 = vpop.f32.mrf.mxu0
  %v454 = vadd.f32 %v327, %v453
  %455 = vmatmul.bf16.gmra.mxu0 %v346
  %v456 = vpop.f32.mrf.mxu0
  %v457 = vadd.f32 %v327, %v456
  %v458 = vpop.f32.mrf.mxu0
  %v459 = vadd.f32 %v327, %v458
  %460 = vmatmul.bf16.gmra.mxu0 %v349
  %v461 = vpop.f32.mrf.mxu0
  %v462 = vadd.f32 %v327, %v461
  %v463 = vpop.f32.mrf.mxu0
  %v464 = vadd.f32 %v327, %v463
  %465 = vmatmul.bf16.gmra.mxu0 %v352
  %v466 = vpop.f32.mrf.mxu0
  %v467 = vadd.f32 %v327, %v466
  %v468 = vpop.f32.mrf.mxu0
  %v469 = vadd.f32 %v327, %v468
  %470 = vmatmul.bf16.gmra.mxu0 %v355
  %v471 = vpop.f32.mrf.mxu0
  %v472 = vadd.f32 %v327, %v471
  %v473 = vpop.f32.mrf.mxu0
  %v474 = vadd.f32 %v327, %v473
  %475 = vmatmul.bf16.gmra.mxu0 %v358
  %v476 = vpop.f32.mrf.mxu0
  %v477 = vadd.f32 %v327, %v476
  %v478 = vpop.f32.mrf.mxu0
  %v479 = vadd.f32 %v327, %v478
  %480 = vmatmul.bf16.gmra.mxu0 %v361
  %v481 = vpop.f32.mrf.mxu0
  %v482 = vadd.f32 %v327, %v481
  %v483 = vpop.f32.mrf.mxu0
  %v484 = vadd.f32 %v327, %v483
  %485 = vmatmul.bf16.gmra.mxu0 %v364
  %v486 = vpop.f32.mrf.mxu0
  %v487 = vadd.f32 %v327, %v486
  %v488 = vpop.f32.mrf.mxu0
  %v489 = vadd.f32 %v327, %v488
  %490 = vmatmul.bf16.gmra.mxu0 %v367
  %v491 = vpop.f32.mrf.mxu0
  %v492 = vadd.f32 %v327, %v491
  %v493 = vpop.f32.mrf.mxu0
  %v494 = vadd.f32 %v327, %v493
  %495 = vmatmul.bf16.gmra.mxu0 %v370
  %v496 = vpop.f32.mrf.mxu0
  %v497 = vadd.f32 %v327, %v496
  %v498 = vpop.f32.mrf.mxu0
  %v499 = vadd.f32 %v327, %v498
  %500 = vmatmul.bf16.gmra.mxu0 %v373
  %v501 = vpop.f32.mrf.mxu0
  %v502 = vadd.f32 %v327, %v501
  %v503 = vpop.f32.mrf.mxu0
  %v504 = vadd.f32 %v327, %v503
  %505 = vmatmul.bf16.gmra.mxu0 %v376
  %v506 = vpop.f32.mrf.mxu0
  %v507 = vadd.f32 %v327, %v506
  %v508 = vpop.f32.mrf.mxu0
  %v509 = vadd.f32 %v327, %v508
  %510 = vmatmul.bf16.gmra.mxu0 %v379
  %v511 = vpop.f32.mrf.mxu0
  %v512 = vadd.f32 %v327, %v511
  %v513 = vpop.f32.mrf.mxu0
  %v514 = vadd.f32 %v327, %v513
  %515 = vmatmul.bf16.gmra.mxu0 %v382
  %v516 = vpop.f32.mrf.mxu0
  %v517 = vadd.f32 %v327, %v516
  %v518 = vpop.f32.mrf.mxu0
  %v519 = vadd.f32 %v327, %v518
  %520 = vmatmul.bf16.gmra.mxu0 %v385
  %v521 = vpop.f32.mrf.mxu0
  %v522 = vadd.f32 %v327, %v521
  %v523 = vpop.f32.mrf.mxu0
  %v524 = vadd.f32 %v327, %v523
  %525 = vmatmul.bf16.gmra.mxu0 %v388
  %v526 = vpop.f32.mrf.mxu0
  %v527 = vadd.f32 %v327, %v526
  %v528 = vpop.f32.mrf.mxu0
  %v529 = vadd.f32 %v327, %v528
  %530 = vmatmul.bf16.gmra.mxu0 %v391
  %v531 = vpop.f32.mrf.mxu0
  %v532 = vadd.f32 %v327, %v531
  %v533 = vpop.f32.mrf.mxu0
  %v534 = vadd.f32 %v327, %v533
  %535 = vmatmul.bf16.gmra.mxu0 %v394
  %v536 = vpop.f32.mrf.mxu0
  %v537 = vadd.f32 %v327, %v536
  %v538 = vpop.f32.mrf.mxu0
  %v539 = vadd.f32 %v327, %v538
  %540 = vmatmul.bf16.gmra.mxu0 %v397
  %v541 = vpop.f32.mrf.mxu0
  %v542 = vadd.f32 %v327, %v541
  %v543 = vpop.f32.mrf.mxu0
  %v544 = vadd.f32 %v327, %v543
  %545 = vmatmul.bf16.gmra.mxu0 %v400
  %v546 = vpop.f32.mrf.mxu0
  %v547 = vadd.f32 %v327, %v546
  %v548 = vpop.f32.mrf.mxu0
  %v549 = vadd.f32 %v327, %v548
  %550 = vmatmul.bf16.gmra.mxu0 %v403
  %v551 = vpop.f32.mrf.mxu0
  %v552 = vadd.f32 %v327, %v551
  %v553 = vpop.f32.mrf.mxu0
  %v554 = vadd.f32 %v327, %v553
  %555 = vmatmul.bf16.gmra.mxu0 %v406
  %v556 = vpop.f32.mrf.mxu0
  %v557 = vadd.f32 %v327, %v556
  %v558 = vpop.f32.mrf.mxu0
  %v559 = vadd.f32 %v327, %v558
  %560 = vmatmul.bf16.gmra.mxu0 %v409
  %v561 = vpop.f32.mrf.mxu0
  %v562 = vadd.f32 %v327, %v561
  %v563 = vpop.f32.mrf.mxu0
  %v564 = vadd.f32 %v327, %v563
  %565 = vmatmul.bf16.gmra.mxu0 %v412
  %v566 = vpop.f32.mrf.mxu0
  %v567 = vadd.f32 %v327, %v566
  %v568 = vpop.f32.mrf.mxu0
  %v569 = vadd.f32 %v327, %v568
  %570 = vmatmul.bf16.gmra.mxu0 %v415
  %v571 = vpop.f32.mrf.mxu0
  %v572 = vadd.f32 %v327, %v571
  %v573 = vpop.f32.mrf.mxu0
  %v574 = vadd.f32 %v327, %v573
  %575 = vmatmul.bf16.gmra.mxu0 %v418
  %v576 = vpop.f32.mrf.mxu0
  %v577 = vadd.f32 %v327, %v576
  %v578 = vpop.f32.mrf.mxu0
  %v579 = vadd.f32 %v327, %v578
  %580 = vmatmul.bf16.gmra.mxu0 %v421
  %v581 = vpop.f32.mrf.mxu0
  %v582 = vadd.f32 %v327, %v581
  %v583 = vpop.f32.mrf.mxu0
  %v584 = vadd.f32 %v327, %v583
  %585 = vmatmul.bf16.gmra.mxu0 %v424
  %v586 = vpop.f32.mrf.mxu0
  %v587 = vadd.f32 %v327, %v586
  %v588 = vpop.f32.mrf.mxu0
  %v589 = vadd.f32 %v327, %v588
  %590 = vmatmul.bf16.gmra.mxu0 %v427
  %v591 = vpop.f32.mrf.mxu0
  %v592 = vadd.f32 %v327, %v591
  %v593 = vpop.f32.mrf.mxu0
  %v594 = vadd.f32 %v327, %v593
  %595 = vmatmul.bf16.gmra.mxu0 %v430
  %v596 = vpop.f32.mrf.mxu0
  %v597 = vadd.f32 %v327, %v596
  %v598 = vpop.f32.mrf.mxu0
  %v599 = vadd.f32 %v327, %v598
  %600 = vdwg.mxu0
  %v601 = vld [vmem:[%s5] sm:$0xff]
  %v602 = vld [vmem:[%s5 + $0x8] sm:$0xff]
  %v603 = vld [vmem:[%s5 + $0x10] sm:$0xff]
  %v604 = vld [vmem:[%s5 + $0x18] sm:$0xff]
  %v605 = vld [vmem:[%s5 + $0x20] sm:$0xff]
  %v606 = vld [vmem:[%s5 + $0x28] sm:$0xff]
  %v607 = vld [vmem:[%s5 + $0x30] sm:$0xff]
  %v608 = vld [vmem:[%s5 + $0x38] sm:$0xff]
  %v609 = vld [vmem:[%s5 + $0x40] sm:$0xff]
  %v610 = vld [vmem:[%s5 + $0x48] sm:$0xff]
  %v611 = vld [vmem:[%s5 + $0x50] sm:$0xff]
  %v612 = vld [vmem:[%s5 + $0x58] sm:$0xff]
  %v613 = vld [vmem:[%s5 + $0x60] sm:$0xff]
  %v614 = vld [vmem:[%s5 + $0x68] sm:$0xff]
  %v615 = vld [vmem:[%s5 + $0x70] sm:$0xff]
  %v616 = vld [vmem:[%s5 + $0x78] sm:$0xff]
  %v617 = vld [vmem:[%s5 + $0x80] sm:$0xff]
  %v618 = vld [vmem:[%s5 + $0x88] sm:$0xff]
  %v619 = vld [vmem:[%s5 + $0x90] sm:$0xff]
  %v620 = vld [vmem:[%s5 + $0x98] sm:$0xff]
  %v621 = vld [vmem:[%s5 + $0xa0] sm:$0xff]
  %v622 = vld [vmem:[%s5 + $0xa8] sm:$0xff]
  %v623 = vld [vmem:[%s5 + $0xb0] sm:$0xff]
  %v624 = vld [vmem:[%s5 + $0xb8] sm:$0xff]
  %v625 = vld [vmem:[%s5 + $0xc0] sm:$0xff]
  %v626 = vld [vmem:[%s5 + $0xc8] sm:$0xff]
  %v627 = vld [vmem:[%s5 + $0xd0] sm:$0xff]
  %v628 = vld [vmem:[%s5 + $0xd8] sm:$0xff]
  %v629 = vld [vmem:[%s5 + $0xe0] sm:$0xff]
  %v630 = vld [vmem:[%s5 + $0xe8] sm:$0xff]
  %v631 = vld [vmem:[%s5 + $0xf0] sm:$0xff]
  %v632 = vld [vmem:[%s5 + $0xf8] sm:$0xff]
  %v633 = vld [vmem:[%s5 + $0x100] sm:$0xff]
  %v634 = vld [vmem:[%s5 + $0x108] sm:$0xff]
  %v635 = vld [vmem:[%s5 + $0x110] sm:$0xff]
  %v636 = vld [vmem:[%s5 + $0x118] sm:$0xff]
  %v637 = vld [vmem:[%s5 + $0x120] sm:$0xff]
  %v638 = vld [vmem:[%s5 + $0x128] sm:$0xff]
  %v639 = vld [vmem:[%s5 + $0x130] sm:$0xff]
  %v640 = vld [vmem:[%s5 + $0x138] sm:$0xff]
  %v641 = vld [vmem:[%s5 + $0x140] sm:$0xff]
  %v642 = vld [vmem:[%s5 + $0x148] sm:$0xff]
  %v643 = vld [vmem:[%s5 + $0x150] sm:$0xff]
  %v644 = vld [vmem:[%s5 + $0x158] sm:$0xff]
  %v645 = vld [vmem:[%s5 + $0x160] sm:$0xff]
  %v646 = vld [vmem:[%s5 + $0x168] sm:$0xff]
  %v647 = vld [vmem:[%s5 + $0x170] sm:$0xff]
  %v648 = vld [vmem:[%s5 + $0x178] sm:$0xff]
  %v649 = vld [vmem:[%s5 + $0x180] sm:$0xff]
  %v650 = vld [vmem:[%s5 + $0x188] sm:$0xff]
  %v651 = vld [vmem:[%s5 + $0x190] sm:$0xff]
  %v652 = vld [vmem:[%s5 + $0x198] sm:$0xff]
  %v653 = vld [vmem:[%s5 + $0x1a0] sm:$0xff]
  %v654 = vld [vmem:[%s5 + $0x1a8] sm:$0xff]
  %v655 = vld [vmem:[%s5 + $0x1b0] sm:$0xff]
  %v656 = vld [vmem:[%s5 + $0x1b8] sm:$0xff]
  %v657 = vld [vmem:[%s5 + $0x1c0] sm:$0xff]
  %v658 = vld [vmem:[%s5 + $0x1c8] sm:$0xff]
  %v659 = vld [vmem:[%s5 + $0x1d0] sm:$0xff]
  %v660 = vld [vmem:[%s5 + $0x1d8] sm:$0xff]
  %v661 = vld [vmem:[%s5 + $0x1e0] sm:$0xff]
  %v662 = vld [vmem:[%s5 + $0x1e8] sm:$0xff]
  %v663 = vld [vmem:[%s5 + $0x1f0] sm:$0xff]
  %v664 = vld [vmem:[%s5 + $0x1f8] sm:$0xff]
  %v665 = vadd.f32 %v442, %v601
  %v666 = vadd.f32 %v444, %v602
  %v667 = vadd.f32 %v447, %v603
  %v668 = vadd.f32 %v449, %v604
  %v669 = vadd.f32 %v452, %v605
  %v670 = vadd.f32 %v454, %v606
  %v671 = vadd.f32 %v457, %v607
  %v672 = vadd.f32 %v459, %v608
  %v673 = vadd.f32 %v462, %v609
  %v674 = vadd.f32 %v464, %v610
  %v675 = vadd.f32 %v467, %v611
  %v676 = vadd.f32 %v469, %v612
  %v677 = vadd.f32 %v472, %v613
  %v678 = vadd.f32 %v474, %v614
  %v679 = vadd.f32 %v477, %v615
  %v680 = vadd.f32 %v479, %v616
  %v681 = vadd.f32 %v482, %v617
  %v682 = vadd.f32 %v484, %v618
  %v683 = vadd.f32 %v487, %v619
  %v684 = vadd.f32 %v489, %v620
  %v685 = vadd.f32 %v492, %v621
  %v686 = vadd.f32 %v494, %v622
  %v687 = vadd.f32 %v497, %v623
  %v688 = vadd.f32 %v499, %v624
  %v689 = vadd.f32 %v502, %v625
  %v690 = vadd.f32 %v504, %v626
  %v691 = vadd.f32 %v507, %v627
  %v692 = vadd.f32 %v509, %v628
  %v693 = vadd.f32 %v512, %v629
  %v694 = vadd.f32 %v514, %v630
  %v695 = vadd.f32 %v517, %v631
  %v696 = vadd.f32 %v519, %v632
  %v697 = vadd.f32 %v522, %v633
  %v698 = vadd.f32 %v524, %v634
  %v699 = vadd.f32 %v527, %v635
  %v700 = vadd.f32 %v529, %v636
  %v701 = vadd.f32 %v532, %v637
  %v702 = vadd.f32 %v534, %v638
  %v703 = vadd.f32 %v537, %v639
  %v704 = vadd.f32 %v539, %v640
  %v705 = vadd.f32 %v542, %v641
  %v706 = vadd.f32 %v544, %v642
  %v707 = vadd.f32 %v547, %v643
  %v708 = vadd.f32 %v549, %v644
  %v709 = vadd.f32 %v552, %v645
  %v710 = vadd.f32 %v554, %v646
  %v711 = vadd.f32 %v557, %v647
  %v712 = vadd.f32 %v559, %v648
  %v713 = vadd.f32 %v562, %v649
  %v714 = vadd.f32 %v564, %v650
  %v715 = vadd.f32 %v567, %v651
  %v716 = vadd.f32 %v569, %v652
  %v717 = vadd.f32 %v572, %v653
  %v718 = vadd.f32 %v574, %v654
  %v719 = vadd.f32 %v577, %v655
  %v720 = vadd.f32 %v579, %v656
  %v721 = vadd.f32 %v582, %v657
  %v722 = vadd.f32 %v584, %v658
  %v723 = vadd.f32 %v587, %v659
  %v724 = vadd.f32 %v589, %v660
  %v725 = vadd.f32 %v592, %v661
  %v726 = vadd.f32 %v594, %v662
  %v727 = vadd.f32 %v597, %v663
  %v728 = vadd.f32 %v599, %v664
  %vm729 = vcmask 261120
  %730 = vst.msk [vmem:[%s6] sm:$0xff] %vm729, %v665
  %731 = vst.msk [vmem:[%s6 + $0x8] sm:$0xff] %vm729, %v666
  %732 = vst.msk [vmem:[%s6 + $0x10] sm:$0xff] %vm729, %v667
  %733 = vst.msk [vmem:[%s6 + $0x18] sm:$0xff] %vm729, %v668
  %734 = vst.msk [vmem:[%s6 + $0x20] sm:$0xff] %vm729, %v669
  %735 = vst.msk [vmem:[%s6 + $0x28] sm:$0xff] %vm729, %v670
  %736 = vst.msk [vmem:[%s6 + $0x30] sm:$0xff] %vm729, %v671
  %737 = vst.msk [vmem:[%s6 + $0x38] sm:$0xff] %vm729, %v672
  %738 = vst.msk [vmem:[%s6 + $0x40] sm:$0xff] %vm729, %v673
  %739 = vst.msk [vmem:[%s6 + $0x48] sm:$0xff] %vm729, %v674
  %740 = vst.msk [vmem:[%s6 + $0x50] sm:$0xff] %vm729, %v675
  %741 = vst.msk [vmem:[%s6 + $0x58] sm:$0xff] %vm729, %v676
  %742 = vst.msk [vmem:[%s6 + $0x60] sm:$0xff] %vm729, %v677
  %743 = vst.msk [vmem:[%s6 + $0x68] sm:$0xff] %vm729, %v678
  %744 = vst.msk [vmem:[%s6 + $0x70] sm:$0xff] %vm729, %v679
  %745 = vst.msk [vmem:[%s6 + $0x78] sm:$0xff] %vm729, %v680
  %746 = vst.msk [vmem:[%s6 + $0x80] sm:$0xff] %vm729, %v681
  %747 = vst.msk [vmem:[%s6 + $0x88] sm:$0xff] %vm729, %v682
  %748 = vst.msk [vmem:[%s6 + $0x90] sm:$0xff] %vm729, %v683
  %749 = vst.msk [vmem:[%s6 + $0x98] sm:$0xff] %vm729, %v684
  %750 = vst.msk [vmem:[%s6 + $0xa0] sm:$0xff] %vm729, %v685
  %751 = vst.msk [vmem:[%s6 + $0xa8] sm:$0xff] %vm729, %v686
  %752 = vst.msk [vmem:[%s6 + $0xb0] sm:$0xff] %vm729, %v687
  %753 = vst.msk [vmem:[%s6 + $0xb8] sm:$0xff] %vm729, %v688
  %754 = vst.msk [vmem:[%s6 + $0xc0] sm:$0xff] %vm729, %v689
  %755 = vst.msk [vmem:[%s6 + $0xc8] sm:$0xff] %vm729, %v690
  %756 = vst.msk [vmem:[%s6 + $0xd0] sm:$0xff] %vm729, %v691
  %757 = vst.msk [vmem:[%s6 + $0xd8] sm:$0xff] %vm729, %v692
  %758 = vst.msk [vmem:[%s6 + $0xe0] sm:$0xff] %vm729, %v693
  %759 = vst.msk [vmem:[%s6 + $0xe8] sm:$0xff] %vm729, %v694
  %760 = vst.msk [vmem:[%s6 + $0xf0] sm:$0xff] %vm729, %v695
  %761 = vst.msk [vmem:[%s6 + $0xf8] sm:$0xff] %vm729, %v696
  %762 = vst.msk [vmem:[%s6 + $0x100] sm:$0xff] %vm729, %v697
  %763 = vst.msk [vmem:[%s6 + $0x108] sm:$0xff] %vm729, %v698
  %764 = vst.msk [vmem:[%s6 + $0x110] sm:$0xff] %vm729, %v699
  %765 = vst.msk [vmem:[%s6 + $0x118] sm:$0xff] %vm729, %v700
  %766 = vst.msk [vmem:[%s6 + $0x120] sm:$0xff] %vm729, %v701
  %767 = vst.msk [vmem:[%s6 + $0x128] sm:$0xff] %vm729, %v702
  %768 = vst.msk [vmem:[%s6 + $0x130] sm:$0xff] %vm729, %v703
  %769 = vst.msk [vmem:[%s6 + $0x138] sm:$0xff] %vm729, %v704
  %770 = vst.msk [vmem:[%s6 + $0x140] sm:$0xff] %vm729, %v705
  %771 = vst.msk [vmem:[%s6 + $0x148] sm:$0xff] %vm729, %v706
  %772 = vst.msk [vmem:[%s6 + $0x150] sm:$0xff] %vm729, %v707
  %773 = vst.msk [vmem:[%s6 + $0x158] sm:$0xff] %vm729, %v708
  %774 = vst.msk [vmem:[%s6 + $0x160] sm:$0xff] %vm729, %v709
  %775 = vst.msk [vmem:[%s6 + $0x168] sm:$0xff] %vm729, %v710
  %776 = vst.msk [vmem:[%s6 + $0x170] sm:$0xff] %vm729, %v711
  %777 = vst.msk [vmem:[%s6 + $0x178] sm:$0xff] %vm729, %v712
  %778 = vst.msk [vmem:[%s6 + $0x180] sm:$0xff] %vm729, %v713
  %779 = vst.msk [vmem:[%s6 + $0x188] sm:$0xff] %vm729, %v714
  %780 = vst.msk [vmem:[%s6 + $0x190] sm:$0xff] %vm729, %v715
  %781 = vst.msk [vmem:[%s6 + $0x198] sm:$0xff] %vm729, %v716
  %782 = vst.msk [vmem:[%s6 + $0x1a0] sm:$0xff] %vm729, %v717
  %783 = vst.msk [vmem:[%s6 + $0x1a8] sm:$0xff] %vm729, %v718
  %784 = vst.msk [vmem:[%s6 + $0x1b0] sm:$0xff] %vm729, %v719
  %785 = vst.msk [vmem:[%s6 + $0x1b8] sm:$0xff] %vm729, %v720
  %786 = vst.msk [vmem:[%s6 + $0x1c0] sm:$0xff] %vm729, %v721
  %787 = vst.msk [vmem:[%s6 + $0x1c8] sm:$0xff] %vm729, %v722
  %788 = vst.msk [vmem:[%s6 + $0x1d0] sm:$0xff] %vm729, %v723
  %789 = vst.msk [vmem:[%s6 + $0x1d8] sm:$0xff] %vm729, %v724
  %790 = vst.msk [vmem:[%s6 + $0x1e0] sm:$0xff] %vm729, %v725
  %791 = vst.msk [vmem:[%s6 + $0x1e8] sm:$0xff] %vm729, %v726
  %792 = vst.msk [vmem:[%s6 + $0x1f0] sm:$0xff] %vm729, %v727
  %793 = vst.msk [vmem:[%s6 + $0x1f8] sm:$0xff] %vm729, %v728
  %v794 = vsel %vm729, %v665, 0.0
  %v795 = vsel %vm729, %v666, 0.0
  %v796 = vadd.f32 %v794, %v795
  %v797 = vsel %vm729, %v667, 0.0
  %v798 = vadd.f32 %v796, %v797
  %v799 = vsel %vm729, %v668, 0.0
  %v800 = vadd.f32 %v798, %v799
  %v801 = vsel %vm729, %v669, 0.0
  %v802 = vadd.f32 %v800, %v801
  %v803 = vsel %vm729, %v670, 0.0
  %v804 = vadd.f32 %v802, %v803
  %v805 = vsel %vm729, %v671, 0.0
  %v806 = vadd.f32 %v804, %v805
  %v807 = vsel %vm729, %v672, 0.0
  %v808 = vadd.f32 %v806, %v807
  %v809 = vsel %vm729, %v673, 0.0
  %v810 = vadd.f32 %v808, %v809
  %v811 = vsel %vm729, %v674, 0.0
  %v812 = vadd.f32 %v810, %v811
  %v813 = vsel %vm729, %v675, 0.0
  %v814 = vadd.f32 %v812, %v813
  %v815 = vsel %vm729, %v676, 0.0
  %v816 = vadd.f32 %v814, %v815
  %v817 = vsel %vm729, %v677, 0.0
  %v818 = vadd.f32 %v816, %v817
  %v819 = vsel %vm729, %v678, 0.0
  %v820 = vadd.f32 %v818, %v819
  %v821 = vsel %vm729, %v679, 0.0
  %v822 = vadd.f32 %v820, %v821
  %v823 = vsel %vm729, %v680, 0.0
  %v824 = vadd.f32 %v822, %v823
  %v825 = vsel %vm729, %v681, 0.0
  %v826 = vadd.f32 %v824, %v825
  %v827 = vsel %vm729, %v682, 0.0
  %v828 = vadd.f32 %v826, %v827
  %v829 = vsel %vm729, %v683, 0.0
  %v830 = vadd.f32 %v828, %v829
  %v831 = vsel %vm729, %v684, 0.0
  %v832 = vadd.f32 %v830, %v831
  %v833 = vsel %vm729, %v685, 0.0
  %v834 = vadd.f32 %v832, %v833
  %v835 = vsel %vm729, %v686, 0.0
  %v836 = vadd.f32 %v834, %v835
  %v837 = vsel %vm729, %v687, 0.0
  %v838 = vadd.f32 %v836, %v837
  %v839 = vsel %vm729, %v688, 0.0
  %v840 = vadd.f32 %v838, %v839
  %v841 = vsel %vm729, %v689, 0.0
  %v842 = vadd.f32 %v840, %v841
  %v843 = vsel %vm729, %v690, 0.0
  %v844 = vadd.f32 %v842, %v843
  %v845 = vsel %vm729, %v691, 0.0
  %v846 = vadd.f32 %v844, %v845
  %v847 = vsel %vm729, %v692, 0.0
  %v848 = vadd.f32 %v846, %v847
  %v849 = vsel %vm729, %v693, 0.0
  %v850 = vadd.f32 %v848, %v849
  %v851 = vsel %vm729, %v694, 0.0
  %v852 = vadd.f32 %v850, %v851
  %v853 = vsel %vm729, %v695, 0.0
  %v854 = vadd.f32 %v852, %v853
  %v855 = vsel %vm729, %v696, 0.0
  %v856 = vadd.f32 %v854, %v855
  %v857 = vsel %vm729, %v697, 0.0
  %v858 = vadd.f32 %v856, %v857
  %v859 = vsel %vm729, %v698, 0.0
  %v860 = vadd.f32 %v858, %v859
  %v861 = vsel %vm729, %v699, 0.0
  %v862 = vadd.f32 %v860, %v861
  %v863 = vsel %vm729, %v700, 0.0
  %v864 = vadd.f32 %v862, %v863
  %v865 = vsel %vm729, %v701, 0.0
  %v866 = vadd.f32 %v864, %v865
  %v867 = vsel %vm729, %v702, 0.0
  %v868 = vadd.f32 %v866, %v867
  %v869 = vsel %vm729, %v703, 0.0
  %v870 = vadd.f32 %v868, %v869
  %v871 = vsel %vm729, %v704, 0.0
  %v872 = vadd.f32 %v870, %v871
  %v873 = vsel %vm729, %v705, 0.0
  %v874 = vadd.f32 %v872, %v873
  %v875 = vsel %vm729, %v706, 0.0
  %v876 = vadd.f32 %v874, %v875
  %v877 = vsel %vm729, %v707, 0.0
  %v878 = vadd.f32 %v876, %v877
  %v879 = vsel %vm729, %v708, 0.0
  %v880 = vadd.f32 %v878, %v879
  %v881 = vsel %vm729, %v709, 0.0
  %v882 = vadd.f32 %v880, %v881
  %v883 = vsel %vm729, %v710, 0.0
  %v884 = vadd.f32 %v882, %v883
  %v885 = vsel %vm729, %v711, 0.0
  %v886 = vadd.f32 %v884, %v885
  %v887 = vsel %vm729, %v712, 0.0
  %v888 = vadd.f32 %v886, %v887
  %v889 = vsel %vm729, %v713, 0.0
  %v890 = vadd.f32 %v888, %v889
  %v891 = vsel %vm729, %v714, 0.0
  %v892 = vadd.f32 %v890, %v891
  %v893 = vsel %vm729, %v715, 0.0
  %v894 = vadd.f32 %v892, %v893
  %v895 = vsel %vm729, %v716, 0.0
  %v896 = vadd.f32 %v894, %v895
  %v897 = vsel %vm729, %v717, 0.0
  %v898 = vadd.f32 %v896, %v897
  %v899 = vsel %vm729, %v718, 0.0
  %v900 = vadd.f32 %v898, %v899
  %v901 = vsel %vm729, %v719, 0.0
  %v902 = vadd.f32 %v900, %v901
  %v903 = vsel %vm729, %v720, 0.0
  %v904 = vadd.f32 %v902, %v903
  %v905 = vsel %vm729, %v721, 0.0
  %v906 = vadd.f32 %v904, %v905
  %v907 = vsel %vm729, %v722, 0.0
  %v908 = vadd.f32 %v906, %v907
  %v909 = vsel %vm729, %v723, 0.0
  %v910 = vadd.f32 %v908, %v909
  %v911 = vsel %vm729, %v724, 0.0
  %v912 = vadd.f32 %v910, %v911
  %v913 = vsel %vm729, %v725, 0.0
  %v914 = vadd.f32 %v912, %v913
  %v915 = vsel %vm729, %v726, 0.0
  %v916 = vadd.f32 %v914, %v915
  %v917 = vsel %vm729, %v727, 0.0
  %v918 = vadd.f32 %v916, %v917
  %v919 = vsel %vm729, %v728, 0.0
  %v920 = vadd.f32 %v918, %v919
  %v921 = vrot.slane %v920, 4
  %v922 = vadd.f32 %v920, %v921
  %v923 = vrot.slane %v922, 2
  %v924 = vadd.f32 %v922, %v923
  %v925 = vrot.slane %v924, 1
  %v926 = vadd.f32 %v924, %v925
  %v927 = vmul.f32 %v665, %v665
  %v928 = vmul.f32 %v666, %v666
  %v929 = vmul.f32 %v667, %v667
  %v930 = vmul.f32 %v668, %v668
  %v931 = vmul.f32 %v669, %v669
  %v932 = vmul.f32 %v670, %v670
  %v933 = vmul.f32 %v671, %v671
  %v934 = vmul.f32 %v672, %v672
  %v935 = vmul.f32 %v673, %v673
  %v936 = vmul.f32 %v674, %v674
  %v937 = vmul.f32 %v675, %v675
  %v938 = vmul.f32 %v676, %v676
  %v939 = vmul.f32 %v677, %v677
  %v940 = vmul.f32 %v678, %v678
  %v941 = vmul.f32 %v679, %v679
  %v942 = vmul.f32 %v680, %v680
  %v943 = vmul.f32 %v681, %v681
  %v944 = vmul.f32 %v682, %v682
  %v945 = vmul.f32 %v683, %v683
  %v946 = vmul.f32 %v684, %v684
  %v947 = vmul.f32 %v685, %v685
  %v948 = vmul.f32 %v686, %v686
  %v949 = vmul.f32 %v687, %v687
  %v950 = vmul.f32 %v688, %v688
  %v951 = vmul.f32 %v689, %v689
  %v952 = vmul.f32 %v690, %v690
  %v953 = vmul.f32 %v691, %v691
  %v954 = vmul.f32 %v692, %v692
  %v955 = vmul.f32 %v693, %v693
  %v956 = vmul.f32 %v694, %v694
  %v957 = vmul.f32 %v695, %v695
  %v958 = vmul.f32 %v696, %v696
  %v959 = vmul.f32 %v697, %v697
  %v960 = vmul.f32 %v698, %v698
  %v961 = vmul.f32 %v699, %v699
  %v962 = vmul.f32 %v700, %v700
  %v963 = vmul.f32 %v701, %v701
  %v964 = vmul.f32 %v702, %v702
  %v965 = vmul.f32 %v703, %v703
  %v966 = vmul.f32 %v704, %v704
  %v967 = vmul.f32 %v705, %v705
  %v968 = vmul.f32 %v706, %v706
  %v969 = vmul.f32 %v707, %v707
  %v970 = vmul.f32 %v708, %v708
  %v971 = vmul.f32 %v709, %v709
  %v972 = vmul.f32 %v710, %v710
  %v973 = vmul.f32 %v711, %v711
  %v974 = vmul.f32 %v712, %v712
  %v975 = vmul.f32 %v713, %v713
  %v976 = vmul.f32 %v714, %v714
  %v977 = vmul.f32 %v715, %v715
  %v978 = vmul.f32 %v716, %v716
  %v979 = vmul.f32 %v717, %v717
  %v980 = vmul.f32 %v718, %v718
  %v981 = vmul.f32 %v719, %v719
  %v982 = vmul.f32 %v720, %v720
  %v983 = vmul.f32 %v721, %v721
  %v984 = vmul.f32 %v722, %v722
  %v985 = vmul.f32 %v723, %v723
  %v986 = vmul.f32 %v724, %v724
  %v987 = vmul.f32 %v725, %v725
  %v988 = vmul.f32 %v726, %v726
  %v989 = vmul.f32 %v727, %v727
  %v990 = vmul.f32 %v728, %v728
  %v991 = vsel %vm729, %v927, 0.0
  %v992 = vsel %vm729, %v928, 0.0
  %v993 = vadd.f32 %v991, %v992
  %v994 = vsel %vm729, %v929, 0.0
  %v995 = vadd.f32 %v993, %v994
  %v996 = vsel %vm729, %v930, 0.0
  %v997 = vadd.f32 %v995, %v996
  %v998 = vsel %vm729, %v931, 0.0
  %v999 = vadd.f32 %v997, %v998
  %v1000 = vsel %vm729, %v932, 0.0
  %v1001 = vadd.f32 %v999, %v1000
  %v1002 = vsel %vm729, %v933, 0.0
  %v1003 = vadd.f32 %v1001, %v1002
  %v1004 = vsel %vm729, %v934, 0.0
  %v1005 = vadd.f32 %v1003, %v1004
  %v1006 = vsel %vm729, %v935, 0.0
  %v1007 = vadd.f32 %v1005, %v1006
  %v1008 = vsel %vm729, %v936, 0.0
  %v1009 = vadd.f32 %v1007, %v1008
  %v1010 = vsel %vm729, %v937, 0.0
  %v1011 = vadd.f32 %v1009, %v1010
  %v1012 = vsel %vm729, %v938, 0.0
  %v1013 = vadd.f32 %v1011, %v1012
  %v1014 = vsel %vm729, %v939, 0.0
  %v1015 = vadd.f32 %v1013, %v1014
  %v1016 = vsel %vm729, %v940, 0.0
  %v1017 = vadd.f32 %v1015, %v1016
  %v1018 = vsel %vm729, %v941, 0.0
  %v1019 = vadd.f32 %v1017, %v1018
  %v1020 = vsel %vm729, %v942, 0.0
  %v1021 = vadd.f32 %v1019, %v1020
  %v1022 = vsel %vm729, %v943, 0.0
  %v1023 = vadd.f32 %v1021, %v1022
  %v1024 = vsel %vm729, %v944, 0.0
  %v1025 = vadd.f32 %v1023, %v1024
  %v1026 = vsel %vm729, %v945, 0.0
  %v1027 = vadd.f32 %v1025, %v1026
  %v1028 = vsel %vm729, %v946, 0.0
  %v1029 = vadd.f32 %v1027, %v1028
  %v1030 = vsel %vm729, %v947, 0.0
  %v1031 = vadd.f32 %v1029, %v1030
  %v1032 = vsel %vm729, %v948, 0.0
  %v1033 = vadd.f32 %v1031, %v1032
  %v1034 = vsel %vm729, %v949, 0.0
  %v1035 = vadd.f32 %v1033, %v1034
  %v1036 = vsel %vm729, %v950, 0.0
  %v1037 = vadd.f32 %v1035, %v1036
  %v1038 = vsel %vm729, %v951, 0.0
  %v1039 = vadd.f32 %v1037, %v1038
  %v1040 = vsel %vm729, %v952, 0.0
  %v1041 = vadd.f32 %v1039, %v1040
  %v1042 = vsel %vm729, %v953, 0.0
  %v1043 = vadd.f32 %v1041, %v1042
  %v1044 = vsel %vm729, %v954, 0.0
  %v1045 = vadd.f32 %v1043, %v1044
  %v1046 = vsel %vm729, %v955, 0.0
  %v1047 = vadd.f32 %v1045, %v1046
  %v1048 = vsel %vm729, %v956, 0.0
  %v1049 = vadd.f32 %v1047, %v1048
  %v1050 = vsel %vm729, %v957, 0.0
  %v1051 = vadd.f32 %v1049, %v1050
  %v1052 = vsel %vm729, %v958, 0.0
  %v1053 = vadd.f32 %v1051, %v1052
  %v1054 = vsel %vm729, %v959, 0.0
  %v1055 = vadd.f32 %v1053, %v1054
  %v1056 = vsel %vm729, %v960, 0.0
  %v1057 = vadd.f32 %v1055, %v1056
  %v1058 = vsel %vm729, %v961, 0.0
  %v1059 = vadd.f32 %v1057, %v1058
  %v1060 = vsel %vm729, %v962, 0.0
  %v1061 = vadd.f32 %v1059, %v1060
  %v1062 = vsel %vm729, %v963, 0.0
  %v1063 = vadd.f32 %v1061, %v1062
  %v1064 = vsel %vm729, %v964, 0.0
  %v1065 = vadd.f32 %v1063, %v1064
  %v1066 = vsel %vm729, %v965, 0.0
  %v1067 = vadd.f32 %v1065, %v1066
  %v1068 = vsel %vm729, %v966, 0.0
  %v1069 = vadd.f32 %v1067, %v1068
  %v1070 = vsel %vm729, %v967, 0.0
  %v1071 = vadd.f32 %v1069, %v1070
  %v1072 = vsel %vm729, %v968, 0.0
  %v1073 = vadd.f32 %v1071, %v1072
  %v1074 = vsel %vm729, %v969, 0.0
  %v1075 = vadd.f32 %v1073, %v1074
  %v1076 = vsel %vm729, %v970, 0.0
  %v1077 = vadd.f32 %v1075, %v1076
  %v1078 = vsel %vm729, %v971, 0.0
  %v1079 = vadd.f32 %v1077, %v1078
  %v1080 = vsel %vm729, %v972, 0.0
  %v1081 = vadd.f32 %v1079, %v1080
  %v1082 = vsel %vm729, %v973, 0.0
  %v1083 = vadd.f32 %v1081, %v1082
  %v1084 = vsel %vm729, %v974, 0.0
  %v1085 = vadd.f32 %v1083, %v1084
  %v1086 = vsel %vm729, %v975, 0.0
  %v1087 = vadd.f32 %v1085, %v1086
  %v1088 = vsel %vm729, %v976, 0.0
  %v1089 = vadd.f32 %v1087, %v1088
  %v1090 = vsel %vm729, %v977, 0.0
  %v1091 = vadd.f32 %v1089, %v1090
  %v1092 = vsel %vm729, %v978, 0.0
  %v1093 = vadd.f32 %v1091, %v1092
  %v1094 = vsel %vm729, %v979, 0.0
  %v1095 = vadd.f32 %v1093, %v1094
  %v1096 = vsel %vm729, %v980, 0.0
  %v1097 = vadd.f32 %v1095, %v1096
  %v1098 = vsel %vm729, %v981, 0.0
  %v1099 = vadd.f32 %v1097, %v1098
  %v1100 = vsel %vm729, %v982, 0.0
  %v1101 = vadd.f32 %v1099, %v1100
  %v1102 = vsel %vm729, %v983, 0.0
  %v1103 = vadd.f32 %v1101, %v1102
  %v1104 = vsel %vm729, %v984, 0.0
  %v1105 = vadd.f32 %v1103, %v1104
  %v1106 = vsel %vm729, %v985, 0.0
  %v1107 = vadd.f32 %v1105, %v1106
  %v1108 = vsel %vm729, %v986, 0.0
  %v1109 = vadd.f32 %v1107, %v1108
  %v1110 = vsel %vm729, %v987, 0.0
  %v1111 = vadd.f32 %v1109, %v1110
  %v1112 = vsel %vm729, %v988, 0.0
  %v1113 = vadd.f32 %v1111, %v1112
  %v1114 = vsel %vm729, %v989, 0.0
  %v1115 = vadd.f32 %v1113, %v1114
  %v1116 = vsel %vm729, %v990, 0.0
  %v1117 = vadd.f32 %v1115, %v1116
  %v1118 = vrot.slane %v1117, 4
  %v1119 = vadd.f32 %v1117, %v1118
  %v1120 = vrot.slane %v1119, 2
  %v1121 = vadd.f32 %v1119, %v1120
  %v1122 = vrot.slane %v1121, 1
  %v1123 = vadd.f32 %v1121, %v1122
  %vm1124 = vcmask 253952
  %1125 = vst.msk [vmem:[%s7] sm:$0x1] %vm1124, %v926
  %1126 = vst.msk [vmem:[%s8] sm:$0x1] %vm1124, %v1123
  // Predicated region
  $region26: #{pyraconvblock_forward.14} parent=0 // pred_check
    _
  $region27: #{pyraconvblock_forward.14} parent=0 // pred_check_branch
    %1128 = sbr.rel (0) target = $region29
  $region28: #{pyraconvblock_forward.14} parent=0 // pred_region
    _
  $region29: #{pyraconvblock_forward.14} parent=0 // pred_fallthru
    _
  // Predicated region
  $region30: #{pyraconvblock_forward.14} parent=0 // pred_check
    _
  $region31: #{pyraconvblock_forward.14} parent=0 // pred_check_branch
    %1130 = sbr.rel (0) target = $region33
  $region32: #{pyraconvblock_forward.14} parent=0 // pred_region
    _
  $region33: #{pyraconvblock_forward.14} parent=0 // pred_fallthru
    _
  // Predicated region
  $region34: #{pyraconvblock_forward.14} parent=0 // pred_check
    _
  $region35: #{pyraconvblock_forward.14} parent=0 // pred_check_branch
    %1132 = sbr.rel (0) target = $region37
  $region36: #{pyraconvblock_forward.14} parent=0 // pred_region
    _
  $region37: #{pyraconvblock_forward.14} parent=0 // pred_fallthru
    _
  // Predicated region
  $region38: #{pyraconvblock_forward.14} parent=0 // pred_check
    _
  $region39: #{pyraconvblock_forward.14} parent=0 // pred_check_branch
    %1134 = sbr.rel (0) target = $region41
  $region40: #{pyraconvblock_forward.14} parent=0 // pred_region
    _
  $region41: #{pyraconvblock_forward.14} parent=0 // pred_fallthru
    _
  // Predicated region
  $region42: #{pyraconvblock_forward.14} parent=0 // pred_check
    _
  $region43: #{pyraconvblock_forward.14} parent=0 // pred_check_branch
    %1136 = sbr.rel (0) target = $region45
  $region44: #{pyraconvblock_forward.14} parent=0 // pred_region
    _
  $region45: #{pyraconvblock_forward.14} parent=0 // pred_fallthru
    _
  // Predicated region
  $region46: #{pyraconvblock_forward.14} parent=0 // pred_check
    _
  $region47: #{pyraconvblock_forward.14} parent=0 // pred_check_branch
    %1138 = sbr.rel (0) target = $region49
  $region48: #{pyraconvblock_forward.14} parent=0 // pred_region
    _
  $region49: #{pyraconvblock_forward.14} parent=0 // pred_fallthru
    _

// kernel: pyraconvblock_forward.10
$region0: #{pyraconvblock_forward.10}
  #allocation0 [shape = 'u32[]', space=smem, size = 0x4, offset = 0x4, fixed_abs, tag = 'smem constant byte address 0x4 - core index']
  #allocation1 [shape = 'u32[72,128]{1,0:T(1,128)}', space=vmem, size = 0x9000, scoped, tag = 'internal scratch']
  %s0 = inlined_call_operand.vmem [shape: f32[2,608,32], index: 0, kind: input, shape index: {}]
  %s1 = inlined_call_operand.vmem [shape: f32[608,1], index: 1, kind: input, shape index: {}]
  %s2 = inlined_call_operand.vmem [shape: f32[1,32], index: 2, kind: input, shape index: {}]
  %s3 = inlined_call_operand.vmem [shape: f32[1,32], index: 3, kind: input, shape index: {}]
  %s4 = inlined_call_operand.vmem [shape: bf16[3,96,32], index: 4, kind: input, shape index: {}]
  %s5 = inlined_call_operand.vmem [shape: f32[1,32], index: 5, kind: input, shape index: {}]
  %s6 = inlined_call_operand.vmem [shape: f32[2,512,32], index: 6, kind: output, shape index: {}]
  %s7 = sld [smem:[#allocation0]]
  $region57: #{pyraconvblock_forward.10} parent=0
    _
  %s9 = ssub.s32 1, %s7
  %s10 = scalar_select 0, %s9, %s7
  loop: start=0, step=1, limit=4
  $region2: #{pyraconvblock_forward.10} parent=0 // loop_pre_header
    _
  $region3: #{pyraconvblock_forward.10} parent=0 // loop_header
    %s12 = sphi 0, %s16
    %p13 = scmp.ge.s32.totalorder %s12, 4
    %s22 = sphi 0, %s24
    %s25 = sphi 0, %s22
    %s26 = sphi 0, %s25
    %s42 = sphi 0, %s26
    %s46 = sphi 0, %s46
    %s48 = sphi 0, %s46
    %s49 = sphi 0, %s48
    %s63 = sphi 0, %s49
    %s67 = sphi 0, %s67
    %s69 = sphi 0, %s67
    %s70 = sphi 0, %s69
    %s84 = sphi 0, %s70
    %s88 = sphi 0, %s88
    %s90 = sphi 0, %s88
    %s91 = sphi 0, %s90
    %s105 = sphi 0, %s91
    %s109 = sphi 0, %s109
    %s111 = sphi 0, %s109
    %s112 = sphi 0, %s111
    %s126 = sphi 0, %s112
    %s130 = sphi 0, %s130
    %s132 = sphi 0, %s130
    %s133 = sphi 0, %s132
    %s147 = sphi 0, %s133
    %s153 = sphi 0, %s155
    %s156 = sphi 0, %s153
    %s157 = sphi 0, %s156
    %s173 = sphi 0, %s157
  $region4: #{pyraconvblock_forward.10} parent=0 // loop_header_branch
    %15 = sbr.rel (%p13) target = $region8
  $region5: #{pyraconvblock_forward.10} parent=0 // loop_body
    %s17 = ssub.s32 %s12, 1
    %s18 = ssub.s32 %s12, 2
    %s19 = sadd.s32 %s12, 1
    %s20 = ssub.s32 %s12, %s19
    %p21 = scmp.eq.s32.totalorder %s20, 0
    %s23 = sadd.s32 %s22, 1
    %s24 = scalar_select %p21, %s22, %s23
    %p27 = pneg %p21
    %p28 = scmp.eq.s32.totalorder %s12, 1
    %p29 = por %p27, %p28
    %p30 = scmp.ne.s32.totalorder %s22, %s25
    %p31 = scmp.eq.s32.totalorder %s12, 0
    %p32 = por %p30, %p31
    %p33 = scmp.ne.s32.totalorder %s22, %s25
    %p34 = scmp.eq.s32.totalorder %s17, 1
    %p35 = por %p33, %p34
    %p36 = scmp.ne.s32.totalorder %s25, %s26
    %p37 = scmp.eq.s32.totalorder %s17, 0
    %p38 = por %p36, %p37
    %p39 = scmp.ne.s32.totalorder %s25, %s26
    %p40 = scmp.eq.s32.totalorder %s18, 1
    %p41 = por %p39, %p40
    %p43 = scmp.ne.s32.totalorder %s26, %s42
    %p44 = scmp.eq.s32.totalorder %s18, 0
    %p45 = por %p43, %p44
    %s47 = sadd.s32 %s46, 1
    %p50 = scmp.eq.s32.totalorder %s12, 1
    %p51 = scmp.ne.s32.totalorder %s46, %s48
    %p52 = scmp.eq.s32.totalorder %s12, 0
    %p53 = por %p51, %p52
    %p54 = scmp.ne.s32.totalorder %s46, %s48
    %p55 = scmp.eq.s32.totalorder %s17, 1
    %p56 = por %p54, %p55
    %p57 = scmp.ne.s32.totalorder %s48, %s49
    %p58 = scmp.eq.s32.totalorder %s17, 0
    %p59 = por %p57, %p58
    %p60 = scmp.ne.s32.totalorder %s48, %s49
    %p61 = scmp.eq.s32.totalorder %s18, 1
    %p62 = por %p60, %p61
    %p64 = scmp.ne.s32.totalorder %s49, %s63
    %p65 = scmp.eq.s32.totalorder %s18, 0
    %p66 = por %p64, %p65
    %s68 = sadd.s32 %s67, 1
    %p71 = scmp.eq.s32.totalorder %s12, 1
    %p72 = scmp.ne.s32.totalorder %s67, %s69
    %p73 = scmp.eq.s32.totalorder %s12, 0
    %p74 = por %p72, %p73
    %p75 = scmp.ne.s32.totalorder %s67, %s69
    %p76 = scmp.eq.s32.totalorder %s17, 1
    %p77 = por %p75, %p76
    %p78 = scmp.ne.s32.totalorder %s69, %s70
    %p79 = scmp.eq.s32.totalorder %s17, 0
    %p80 = por %p78, %p79
    %p81 = scmp.ne.s32.totalorder %s69, %s70
    %p82 = scmp.eq.s32.totalorder %s18, 1
    %p83 = por %p81, %p82
    %p85 = scmp.ne.s32.totalorder %s70, %s84
    %p86 = scmp.eq.s32.totalorder %s18, 0
    %p87 = por %p85, %p86
    %s89 = sadd.s32 %s88, 1
    %p92 = scmp.eq.s32.totalorder %s12, 1
    %p93 = scmp.ne.s32.totalorder %s88, %s90
    %p94 = scmp.eq.s32.totalorder %s12, 0
    %p95 = por %p93, %p94
    %p96 = scmp.ne.s32.totalorder %s88, %s90
    %p97 = scmp.eq.s32.totalorder %s17, 1
    %p98 = por %p96, %p97
    %p99 = scmp.ne.s32.totalorder %s90, %s91
    %p100 = scmp.eq.s32.totalorder %s17, 0
    %p101 = por %p99, %p100
    %p102 = scmp.ne.s32.totalorder %s90, %s91
    %p103 = scmp.eq.s32.totalorder %s18, 1
    %p104 = por %p102, %p103
    %p106 = scmp.ne.s32.totalorder %s91, %s105
    %p107 = scmp.eq.s32.totalorder %s18, 0
    %p108 = por %p106, %p107
    %s110 = sadd.s32 %s109, 1
    %p113 = scmp.eq.s32.totalorder %s12, 1
    %p114 = scmp.ne.s32.totalorder %s109, %s111
    %p115 = scmp.eq.s32.totalorder %s12, 0
    %p116 = por %p114, %p115
    %p117 = scmp.ne.s32.totalorder %s109, %s111
    %p118 = scmp.eq.s32.totalorder %s17, 1
    %p119 = por %p117, %p118
    %p120 = scmp.ne.s32.totalorder %s111, %s112
    %p121 = scmp.eq.s32.totalorder %s17, 0
    %p122 = por %p120, %p121
    %p123 = scmp.ne.s32.totalorder %s111, %s112
    %p124 = scmp.eq.s32.totalorder %s18, 1
    %p125 = por %p123, %p124
    %p127 = scmp.ne.s32.totalorder %s112, %s126
    %p128 = scmp.eq.s32.totalorder %s18, 0
    %p129 = por %p127, %p128
    %s131 = sadd.s32 %s130, 1
    %p134 = scmp.eq.s32.totalorder %s12, 1
    %p135 = scmp.ne.s32.totalorder %s130, %s132
    %p136 = scmp.eq.s32.totalorder %s12, 0
    %p137 = por %p135, %p136
    %p138 = scmp.ne.s32.totalorder %s130, %s132
    %p139 = scmp.eq.s32.totalorder %s17, 1
    %p140 = por %p138, %p139
    %p141 = scmp.ne.s32.totalorder %s132, %s133
    %p142 = scmp.eq.s32.totalorder %s17, 0
    %p143 = por %p141, %p142
    %p144 = scmp.ne.s32.totalorder %s132, %s133
    %p145 = scmp.eq.s32.totalorder %s18, 1
    %p146 = por %p144, %p145
    %p148 = scmp.ne.s32.totalorder %s133, %s147
    %p149 = scmp.eq.s32.totalorder %s18, 0
    %p150 = por %p148, %p149
    %s151 = ssub.s32 %s12, %s19
    %p152 = scmp.eq.s32.totalorder %s151, 0
    %s154 = sadd.s32 %s153, 1
    %s155 = scalar_select %p152, %s153, %s154
    %p158 = pneg %p152
    %p159 = scmp.eq.s32.totalorder %s12, 1
    %p160 = por %p158, %p159
    %p161 = scmp.ne.s32.totalorder %s153, %s156
    %p162 = scmp.eq.s32.totalorder %s12, 0
    %p163 = por %p161, %p162
    %p164 = scmp.ne.s32.totalorder %s153, %s156
    %p165 = scmp.eq.s32.totalorder %s17, 1
    %p166 = por %p164, %p165
    %p167 = scmp.ne.s32.totalorder %s156, %s157
    %p168 = scmp.eq.s32.totalorder %s17, 0
    %p169 = por %p167, %p168
    %p170 = scmp.ne.s32.totalorder %s156, %s157
    %p171 = scmp.eq.s32.totalorder %s18, 1
    %p172 = por %p170, %p171
    %p174 = scmp.ne.s32.totalorder %s157, %s173
    %p175 = scmp.eq.s32.totalorder %s18, 0
    %p176 = por %p174, %p175
    %p177 = scmp.le.s32.totalorder 1, %s12
    %p178 = scmp.lt.s32.totalorder %s12, 3
    %p179 = pnand %p177, %p178
    %p180 = pneg %p179
    // Predicated region
    $region9: #{pyraconvblock_forward.10} parent=5 // pred_check
      _
    $region10: #{pyraconvblock_forward.10} parent=5 // pred_check_branch
      %182 = sbr.rel (%p179) target = $region12
    $region11: #{pyraconvblock_forward.10} parent=5 // pred_region
      %s183 = ssub.s32 %s12, 1
      // Predicated region
      $region13: #{pyraconvblock_forward.10} parent=11 // pred_check
        %p184 = pneg %p59
      $region14: #{pyraconvblock_forward.10} parent=11 // pred_check_branch
        %186 = sbr.rel (%p184) target = $region16
      $region15: #{pyraconvblock_forward.10} parent=11 // pred_region
        _
      $region16: #{pyraconvblock_forward.10} parent=11 // pred_fallthru
        _
      // Predicated region
      $region17: #{pyraconvblock_forward.10} parent=11 // pred_check
        %p187 = pneg %p80
      $region18: #{pyraconvblock_forward.10} parent=11 // pred_check_branch
        %189 = sbr.rel (%p187) target = $region20
      $region19: #{pyraconvblock_forward.10} parent=11 // pred_region
        _
      $region20: #{pyraconvblock_forward.10} parent=11 // pred_fallthru
        _
      // Predicated region
      $region21: #{pyraconvblock_forward.10} parent=11 // pred_check
        %p190 = pneg %p101
      $region22: #{pyraconvblock_forward.10} parent=11 // pred_check_branch
        %192 = sbr.rel (%p190) target = $region24
      $region23: #{pyraconvblock_forward.10} parent=11 // pred_region
        _
      $region24: #{pyraconvblock_forward.10} parent=11 // pred_fallthru
        _
      // Predicated region
      $region25: #{pyraconvblock_forward.10} parent=11 // pred_check
        %p193 = pneg %p122
      $region26: #{pyraconvblock_forward.10} parent=11 // pred_check_branch
        %195 = sbr.rel (%p193) target = $region28
      $region27: #{pyraconvblock_forward.10} parent=11 // pred_region
        _
      $region28: #{pyraconvblock_forward.10} parent=11 // pred_fallthru
        _
      // Predicated region
      $region29: #{pyraconvblock_forward.10} parent=11 // pred_check
        %p196 = pneg %p143
      $region30: #{pyraconvblock_forward.10} parent=11 // pred_check_branch
        %198 = sbr.rel (%p196) target = $region32
      $region31: #{pyraconvblock_forward.10} parent=11 // pred_region
        _
      $region32: #{pyraconvblock_forward.10} parent=11 // pred_fallthru
        _
    $region12: #{pyraconvblock_forward.10} parent=5 // pred_fallthru
      _
    %p199 = scmp.lt.s32.totalorder %s12, 2
    // Predicated region
    $region33: #{pyraconvblock_forward.10} parent=5 // pred_check
      %p200 = pneg %p199
    $region34: #{pyraconvblock_forward.10} parent=5 // pred_check_branch
      %202 = sbr.rel (%p200) target = $region36
    $region35: #{pyraconvblock_forward.10} parent=5 // pred_region
      // Predicated region
      $region37: #{pyraconvblock_forward.10} parent=35 // pred_check
        %p203 = pneg %p32
      $region38: #{pyraconvblock_forward.10} parent=35 // pred_check_branch
        %205 = sbr.rel (%p203) target = $region40
      $region39: #{pyraconvblock_forward.10} parent=35 // pred_region
        %p206 = scmp.lt.s32.totalorder %s12, 1
        %s207 = scalar_select %p206, %s12, 1
        %s208 = smul.addr %s207, 76
        %s209 = smul.addr %s208, 8
        %s210 = scalar_lea.vmem %s0, %s209
      $region40: #{pyraconvblock_forward.10} parent=35 // pred_fallthru
        _
    $region36: #{pyraconvblock_forward.10} parent=5 // pred_fallthru
      _
    %p211 = scmp.le.s32.totalorder 1, %s12
    %p212 = scmp.lt.s32.totalorder %s12, 3
    %p213 = pnand %p211, %p212
    %p214 = pneg %p213
    // Predicated region
    $region41: #{pyraconvblock_forward.10} parent=5 // pred_check
      _
    $region42: #{pyraconvblock_forward.10} parent=5 // pred_check_branch
      %216 = sbr.rel (%p213) target = $region44
    $region43: #{pyraconvblock_forward.10} parent=5 // pred_region
      %s217 = ssub.s32 %s12, 1
      %p218 = scmp.lt.s32.totalorder %s17, 1
      %s219 = scalar_select %p218, %s17, 1
      %s220 = smul.addr %s219, 76
      %s221 = smul.addr %s220, 8
      %s222 = scalar_lea.vmem %s0, %s221
      %p223 = pneg %p38
      %p224 = pneg %p35
      %p225 = pneg %p59
      %p226 = pneg %p56
      %p227 = pneg %p80
      %p228 = pneg %p77
      %p229 = pneg %p101
      %p230 = pneg %p98
      %p231 = pneg %p122
      %p232 = pneg %p119
      %p233 = pneg %p143
      %p234 = pneg %p140
      %p235 = pneg %p169
      %p236 = pneg %p166
      %p237 = scmp.lt.s32.totalorder %s17, 1
      %s238 = scalar_select %p237, %s17, 1
      %s239 = smul.addr %s238, 64
      %s240 = smul.addr %s239, 8
      %s241 = scalar_lea.vmem %s6, %s240
      %p242 = scmp.lt.s32.totalorder %s17, 1
      %s243 = scalar_select %p242, %s17, 1
      %s244 = smul.addr %s243, 76
      %s245 = smul.addr %s244, 8
      %s246 = scalar_lea.vmem %s0, %s245
      %p247 = scmp.lt.s32.totalorder %s17, 1
      %s248 = scalar_select %p247, %s17, 1
      %s249 = smul.addr %s248, 64
      %s250 = smul.addr %s249, 8
      %s251 = scalar_lea.vmem %s6, %s250
      %v253 = vld [vmem:[%s246] sm:$0xff]
      %v254 = vld [vmem:[%s246 + $0x8] sm:$0xff]
      %v255 = vld [vmem:[%s246 + $0x10] sm:$0xff]
      %v256 = vld [vmem:[%s246 + $0x18] sm:$0xff]
      %v257 = vld [vmem:[%s246 + $0x20] sm:$0xff]
      %v258 = vld [vmem:[%s246 + $0x28] sm:$0xff]
      %v259 = vld [vmem:[%s246 + $0x30] sm:$0xff]
      %v260 = vld [vmem:[%s246 + $0x38] sm:$0xff]
      %v261 = vld [vmem:[%s246 + $0x40] sm:$0xff]
      %v262 = vld [vmem:[%s246 + $0x48] sm:$0xff]
      %v263 = vld [vmem:[%s246 + $0x50] sm:$0xff]
      %v264 = vld [vmem:[%s246 + $0x58] sm:$0xff]
      %v265 = vld [vmem:[%s246 + $0x60] sm:$0xff]
      %v266 = vld [vmem:[%s246 + $0x68] sm:$0xff]
      %v267 = vld [vmem:[%s246 + $0x70] sm:$0xff]
      %v268 = vld [vmem:[%s246 + $0x78] sm:$0xff]
      %v269 = vld [vmem:[%s246 + $0x80] sm:$0xff]
      %v270 = vld [vmem:[%s246 + $0x88] sm:$0xff]
      %v271 = vld [vmem:[%s246 + $0x90] sm:$0xff]
      %v272 = vld [vmem:[%s246 + $0x98] sm:$0xff]
      %v273 = vld [vmem:[%s246 + $0xa0] sm:$0xff]
      %v274 = vld [vmem:[%s246 + $0xa8] sm:$0xff]
      %v275 = vld [vmem:[%s246 + $0xb0] sm:$0xff]
      %v276 = vld [vmem:[%s246 + $0xb8] sm:$0xff]
      %v277 = vld [vmem:[%s246 + $0xc0] sm:$0xff]
      %v278 = vld [vmem:[%s246 + $0xc8] sm:$0xff]
      %v279 = vld [vmem:[%s246 + $0xd0] sm:$0xff]
      %v280 = vld [vmem:[%s246 + $0xd8] sm:$0xff]
      %v281 = vld [vmem:[%s246 + $0xe0] sm:$0xff]
      %v282 = vld [vmem:[%s246 + $0xe8] sm:$0xff]
      %v283 = vld [vmem:[%s246 + $0xf0] sm:$0xff]
      %v284 = vld [vmem:[%s246 + $0xf8] sm:$0xff]
      %v285 = vld [vmem:[%s246 + $0x100] sm:$0xff]
      %v286 = vld [vmem:[%s246 + $0x108] sm:$0xff]
      %v287 = vld [vmem:[%s246 + $0x110] sm:$0xff]
      %v288 = vld [vmem:[%s246 + $0x118] sm:$0xff]
      %v289 = vld [vmem:[%s246 + $0x120] sm:$0xff]
      %v290 = vld [vmem:[%s246 + $0x128] sm:$0xff]
      %v291 = vld [vmem:[%s246 + $0x130] sm:$0xff]
      %v292 = vld [vmem:[%s246 + $0x138] sm:$0xff]
      %v293 = vld [vmem:[%s246 + $0x140] sm:$0xff]
      %v294 = vld [vmem:[%s246 + $0x148] sm:$0xff]
      %v295 = vld [vmem:[%s246 + $0x150] sm:$0xff]
      %v296 = vld [vmem:[%s246 + $0x158] sm:$0xff]
      %v297 = vld [vmem:[%s246 + $0x160] sm:$0xff]
      %v298 = vld [vmem:[%s246 + $0x168] sm:$0xff]
      %v299 = vld [vmem:[%s246 + $0x170] sm:$0xff]
      %v300 = vld [vmem:[%s246 + $0x178] sm:$0xff]
      %v301 = vld [vmem:[%s246 + $0x180] sm:$0xff]
      %v302 = vld [vmem:[%s246 + $0x188] sm:$0xff]
      %v303 = vld [vmem:[%s246 + $0x190] sm:$0xff]
      %v304 = vld [vmem:[%s246 + $0x198] sm:$0xff]
      %v305 = vld [vmem:[%s246 + $0x1a0] sm:$0xff]
      %v306 = vld [vmem:[%s246 + $0x1a8] sm:$0xff]
      %v307 = vld [vmem:[%s246 + $0x1b0] sm:$0xff]
      %v308 = vld [vmem:[%s246 + $0x1b8] sm:$0xff]
      %v309 = vld [vmem:[%s246 + $0x1c0] sm:$0xff]
      %v310 = vld [vmem:[%s246 + $0x1c8] sm:$0xff]
      %v311 = vld [vmem:[%s246 + $0x1d0] sm:$0xff]
      %v312 = vld [vmem:[%s246 + $0x1d8] sm:$0xff]
      %v313 = vld [vmem:[%s246 + $0x1e0] sm:$0xff]
      %v314 = vld [vmem:[%s246 + $0x1e8] sm:$0xff]
      %v315 = vld [vmem:[%s246 + $0x1f0] sm:$0xff]
      %v316 = vld [vmem:[%s246 + $0x1f8] sm:$0xff]
      %v317 = vld [vmem:[%s246 + $0x200] sm:$0xff]
      %v318 = vld [vmem:[%s246 + $0x208] sm:$0xff]
      %v319 = vld [vmem:[%s246 + $0x210] sm:$0xff]
      %v320 = vld [vmem:[%s246 + $0x218] sm:$0xff]
      %v321 = vld [vmem:[%s246 + $0x220] sm:$0xff]
      %v322 = vld [vmem:[%s246 + $0x228] sm:$0xff]
      %v323 = vld [vmem:[%s246 + $0x230] sm:$0xff]
      %v324 = vld [vmem:[%s246 + $0x238] sm:$0xff]
      %v325 = vld [vmem:[%s246 + $0x240] sm:$0xff]
      %v326 = vld [vmem:[%s2] sm:$0x1]
      %v328 = vperm.slane %v326, 0
      %v330 = vmul.f32 %v253, %v328
      %v331 = vmul.f32 %v254, %v328
      %v332 = vmul.f32 %v255, %v328
      %v333 = vmul.f32 %v256, %v328
      %v334 = vmul.f32 %v257, %v328
      %v335 = vmul.f32 %v258, %v328
      %v336 = vmul.f32 %v259, %v328
      %v337 = vmul.f32 %v260, %v328
      %v338 = vmul.f32 %v261, %v328
      %v339 = vmul.f32 %v262, %v328
      %v340 = vmul.f32 %v263, %v328
      %v341 = vmul.f32 %v264, %v328
      %v342 = vmul.f32 %v265, %v328
      %v343 = vmul.f32 %v266, %v328
      %v344 = vmul.f32 %v267, %v328
      %v345 = vmul.f32 %v268, %v328
      %v346 = vmul.f32 %v269, %v328
      %v347 = vmul.f32 %v270, %v328
      %v348 = vmul.f32 %v271, %v328
      %v349 = vmul.f32 %v272, %v328
      %v350 = vmul.f32 %v273, %v328
      %v351 = vmul.f32 %v274, %v328
      %v352 = vmul.f32 %v275, %v328
      %v353 = vmul.f32 %v276, %v328
      %v354 = vmul.f32 %v277, %v328
      %v355 = vmul.f32 %v278, %v328
      %v356 = vmul.f32 %v279, %v328
      %v357 = vmul.f32 %v280, %v328
      %v358 = vmul.f32 %v281, %v328
      %v359 = vmul.f32 %v282, %v328
      %v360 = vmul.f32 %v283, %v328
      %v361 = vmul.f32 %v284, %v328
      %v362 = vmul.f32 %v285, %v328
      %v363 = vmul.f32 %v286, %v328
      %v364 = vmul.f32 %v287, %v328
      %v365 = vmul.f32 %v288, %v328
      %v366 = vmul.f32 %v289, %v328
      %v367 = vmul.f32 %v290, %v328
      %v368 = vmul.f32 %v291, %v328
      %v369 = vmul.f32 %v292, %v328
      %v370 = vmul.f32 %v293, %v328
      %v371 = vmul.f32 %v294, %v328
      %v372 = vmul.f32 %v295, %v328
      %v373 = vmul.f32 %v296, %v328
      %v374 = vmul.f32 %v297, %v328
      %v375 = vmul.f32 %v298, %v328
      %v376 = vmul.f32 %v299, %v328
      %v377 = vmul.f32 %v300, %v328
      %v378 = vmul.f32 %v301, %v328
      %v379 = vmul.f32 %v302, %v328
      %v380 = vmul.f32 %v303, %v328
      %v381 = vmul.f32 %v304, %v328
      %v382 = vmul.f32 %v305, %v328
      %v383 = vmul.f32 %v306, %v328
      %v384 = vmul.f32 %v307, %v328
      %v385 = vmul.f32 %v308, %v328
      %v386 = vmul.f32 %v309, %v328
      %v387 = vmul.f32 %v310, %v328
      %v388 = vmul.f32 %v311, %v328
      %v389 = vmul.f32 %v312, %v328
      %v390 = vmul.f32 %v313, %v328
      %v391 = vmul.f32 %v314, %v328
      %v392 = vmul.f32 %v315, %v328
      %v393 = vmul.f32 %v316, %v328
      %v394 = vmul.f32 %v317, %v328
      %v395 = vmul.f32 %v318, %v328
      %v396 = vmul.f32 %v319, %v328
      %v397 = vmul.f32 %v320, %v328
      %v398 = vmul.f32 %v321, %v328
      %v399 = vmul.f32 %v322, %v328
      %v400 = vmul.f32 %v323, %v328
      %v401 = vmul.f32 %v324, %v328
      %v402 = vmul.f32 %v325, %v328
      %v403 = vld [vmem:[%s3] sm:$0x1]
      %v405 = vperm.slane %v403, 0
      %v407 = vadd.f32 %v330, %v405
      %v408 = vadd.f32 %v331, %v405
      %v409 = vadd.f32 %v332, %v405
      %v410 = vadd.f32 %v333, %v405
      %v411 = vadd.f32 %v334, %v405
      %v412 = vadd.f32 %v335, %v405
      %v413 = vadd.f32 %v336, %v405
      %v414 = vadd.f32 %v337, %v405
      %v415 = vadd.f32 %v338, %v405
      %v416 = vadd.f32 %v339, %v405
      %v417 = vadd.f32 %v340, %v405
      %v418 = vadd.f32 %v341, %v405
      %v419 = vadd.f32 %v342, %v405
      %v420 = vadd.f32 %v343, %v405
      %v421 = vadd.f32 %v344, %v405
      %v422 = vadd.f32 %v345, %v405
      %v423 = vadd.f32 %v346, %v405
      %v424 = vadd.f32 %v347, %v405
      %v425 = vadd.f32 %v348, %v405
      %v426 = vadd.f32 %v349, %v405
      %v427 = vadd.f32 %v350, %v405
      %v428 = vadd.f32 %v351, %v405
      %v429 = vadd.f32 %v352, %v405
      %v430 = vadd.f32 %v353, %v405
      %v431 = vadd.f32 %v354, %v405
      %v432 = vadd.f32 %v355, %v405
      %v433 = vadd.f32 %v356, %v405
      %v434 = vadd.f32 %v357, %v405
      %v435 = vadd.f32 %v358, %v405
      %v436 = vadd.f32 %v359, %v405
      %v437 = vadd.f32 %v360, %v405
      %v438 = vadd.f32 %v361, %v405
      %v439 = vadd.f32 %v362, %v405
      %v440 = vadd.f32 %v363, %v405
      %v441 = vadd.f32 %v364, %v405
      %v442 = vadd.f32 %v365, %v405
      %v443 = vadd.f32 %v366, %v405
      %v444 = vadd.f32 %v367, %v405
      %v445 = vadd.f32 %v368, %v405
      %v446 = vadd.f32 %v369, %v405
      %v447 = vadd.f32 %v370, %v405
      %v448 = vadd.f32 %v371, %v405
      %v449 = vadd.f32 %v372, %v405
      %v450 = vadd.f32 %v373, %v405
      %v451 = vadd.f32 %v374, %v405
      %v452 = vadd.f32 %v375, %v405
      %v453 = vadd.f32 %v376, %v405
      %v454 = vadd.f32 %v377, %v405
      %v455 = vadd.f32 %v378, %v405
      %v456 = vadd.f32 %v379, %v405
      %v457 = vadd.f32 %v380, %v405
      %v458 = vadd.f32 %v381, %v405
      %v459 = vadd.f32 %v382, %v405
      %v460 = vadd.f32 %v383, %v405
      %v461 = vadd.f32 %v384, %v405
      %v462 = vadd.f32 %v385, %v405
      %v463 = vadd.f32 %v386, %v405
      %v464 = vadd.f32 %v387, %v405
      %v465 = vadd.f32 %v388, %v405
      %v466 = vadd.f32 %v389, %v405
      %v467 = vadd.f32 %v390, %v405
      %v468 = vadd.f32 %v391, %v405
      %v469 = vadd.f32 %v392, %v405
      %v470 = vadd.f32 %v393, %v405
      %v471 = vadd.f32 %v394, %v405
      %v472 = vadd.f32 %v395, %v405
      %v473 = vadd.f32 %v396, %v405
      %v474 = vadd.f32 %v397, %v405
      %v475 = vadd.f32 %v398, %v405
      %v476 = vadd.f32 %v399, %v405
      %v477 = vadd.f32 %v400, %v405
      %v478 = vadd.f32 %v401, %v405
      %v479 = vadd.f32 %v402, %v405
      %v480 = vmax.f32 %v407, 0.0
      %v481 = vmax.f32 %v408, 0.0
      %v482 = vmax.f32 %v409, 0.0
      %v483 = vmax.f32 %v410, 0.0
      %v484 = vmax.f32 %v411, 0.0
      %v485 = vmax.f32 %v412, 0.0
      %v486 = vmax.f32 %v413, 0.0
      %v487 = vmax.f32 %v414, 0.0
      %v488 = vmax.f32 %v415, 0.0
      %v489 = vmax.f32 %v416, 0.0
      %v490 = vmax.f32 %v417, 0.0
      %v491 = vmax.f32 %v418, 0.0
      %v492 = vmax.f32 %v419, 0.0
      %v493 = vmax.f32 %v420, 0.0
      %v494 = vmax.f32 %v421, 0.0
      %v495 = vmax.f32 %v422, 0.0
      %v496 = vmax.f32 %v423, 0.0
      %v497 = vmax.f32 %v424, 0.0
      %v498 = vmax.f32 %v425, 0.0
      %v499 = vmax.f32 %v426, 0.0
      %v500 = vmax.f32 %v427, 0.0
      %v501 = vmax.f32 %v428, 0.0
      %v502 = vmax.f32 %v429, 0.0
      %v503 = vmax.f32 %v430, 0.0
      %v504 = vmax.f32 %v431, 0.0
      %v505 = vmax.f32 %v432, 0.0
      %v506 = vmax.f32 %v433, 0.0
      %v507 = vmax.f32 %v434, 0.0
      %v508 = vmax.f32 %v435, 0.0
      %v509 = vmax.f32 %v436, 0.0
      %v510 = vmax.f32 %v437, 0.0
      %v511 = vmax.f32 %v438, 0.0
      %v512 = vmax.f32 %v439, 0.0
      %v513 = vmax.f32 %v440, 0.0
      %v514 = vmax.f32 %v441, 0.0
      %v515 = vmax.f32 %v442, 0.0
      %v516 = vmax.f32 %v443, 0.0
      %v517 = vmax.f32 %v444, 0.0
      %v518 = vmax.f32 %v445, 0.0
      %v519 = vmax.f32 %v446, 0.0
      %v520 = vmax.f32 %v447, 0.0
      %v521 = vmax.f32 %v448, 0.0
      %v522 = vmax.f32 %v449, 0.0
      %v523 = vmax.f32 %v450, 0.0
      %v524 = vmax.f32 %v451, 0.0
      %v525 = vmax.f32 %v452, 0.0
      %v526 = vmax.f32 %v453, 0.0
      %v527 = vmax.f32 %v454, 0.0
      %v528 = vmax.f32 %v455, 0.0
      %v529 = vmax.f32 %v456, 0.0
      %v530 = vmax.f32 %v457, 0.0
      %v531 = vmax.f32 %v458, 0.0
      %v532 = vmax.f32 %v459, 0.0
      %v533 = vmax.f32 %v460, 0.0
      %v534 = vmax.f32 %v461, 0.0
      %v535 = vmax.f32 %v462, 0.0
      %v536 = vmax.f32 %v463, 0.0
      %v537 = vmax.f32 %v464, 0.0
      %v538 = vmax.f32 %v465, 0.0
      %v539 = vmax.f32 %v466, 0.0
      %v540 = vmax.f32 %v467, 0.0
      %v541 = vmax.f32 %v468, 0.0
      %v542 = vmax.f32 %v469, 0.0
      %v543 = vmax.f32 %v470, 0.0
      %v544 = vmax.f32 %v471, 0.0
      %v545 = vmax.f32 %v472, 0.0
      %v546 = vmax.f32 %v473, 0.0
      %v547 = vmax.f32 %v474, 0.0
      %v548 = vmax.f32 %v475, 0.0
      %v549 = vmax.f32 %v476, 0.0
      %v550 = vmax.f32 %v477, 0.0
      %v551 = vmax.f32 %v478, 0.0
      %v552 = vmax.f32 %v479, 0.0
      %v553 = vld [vmem:[%s1] sm:$0xff]
      %v554 = vld [vmem:[%s1 + $0x8] sm:$0xff]
      %v555 = vld [vmem:[%s1 + $0x10] sm:$0xff]
      %v556 = vld [vmem:[%s1 + $0x18] sm:$0xff]
      %v557 = vld [vmem:[%s1 + $0x20] sm:$0xff]
      %v558 = vld [vmem:[%s1 + $0x28] sm:$0xff]
      %v559 = vld [vmem:[%s1 + $0x30] sm:$0xff]
      %v560 = vld [vmem:[%s1 + $0x38] sm:$0xff]
      %v561 = vld [vmem:[%s1 + $0x40] sm:$0xff]
      %v562 = vld [vmem:[%s1 + $0x48] sm:$0xff]
      %v563 = vld [vmem:[%s1 + $0x50] sm:$0xff]
      %v564 = vld [vmem:[%s1 + $0x58] sm:$0xff]
      %v565 = vld [vmem:[%s1 + $0x60] sm:$0xff]
      %v566 = vld [vmem:[%s1 + $0x68] sm:$0xff]
      %v567 = vld [vmem:[%s1 + $0x70] sm:$0xff]
      %v568 = vld [vmem:[%s1 + $0x78] sm:$0xff]
      %v569 = vld [vmem:[%s1 + $0x80] sm:$0xff]
      %v570 = vld [vmem:[%s1 + $0x88] sm:$0xff]
      %v571 = vld [vmem:[%s1 + $0x90] sm:$0xff]
      %v572 = vld [vmem:[%s1 + $0x98] sm:$0xff]
      %v573 = vld [vmem:[%s1 + $0xa0] sm:$0xff]
      %v574 = vld [vmem:[%s1 + $0xa8] sm:$0xff]
      %v575 = vld [vmem:[%s1 + $0xb0] sm:$0xff]
      %v576 = vld [vmem:[%s1 + $0xb8] sm:$0xff]
      %v577 = vld [vmem:[%s1 + $0xc0] sm:$0xff]
      %v578 = vld [vmem:[%s1 + $0xc8] sm:$0xff]
      %v579 = vld [vmem:[%s1 + $0xd0] sm:$0xff]
      %v580 = vld [vmem:[%s1 + $0xd8] sm:$0xff]
      %v581 = vld [vmem:[%s1 + $0xe0] sm:$0xff]
      %v582 = vld [vmem:[%s1 + $0xe8] sm:$0xff]
      %v583 = vld [vmem:[%s1 + $0xf0] sm:$0xff]
      %v584 = vld [vmem:[%s1 + $0xf8] sm:$0xff]
      %v585 = vld [vmem:[%s1 + $0x100] sm:$0xff]
      %v586 = vld [vmem:[%s1 + $0x108] sm:$0xff]
      %v587 = vld [vmem:[%s1 + $0x110] sm:$0xff]
      %v588 = vld [vmem:[%s1 + $0x118] sm:$0xff]
      %v589 = vld [vmem:[%s1 + $0x120] sm:$0xff]
      %v590 = vld [vmem:[%s1 + $0x128] sm:$0xff]
      %v591 = vld [vmem:[%s1 + $0x130] sm:$0xff]
      %v592 = vld [vmem:[%s1 + $0x138] sm:$0xff]
      %v593 = vld [vmem:[%s1 + $0x140] sm:$0xff]
      %v594 = vld [vmem:[%s1 + $0x148] sm:$0xff]
      %v595 = vld [vmem:[%s1 + $0x150] sm:$0xff]
      %v596 = vld [vmem:[%s1 + $0x158] sm:$0xff]
      %v597 = vld [vmem:[%s1 + $0x160] sm:$0xff]
      %v598 = vld [vmem:[%s1 + $0x168] sm:$0xff]
      %v599 = vld [vmem:[%s1 + $0x170] sm:$0xff]
      %v600 = vld [vmem:[%s1 + $0x178] sm:$0xff]
      %v601 = vld [vmem:[%s1 + $0x180] sm:$0xff]
      %v602 = vld [vmem:[%s1 + $0x188] sm:$0xff]
      %v603 = vld [vmem:[%s1 + $0x190] sm:$0xff]
      %v604 = vld [vmem:[%s1 + $0x198] sm:$0xff]
      %v605 = vld [vmem:[%s1 + $0x1a0] sm:$0xff]
      %v606 = vld [vmem:[%s1 + $0x1a8] sm:$0xff]
      %v607 = vld [vmem:[%s1 + $0x1b0] sm:$0xff]
      %v608 = vld [vmem:[%s1 + $0x1b8] sm:$0xff]
      %v609 = vld [vmem:[%s1 + $0x1c0] sm:$0xff]
      %v610 = vld [vmem:[%s1 + $0x1c8] sm:$0xff]
      %v611 = vld [vmem:[%s1 + $0x1d0] sm:$0xff]
      %v612 = vld [vmem:[%s1 + $0x1d8] sm:$0xff]
      %v613 = vld [vmem:[%s1 + $0x1e0] sm:$0xff]
      %v614 = vld [vmem:[%s1 + $0x1e8] sm:$0xff]
      %v615 = vld [vmem:[%s1 + $0x1f0] sm:$0xff]
      %v616 = vld [vmem:[%s1 + $0x1f8] sm:$0xff]
      %v617 = vld [vmem:[%s1 + $0x200] sm:$0xff]
      %v618 = vld [vmem:[%s1 + $0x208] sm:$0xff]
      %v619 = vld [vmem:[%s1 + $0x210] sm:$0xff]
      %v620 = vld [vmem:[%s1 + $0x218] sm:$0xff]
      %v621 = vld [vmem:[%s1 + $0x220] sm:$0xff]
      %v622 = vld [vmem:[%s1 + $0x228] sm:$0xff]
      %v623 = vld [vmem:[%s1 + $0x230] sm:$0xff]
      %v624 = vld [vmem:[%s1 + $0x238] sm:$0xff]
      %v625 = vld [vmem:[%s1 + $0x240] sm:$0xff]
      %627 = vset.pattern.permute.xlu0 0
      %628 = vperm.xlu0 %627, %v553
      %v629 = vpop.permute.xlu0 %628
      %632 = vset.pattern.permute.xlu0 0
      %633 = vperm.xlu0 %632, %v554
      %v634 = vpop.permute.xlu0 %633
      %637 = vset.pattern.permute.xlu0 0
      %638 = vperm.xlu0 %637, %v555
      %v639 = vpop.permute.xlu0 %638
      %642 = vset.pattern.permute.xlu0 0
      %643 = vperm.xlu0 %642, %v556
      %v644 = vpop.permute.xlu0 %643
      %647 = vset.pattern.permute.xlu0 0
      %648 = vperm.xlu0 %647, %v557
      %v649 = vpop.permute.xlu0 %648
      %652 = vset.pattern.permute.xlu0 0
      %653 = vperm.xlu0 %652, %v558
      %v654 = vpop.permute.xlu0 %653
      %657 = vset.pattern.permute.xlu0 0
      %658 = vperm.xlu0 %657, %v559
      %v659 = vpop.permute.xlu0 %658
      %662 = vset.pattern.permute.xlu0 0
      %663 = vperm.xlu0 %662, %v560
      %v664 = vpop.permute.xlu0 %663
      %667 = vset.pattern.permute.xlu0 0
      %668 = vperm.xlu0 %667, %v561
      %v669 = vpop.permute.xlu0 %668
      %672 = vset.pattern.permute.xlu0 0
      %673 = vperm.xlu0 %672, %v562
      %v674 = vpop.permute.xlu0 %673
      %677 = vset.pattern.permute.xlu0 0
      %678 = vperm.xlu0 %677, %v563
      %v679 = vpop.permute.xlu0 %678
      %682 = vset.pattern.permute.xlu0 0
      %683 = vperm.xlu0 %682, %v564
      %v684 = vpop.permute.xlu0 %683
      %687 = vset.pattern.permute.xlu0 0
      %688 = vperm.xlu0 %687, %v565
      %v689 = vpop.permute.xlu0 %688
      %692 = vset.pattern.permute.xlu0 0
      %693 = vperm.xlu0 %692, %v566
      %v694 = vpop.permute.xlu0 %693
      %697 = vset.pattern.permute.xlu0 0
      %698 = vperm.xlu0 %697, %v567
      %v699 = vpop.permute.xlu0 %698
      %702 = vset.pattern.permute.xlu0 0
      %703 = vperm.xlu0 %702, %v568
      %v704 = vpop.permute.xlu0 %703
      %707 = vset.pattern.permute.xlu0 0
      %708 = vperm.xlu0 %707, %v569
      %v709 = vpop.permute.xlu0 %708
      %712 = vset.pattern.permute.xlu0 0
      %713 = vperm.xlu0 %712, %v570
      %v714 = vpop.permute.xlu0 %713
      %717 = vset.pattern.permute.xlu0 0
      %718 = vperm.xlu0 %717, %v571
      %v719 = vpop.permute.xlu0 %718
      %722 = vset.pattern.permute.xlu0 0
      %723 = vperm.xlu0 %722, %v572
      %v724 = vpop.permute.xlu0 %723
      %727 = vset.pattern.permute.xlu0 0
      %728 = vperm.xlu0 %727, %v573
      %v729 = vpop.permute.xlu0 %728
      %732 = vset.pattern.permute.xlu0 0
      %733 = vperm.xlu0 %732, %v574
      %v734 = vpop.permute.xlu0 %733
      %737 = vset.pattern.permute.xlu0 0
      %738 = vperm.xlu0 %737, %v575
      %v739 = vpop.permute.xlu0 %738
      %742 = vset.pattern.permute.xlu0 0
      %743 = vperm.xlu0 %742, %v576
      %v744 = vpop.permute.xlu0 %743
      %747 = vset.pattern.permute.xlu0 0
      %748 = vperm.xlu0 %747, %v577
      %v749 = vpop.permute.xlu0 %748
      %752 = vset.pattern.permute.xlu0 0
      %753 = vperm.xlu0 %752, %v578
      %v754 = vpop.permute.xlu0 %753
      %757 = vset.pattern.permute.xlu0 0
      %758 = vperm.xlu0 %757, %v579
      %v759 = vpop.permute.xlu0 %758
      %762 = vset.pattern.permute.xlu0 0
      %763 = vperm.xlu0 %762, %v580
      %v764 = vpop.permute.xlu0 %763
      %767 = vset.pattern.permute.xlu0 0
      %768 = vperm.xlu0 %767, %v581
      %v769 = vpop.permute.xlu0 %768
      %772 = vset.pattern.permute.xlu0 0
      %773 = vperm.xlu0 %772, %v582
      %v774 = vpop.permute.xlu0 %773
      %777 = vset.pattern.permute.xlu0 0
      %778 = vperm.xlu0 %777, %v583
      %v779 = vpop.permute.xlu0 %778
      %782 = vset.pattern.permute.xlu0 0
      %783 = vperm.xlu0 %782, %v584
      %v784 = vpop.permute.xlu0 %783
      %787 = vset.pattern.permute.xlu0 0
      %788 = vperm.xlu0 %787, %v585
      %v789 = vpop.permute.xlu0 %788
      %792 = vset.pattern.permute.xlu0 0
      %793 = vperm.xlu0 %792, %v586
      %v794 = vpop.permute.xlu0 %793
      %797 = vset.pattern.permute.xlu0 0
      %798 = vperm.xlu0 %797, %v587
      %v799 = vpop.permute.xlu0 %798
      %802 = vset.pattern.permute.xlu0 0
      %803 = vperm.xlu0 %802, %v588
      %v804 = vpop.permute.xlu0 %803
      %807 = vset.pattern.permute.xlu0 0
      %808 = vperm.xlu0 %807, %v589
      %v809 = vpop.permute.xlu0 %808
      %812 = vset.pattern.permute.xlu0 0
      %813 = vperm.xlu0 %812, %v590
      %v814 = vpop.permute.xlu0 %813
      %817 = vset.pattern.permute.xlu0 0
      %818 = vperm.xlu0 %817, %v591
      %v819 = vpop.permute.xlu0 %818
      %822 = vset.pattern.permute.xlu0 0
      %823 = vperm.xlu0 %822, %v592
      %v824 = vpop.permute.xlu0 %823
      %827 = vset.pattern.permute.xlu0 0
      %828 = vperm.xlu0 %827, %v593
      %v829 = vpop.permute.xlu0 %828
      %832 = vset.pattern.permute.xlu0 0
      %833 = vperm.xlu0 %832, %v594
      %v834 = vpop.permute.xlu0 %833
      %837 = vset.pattern.permute.xlu0 0
      %838 = vperm.xlu0 %837, %v595
      %v839 = vpop.permute.xlu0 %838
      %842 = vset.pattern.permute.xlu0 0
      %843 = vperm.xlu0 %842, %v596
      %v844 = vpop.permute.xlu0 %843
      %847 = vset.pattern.permute.xlu0 0
      %848 = vperm.xlu0 %847, %v597
      %v849 = vpop.permute.xlu0 %848
      %852 = vset.pattern.permute.xlu0 0
      %853 = vperm.xlu0 %852, %v598
      %v854 = vpop.permute.xlu0 %853
      %857 = vset.pattern.permute.xlu0 0
      %858 = vperm.xlu0 %857, %v599
      %v859 = vpop.permute.xlu0 %858
      %862 = vset.pattern.permute.xlu0 0
      %863 = vperm.xlu0 %862, %v600
      %v864 = vpop.permute.xlu0 %863
      %867 = vset.pattern.permute.xlu0 0
      %868 = vperm.xlu0 %867, %v601
      %v869 = vpop.permute.xlu0 %868
      %872 = vset.pattern.permute.xlu0 0
      %873 = vperm.xlu0 %872, %v602
      %v874 = vpop.permute.xlu0 %873
      %877 = vset.pattern.permute.xlu0 0
      %878 = vperm.xlu0 %877, %v603
      %v879 = vpop.permute.xlu0 %878
      %882 = vset.pattern.permute.xlu0 0
      %883 = vperm.xlu0 %882, %v604
      %v884 = vpop.permute.xlu0 %883
      %887 = vset.pattern.permute.xlu0 0
      %888 = vperm.xlu0 %887, %v605
      %v889 = vpop.permute.xlu0 %888
      %892 = vset.pattern.permute.xlu0 0
      %893 = vperm.xlu0 %892, %v606
      %v894 = vpop.permute.xlu0 %893
      %897 = vset.pattern.permute.xlu0 0
      %898 = vperm.xlu0 %897, %v607
      %v899 = vpop.permute.xlu0 %898
      %902 = vset.pattern.permute.xlu0 0
      %903 = vperm.xlu0 %902, %v608
      %v904 = vpop.permute.xlu0 %903
      %907 = vset.pattern.permute.xlu0 0
      %908 = vperm.xlu0 %907, %v609
      %v909 = vpop.permute.xlu0 %908
      %912 = vset.pattern.permute.xlu0 0
      %913 = vperm.xlu0 %912, %v610
      %v914 = vpop.permute.xlu0 %913
      %917 = vset.pattern.permute.xlu0 0
      %918 = vperm.xlu0 %917, %v611
      %v919 = vpop.permute.xlu0 %918
      %922 = vset.pattern.permute.xlu0 0
      %923 = vperm.xlu0 %922, %v612
      %v924 = vpop.permute.xlu0 %923
      %927 = vset.pattern.permute.xlu0 0
      %928 = vperm.xlu0 %927, %v613
      %v929 = vpop.permute.xlu0 %928
      %932 = vset.pattern.permute.xlu0 0
      %933 = vperm.xlu0 %932, %v614
      %v934 = vpop.permute.xlu0 %933
      %937 = vset.pattern.permute.xlu0 0
      %938 = vperm.xlu0 %937, %v615
      %v939 = vpop.permute.xlu0 %938
      %942 = vset.pattern.permute.xlu0 0
      %943 = vperm.xlu0 %942, %v616
      %v944 = vpop.permute.xlu0 %943
      %947 = vset.pattern.permute.xlu0 0
      %948 = vperm.xlu0 %947, %v617
      %v949 = vpop.permute.xlu0 %948
      %952 = vset.pattern.permute.xlu0 0
      %953 = vperm.xlu0 %952, %v618
      %v954 = vpop.permute.xlu0 %953
      %957 = vset.pattern.permute.xlu0 0
      %958 = vperm.xlu0 %957, %v619
      %v959 = vpop.permute.xlu0 %958
      %962 = vset.pattern.permute.xlu0 0
      %963 = vperm.xlu0 %962, %v620
      %v964 = vpop.permute.xlu0 %963
      %967 = vset.pattern.permute.xlu0 0
      %968 = vperm.xlu0 %967, %v621
      %v969 = vpop.permute.xlu0 %968
      %972 = vset.pattern.permute.xlu0 0
      %973 = vperm.xlu0 %972, %v622
      %v974 = vpop.permute.xlu0 %973
      %977 = vset.pattern.permute.xlu0 0
      %978 = vperm.xlu0 %977, %v623
      %v979 = vpop.permute.xlu0 %978
      %982 = vset.pattern.permute.xlu0 0
      %983 = vperm.xlu0 %982, %v624
      %v984 = vpop.permute.xlu0 %983
      %987 = vset.pattern.permute.xlu0 0
      %988 = vperm.xlu0 %987, %v625
      %v989 = vpop.permute.xlu0 %988
      %v991 = vmul.f32 %v480, %v629
      %v992 = vmul.f32 %v481, %v634
      %v993 = vmul.f32 %v482, %v639
      %v994 = vmul.f32 %v483, %v644
      %v995 = vmul.f32 %v484, %v649
      %v996 = vmul.f32 %v485, %v654
      %v997 = vmul.f32 %v486, %v659
      %v998 = vmul.f32 %v487, %v664
      %v999 = vmul.f32 %v488, %v669
      %v1000 = vmul.f32 %v489, %v674
      %v1001 = vmul.f32 %v490, %v679
      %v1002 = vmul.f32 %v491, %v684
      %v1003 = vmul.f32 %v492, %v689
      %v1004 = vmul.f32 %v493, %v694
      %v1005 = vmul.f32 %v494, %v699
      %v1006 = vmul.f32 %v495, %v704
      %v1007 = vmul.f32 %v496, %v709
      %v1008 = vmul.f32 %v497, %v714
      %v1009 = vmul.f32 %v498, %v719
      %v1010 = vmul.f32 %v499, %v724
      %v1011 = vmul.f32 %v500, %v729
      %v1012 = vmul.f32 %v501, %v734
      %v1013 = vmul.f32 %v502, %v739
      %v1014 = vmul.f32 %v503, %v744
      %v1015 = vmul.f32 %v504, %v749
      %v1016 = vmul.f32 %v505, %v754
      %v1017 = vmul.f32 %v506, %v759
      %v1018 = vmul.f32 %v507, %v764
      %v1019 = vmul.f32 %v508, %v769
      %v1020 = vmul.f32 %v509, %v774
      %v1021 = vmul.f32 %v510, %v779
      %v1022 = vmul.f32 %v511, %v784
      %v1023 = vmul.f32 %v512, %v789
      %v1024 = vmul.f32 %v513, %v794
      %v1025 = vmul.f32 %v514, %v799
      %v1026 = vmul.f32 %v515, %v804
      %v1027 = vmul.f32 %v516, %v809
      %v1028 = vmul.f32 %v517, %v814
      %v1029 = vmul.f32 %v518, %v819
      %v1030 = vmul.f32 %v519, %v824
      %v1031 = vmul.f32 %v520, %v829
      %v1032 = vmul.f32 %v521, %v834
      %v1033 = vmul.f32 %v522, %v839
      %v1034 = vmul.f32 %v523, %v844
      %v1035 = vmul.f32 %v524, %v849
      %v1036 = vmul.f32 %v525, %v854
      %v1037 = vmul.f32 %v526, %v859
      %v1038 = vmul.f32 %v527, %v864
      %v1039 = vmul.f32 %v528, %v869
      %v1040 = vmul.f32 %v529, %v874
      %v1041 = vmul.f32 %v530, %v879
      %v1042 = vmul.f32 %v531, %v884
      %v1043 = vmul.f32 %v532, %v889
      %v1044 = vmul.f32 %v533, %v894
      %v1045 = vmul.f32 %v534, %v899
      %v1046 = vmul.f32 %v535, %v904
      %v1047 = vmul.f32 %v536, %v909
      %v1048 = vmul.f32 %v537, %v914
      %v1049 = vmul.f32 %v538, %v919
      %v1050 = vmul.f32 %v539, %v924
      %v1051 = vmul.f32 %v540, %v929
      %v1052 = vmul.f32 %v541, %v934
      %v1053 = vmul.f32 %v542, %v939
      %v1054 = vmul.f32 %v543, %v944
      %v1055 = vmul.f32 %v544, %v949
      %v1056 = vmul.f32 %v545, %v954
      %v1057 = vmul.f32 %v546, %v959
      %v1058 = vmul.f32 %v547, %v964
      %v1059 = vmul.f32 %v548, %v969
      %v1060 = vmul.f32 %v549, %v974
      %v1061 = vmul.f32 %v550, %v979
      %v1062 = vmul.f32 %v551, %v984
      %v1063 = vmul.f32 %v552, %v989
      %vm1137 = vcmask 1046528
      %v1138 = vrot.slane %v991, 1
      %v1139 = vrot.slane %v992, 1
      %v1140 = vsel %vm1137, %v1138, %v1139
      %v1141 = vrot.slane %v993, 1
      %v1142 = vsel %vm1137, %v1139, %v1141
      %v1143 = vrot.slane %v994, 1
      %v1144 = vsel %vm1137, %v1141, %v1143
      %v1145 = vrot.slane %v995, 1
      %v1146 = vsel %vm1137, %v1143, %v1145
      %v1147 = vrot.slane %v996, 1
      %v1148 = vsel %vm1137, %v1145, %v1147
      %v1149 = vrot.slane %v997, 1
      %v1150 = vsel %vm1137, %v1147, %v1149
      %v1151 = vrot.slane %v998, 1
      %v1152 = vsel %vm1137, %v1149, %v1151
      %v1153 = vrot.slane %v999, 1
      %v1154 = vsel %vm1137, %v1151, %v1153
      %v1155 = vrot.slane %v1000, 1
      %v1156 = vsel %vm1137, %v1153, %v1155
      %v1157 = vrot.slane %v1001, 1
      %v1158 = vsel %vm1137, %v1155, %v1157
      %v1159 = vrot.slane %v1002, 1
      %v1160 = vsel %vm1137, %v1157, %v1159
      %v1161 = vrot.slane %v1003, 1
      %v1162 = vsel %vm1137, %v1159, %v1161
      %v1163 = vrot.slane %v1004, 1
      %v1164 = vsel %vm1137, %v1161, %v1163
      %v1165 = vrot.slane %v1005, 1
      %v1166 = vsel %vm1137, %v1163, %v1165
      %v1167 = vrot.slane %v1006, 1
      %v1168 = vsel %vm1137, %v1165, %v1167
      %v1169 = vrot.slane %v1007, 1
      %v1170 = vsel %vm1137, %v1167, %v1169
      %v1171 = vrot.slane %v1008, 1
      %v1172 = vsel %vm1137, %v1169, %v1171
      %v1173 = vrot.slane %v1009, 1
      %v1174 = vsel %vm1137, %v1171, %v1173
      %v1175 = vrot.slane %v1010, 1
      %v1176 = vsel %vm1137, %v1173, %v1175
      %v1177 = vrot.slane %v1011, 1
      %v1178 = vsel %vm1137, %v1175, %v1177
      %v1179 = vrot.slane %v1012, 1
      %v1180 = vsel %vm1137, %v1177, %v1179
      %v1181 = vrot.slane %v1013, 1
      %v1182 = vsel %vm1137, %v1179, %v1181
      %v1183 = vrot.slane %v1014, 1
      %v1184 = vsel %vm1137, %v1181, %v1183
      %v1185 = vrot.slane %v1015, 1
      %v1186 = vsel %vm1137, %v1183, %v1185
      %v1187 = vrot.slane %v1016, 1
      %v1188 = vsel %vm1137, %v1185, %v1187
      %v1189 = vrot.slane %v1017, 1
      %v1190 = vsel %vm1137, %v1187, %v1189
      %v1191 = vrot.slane %v1018, 1
      %v1192 = vsel %vm1137, %v1189, %v1191
      %v1193 = vrot.slane %v1019, 1
      %v1194 = vsel %vm1137, %v1191, %v1193
      %v1195 = vrot.slane %v1020, 1
      %v1196 = vsel %vm1137, %v1193, %v1195
      %v1197 = vrot.slane %v1021, 1
      %v1198 = vsel %vm1137, %v1195, %v1197
      %v1199 = vrot.slane %v1022, 1
      %v1200 = vsel %vm1137, %v1197, %v1199
      %v1201 = vrot.slane %v1023, 1
      %v1202 = vsel %vm1137, %v1199, %v1201
      %v1203 = vrot.slane %v1024, 1
      %v1204 = vsel %vm1137, %v1201, %v1203
      %v1205 = vrot.slane %v1025, 1
      %v1206 = vsel %vm1137, %v1203, %v1205
      %v1207 = vrot.slane %v1026, 1
      %v1208 = vsel %vm1137, %v1205, %v1207
      %v1209 = vrot.slane %v1027, 1
      %v1210 = vsel %vm1137, %v1207, %v1209
      %v1211 = vrot.slane %v1028, 1
      %v1212 = vsel %vm1137, %v1209, %v1211
      %v1213 = vrot.slane %v1029, 1
      %v1214 = vsel %vm1137, %v1211, %v1213
      %v1215 = vrot.slane %v1030, 1
      %v1216 = vsel %vm1137, %v1213, %v1215
      %v1217 = vrot.slane %v1031, 1
      %v1218 = vsel %vm1137, %v1215, %v1217
      %v1219 = vrot.slane %v1032, 1
      %v1220 = vsel %vm1137, %v1217, %v1219
      %v1221 = vrot.slane %v1033, 1
      %v1222 = vsel %vm1137, %v1219, %v1221
      %v1223 = vrot.slane %v1034, 1
      %v1224 = vsel %vm1137, %v1221, %v1223
      %v1225 = vrot.slane %v1035, 1
      %v1226 = vsel %vm1137, %v1223, %v1225
      %v1227 = vrot.slane %v1036, 1
      %v1228 = vsel %vm1137, %v1225, %v1227
      %v1229 = vrot.slane %v1037, 1
      %v1230 = vsel %vm1137, %v1227, %v1229
      %v1231 = vrot.slane %v1038, 1
      %v1232 = vsel %vm1137, %v1229, %v1231
      %v1233 = vrot.slane %v1039, 1
      %v1234 = vsel %vm1137, %v1231, %v1233
      %v1235 = vrot.slane %v1040, 1
      %v1236 = vsel %vm1137, %v1233, %v1235
      %v1237 = vrot.slane %v1041, 1
      %v1238 = vsel %vm1137, %v1235, %v1237
      %v1239 = vrot.slane %v1042, 1
      %v1240 = vsel %vm1137, %v1237, %v1239
      %v1241 = vrot.slane %v1043, 1
      %v1242 = vsel %vm1137, %v1239, %v1241
      %v1243 = vrot.slane %v1044, 1
      %v1244 = vsel %vm1137, %v1241, %v1243
      %v1245 = vrot.slane %v1045, 1
      %v1246 = vsel %vm1137, %v1243, %v1245
      %v1247 = vrot.slane %v1046, 1
      %v1248 = vsel %vm1137, %v1245, %v1247
      %v1249 = vrot.slane %v1047, 1
      %v1250 = vsel %vm1137, %v1247, %v1249
      %v1251 = vrot.slane %v1048, 1
      %v1252 = vsel %vm1137, %v1249, %v1251
      %v1253 = vrot.slane %v1049, 1
      %v1254 = vsel %vm1137, %v1251, %v1253
      %v1255 = vrot.slane %v1050, 1
      %v1256 = vsel %vm1137, %v1253, %v1255
      %v1257 = vrot.slane %v1051, 1
      %v1258 = vsel %vm1137, %v1255, %v1257
      %v1259 = vrot.slane %v1052, 1
      %v1260 = vsel %vm1137, %v1257, %v1259
      %v1261 = vrot.slane %v1053, 1
      %v1262 = vsel %vm1137, %v1259, %v1261
      %v1263 = vrot.slane %v1054, 1
      %v1264 = vsel %vm1137, %v1261, %v1263
      %v1265 = vrot.slane %v1055, 1
      %v1266 = vsel %vm1137, %v1263, %v1265
      %v1267 = vrot.slane %v1056, 1
      %v1268 = vsel %vm1137, %v1265, %v1267
      %v1269 = vrot.slane %v1057, 1
      %v1270 = vsel %vm1137, %v1267, %v1269
      %v1271 = vrot.slane %v1058, 1
      %v1272 = vsel %vm1137, %v1269, %v1271
      %v1273 = vrot.slane %v1059, 1
      %v1274 = vsel %vm1137, %v1271, %v1273
      %v1275 = vrot.slane %v1060, 1
      %v1276 = vsel %vm1137, %v1273, %v1275
      %v1277 = vrot.slane %v1061, 1
      %v1278 = vsel %vm1137, %v1275, %v1277
      %v1279 = vrot.slane %v1062, 1
      %v1280 = vsel %vm1137, %v1277, %v1279
      %v1281 = vrot.slane %v1063, 1
      %v1282 = vsel %vm1137, %v1279, %v1281
      %1283 = vrot.lane.b32.xlu0 %v1140, 32
      %v1284 = vpop.permute.xlu0 %1283
      %1285 = vrot.lane.b32.xlu0 %v1142, 32
      %v1286 = vpop.permute.xlu0 %1285
      %1287 = vrot.lane.b32.xlu0 %v1144, 32
      %v1288 = vpop.permute.xlu0 %1287
      %1289 = vrot.lane.b32.xlu0 %v1146, 32
      %v1290 = vpop.permute.xlu0 %1289
      %1291 = vrot.lane.b32.xlu0 %v1148, 32
      %v1292 = vpop.permute.xlu0 %1291
      %1293 = vrot.lane.b32.xlu0 %v1150, 32
      %v1294 = vpop.permute.xlu0 %1293
      %1295 = vrot.lane.b32.xlu0 %v1152, 32
      %v1296 = vpop.permute.xlu0 %1295
      %1297 = vrot.lane.b32.xlu0 %v1154, 32
      %v1298 = vpop.permute.xlu0 %1297
      %1299 = vrot.lane.b32.xlu0 %v1156, 32
      %v1300 = vpop.permute.xlu0 %1299
      %1301 = vrot.lane.b32.xlu0 %v1158, 32
      %v1302 = vpop.permute.xlu0 %1301
      %1303 = vrot.lane.b32.xlu0 %v1160, 32
      %v1304 = vpop.permute.xlu0 %1303
      %1305 = vrot.lane.b32.xlu0 %v1162, 32
      %v1306 = vpop.permute.xlu0 %1305
      %1307 = vrot.lane.b32.xlu0 %v1164, 32
      %v1308 = vpop.permute.xlu0 %1307
      %1309 = vrot.lane.b32.xlu0 %v1166, 32
      %v1310 = vpop.permute.xlu0 %1309
      %1311 = vrot.lane.b32.xlu0 %v1168, 32
      %v1312 = vpop.permute.xlu0 %1311
      %1313 = vrot.lane.b32.xlu0 %v1170, 32
      %v1314 = vpop.permute.xlu0 %1313
      %1315 = vrot.lane.b32.xlu0 %v1172, 32
      %v1316 = vpop.permute.xlu0 %1315
      %1317 = vrot.lane.b32.xlu0 %v1174, 32
      %v1318 = vpop.permute.xlu0 %1317
      %1319 = vrot.lane.b32.xlu0 %v1176, 32
      %v1320 = vpop.permute.xlu0 %1319
      %1321 = vrot.lane.b32.xlu0 %v1178, 32
      %v1322 = vpop.permute.xlu0 %1321
      %1323 = vrot.lane.b32.xlu0 %v1180, 32
      %v1324 = vpop.permute.xlu0 %1323
      %1325 = vrot.lane.b32.xlu0 %v1182, 32
      %v1326 = vpop.permute.xlu0 %1325
      %1327 = vrot.lane.b32.xlu0 %v1184, 32
      %v1328 = vpop.permute.xlu0 %1327
      %1329 = vrot.lane.b32.xlu0 %v1186, 32
      %v1330 = vpop.permute.xlu0 %1329
      %1331 = vrot.lane.b32.xlu0 %v1188, 32
      %v1332 = vpop.permute.xlu0 %1331
      %1333 = vrot.lane.b32.xlu0 %v1190, 32
      %v1334 = vpop.permute.xlu0 %1333
      %1335 = vrot.lane.b32.xlu0 %v1192, 32
      %v1336 = vpop.permute.xlu0 %1335
      %1337 = vrot.lane.b32.xlu0 %v1194, 32
      %v1338 = vpop.permute.xlu0 %1337
      %1339 = vrot.lane.b32.xlu0 %v1196, 32
      %v1340 = vpop.permute.xlu0 %1339
      %1341 = vrot.lane.b32.xlu0 %v1198, 32
      %v1342 = vpop.permute.xlu0 %1341
      %1343 = vrot.lane.b32.xlu0 %v1200, 32
      %v1344 = vpop.permute.xlu0 %1343
      %1345 = vrot.lane.b32.xlu0 %v1202, 32
      %v1346 = vpop.permute.xlu0 %1345
      %1347 = vrot.lane.b32.xlu0 %v1204, 32
      %v1348 = vpop.permute.xlu0 %1347
      %1349 = vrot.lane.b32.xlu0 %v1206, 32
      %v1350 = vpop.permute.xlu0 %1349
      %1351 = vrot.lane.b32.xlu0 %v1208, 32
      %v1352 = vpop.permute.xlu0 %1351
      %1353 = vrot.lane.b32.xlu0 %v1210, 32
      %v1354 = vpop.permute.xlu0 %1353
      %1355 = vrot.lane.b32.xlu0 %v1212, 32
      %v1356 = vpop.permute.xlu0 %1355
      %1357 = vrot.lane.b32.xlu0 %v1214, 32
      %v1358 = vpop.permute.xlu0 %1357
      %1359 = vrot.lane.b32.xlu0 %v1216, 32
      %v1360 = vpop.permute.xlu0 %1359
      %1361 = vrot.lane.b32.xlu0 %v1218, 32
      %v1362 = vpop.permute.xlu0 %1361
      %1363 = vrot.lane.b32.xlu0 %v1220, 32
      %v1364 = vpop.permute.xlu0 %1363
      %1365 = vrot.lane.b32.xlu0 %v1222, 32
      %v1366 = vpop.permute.xlu0 %1365
      %1367 = vrot.lane.b32.xlu0 %v1224, 32
      %v1368 = vpop.permute.xlu0 %1367
      %1369 = vrot.lane.b32.xlu0 %v1226, 32
      %v1370 = vpop.permute.xlu0 %1369
      %1371 = vrot.lane.b32.xlu0 %v1228, 32
      %v1372 = vpop.permute.xlu0 %1371
      %1373 = vrot.lane.b32.xlu0 %v1230, 32
      %v1374 = vpop.permute.xlu0 %1373
      %1375 = vrot.lane.b32.xlu0 %v1232, 32
      %v1376 = vpop.permute.xlu0 %1375
      %1377 = vrot.lane.b32.xlu0 %v1234, 32
      %v1378 = vpop.permute.xlu0 %1377
      %1379 = vrot.lane.b32.xlu0 %v1236, 32
      %v1380 = vpop.permute.xlu0 %1379
      %1381 = vrot.lane.b32.xlu0 %v1238, 32
      %v1382 = vpop.permute.xlu0 %1381
      %1383 = vrot.lane.b32.xlu0 %v1240, 32
      %v1384 = vpop.permute.xlu0 %1383
      %1385 = vrot.lane.b32.xlu0 %v1242, 32
      %v1386 = vpop.permute.xlu0 %1385
      %1387 = vrot.lane.b32.xlu0 %v1244, 32
      %v1388 = vpop.permute.xlu0 %1387
      %1389 = vrot.lane.b32.xlu0 %v1246, 32
      %v1390 = vpop.permute.xlu0 %1389
      %1391 = vrot.lane.b32.xlu0 %v1248, 32
      %v1392 = vpop.permute.xlu0 %1391
      %1393 = vrot.lane.b32.xlu0 %v1250, 32
      %v1394 = vpop.permute.xlu0 %1393
      %1395 = vrot.lane.b32.xlu0 %v1252, 32
      %v1396 = vpop.permute.xlu0 %1395
      %1397 = vrot.lane.b32.xlu0 %v1254, 32
      %v1398 = vpop.permute.xlu0 %1397
      %1399 = vrot.lane.b32.xlu0 %v1256, 32
      %v1400 = vpop.permute.xlu0 %1399
      %1401 = vrot.lane.b32.xlu0 %v1258, 32
      %v1402 = vpop.permute.xlu0 %1401
      %1403 = vrot.lane.b32.xlu0 %v1260, 32
      %v1404 = vpop.permute.xlu0 %1403
      %1405 = vrot.lane.b32.xlu0 %v1262, 32
      %v1406 = vpop.permute.xlu0 %1405
      %1407 = vrot.lane.b32.xlu0 %v1264, 32
      %v1408 = vpop.permute.xlu0 %1407
      %1409 = vrot.lane.b32.xlu0 %v1266, 32
      %v1410 = vpop.permute.xlu0 %1409
      %1411 = vrot.lane.b32.xlu0 %v1268, 32
      %v1412 = vpop.permute.xlu0 %1411
      %1413 = vrot.lane.b32.xlu0 %v1270, 32
      %v1414 = vpop.permute.xlu0 %1413
      %1415 = vrot.lane.b32.xlu0 %v1272, 32
      %v1416 = vpop.permute.xlu0 %1415
      %1417 = vrot.lane.b32.xlu0 %v1274, 32
      %v1418 = vpop.permute.xlu0 %1417
      %1419 = vrot.lane.b32.xlu0 %v1276, 32
      %v1420 = vpop.permute.xlu0 %1419
      %1421 = vrot.lane.b32.xlu0 %v1278, 32
      %v1422 = vpop.permute.xlu0 %1421
      %1423 = vrot.lane.b32.xlu0 %v1280, 32
      %v1424 = vpop.permute.xlu0 %1423
      %1425 = vrot.lane.b32.xlu0 %v1282, 32
      %v1426 = vpop.permute.xlu0 %1425
      %vm1499 = vcmask 1045504
      %v1500 = vrot.slane %v991, 2
      %v1501 = vrot.slane %v992, 2
      %v1502 = vsel %vm1499, %v1500, %v1501
      %v1503 = vrot.slane %v993, 2
      %v1504 = vsel %vm1499, %v1501, %v1503
      %v1505 = vrot.slane %v994, 2
      %v1506 = vsel %vm1499, %v1503, %v1505
      %v1507 = vrot.slane %v995, 2
      %v1508 = vsel %vm1499, %v1505, %v1507
      %v1509 = vrot.slane %v996, 2
      %v1510 = vsel %vm1499, %v1507, %v1509
      %v1511 = vrot.slane %v997, 2
      %v1512 = vsel %vm1499, %v1509, %v1511
      %v1513 = vrot.slane %v998, 2
      %v1514 = vsel %vm1499, %v1511, %v1513
      %v1515 = vrot.slane %v999, 2
      %v1516 = vsel %vm1499, %v1513, %v1515
      %v1517 = vrot.slane %v1000, 2
      %v1518 = vsel %vm1499, %v1515, %v1517
      %v1519 = vrot.slane %v1001, 2
      %v1520 = vsel %vm1499, %v1517, %v1519
      %v1521 = vrot.slane %v1002, 2
      %v1522 = vsel %vm1499, %v1519, %v1521
      %v1523 = vrot.slane %v1003, 2
      %v1524 = vsel %vm1499, %v1521, %v1523
      %v1525 = vrot.slane %v1004, 2
      %v1526 = vsel %vm1499, %v1523, %v1525
      %v1527 = vrot.slane %v1005, 2
      %v1528 = vsel %vm1499, %v1525, %v1527
      %v1529 = vrot.slane %v1006, 2
      %v1530 = vsel %vm1499, %v1527, %v1529
      %v1531 = vrot.slane %v1007, 2
      %v1532 = vsel %vm1499, %v1529, %v1531
      %v1533 = vrot.slane %v1008, 2
      %v1534 = vsel %vm1499, %v1531, %v1533
      %v1535 = vrot.slane %v1009, 2
      %v1536 = vsel %vm1499, %v1533, %v1535
      %v1537 = vrot.slane %v1010, 2
      %v1538 = vsel %vm1499, %v1535, %v1537
      %v1539 = vrot.slane %v1011, 2
      %v1540 = vsel %vm1499, %v1537, %v1539
      %v1541 = vrot.slane %v1012, 2
      %v1542 = vsel %vm1499, %v1539, %v1541
      %v1543 = vrot.slane %v1013, 2
      %v1544 = vsel %vm1499, %v1541, %v1543
      %v1545 = vrot.slane %v1014, 2
      %v1546 = vsel %vm1499, %v1543, %v1545
      %v1547 = vrot.slane %v1015, 2
      %v1548 = vsel %vm1499, %v1545, %v1547
      %v1549 = vrot.slane %v1016, 2
      %v1550 = vsel %vm1499, %v1547, %v1549
      %v1551 = vrot.slane %v1017, 2
      %v1552 = vsel %vm1499, %v1549, %v1551
      %v1553 = vrot.slane %v1018, 2
      %v1554 = vsel %vm1499, %v1551, %v1553
      %v1555 = vrot.slane %v1019, 2
      %v1556 = vsel %vm1499, %v1553, %v1555
      %v1557 = vrot.slane %v1020, 2
      %v1558 = vsel %vm1499, %v1555, %v1557
      %v1559 = vrot.slane %v1021, 2
      %v1560 = vsel %vm1499, %v1557, %v1559
      %v1561 = vrot.slane %v1022, 2
      %v1562 = vsel %vm1499, %v1559, %v1561
      %v1563 = vrot.slane %v1023, 2
      %v1564 = vsel %vm1499, %v1561, %v1563
      %v1565 = vrot.slane %v1024, 2
      %v1566 = vsel %vm1499, %v1563, %v1565
      %v1567 = vrot.slane %v1025, 2
      %v1568 = vsel %vm1499, %v1565, %v1567
      %v1569 = vrot.slane %v1026, 2
      %v1570 = vsel %vm1499, %v1567, %v1569
      %v1571 = vrot.slane %v1027, 2
      %v1572 = vsel %vm1499, %v1569, %v1571
      %v1573 = vrot.slane %v1028, 2
      %v1574 = vsel %vm1499, %v1571, %v1573
      %v1575 = vrot.slane %v1029, 2
      %v1576 = vsel %vm1499, %v1573, %v1575
      %v1577 = vrot.slane %v1030, 2
      %v1578 = vsel %vm1499, %v1575, %v1577
      %v1579 = vrot.slane %v1031, 2
      %v1580 = vsel %vm1499, %v1577, %v1579
      %v1581 = vrot.slane %v1032, 2
      %v1582 = vsel %vm1499, %v1579, %v1581
      %v1583 = vrot.slane %v1033, 2
      %v1584 = vsel %vm1499, %v1581, %v1583
      %v1585 = vrot.slane %v1034, 2
      %v1586 = vsel %vm1499, %v1583, %v1585
      %v1587 = vrot.slane %v1035, 2
      %v1588 = vsel %vm1499, %v1585, %v1587
      %v1589 = vrot.slane %v1036, 2
      %v1590 = vsel %vm1499, %v1587, %v1589
      %v1591 = vrot.slane %v1037, 2
      %v1592 = vsel %vm1499, %v1589, %v1591
      %v1593 = vrot.slane %v1038, 2
      %v1594 = vsel %vm1499, %v1591, %v1593
      %v1595 = vrot.slane %v1039, 2
      %v1596 = vsel %vm1499, %v1593, %v1595
      %v1597 = vrot.slane %v1040, 2
      %v1598 = vsel %vm1499, %v1595, %v1597
      %v1599 = vrot.slane %v1041, 2
      %v1600 = vsel %vm1499, %v1597, %v1599
      %v1601 = vrot.slane %v1042, 2
      %v1602 = vsel %vm1499, %v1599, %v1601
      %v1603 = vrot.slane %v1043, 2
      %v1604 = vsel %vm1499, %v1601, %v1603
      %v1605 = vrot.slane %v1044, 2
      %v1606 = vsel %vm1499, %v1603, %v1605
      %v1607 = vrot.slane %v1045, 2
      %v1608 = vsel %vm1499, %v1605, %v1607
      %v1609 = vrot.slane %v1046, 2
      %v1610 = vsel %vm1499, %v1607, %v1609
      %v1611 = vrot.slane %v1047, 2
      %v1612 = vsel %vm1499, %v1609, %v1611
      %v1613 = vrot.slane %v1048, 2
      %v1614 = vsel %vm1499, %v1611, %v1613
      %v1615 = vrot.slane %v1049, 2
      %v1616 = vsel %vm1499, %v1613, %v1615
      %v1617 = vrot.slane %v1050, 2
      %v1618 = vsel %vm1499, %v1615, %v1617
      %v1619 = vrot.slane %v1051, 2
      %v1620 = vsel %vm1499, %v1617, %v1619
      %v1621 = vrot.slane %v1052, 2
      %v1622 = vsel %vm1499, %v1619, %v1621
      %v1623 = vrot.slane %v1053, 2
      %v1624 = vsel %vm1499, %v1621, %v1623
      %v1625 = vrot.slane %v1054, 2
      %v1626 = vsel %vm1499, %v1623, %v1625
      %v1627 = vrot.slane %v1055, 2
      %v1628 = vsel %vm1499, %v1625, %v1627
      %v1629 = vrot.slane %v1056, 2
      %v1630 = vsel %vm1499, %v1627, %v1629
      %v1631 = vrot.slane %v1057, 2
      %v1632 = vsel %vm1499, %v1629, %v1631
      %v1633 = vrot.slane %v1058, 2
      %v1634 = vsel %vm1499, %v1631, %v1633
      %v1635 = vrot.slane %v1059, 2
      %v1636 = vsel %vm1499, %v1633, %v1635
      %v1637 = vrot.slane %v1060, 2
      %v1638 = vsel %vm1499, %v1635, %v1637
      %v1639 = vrot.slane %v1061, 2
      %v1640 = vsel %vm1499, %v1637, %v1639
      %v1641 = vrot.slane %v1062, 2
      %v1642 = vsel %vm1499, %v1639, %v1641
      %v1643 = vrot.slane %v1063, 2
      %v1644 = vsel %vm1499, %v1641, %v1643
      %1645 = vrot.lane.b32.xlu0 %v1502, 64
      %v1646 = vpop.permute.xlu0 %1645
      %1647 = vrot.lane.b32.xlu0 %v1504, 64
      %v1648 = vpop.permute.xlu0 %1647
      %1649 = vrot.lane.b32.xlu0 %v1506, 64
      %v1650 = vpop.permute.xlu0 %1649
      %1651 = vrot.lane.b32.xlu0 %v1508, 64
      %v1652 = vpop.permute.xlu0 %1651
      %1653 = vrot.lane.b32.xlu0 %v1510, 64
      %v1654 = vpop.permute.xlu0 %1653
      %1655 = vrot.lane.b32.xlu0 %v1512, 64
      %v1656 = vpop.permute.xlu0 %1655
      %1657 = vrot.lane.b32.xlu0 %v1514, 64
      %v1658 = vpop.permute.xlu0 %1657
      %1659 = vrot.lane.b32.xlu0 %v1516, 64
      %v1660 = vpop.permute.xlu0 %1659
      %1661 = vrot.lane.b32.xlu0 %v1518, 64
      %v1662 = vpop.permute.xlu0 %1661
      %1663 = vrot.lane.b32.xlu0 %v1520, 64
      %v1664 = vpop.permute.xlu0 %1663
      %1665 = vrot.lane.b32.xlu0 %v1522, 64
      %v1666 = vpop.permute.xlu0 %1665
      %1667 = vrot.lane.b32.xlu0 %v1524, 64
      %v1668 = vpop.permute.xlu0 %1667
      %1669 = vrot.lane.b32.xlu0 %v1526, 64
      %v1670 = vpop.permute.xlu0 %1669
      %1671 = vrot.lane.b32.xlu0 %v1528, 64
      %v1672 = vpop.permute.xlu0 %1671
      %1673 = vrot.lane.b32.xlu0 %v1530, 64
      %v1674 = vpop.permute.xlu0 %1673
      %1675 = vrot.lane.b32.xlu0 %v1532, 64
      %v1676 = vpop.permute.xlu0 %1675
      %1677 = vrot.lane.b32.xlu0 %v1534, 64
      %v1678 = vpop.permute.xlu0 %1677
      %1679 = vrot.lane.b32.xlu0 %v1536, 64
      %v1680 = vpop.permute.xlu0 %1679
      %1681 = vrot.lane.b32.xlu0 %v1538, 64
      %v1682 = vpop.permute.xlu0 %1681
      %1683 = vrot.lane.b32.xlu0 %v1540, 64
      %v1684 = vpop.permute.xlu0 %1683
      %1685 = vrot.lane.b32.xlu0 %v1542, 64
      %v1686 = vpop.permute.xlu0 %1685
      %1687 = vrot.lane.b32.xlu0 %v1544, 64
      %v1688 = vpop.permute.xlu0 %1687
      %1689 = vrot.lane.b32.xlu0 %v1546, 64
      %v1690 = vpop.permute.xlu0 %1689
      %1691 = vrot.lane.b32.xlu0 %v1548, 64
      %v1692 = vpop.permute.xlu0 %1691
      %1693 = vrot.lane.b32.xlu0 %v1550, 64
      %v1694 = vpop.permute.xlu0 %1693
      %1695 = vrot.lane.b32.xlu0 %v1552, 64
      %v1696 = vpop.permute.xlu0 %1695
      %1697 = vrot.lane.b32.xlu0 %v1554, 64
      %v1698 = vpop.permute.xlu0 %1697
      %1699 = vrot.lane.b32.xlu0 %v1556, 64
      %v1700 = vpop.permute.xlu0 %1699
      %1701 = vrot.lane.b32.xlu0 %v1558, 64
      %v1702 = vpop.permute.xlu0 %1701
      %1703 = vrot.lane.b32.xlu0 %v1560, 64
      %v1704 = vpop.permute.xlu0 %1703
      %1705 = vrot.lane.b32.xlu0 %v1562, 64
      %v1706 = vpop.permute.xlu0 %1705
      %1707 = vrot.lane.b32.xlu0 %v1564, 64
      %v1708 = vpop.permute.xlu0 %1707
      %1709 = vrot.lane.b32.xlu0 %v1566, 64
      %v1710 = vpop.permute.xlu0 %1709
      %1711 = vrot.lane.b32.xlu0 %v1568, 64
      %v1712 = vpop.permute.xlu0 %1711
      %1713 = vrot.lane.b32.xlu0 %v1570, 64
      %v1714 = vpop.permute.xlu0 %1713
      %1715 = vrot.lane.b32.xlu0 %v1572, 64
      %v1716 = vpop.permute.xlu0 %1715
      %1717 = vrot.lane.b32.xlu0 %v1574, 64
      %v1718 = vpop.permute.xlu0 %1717
      %1719 = vrot.lane.b32.xlu0 %v1576, 64
      %v1720 = vpop.permute.xlu0 %1719
      %1721 = vrot.lane.b32.xlu0 %v1578, 64
      %v1722 = vpop.permute.xlu0 %1721
      %1723 = vrot.lane.b32.xlu0 %v1580, 64
      %v1724 = vpop.permute.xlu0 %1723
      %1725 = vrot.lane.b32.xlu0 %v1582, 64
      %v1726 = vpop.permute.xlu0 %1725
      %1727 = vrot.lane.b32.xlu0 %v1584, 64
      %v1728 = vpop.permute.xlu0 %1727
      %1729 = vrot.lane.b32.xlu0 %v1586, 64
      %v1730 = vpop.permute.xlu0 %1729
      %1731 = vrot.lane.b32.xlu0 %v1588, 64
      %v1732 = vpop.permute.xlu0 %1731
      %1733 = vrot.lane.b32.xlu0 %v1590, 64
      %v1734 = vpop.permute.xlu0 %1733
      %1735 = vrot.lane.b32.xlu0 %v1592, 64
      %v1736 = vpop.permute.xlu0 %1735
      %1737 = vrot.lane.b32.xlu0 %v1594, 64
      %v1738 = vpop.permute.xlu0 %1737
      %1739 = vrot.lane.b32.xlu0 %v1596, 64
      %v1740 = vpop.permute.xlu0 %1739
      %1741 = vrot.lane.b32.xlu0 %v1598, 64
      %v1742 = vpop.permute.xlu0 %1741
      %1743 = vrot.lane.b32.xlu0 %v1600, 64
      %v1744 = vpop.permute.xlu0 %1743
      %1745 = vrot.lane.b32.xlu0 %v1602, 64
      %v1746 = vpop.permute.xlu0 %1745
      %1747 = vrot.lane.b32.xlu0 %v1604, 64
      %v1748 = vpop.permute.xlu0 %1747
      %1749 = vrot.lane.b32.xlu0 %v1606, 64
      %v1750 = vpop.permute.xlu0 %1749
      %1751 = vrot.lane.b32.xlu0 %v1608, 64
      %v1752 = vpop.permute.xlu0 %1751
      %1753 = vrot.lane.b32.xlu0 %v1610, 64
      %v1754 = vpop.permute.xlu0 %1753
      %1755 = vrot.lane.b32.xlu0 %v1612, 64
      %v1756 = vpop.permute.xlu0 %1755
      %1757 = vrot.lane.b32.xlu0 %v1614, 64
      %v1758 = vpop.permute.xlu0 %1757
      %1759 = vrot.lane.b32.xlu0 %v1616, 64
      %v1760 = vpop.permute.xlu0 %1759
      %1761 = vrot.lane.b32.xlu0 %v1618, 64
      %v1762 = vpop.permute.xlu0 %1761
      %1763 = vrot.lane.b32.xlu0 %v1620, 64
      %v1764 = vpop.permute.xlu0 %1763
      %1765 = vrot.lane.b32.xlu0 %v1622, 64
      %v1766 = vpop.permute.xlu0 %1765
      %1767 = vrot.lane.b32.xlu0 %v1624, 64
      %v1768 = vpop.permute.xlu0 %1767
      %1769 = vrot.lane.b32.xlu0 %v1626, 64
      %v1770 = vpop.permute.xlu0 %1769
      %1771 = vrot.lane.b32.xlu0 %v1628, 64
      %v1772 = vpop.permute.xlu0 %1771
      %1773 = vrot.lane.b32.xlu0 %v1630, 64
      %v1774 = vpop.permute.xlu0 %1773
      %1775 = vrot.lane.b32.xlu0 %v1632, 64
      %v1776 = vpop.permute.xlu0 %1775
      %1777 = vrot.lane.b32.xlu0 %v1634, 64
      %v1778 = vpop.permute.xlu0 %1777
      %1779 = vrot.lane.b32.xlu0 %v1636, 64
      %v1780 = vpop.permute.xlu0 %1779
      %1781 = vrot.lane.b32.xlu0 %v1638, 64
      %v1782 = vpop.permute.xlu0 %1781
      %1783 = vrot.lane.b32.xlu0 %v1640, 64
      %v1784 = vpop.permute.xlu0 %1783
      %1785 = vrot.lane.b32.xlu0 %v1642, 64
      %v1786 = vpop.permute.xlu0 %1785
      %1787 = vrot.lane.b32.xlu0 %v1644, 64
      %v1788 = vpop.permute.xlu0 %1787
      %vm1861 = vcmask 261120
      %v1862 = vsel %vm1861, %v991, %v1284
      %v1863 = vsel %vm1861, %v992, %v1286
      %v1864 = vsel %vm1861, %v993, %v1288
      %v1865 = vsel %vm1861, %v994, %v1290
      %v1866 = vsel %vm1861, %v995, %v1292
      %v1867 = vsel %vm1861, %v996, %v1294
      %v1868 = vsel %vm1861, %v997, %v1296
      %v1869 = vsel %vm1861, %v998, %v1298
      %v1870 = vsel %vm1861, %v999, %v1300
      %v1871 = vsel %vm1861, %v1000, %v1302
      %v1872 = vsel %vm1861, %v1001, %v1304
      %v1873 = vsel %vm1861, %v1002, %v1306
      %v1874 = vsel %vm1861, %v1003, %v1308
      %v1875 = vsel %vm1861, %v1004, %v1310
      %v1876 = vsel %vm1861, %v1005, %v1312
      %v1877 = vsel %vm1861, %v1006, %v1314
      %v1878 = vsel %vm1861, %v1007, %v1316
      %v1879 = vsel %vm1861, %v1008, %v1318
      %v1880 = vsel %vm1861, %v1009, %v1320
      %v1881 = vsel %vm1861, %v1010, %v1322
      %v1882 = vsel %vm1861, %v1011, %v1324
      %v1883 = vsel %vm1861, %v1012, %v1326
      %v1884 = vsel %vm1861, %v1013, %v1328
      %v1885 = vsel %vm1861, %v1014, %v1330
      %v1886 = vsel %vm1861, %v1015, %v1332
      %v1887 = vsel %vm1861, %v1016, %v1334
      %v1888 = vsel %vm1861, %v1017, %v1336
      %v1889 = vsel %vm1861, %v1018, %v1338
      %v1890 = vsel %vm1861, %v1019, %v1340
      %v1891 = vsel %vm1861, %v1020, %v1342
      %v1892 = vsel %vm1861, %v1021, %v1344
      %v1893 = vsel %vm1861, %v1022, %v1346
      %v1894 = vsel %vm1861, %v1023, %v1348
      %v1895 = vsel %vm1861, %v1024, %v1350
      %v1896 = vsel %vm1861, %v1025, %v1352
      %v1897 = vsel %vm1861, %v1026, %v1354
      %v1898 = vsel %vm1861, %v1027, %v1356
      %v1899 = vsel %vm1861, %v1028, %v1358
      %v1900 = vsel %vm1861, %v1029, %v1360
      %v1901 = vsel %vm1861, %v1030, %v1362
      %v1902 = vsel %vm1861, %v1031, %v1364
      %v1903 = vsel %vm1861, %v1032, %v1366
      %v1904 = vsel %vm1861, %v1033, %v1368
      %v1905 = vsel %vm1861, %v1034, %v1370
      %v1906 = vsel %vm1861, %v1035, %v1372
      %v1907 = vsel %vm1861, %v1036, %v1374
      %v1908 = vsel %vm1861, %v1037, %v1376
      %v1909 = vsel %vm1861, %v1038, %v1378
      %v1910 = vsel %vm1861, %v1039, %v1380
      %v1911 = vsel %vm1861, %v1040, %v1382
      %v1912 = vsel %vm1861, %v1041, %v1384
      %v1913 = vsel %vm1861, %v1042, %v1386
      %v1914 = vsel %vm1861, %v1043, %v1388
      %v1915 = vsel %vm1861, %v1044, %v1390
      %v1916 = vsel %vm1861, %v1045, %v1392
      %v1917 = vsel %vm1861, %v1046, %v1394
      %v1918 = vsel %vm1861, %v1047, %v1396
      %v1919 = vsel %vm1861, %v1048, %v1398
      %v1920 = vsel %vm1861, %v1049, %v1400
      %v1921 = vsel %vm1861, %v1050, %v1402
      %v1922 = vsel %vm1861, %v1051, %v1404
      %v1923 = vsel %vm1861, %v1052, %v1406
      %v1924 = vsel %vm1861, %v1053, %v1408
      %v1925 = vsel %vm1861, %v1054, %v1410
      %v1926 = vsel %vm1861, %v1055, %v1412
      %v1927 = vsel %vm1861, %v1056, %v1414
      %v1928 = vsel %vm1861, %v1057, %v1416
      %v1929 = vsel %vm1861, %v1058, %v1418
      %v1930 = vsel %vm1861, %v1059, %v1420
      %v1931 = vsel %vm1861, %v1060, %v1422
      %v1932 = vsel %vm1861, %v1061, %v1424
      %v1933 = vsel %vm1861, %v1062, %v1426
      %vm1934 = vcmask 523264
      %v1935 = vsel %vm1934, %v1862, %v1646
      %v1936 = vsel %vm1934, %v1863, %v1648
      %v1937 = vsel %vm1934, %v1864, %v1650
      %v1938 = vsel %vm1934, %v1865, %v1652
      %v1939 = vsel %vm1934, %v1866, %v1654
      %v1940 = vsel %vm1934, %v1867, %v1656
      %v1941 = vsel %vm1934, %v1868, %v1658
      %v1942 = vsel %vm1934, %v1869, %v1660
      %v1943 = vsel %vm1934, %v1870, %v1662
      %v1944 = vsel %vm1934, %v1871, %v1664
      %v1945 = vsel %vm1934, %v1872, %v1666
      %v1946 = vsel %vm1934, %v1873, %v1668
      %v1947 = vsel %vm1934, %v1874, %v1670
      %v1948 = vsel %vm1934, %v1875, %v1672
      %v1949 = vsel %vm1934, %v1876, %v1674
      %v1950 = vsel %vm1934, %v1877, %v1676
      %v1951 = vsel %vm1934, %v1878, %v1678
      %v1952 = vsel %vm1934, %v1879, %v1680
      %v1953 = vsel %vm1934, %v1880, %v1682
      %v1954 = vsel %vm1934, %v1881, %v1684
      %v1955 = vsel %vm1934, %v1882, %v1686
      %v1956 = vsel %vm1934, %v1883, %v1688
      %v1957 = vsel %vm1934, %v1884, %v1690
      %v1958 = vsel %vm1934, %v1885, %v1692
      %v1959 = vsel %vm1934, %v1886, %v1694
      %v1960 = vsel %vm1934, %v1887, %v1696
      %v1961 = vsel %vm1934, %v1888, %v1698
      %v1962 = vsel %vm1934, %v1889, %v1700
      %v1963 = vsel %vm1934, %v1890, %v1702
      %v1964 = vsel %vm1934, %v1891, %v1704
      %v1965 = vsel %vm1934, %v1892, %v1706
      %v1966 = vsel %vm1934, %v1893, %v1708
      %v1967 = vsel %vm1934, %v1894, %v1710
      %v1968 = vsel %vm1934, %v1895, %v1712
      %v1969 = vsel %vm1934, %v1896, %v1714
      %v1970 = vsel %vm1934, %v1897, %v1716
      %v1971 = vsel %vm1934, %v1898, %v1718
      %v1972 = vsel %vm1934, %v1899, %v1720
      %v1973 = vsel %vm1934, %v1900, %v1722
      %v1974 = vsel %vm1934, %v1901, %v1724
      %v1975 = vsel %vm1934, %v1902, %v1726
      %v1976 = vsel %vm1934, %v1903, %v1728
      %v1977 = vsel %vm1934, %v1904, %v1730
      %v1978 = vsel %vm1934, %v1905, %v1732
      %v1979 = vsel %vm1934, %v1906, %v1734
      %v1980 = vsel %vm1934, %v1907, %v1736
      %v1981 = vsel %vm1934, %v1908, %v1738
      %v1982 = vsel %vm1934, %v1909, %v1740
      %v1983 = vsel %vm1934, %v1910, %v1742
      %v1984 = vsel %vm1934, %v1911, %v1744
      %v1985 = vsel %vm1934, %v1912, %v1746
      %v1986 = vsel %vm1934, %v1913, %v1748
      %v1987 = vsel %vm1934, %v1914, %v1750
      %v1988 = vsel %vm1934, %v1915, %v1752
      %v1989 = vsel %vm1934, %v1916, %v1754
      %v1990 = vsel %vm1934, %v1917, %v1756
      %v1991 = vsel %vm1934, %v1918, %v1758
      %v1992 = vsel %vm1934, %v1919, %v1760
      %v1993 = vsel %vm1934, %v1920, %v1762
      %v1994 = vsel %vm1934, %v1921, %v1764
      %v1995 = vsel %vm1934, %v1922, %v1766
      %v1996 = vsel %vm1934, %v1923, %v1768
      %v1997 = vsel %vm1934, %v1924, %v1770
      %v1998 = vsel %vm1934, %v1925, %v1772
      %v1999 = vsel %vm1934, %v1926, %v1774
      %v2000 = vsel %vm1934, %v1927, %v1776
      %v2001 = vsel %vm1934, %v1928, %v1778
      %v2002 = vsel %vm1934, %v1929, %v1780
      %v2003 = vsel %vm1934, %v1930, %v1782
      %v2004 = vsel %vm1934, %v1931, %v1784
      %v2005 = vsel %vm1934, %v1932, %v1786
      %v2006 = vsel %vm1934, %v1933, %v1788
      %v2007 = vpack.c.bf16 %v1935, %v1935
      %v2008 = vpack.c.bf16 %v1936, %v1936
      %v2009 = vpack.c.bf16 %v1937, %v1937
      %v2010 = vpack.c.bf16 %v1938, %v1938
      %v2011 = vpack.c.bf16 %v1939, %v1939
      %v2012 = vpack.c.bf16 %v1940, %v1940
      %v2013 = vpack.c.bf16 %v1941, %v1941
      %v2014 = vpack.c.bf16 %v1942, %v1942
      %v2015 = vpack.c.bf16 %v1943, %v1943
      %v2016 = vpack.c.bf16 %v1944, %v1944
      %v2017 = vpack.c.bf16 %v1945, %v1945
      %v2018 = vpack.c.bf16 %v1946, %v1946
      %v2019 = vpack.c.bf16 %v1947, %v1947
      %v2020 = vpack.c.bf16 %v1948, %v1948
      %v2021 = vpack.c.bf16 %v1949, %v1949
      %v2022 = vpack.c.bf16 %v1950, %v1950
      %v2023 = vpack.c.bf16 %v1951, %v1951
      %v2024 = vpack.c.bf16 %v1952, %v1952
      %v2025 = vpack.c.bf16 %v1953, %v1953
      %v2026 = vpack.c.bf16 %v1954, %v1954
      %v2027 = vpack.c.bf16 %v1955, %v1955
      %v2028 = vpack.c.bf16 %v1956, %v1956
      %v2029 = vpack.c.bf16 %v1957, %v1957
      %v2030 = vpack.c.bf16 %v1958, %v1958
      %v2031 = vpack.c.bf16 %v1959, %v1959
      %v2032 = vpack.c.bf16 %v1960, %v1960
      %v2033 = vpack.c.bf16 %v1961, %v1961
      %v2034 = vpack.c.bf16 %v1962, %v1962
      %v2035 = vpack.c.bf16 %v1963, %v1963
      %v2036 = vpack.c.bf16 %v1964, %v1964
      %v2037 = vpack.c.bf16 %v1965, %v1965
      %v2038 = vpack.c.bf16 %v1966, %v1966
      %v2039 = vpack.c.bf16 %v1967, %v1967
      %v2040 = vpack.c.bf16 %v1968, %v1968
      %v2041 = vpack.c.bf16 %v1969, %v1969
      %v2042 = vpack.c.bf16 %v1970, %v1970
      %v2043 = vpack.c.bf16 %v1971, %v1971
      %v2044 = vpack.c.bf16 %v1972, %v1972
      %v2045 = vpack.c.bf16 %v1973, %v1973
      %v2046 = vpack.c.bf16 %v1974, %v1974
      %v2047 = vpack.c.bf16 %v1975, %v1975
      %v2048 = vpack.c.bf16 %v1976, %v1976
      %v2049 = vpack.c.bf16 %v1977, %v1977
      %v2050 = vpack.c.bf16 %v1978, %v1978
      %v2051 = vpack.c.bf16 %v1979, %v1979
      %v2052 = vpack.c.bf16 %v1980, %v1980
      %v2053 = vpack.c.bf16 %v1981, %v1981
      %v2054 = vpack.c.bf16 %v1982, %v1982
      %v2055 = vpack.c.bf16 %v1983, %v1983
      %v2056 = vpack.c.bf16 %v1984, %v1984
      %v2057 = vpack.c.bf16 %v1985, %v1985
      %v2058 = vpack.c.bf16 %v1986, %v1986
      %v2059 = vpack.c.bf16 %v1987, %v1987
      %v2060 = vpack.c.bf16 %v1988, %v1988
      %v2061 = vpack.c.bf16 %v1989, %v1989
      %v2062 = vpack.c.bf16 %v1990, %v1990
      %v2063 = vpack.c.bf16 %v1991, %v1991
      %v2064 = vpack.c.bf16 %v1992, %v1992
      %v2065 = vpack.c.bf16 %v1993, %v1993
      %v2066 = vpack.c.bf16 %v1994, %v1994
      %v2067 = vpack.c.bf16 %v1995, %v1995
      %v2068 = vpack.c.bf16 %v1996, %v1996
      %v2069 = vpack.c.bf16 %v1997, %v1997
      %v2070 = vpack.c.bf16 %v1998, %v1998
      %v2071 = vpack.c.bf16 %v1999, %v1999
      %v2072 = vpack.c.bf16 %v2000, %v2000
      %v2073 = vpack.c.bf16 %v2001, %v2001
      %v2074 = vpack.c.bf16 %v2002, %v2002
      %v2075 = vpack.c.bf16 %v2003, %v2003
      %v2076 = vpack.c.bf16 %v2004, %v2004
      %v2077 = vpack.c.bf16 %v2005, %v2005
      %v2078 = vpack.c.bf16 %v2006, %v2006
      %v2079 = vld [vmem:[%s4] sm:$0xf]
      %v2080 = vld [vmem:[%s4 + $0x4] sm:$0xf]
      %v2081 = vld [vmem:[%s4 + $0x8] sm:$0xf]
      %v2082 = vld [vmem:[%s4 + $0xc] sm:$0xf]
      %v2083 = vld [vmem:[%s4 + $0x10] sm:$0xf]
      %v2084 = vld [vmem:[%s4 + $0x14] sm:$0xf]
      %v2085 = vld [vmem:[%s4 + $0x18] sm:$0xf]
      %v2086 = vld [vmem:[%s4 + $0x1c] sm:$0xf]
      %v2087 = vld [vmem:[%s4 + $0x20] sm:$0xf]
      %v2088 = vld [vmem:[%s4 + $0x24] sm:$0xf]
      %v2089 = vld [vmem:[%s4 + $0x28] sm:$0xf]
      %v2090 = vld [vmem:[%s4 + $0x2c] sm:$0xf]
      %s2091 = scalar_lea.vmem %s4, 48
      %v2092 = vld [vmem:[%s2091] sm:$0xf]
      %v2093 = vld [vmem:[%s2091 + $0x4] sm:$0xf]
      %v2094 = vld [vmem:[%s2091 + $0x8] sm:$0xf]
      %v2095 = vld [vmem:[%s2091 + $0xc] sm:$0xf]
      %v2096 = vld [vmem:[%s2091 + $0x10] sm:$0xf]
      %v2097 = vld [vmem:[%s2091 + $0x14] sm:$0xf]
      %v2098 = vld [vmem:[%s2091 + $0x18] sm:$0xf]
      %v2099 = vld [vmem:[%s2091 + $0x1c] sm:$0xf]
      %v2100 = vld [vmem:[%s2091 + $0x20] sm:$0xf]
      %v2101 = vld [vmem:[%s2091 + $0x24] sm:$0xf]
      %v2102 = vld [vmem:[%s2091 + $0x28] sm:$0xf]
      %v2103 = vld [vmem:[%s2091 + $0x2c] sm:$0xf]
      %v2168 = vunpack.c.l.b16 %v2011
      %v2169 = vunpack.c.l.b16 %v2012
      %v2170 = vunpack.c.l.b16 %v2013
      %v2171 = vunpack.c.l.b16 %v2014
      %v2172 = vunpack.c.l.b16 %v2015
      %v2173 = vunpack.c.l.b16 %v2016
      %v2174 = vunpack.c.l.b16 %v2017
      %v2175 = vunpack.c.l.b16 %v2018
      %v2176 = vunpack.c.l.b16 %v2019
      %v2177 = vunpack.c.l.b16 %v2020
      %v2178 = vunpack.c.l.b16 %v2021
      %v2179 = vunpack.c.l.b16 %v2022
      %v2180 = vunpack.c.l.b16 %v2023
      %v2181 = vunpack.c.l.b16 %v2024
      %v2182 = vunpack.c.l.b16 %v2025
      %v2183 = vunpack.c.l.b16 %v2026
      %v2184 = vunpack.c.l.b16 %v2027
      %v2185 = vunpack.c.l.b16 %v2028
      %v2186 = vunpack.c.l.b16 %v2029
      %v2187 = vunpack.c.l.b16 %v2030
      %v2188 = vunpack.c.l.b16 %v2031
      %v2189 = vunpack.c.l.b16 %v2032
      %v2190 = vunpack.c.l.b16 %v2033
      %v2191 = vunpack.c.l.b16 %v2034
      %v2192 = vunpack.c.l.b16 %v2035
      %v2193 = vunpack.c.l.b16 %v2036
      %v2194 = vunpack.c.l.b16 %v2037
      %v2195 = vunpack.c.l.b16 %v2038
      %v2196 = vunpack.c.l.b16 %v2039
      %v2197 = vunpack.c.l.b16 %v2040
      %v2198 = vunpack.c.l.b16 %v2041
      %v2199 = vunpack.c.l.b16 %v2042
      %v2200 = vunpack.c.l.b16 %v2043
      %v2201 = vunpack.c.l.b16 %v2044
      %v2202 = vunpack.c.l.b16 %v2045
      %v2203 = vunpack.c.l.b16 %v2046
      %v2204 = vunpack.c.l.b16 %v2047
      %v2205 = vunpack.c.l.b16 %v2048
      %v2206 = vunpack.c.l.b16 %v2049
      %v2207 = vunpack.c.l.b16 %v2050
      %v2208 = vunpack.c.l.b16 %v2051
      %v2209 = vunpack.c.l.b16 %v2052
      %v2210 = vunpack.c.l.b16 %v2053
      %v2211 = vunpack.c.l.b16 %v2054
      %v2212 = vunpack.c.l.b16 %v2055
      %v2213 = vunpack.c.l.b16 %v2056
      %v2214 = vunpack.c.l.b16 %v2057
      %v2215 = vunpack.c.l.b16 %v2058
      %v2216 = vunpack.c.l.b16 %v2059
      %v2217 = vunpack.c.l.b16 %v2060
      %v2218 = vunpack.c.l.b16 %v2061
      %v2219 = vunpack.c.l.b16 %v2062
      %v2220 = vunpack.c.l.b16 %v2063
      %v2221 = vunpack.c.l.b16 %v2064
      %v2222 = vunpack.c.l.b16 %v2065
      %v2223 = vunpack.c.l.b16 %v2066
      %v2224 = vunpack.c.l.b16 %v2067
      %v2225 = vunpack.c.l.b16 %v2068
      %v2226 = vunpack.c.l.b16 %v2069
      %v2227 = vunpack.c.l.b16 %v2070
      %v2228 = vunpack.c.l.b16 %v2071
      %v2229 = vunpack.c.l.b16 %v2072
      %v2230 = vunpack.c.l.b16 %v2073
      %v2231 = vunpack.c.l.b16 %v2074
      %v2232 = vpack.c.b16 %v2169, %v2168
      %v2233 = vpack.c.b16 %v2171, %v2170
      %v2234 = vpack.c.b16 %v2173, %v2172
      %v2235 = vpack.c.b16 %v2175, %v2174
      %v2236 = vpack.c.b16 %v2177, %v2176
      %v2237 = vpack.c.b16 %v2179, %v2178
      %v2238 = vpack.c.b16 %v2181, %v2180
      %v2239 = vpack.c.b16 %v2183, %v2182
      %v2240 = vpack.c.b16 %v2185, %v2184
      %v2241 = vpack.c.b16 %v2187, %v2186
      %v2242 = vpack.c.b16 %v2189, %v2188
      %v2243 = vpack.c.b16 %v2191, %v2190
      %v2244 = vpack.c.b16 %v2193, %v2192
      %v2245 = vpack.c.b16 %v2195, %v2194
      %v2246 = vpack.c.b16 %v2197, %v2196
      %v2247 = vpack.c.b16 %v2199, %v2198
      %v2248 = vpack.c.b16 %v2201, %v2200
      %v2249 = vpack.c.b16 %v2203, %v2202
      %v2250 = vpack.c.b16 %v2205, %v2204
      %v2251 = vpack.c.b16 %v2207, %v2206
      %v2252 = vpack.c.b16 %v2209, %v2208
      %v2253 = vpack.c.b16 %v2211, %v2210
      %v2254 = vpack.c.b16 %v2213, %v2212
      %v2255 = vpack.c.b16 %v2215, %v2214
      %v2256 = vpack.c.b16 %v2217, %v2216
      %v2257 = vpack.c.b16 %v2219, %v2218
      %v2258 = vpack.c.b16 %v2221, %v2220
      %v2259 = vpack.c.b16 %v2223, %v2222
      %v2260 = vpack.c.b16 %v2225, %v2224
      %v2261 = vpack.c.b16 %v2227, %v2226
      %v2262 = vpack.c.b16 %v2229, %v2228
      %v2263 = vpack.c.b16 %v2231, %v2230
      %v2276 = vunpack.c.l.b16 %v2092
      %v2277 = vunpack.c.l.b16 %v2093
      %v2278 = vunpack.c.l.b16 %v2094
      %v2279 = vunpack.c.l.b16 %v2095
      %v2280 = vunpack.c.l.b16 %v2096
      %v2281 = vunpack.c.l.b16 %v2097
      %v2282 = vunpack.c.l.b16 %v2098
      %v2283 = vunpack.c.l.b16 %v2099
      %v2284 = vunpack.c.l.b16 %v2100
      %v2285 = vunpack.c.l.b16 %v2101
      %v2286 = vunpack.c.l.b16 %v2102
      %v2287 = vunpack.c.l.b16 %v2103
      %v2288 = vpack.c.b16 %v2277, %v2276
      %v2289 = vpack.c.b16 %v2279, %v2278
      %v2290 = vpack.c.b16 %v2281, %v2280
      %v2291 = vpack.c.b16 %v2283, %v2282
      %v2292 = vpack.c.b16 %v2285, %v2284
      %v2293 = vpack.c.b16 %v2287, %v2286
      %vm2300 = vcmask 785408
      %v2302 = vsel %vm2300, %v2232, 0
      %v2305 = vsel %vm2300, %v2233, 0
      %v2308 = vsel %vm2300, %v2234, 0
      %v2311 = vsel %vm2300, %v2235, 0
      %v2314 = vsel %vm2300, %v2236, 0
      %v2317 = vsel %vm2300, %v2237, 0
      %v2320 = vsel %vm2300, %v2238, 0
      %v2323 = vsel %vm2300, %v2239, 0
      %v2326 = vsel %vm2300, %v2240, 0
      %v2329 = vsel %vm2300, %v2241, 0
      %v2332 = vsel %vm2300, %v2242, 0
      %v2335 = vsel %vm2300, %v2243, 0
      %v2338 = vsel %vm2300, %v2244, 0
      %v2341 = vsel %vm2300, %v2245, 0
      %v2344 = vsel %vm2300, %v2246, 0
      %v2347 = vsel %vm2300, %v2247, 0
      %v2350 = vsel %vm2300, %v2248, 0
      %v2353 = vsel %vm2300, %v2249, 0
      %v2356 = vsel %vm2300, %v2250, 0
      %v2359 = vsel %vm2300, %v2251, 0
      %v2362 = vsel %vm2300, %v2252, 0
      %v2365 = vsel %vm2300, %v2253, 0
      %v2368 = vsel %vm2300, %v2254, 0
      %v2371 = vsel %vm2300, %v2255, 0
      %v2374 = vsel %vm2300, %v2256, 0
      %v2377 = vsel %vm2300, %v2257, 0
      %v2380 = vsel %vm2300, %v2258, 0
      %v2383 = vsel %vm2300, %v2259, 0
      %v2386 = vsel %vm2300, %v2260, 0
      %v2389 = vsel %vm2300, %v2261, 0
      %v2392 = vsel %vm2300, %v2262, 0
      %v2395 = vsel %vm2300, %v2263, 0
      %2397 = vmatpush.bf16.msra.mxu0 0
      %2398 = vmatpush.bf16.msra.mxu0 0
      %2399 = vmatpush.bf16.msra.mxu0 %v2293
      %2400 = vmatpush.bf16.msra.mxu0 %v2292
      %2401 = vmatpush.bf16.msra.mxu0 %v2291
      %2402 = vmatpush.bf16.msra.mxu0 %v2290
      %2403 = vmatpush.bf16.msra.mxu0 %v2289
      %2404 = vmatpush.bf16.msra.mxu0 %v2288
      %2405 = vmatmul.bf16.gmra.mxu0 %v2302
      %v2406 = vpop.f32.mrf.mxu0
      %v2407 = vadd.f32 0.0, %v2406
      %v2408 = vpop.f32.mrf.mxu0
      %v2409 = vadd.f32 0.0, %v2408
      %2410 = vmatmul.bf16.gmra.mxu0 %v2305
      %v2411 = vpop.f32.mrf.mxu0
      %v2412 = vadd.f32 0.0, %v2411
      %v2413 = vpop.f32.mrf.mxu0
      %v2414 = vadd.f32 0.0, %v2413
      %2415 = vmatmul.bf16.gmra.mxu0 %v2308
      %v2416 = vpop.f32.mrf.mxu0
      %v2417 = vadd.f32 0.0, %v2416
      %v2418 = vpop.f32.mrf.mxu0
      %v2419 = vadd.f32 0.0, %v2418
      %2420 = vmatmul.bf16.gmra.mxu0 %v2311
      %v2421 = vpop.f32.mrf.mxu0
      %v2422 = vadd.f32 0.0, %v2421
      %v2423 = vpop.f32.mrf.mxu0
      %v2424 = vadd.f32 0.0, %v2423
      %2425 = vmatmul.bf16.gmra.mxu0 %v2314
      %v2426 = vpop.f32.mrf.mxu0
      %v2427 = vadd.f32 0.0, %v2426
      %v2428 = vpop.f32.mrf.mxu0
      %v2429 = vadd.f32 0.0, %v2428
      %2430 = vmatmul.bf16.gmra.mxu0 %v2317
      %v2431 = vpop.f32.mrf.mxu0
      %v2432 = vadd.f32 0.0, %v2431
      %v2433 = vpop.f32.mrf.mxu0
      %v2434 = vadd.f32 0.0, %v2433
      %2435 = vmatmul.bf16.gmra.mxu0 %v2320
      %v2436 = vpop.f32.mrf.mxu0
      %v2437 = vadd.f32 0.0, %v2436
      %v2438 = vpop.f32.mrf.mxu0
      %v2439 = vadd.f32 0.0, %v2438
      %2440 = vmatmul.bf16.gmra.mxu0 %v2323
      %v2441 = vpop.f32.mrf.mxu0
      %v2442 = vadd.f32 0.0, %v2441
      %v2443 = vpop.f32.mrf.mxu0
      %v2444 = vadd.f32 0.0, %v2443
      %2445 = vmatmul.bf16.gmra.mxu0 %v2326
      %v2446 = vpop.f32.mrf.mxu0
      %v2447 = vadd.f32 0.0, %v2446
      %v2448 = vpop.f32.mrf.mxu0
      %v2449 = vadd.f32 0.0, %v2448
      %2450 = vmatmul.bf16.gmra.mxu0 %v2329
      %v2451 = vpop.f32.mrf.mxu0
      %v2452 = vadd.f32 0.0, %v2451
      %v2453 = vpop.f32.mrf.mxu0
      %v2454 = vadd.f32 0.0, %v2453
      %2455 = vmatmul.bf16.gmra.mxu0 %v2332
      %v2456 = vpop.f32.mrf.mxu0
      %v2457 = vadd.f32 0.0, %v2456
      %v2458 = vpop.f32.mrf.mxu0
      %v2459 = vadd.f32 0.0, %v2458
      %2460 = vmatmul.bf16.gmra.mxu0 %v2335
      %v2461 = vpop.f32.mrf.mxu0
      %v2462 = vadd.f32 0.0, %v2461
      %v2463 = vpop.f32.mrf.mxu0
      %v2464 = vadd.f32 0.0, %v2463
      %2465 = vmatmul.bf16.gmra.mxu0 %v2338
      %v2466 = vpop.f32.mrf.mxu0
      %v2467 = vadd.f32 0.0, %v2466
      %v2468 = vpop.f32.mrf.mxu0
      %v2469 = vadd.f32 0.0, %v2468
      %2470 = vmatmul.bf16.gmra.mxu0 %v2341
      %v2471 = vpop.f32.mrf.mxu0
      %v2472 = vadd.f32 0.0, %v2471
      %v2473 = vpop.f32.mrf.mxu0
      %v2474 = vadd.f32 0.0, %v2473
      %2475 = vmatmul.bf16.gmra.mxu0 %v2344
      %v2476 = vpop.f32.mrf.mxu0
      %v2477 = vadd.f32 0.0, %v2476
      %v2478 = vpop.f32.mrf.mxu0
      %v2479 = vadd.f32 0.0, %v2478
      %2480 = vmatmul.bf16.gmra.mxu0 %v2347
      %v2481 = vpop.f32.mrf.mxu0
      %v2482 = vadd.f32 0.0, %v2481
      %v2483 = vpop.f32.mrf.mxu0
      %v2484 = vadd.f32 0.0, %v2483
      %2485 = vmatmul.bf16.gmra.mxu0 %v2350
      %v2486 = vpop.f32.mrf.mxu0
      %v2487 = vadd.f32 0.0, %v2486
      %v2488 = vpop.f32.mrf.mxu0
      %v2489 = vadd.f32 0.0, %v2488
      %2490 = vmatmul.bf16.gmra.mxu0 %v2353
      %v2491 = vpop.f32.mrf.mxu0
      %v2492 = vadd.f32 0.0, %v2491
      %v2493 = vpop.f32.mrf.mxu0
      %v2494 = vadd.f32 0.0, %v2493
      %2495 = vmatmul.bf16.gmra.mxu0 %v2356
      %v2496 = vpop.f32.mrf.mxu0
      %v2497 = vadd.f32 0.0, %v2496
      %v2498 = vpop.f32.mrf.mxu0
      %v2499 = vadd.f32 0.0, %v2498
      %2500 = vmatmul.bf16.gmra.mxu0 %v2359
      %v2501 = vpop.f32.mrf.mxu0
      %v2502 = vadd.f32 0.0, %v2501
      %v2503 = vpop.f32.mrf.mxu0
      %v2504 = vadd.f32 0.0, %v2503
      %2505 = vmatmul.bf16.gmra.mxu0 %v2362
      %v2506 = vpop.f32.mrf.mxu0
      %v2507 = vadd.f32 0.0, %v2506
      %v2508 = vpop.f32.mrf.mxu0
      %v2509 = vadd.f32 0.0, %v2508
      %2510 = vmatmul.bf16.gmra.mxu0 %v2365
      %v2511 = vpop.f32.mrf.mxu0
      %v2512 = vadd.f32 0.0, %v2511
      %v2513 = vpop.f32.mrf.mxu0
      %v2514 = vadd.f32 0.0, %v2513
      %2515 = vmatmul.bf16.gmra.mxu0 %v2368
      %v2516 = vpop.f32.mrf.mxu0
      %v2517 = vadd.f32 0.0, %v2516
      %v2518 = vpop.f32.mrf.mxu0
      %v2519 = vadd.f32 0.0, %v2518
      %2520 = vmatmul.bf16.gmra.mxu0 %v2371
      %v2521 = vpop.f32.mrf.mxu0
      %v2522 = vadd.f32 0.0, %v2521
      %v2523 = vpop.f32.mrf.mxu0
      %v2524 = vadd.f32 0.0, %v2523
      %2525 = vmatmul.bf16.gmra.mxu0 %v2374
      %v2526 = vpop.f32.mrf.mxu0
      %v2527 = vadd.f32 0.0, %v2526
      %v2528 = vpop.f32.mrf.mxu0
      %v2529 = vadd.f32 0.0, %v2528
      %2530 = vmatmul.bf16.gmra.mxu0 %v2377
      %v2531 = vpop.f32.mrf.mxu0
      %v2532 = vadd.f32 0.0, %v2531
      %v2533 = vpop.f32.mrf.mxu0
      %v2534 = vadd.f32 0.0, %v2533
      %2535 = vmatmul.bf16.gmra.mxu0 %v2380
      %v2536 = vpop.f32.mrf.mxu0
      %v2537 = vadd.f32 0.0, %v2536
      %v2538 = vpop.f32.mrf.mxu0
      %v2539 = vadd.f32 0.0, %v2538
      %2540 = vmatmul.bf16.gmra.mxu0 %v2383
      %v2541 = vpop.f32.mrf.mxu0
      %v2542 = vadd.f32 0.0, %v2541
      %v2543 = vpop.f32.mrf.mxu0
      %v2544 = vadd.f32 0.0, %v2543
      %2545 = vmatmul.bf16.gmra.mxu0 %v2386
      %v2546 = vpop.f32.mrf.mxu0
      %v2547 = vadd.f32 0.0, %v2546
      %v2548 = vpop.f32.mrf.mxu0
      %v2549 = vadd.f32 0.0, %v2548
      %2550 = vmatmul.bf16.gmra.mxu0 %v2389
      %v2551 = vpop.f32.mrf.mxu0
      %v2552 = vadd.f32 0.0, %v2551
      %v2553 = vpop.f32.mrf.mxu0
      %v2554 = vadd.f32 0.0, %v2553
      %2555 = vmatmul.bf16.gmra.mxu0 %v2392
      %v2556 = vpop.f32.mrf.mxu0
      %v2557 = vadd.f32 0.0, %v2556
      %v2558 = vpop.f32.mrf.mxu0
      %v2559 = vadd.f32 0.0, %v2558
      %2560 = vmatmul.bf16.gmra.mxu0 %v2395
      %v2561 = vpop.f32.mrf.mxu0
      %v2562 = vadd.f32 0.0, %v2561
      %v2563 = vpop.f32.mrf.mxu0
      %v2564 = vadd.f32 0.0, %v2563
      %2565 = vdwg.mxu0
      %v2570 = vunpack.c.l.b16 %v2007
      %v2571 = vunpack.c.l.b16 %v2008
      %v2572 = vunpack.c.l.b16 %v2009
      %v2573 = vunpack.c.l.b16 %v2010
      %v2574 = vpack.c.b16 %v2571, %v2570
      %v2575 = vpack.c.b16 %v2573, %v2572
      %v2588 = vunpack.c.l.b16 %v2079
      %v2589 = vunpack.c.l.b16 %v2080
      %v2590 = vunpack.c.l.b16 %v2081
      %v2591 = vunpack.c.l.b16 %v2082
      %v2592 = vunpack.c.l.b16 %v2083
      %v2593 = vunpack.c.l.b16 %v2084
      %v2594 = vunpack.c.l.b16 %v2085
      %v2595 = vunpack.c.l.b16 %v2086
      %v2596 = vunpack.c.l.b16 %v2087
      %v2597 = vunpack.c.l.b16 %v2088
      %v2598 = vunpack.c.l.b16 %v2089
      %v2599 = vunpack.c.l.b16 %v2090
      %v2600 = vpack.c.b16 %v2589, %v2588
      %v2601 = vpack.c.b16 %v2591, %v2590
      %v2602 = vpack.c.b16 %v2593, %v2592
      %v2603 = vpack.c.b16 %v2595, %v2594
      %v2604 = vpack.c.b16 %v2597, %v2596
      %v2605 = vpack.c.b16 %v2599, %v2598
      %v2613 = vsel %vm2300, %v2574, 0
      %v2616 = vsel %vm2300, %v2575, 0
      %2618 = vmatpush.bf16.msra.mxu0 0
      %2619 = vmatpush.bf16.msra.mxu0 0
      %2620 = vmatpush.bf16.msra.mxu0 %v2605
      %2621 = vmatpush.bf16.msra.mxu0 %v2604
      %2622 = vmatpush.bf16.msra.mxu0 %v2603
      %2623 = vmatpush.bf16.msra.mxu0 %v2602
      %2624 = vmatpush.bf16.msra.mxu0 %v2601
      %2625 = vmatpush.bf16.msra.mxu0 %v2600
      %2626 = vmatmul.bf16.gmra.mxu0 %v2613
      %v2627 = vpop.f32.mrf.mxu0
      %v2628 = vadd.f32 %v2407, %v2627
      %v2629 = vpop.f32.mrf.mxu0
      %v2630 = vadd.f32 %v2409, %v2629
      %2631 = vmatmul.bf16.gmra.mxu0 %v2616
      %v2632 = vpop.f32.mrf.mxu0
      %v2633 = vadd.f32 %v2412, %v2632
      %v2634 = vpop.f32.mrf.mxu0
      %v2635 = vadd.f32 %v2414, %v2634
      %2636 = vmatmul.bf16.gmra.mxu0 %v2302
      %v2637 = vpop.f32.mrf.mxu0
      %v2638 = vadd.f32 %v2417, %v2637
      %v2639 = vpop.f32.mrf.mxu0
      %v2640 = vadd.f32 %v2419, %v2639
      %2641 = vmatmul.bf16.gmra.mxu0 %v2305
      %v2642 = vpop.f32.mrf.mxu0
      %v2643 = vadd.f32 %v2422, %v2642
      %v2644 = vpop.f32.mrf.mxu0
      %v2645 = vadd.f32 %v2424, %v2644
      %2646 = vmatmul.bf16.gmra.mxu0 %v2308
      %v2647 = vpop.f32.mrf.mxu0
      %v2648 = vadd.f32 %v2427, %v2647
      %v2649 = vpop.f32.mrf.mxu0
      %v2650 = vadd.f32 %v2429, %v2649
      %2651 = vmatmul.bf16.gmra.mxu0 %v2311
      %v2652 = vpop.f32.mrf.mxu0
      %v2653 = vadd.f32 %v2432, %v2652
      %v2654 = vpop.f32.mrf.mxu0
      %v2655 = vadd.f32 %v2434, %v2654
      %2656 = vmatmul.bf16.gmra.mxu0 %v2314
      %v2657 = vpop.f32.mrf.mxu0
      %v2658 = vadd.f32 %v2437, %v2657
      %v2659 = vpop.f32.mrf.mxu0
      %v2660 = vadd.f32 %v2439, %v2659
      %2661 = vmatmul.bf16.gmra.mxu0 %v2317
      %v2662 = vpop.f32.mrf.mxu0
      %v2663 = vadd.f32 %v2442, %v2662
      %v2664 = vpop.f32.mrf.mxu0
      %v2665 = vadd.f32 %v2444, %v2664
      %2666 = vmatmul.bf16.gmra.mxu0 %v2320
      %v2667 = vpop.f32.mrf.mxu0
      %v2668 = vadd.f32 %v2447, %v2667
      %v2669 = vpop.f32.mrf.mxu0
      %v2670 = vadd.f32 %v2449, %v2669
      %2671 = vmatmul.bf16.gmra.mxu0 %v2323
      %v2672 = vpop.f32.mrf.mxu0
      %v2673 = vadd.f32 %v2452, %v2672
      %v2674 = vpop.f32.mrf.mxu0
      %v2675 = vadd.f32 %v2454, %v2674
      %2676 = vmatmul.bf16.gmra.mxu0 %v2326
      %v2677 = vpop.f32.mrf.mxu0
      %v2678 = vadd.f32 %v2457, %v2677
      %v2679 = vpop.f32.mrf.mxu0
      %v2680 = vadd.f32 %v2459, %v2679
      %2681 = vmatmul.bf16.gmra.mxu0 %v2329
      %v2682 = vpop.f32.mrf.mxu0
      %v2683 = vadd.f32 %v2462, %v2682
      %v2684 = vpop.f32.mrf.mxu0
      %v2685 = vadd.f32 %v2464, %v2684
      %2686 = vmatmul.bf16.gmra.mxu0 %v2332
      %v2687 = vpop.f32.mrf.mxu0
      %v2688 = vadd.f32 %v2467, %v2687
      %v2689 = vpop.f32.mrf.mxu0
      %v2690 = vadd.f32 %v2469, %v2689
      %2691 = vmatmul.bf16.gmra.mxu0 %v2335
      %v2692 = vpop.f32.mrf.mxu0
      %v2693 = vadd.f32 %v2472, %v2692
      %v2694 = vpop.f32.mrf.mxu0
      %v2695 = vadd.f32 %v2474, %v2694
      %2696 = vmatmul.bf16.gmra.mxu0 %v2338
      %v2697 = vpop.f32.mrf.mxu0
      %v2698 = vadd.f32 %v2477, %v2697
      %v2699 = vpop.f32.mrf.mxu0
      %v2700 = vadd.f32 %v2479, %v2699
      %2701 = vmatmul.bf16.gmra.mxu0 %v2341
      %v2702 = vpop.f32.mrf.mxu0
      %v2703 = vadd.f32 %v2482, %v2702
      %v2704 = vpop.f32.mrf.mxu0
      %v2705 = vadd.f32 %v2484, %v2704
      %2706 = vmatmul.bf16.gmra.mxu0 %v2344
      %v2707 = vpop.f32.mrf.mxu0
      %v2708 = vadd.f32 %v2487, %v2707
      %v2709 = vpop.f32.mrf.mxu0
      %v2710 = vadd.f32 %v2489, %v2709
      %2711 = vmatmul.bf16.gmra.mxu0 %v2347
      %v2712 = vpop.f32.mrf.mxu0
      %v2713 = vadd.f32 %v2492, %v2712
      %v2714 = vpop.f32.mrf.mxu0
      %v2715 = vadd.f32 %v2494, %v2714
      %2716 = vmatmul.bf16.gmra.mxu0 %v2350
      %v2717 = vpop.f32.mrf.mxu0
      %v2718 = vadd.f32 %v2497, %v2717
      %v2719 = vpop.f32.mrf.mxu0
      %v2720 = vadd.f32 %v2499, %v2719
      %2721 = vmatmul.bf16.gmra.mxu0 %v2353
      %v2722 = vpop.f32.mrf.mxu0
      %v2723 = vadd.f32 %v2502, %v2722
      %v2724 = vpop.f32.mrf.mxu0
      %v2725 = vadd.f32 %v2504, %v2724
      %2726 = vmatmul.bf16.gmra.mxu0 %v2356
      %v2727 = vpop.f32.mrf.mxu0
      %v2728 = vadd.f32 %v2507, %v2727
      %v2729 = vpop.f32.mrf.mxu0
      %v2730 = vadd.f32 %v2509, %v2729
      %2731 = vmatmul.bf16.gmra.mxu0 %v2359
      %v2732 = vpop.f32.mrf.mxu0
      %v2733 = vadd.f32 %v2512, %v2732
      %v2734 = vpop.f32.mrf.mxu0
      %v2735 = vadd.f32 %v2514, %v2734
      %2736 = vmatmul.bf16.gmra.mxu0 %v2362
      %v2737 = vpop.f32.mrf.mxu0
      %v2738 = vadd.f32 %v2517, %v2737
      %v2739 = vpop.f32.mrf.mxu0
      %v2740 = vadd.f32 %v2519, %v2739
      %2741 = vmatmul.bf16.gmra.mxu0 %v2365
      %v2742 = vpop.f32.mrf.mxu0
      %v2743 = vadd.f32 %v2522, %v2742
      %v2744 = vpop.f32.mrf.mxu0
      %v2745 = vadd.f32 %v2524, %v2744
      %2746 = vmatmul.bf16.gmra.mxu0 %v2368
      %v2747 = vpop.f32.mrf.mxu0
      %v2748 = vadd.f32 %v2527, %v2747
      %v2749 = vpop.f32.mrf.mxu0
      %v2750 = vadd.f32 %v2529, %v2749
      %2751 = vmatmul.bf16.gmra.mxu0 %v2371
      %v2752 = vpop.f32.mrf.mxu0
      %v2753 = vadd.f32 %v2532, %v2752
      %v2754 = vpop.f32.mrf.mxu0
      %v2755 = vadd.f32 %v2534, %v2754
      %2756 = vmatmul.bf16.gmra.mxu0 %v2374
      %v2757 = vpop.f32.mrf.mxu0
      %v2758 = vadd.f32 %v2537, %v2757
      %v2759 = vpop.f32.mrf.mxu0
      %v2760 = vadd.f32 %v2539, %v2759
      %2761 = vmatmul.bf16.gmra.mxu0 %v2377
      %v2762 = vpop.f32.mrf.mxu0
      %v2763 = vadd.f32 %v2542, %v2762
      %v2764 = vpop.f32.mrf.mxu0
      %v2765 = vadd.f32 %v2544, %v2764
      %2766 = vmatmul.bf16.gmra.mxu0 %v2380
      %v2767 = vpop.f32.mrf.mxu0
      %v2768 = vadd.f32 %v2547, %v2767
      %v2769 = vpop.f32.mrf.mxu0
      %v2770 = vadd.f32 %v2549, %v2769
      %2771 = vmatmul.bf16.gmra.mxu0 %v2383
      %v2772 = vpop.f32.mrf.mxu0
      %v2773 = vadd.f32 %v2552, %v2772
      %v2774 = vpop.f32.mrf.mxu0
      %v2775 = vadd.f32 %v2554, %v2774
      %2776 = vmatmul.bf16.gmra.mxu0 %v2386
      %v2777 = vpop.f32.mrf.mxu0
      %v2778 = vadd.f32 %v2557, %v2777
      %v2779 = vpop.f32.mrf.mxu0
      %v2780 = vadd.f32 %v2559, %v2779
      %2781 = vmatmul.bf16.gmra.mxu0 %v2389
      %v2782 = vpop.f32.mrf.mxu0
      %v2783 = vadd.f32 %v2562, %v2782
      %v2784 = vpop.f32.mrf.mxu0
      %v2785 = vadd.f32 %v2564, %v2784
      %2786 = vdwg.mxu0
      %s2787 = scalar_lea.vmem %s4, 96
      %v2788 = vld [vmem:[%s2787] sm:$0xf]
      %v2789 = vld [vmem:[%s2787 + $0x4] sm:$0xf]
      %v2790 = vld [vmem:[%s2787 + $0x8] sm:$0xf]
      %v2791 = vld [vmem:[%s2787 + $0xc] sm:$0xf]
      %v2792 = vld [vmem:[%s2787 + $0x10] sm:$0xf]
      %v2793 = vld [vmem:[%s2787 + $0x14] sm:$0xf]
      %v2794 = vld [vmem:[%s2787 + $0x18] sm:$0xf]
      %v2795 = vld [vmem:[%s2787 + $0x1c] sm:$0xf]
      %v2796 = vld [vmem:[%s2787 + $0x20] sm:$0xf]
      %v2797 = vld [vmem:[%s2787 + $0x24] sm:$0xf]
      %v2798 = vld [vmem:[%s2787 + $0x28] sm:$0xf]
      %v2799 = vld [vmem:[%s2787 + $0x2c] sm:$0xf]
      %v2804 = vunpack.c.l.b16 %v2075
      %v2805 = vunpack.c.l.b16 %v2076
      %v2806 = vunpack.c.l.b16 %v2077
      %v2807 = vunpack.c.l.b16 %v2078
      %v2808 = vpack.c.b16 %v2805, %v2804
      %v2809 = vpack.c.b16 %v2807, %v2806
      %v2822 = vunpack.c.l.b16 %v2788
      %v2823 = vunpack.c.l.b16 %v2789
      %v2824 = vunpack.c.l.b16 %v2790
      %v2825 = vunpack.c.l.b16 %v2791
      %v2826 = vunpack.c.l.b16 %v2792
      %v2827 = vunpack.c.l.b16 %v2793
      %v2828 = vunpack.c.l.b16 %v2794
      %v2829 = vunpack.c.l.b16 %v2795
      %v2830 = vunpack.c.l.b16 %v2796
      %v2831 = vunpack.c.l.b16 %v2797
      %v2832 = vunpack.c.l.b16 %v2798
      %v2833 = vunpack.c.l.b16 %v2799
      %v2834 = vpack.c.b16 %v2823, %v2822
      %v2835 = vpack.c.b16 %v2825, %v2824
      %v2836 = vpack.c.b16 %v2827, %v2826
      %v2837 = vpack.c.b16 %v2829, %v2828
      %v2838 = vpack.c.b16 %v2831, %v2830
      %v2839 = vpack.c.b16 %v2833, %v2832
      %v2847 = vsel %vm2300, %v2808, 0
      %v2850 = vsel %vm2300, %v2809, 0
      %2852 = vmatpush.bf16.msra.mxu0 0
      %2853 = vmatpush.bf16.msra.mxu0 0
      %2854 = vmatpush.bf16.msra.mxu0 %v2839
      %2855 = vmatpush.bf16.msra.mxu0 %v2838
      %2856 = vmatpush.bf16.msra.mxu0 %v2837
      %2857 = vmatpush.bf16.msra.mxu0 %v2836
      %2858 = vmatpush.bf16.msra.mxu0 %v2835
      %2859 = vmatpush.bf16.msra.mxu0 %v2834
      %2860 = vmatmul.bf16.gmra.mxu0 %v2308
      %v2861 = vpop.f32.mrf.mxu0
      %v2862 = vadd.f32 0.0, %v2861
      %v2863 = vpop.f32.mrf.mxu0
      %v2864 = vadd.f32 0.0, %v2863
      %2865 = vmatmul.bf16.gmra.mxu0 %v2311
      %v2866 = vpop.f32.mrf.mxu0
      %v2867 = vadd.f32 0.0, %v2866
      %v2868 = vpop.f32.mrf.mxu0
      %v2869 = vadd.f32 0.0, %v2868
      %2870 = vmatmul.bf16.gmra.mxu0 %v2314
      %v2871 = vpop.f32.mrf.mxu0
      %v2872 = vadd.f32 0.0, %v2871
      %v2873 = vpop.f32.mrf.mxu0
      %v2874 = vadd.f32 0.0, %v2873
      %2875 = vmatmul.bf16.gmra.mxu0 %v2317
      %v2876 = vpop.f32.mrf.mxu0
      %v2877 = vadd.f32 0.0, %v2876
      %v2878 = vpop.f32.mrf.mxu0
      %v2879 = vadd.f32 0.0, %v2878
      %2880 = vmatmul.bf16.gmra.mxu0 %v2320
      %v2881 = vpop.f32.mrf.mxu0
      %v2882 = vadd.f32 0.0, %v2881
      %v2883 = vpop.f32.mrf.mxu0
      %v2884 = vadd.f32 0.0, %v2883
      %2885 = vmatmul.bf16.gmra.mxu0 %v2323
      %v2886 = vpop.f32.mrf.mxu0
      %v2887 = vadd.f32 0.0, %v2886
      %v2888 = vpop.f32.mrf.mxu0
      %v2889 = vadd.f32 0.0, %v2888
      %2890 = vmatmul.bf16.gmra.mxu0 %v2326
      %v2891 = vpop.f32.mrf.mxu0
      %v2892 = vadd.f32 0.0, %v2891
      %v2893 = vpop.f32.mrf.mxu0
      %v2894 = vadd.f32 0.0, %v2893
      %2895 = vmatmul.bf16.gmra.mxu0 %v2329
      %v2896 = vpop.f32.mrf.mxu0
      %v2897 = vadd.f32 0.0, %v2896
      %v2898 = vpop.f32.mrf.mxu0
      %v2899 = vadd.f32 0.0, %v2898
      %2900 = vmatmul.bf16.gmra.mxu0 %v2332
      %v2901 = vpop.f32.mrf.mxu0
      %v2902 = vadd.f32 0.0, %v2901
      %v2903 = vpop.f32.mrf.mxu0
      %v2904 = vadd.f32 0.0, %v2903
      %2905 = vmatmul.bf16.gmra.mxu0 %v2335
      %v2906 = vpop.f32.mrf.mxu0
      %v2907 = vadd.f32 0.0, %v2906
      %v2908 = vpop.f32.mrf.mxu0
      %v2909 = vadd.f32 0.0, %v2908
      %2910 = vmatmul.bf16.gmra.mxu0 %v2338
      %v2911 = vpop.f32.mrf.mxu0
      %v2912 = vadd.f32 0.0, %v2911
      %v2913 = vpop.f32.mrf.mxu0
      %v2914 = vadd.f32 0.0, %v2913
      %2915 = vmatmul.bf16.gmra.mxu0 %v2341
      %v2916 = vpop.f32.mrf.mxu0
      %v2917 = vadd.f32 0.0, %v2916
      %v2918 = vpop.f32.mrf.mxu0
      %v2919 = vadd.f32 0.0, %v2918
      %2920 = vmatmul.bf16.gmra.mxu0 %v2344
      %v2921 = vpop.f32.mrf.mxu0
      %v2922 = vadd.f32 0.0, %v2921
      %v2923 = vpop.f32.mrf.mxu0
      %v2924 = vadd.f32 0.0, %v2923
      %2925 = vmatmul.bf16.gmra.mxu0 %v2347
      %v2926 = vpop.f32.mrf.mxu0
      %v2927 = vadd.f32 0.0, %v2926
      %v2928 = vpop.f32.mrf.mxu0
      %v2929 = vadd.f32 0.0, %v2928
      %2930 = vmatmul.bf16.gmra.mxu0 %v2350
      %v2931 = vpop.f32.mrf.mxu0
      %v2932 = vadd.f32 0.0, %v2931
      %v2933 = vpop.f32.mrf.mxu0
      %v2934 = vadd.f32 0.0, %v2933
      %2935 = vmatmul.bf16.gmra.mxu0 %v2353
      %v2936 = vpop.f32.mrf.mxu0
      %v2937 = vadd.f32 0.0, %v2936
      %v2938 = vpop.f32.mrf.mxu0
      %v2939 = vadd.f32 0.0, %v2938
      %2940 = vmatmul.bf16.gmra.mxu0 %v2356
      %v2941 = vpop.f32.mrf.mxu0
      %v2942 = vadd.f32 0.0, %v2941
      %v2943 = vpop.f32.mrf.mxu0
      %v2944 = vadd.f32 0.0, %v2943
      %2945 = vmatmul.bf16.gmra.mxu0 %v2359
      %v2946 = vpop.f32.mrf.mxu0
      %v2947 = vadd.f32 0.0, %v2946
      %v2948 = vpop.f32.mrf.mxu0
      %v2949 = vadd.f32 0.0, %v2948
      %2950 = vmatmul.bf16.gmra.mxu0 %v2362
      %v2951 = vpop.f32.mrf.mxu0
      %v2952 = vadd.f32 0.0, %v2951
      %v2953 = vpop.f32.mrf.mxu0
      %v2954 = vadd.f32 0.0, %v2953
      %2955 = vmatmul.bf16.gmra.mxu0 %v2365
      %v2956 = vpop.f32.mrf.mxu0
      %v2957 = vadd.f32 0.0, %v2956
      %v2958 = vpop.f32.mrf.mxu0
      %v2959 = vadd.f32 0.0, %v2958
      %2960 = vmatmul.bf16.gmra.mxu0 %v2368
      %v2961 = vpop.f32.mrf.mxu0
      %v2962 = vadd.f32 0.0, %v2961
      %v2963 = vpop.f32.mrf.mxu0
      %v2964 = vadd.f32 0.0, %v2963
      %2965 = vmatmul.bf16.gmra.mxu0 %v2371
      %v2966 = vpop.f32.mrf.mxu0
      %v2967 = vadd.f32 0.0, %v2966
      %v2968 = vpop.f32.mrf.mxu0
      %v2969 = vadd.f32 0.0, %v2968
      %2970 = vmatmul.bf16.gmra.mxu0 %v2374
      %v2971 = vpop.f32.mrf.mxu0
      %v2972 = vadd.f32 0.0, %v2971
      %v2973 = vpop.f32.mrf.mxu0
      %v2974 = vadd.f32 0.0, %v2973
      %2975 = vmatmul.bf16.gmra.mxu0 %v2377
      %v2976 = vpop.f32.mrf.mxu0
      %v2977 = vadd.f32 0.0, %v2976
      %v2978 = vpop.f32.mrf.mxu0
      %v2979 = vadd.f32 0.0, %v2978
      %2980 = vmatmul.bf16.gmra.mxu0 %v2380
      %v2981 = vpop.f32.mrf.mxu0
      %v2982 = vadd.f32 0.0, %v2981
      %v2983 = vpop.f32.mrf.mxu0
      %v2984 = vadd.f32 0.0, %v2983
      %2985 = vmatmul.bf16.gmra.mxu0 %v2383
      %v2986 = vpop.f32.mrf.mxu0
      %v2987 = vadd.f32 0.0, %v2986
      %v2988 = vpop.f32.mrf.mxu0
      %v2989 = vadd.f32 0.0, %v2988
      %2990 = vmatmul.bf16.gmra.mxu0 %v2386
      %v2991 = vpop.f32.mrf.mxu0
      %v2992 = vadd.f32 0.0, %v2991
      %v2993 = vpop.f32.mrf.mxu0
      %v2994 = vadd.f32 0.0, %v2993
      %2995 = vmatmul.bf16.gmra.mxu0 %v2389
      %v2996 = vpop.f32.mrf.mxu0
      %v2997 = vadd.f32 0.0, %v2996
      %v2998 = vpop.f32.mrf.mxu0
      %v2999 = vadd.f32 0.0, %v2998
      %3000 = vmatmul.bf16.gmra.mxu0 %v2392
      %v3001 = vpop.f32.mrf.mxu0
      %v3002 = vadd.f32 0.0, %v3001
      %v3003 = vpop.f32.mrf.mxu0
      %v3004 = vadd.f32 0.0, %v3003
      %3005 = vmatmul.bf16.gmra.mxu0 %v2395
      %v3006 = vpop.f32.mrf.mxu0
      %v3007 = vadd.f32 0.0, %v3006
      %v3008 = vpop.f32.mrf.mxu0
      %v3009 = vadd.f32 0.0, %v3008
      %3010 = vmatmul.bf16.gmra.mxu0 %v2847
      %v3011 = vpop.f32.mrf.mxu0
      %v3012 = vadd.f32 0.0, %v3011
      %v3013 = vpop.f32.mrf.mxu0
      %v3014 = vadd.f32 0.0, %v3013
      %3015 = vmatmul.bf16.gmra.mxu0 %v2850
      %v3016 = vpop.f32.mrf.mxu0
      %v3017 = vadd.f32 0.0, %v3016
      %v3018 = vpop.f32.mrf.mxu0
      %v3019 = vadd.f32 0.0, %v3018
      %3020 = vdwg.mxu0
      %v3021 = vadd.f32 %v2628, %v2862
      %v3022 = vadd.f32 %v2630, %v2864
      %v3023 = vadd.f32 %v2633, %v2867
      %v3024 = vadd.f32 %v2635, %v2869
      %v3025 = vadd.f32 %v2638, %v2872
      %v3026 = vadd.f32 %v2640, %v2874
      %v3027 = vadd.f32 %v2643, %v2877
      %v3028 = vadd.f32 %v2645, %v2879
      %v3029 = vadd.f32 %v2648, %v2882
      %v3030 = vadd.f32 %v2650, %v2884
      %v3031 = vadd.f32 %v2653, %v2887
      %v3032 = vadd.f32 %v2655, %v2889
      %v3033 = vadd.f32 %v2658, %v2892
      %v3034 = vadd.f32 %v2660, %v2894
      %v3035 = vadd.f32 %v2663, %v2897
      %v3036 = vadd.f32 %v2665, %v2899
      %v3037 = vadd.f32 %v2668, %v2902
      %v3038 = vadd.f32 %v2670, %v2904
      %v3039 = vadd.f32 %v2673, %v2907
      %v3040 = vadd.f32 %v2675, %v2909
      %v3041 = vadd.f32 %v2678, %v2912
      %v3042 = vadd.f32 %v2680, %v2914
      %v3043 = vadd.f32 %v2683, %v2917
      %v3044 = vadd.f32 %v2685, %v2919
      %v3045 = vadd.f32 %v2688, %v2922
      %v3046 = vadd.f32 %v2690, %v2924
      %v3047 = vadd.f32 %v2693, %v2927
      %v3048 = vadd.f32 %v2695, %v2929
      %v3049 = vadd.f32 %v2698, %v2932
      %v3050 = vadd.f32 %v2700, %v2934
      %v3051 = vadd.f32 %v2703, %v2937
      %v3052 = vadd.f32 %v2705, %v2939
      %v3053 = vadd.f32 %v2708, %v2942
      %v3054 = vadd.f32 %v2710, %v2944
      %v3055 = vadd.f32 %v2713, %v2947
      %v3056 = vadd.f32 %v2715, %v2949
      %v3057 = vadd.f32 %v2718, %v2952
      %v3058 = vadd.f32 %v2720, %v2954
      %v3059 = vadd.f32 %v2723, %v2957
      %v3060 = vadd.f32 %v2725, %v2959
      %v3061 = vadd.f32 %v2728, %v2962
      %v3062 = vadd.f32 %v2730, %v2964
      %v3063 = vadd.f32 %v2733, %v2967
      %v3064 = vadd.f32 %v2735, %v2969
      %v3065 = vadd.f32 %v2738, %v2972
      %v3066 = vadd.f32 %v2740, %v2974
      %v3067 = vadd.f32 %v2743, %v2977
      %v3068 = vadd.f32 %v2745, %v2979
      %v3069 = vadd.f32 %v2748, %v2982
      %v3070 = vadd.f32 %v2750, %v2984
      %v3071 = vadd.f32 %v2753, %v2987
      %v3072 = vadd.f32 %v2755, %v2989
      %v3073 = vadd.f32 %v2758, %v2992
      %v3074 = vadd.f32 %v2760, %v2994
      %v3075 = vadd.f32 %v2763, %v2997
      %v3076 = vadd.f32 %v2765, %v2999
      %v3077 = vadd.f32 %v2768, %v3002
      %v3078 = vadd.f32 %v2770, %v3004
      %v3079 = vadd.f32 %v2773, %v3007
      %v3080 = vadd.f32 %v2775, %v3009
      %v3081 = vadd.f32 %v2778, %v3012
      %v3082 = vadd.f32 %v2780, %v3014
      %v3083 = vadd.f32 %v2783, %v3017
      %v3084 = vadd.f32 %v2785, %v3019
      %v3085 = vld [vmem:[%s5] sm:$0x1]
      %v3087 = vperm.slane %v3085, 0
      %v3089 = vadd.f32 %v3021, %v3087
      %v3090 = vadd.f32 %v3022, %v3087
      %v3091 = vadd.f32 %v3023, %v3087
      %v3092 = vadd.f32 %v3024, %v3087
      %v3093 = vadd.f32 %v3025, %v3087
      %v3094 = vadd.f32 %v3026, %v3087
      %v3095 = vadd.f32 %v3027, %v3087
      %v3096 = vadd.f32 %v3028, %v3087
      %v3097 = vadd.f32 %v3029, %v3087
      %v3098 = vadd.f32 %v3030, %v3087
      %v3099 = vadd.f32 %v3031, %v3087
      %v3100 = vadd.f32 %v3032, %v3087
      %v3101 = vadd.f32 %v3033, %v3087
      %v3102 = vadd.f32 %v3034, %v3087
      %v3103 = vadd.f32 %v3035, %v3087
      %v3104 = vadd.f32 %v3036, %v3087
      %v3105 = vadd.f32 %v3037, %v3087
      %v3106 = vadd.f32 %v3038, %v3087
      %v3107 = vadd.f32 %v3039, %v3087
      %v3108 = vadd.f32 %v3040, %v3087
      %v3109 = vadd.f32 %v3041, %v3087
      %v3110 = vadd.f32 %v3042, %v3087
      %v3111 = vadd.f32 %v3043, %v3087
      %v3112 = vadd.f32 %v3044, %v3087
      %v3113 = vadd.f32 %v3045, %v3087
      %v3114 = vadd.f32 %v3046, %v3087
      %v3115 = vadd.f32 %v3047, %v3087
      %v3116 = vadd.f32 %v3048, %v3087
      %v3117 = vadd.f32 %v3049, %v3087
      %v3118 = vadd.f32 %v3050, %v3087
      %v3119 = vadd.f32 %v3051, %v3087
      %v3120 = vadd.f32 %v3052, %v3087
      %v3121 = vadd.f32 %v3053, %v3087
      %v3122 = vadd.f32 %v3054, %v3087
      %v3123 = vadd.f32 %v3055, %v3087
      %v3124 = vadd.f32 %v3056, %v3087
      %v3125 = vadd.f32 %v3057, %v3087
      %v3126 = vadd.f32 %v3058, %v3087
      %v3127 = vadd.f32 %v3059, %v3087
      %v3128 = vadd.f32 %v3060, %v3087
      %v3129 = vadd.f32 %v3061, %v3087
      %v3130 = vadd.f32 %v3062, %v3087
      %v3131 = vadd.f32 %v3063, %v3087
      %v3132 = vadd.f32 %v3064, %v3087
      %v3133 = vadd.f32 %v3065, %v3087
      %v3134 = vadd.f32 %v3066, %v3087
      %v3135 = vadd.f32 %v3067, %v3087
      %v3136 = vadd.f32 %v3068, %v3087
      %v3137 = vadd.f32 %v3069, %v3087
      %v3138 = vadd.f32 %v3070, %v3087
      %v3139 = vadd.f32 %v3071, %v3087
      %v3140 = vadd.f32 %v3072, %v3087
      %v3141 = vadd.f32 %v3073, %v3087
      %v3142 = vadd.f32 %v3074, %v3087
      %v3143 = vadd.f32 %v3075, %v3087
      %v3144 = vadd.f32 %v3076, %v3087
      %v3145 = vadd.f32 %v3077, %v3087
      %v3146 = vadd.f32 %v3078, %v3087
      %v3147 = vadd.f32 %v3079, %v3087
      %v3148 = vadd.f32 %v3080, %v3087
      %v3149 = vadd.f32 %v3081, %v3087
      %v3150 = vadd.f32 %v3082, %v3087
      %v3151 = vadd.f32 %v3083, %v3087
      %v3152 = vadd.f32 %v3084, %v3087
      %3153 = vst.msk [vmem:[%s251] sm:$0xff] %vm1861, %v3089
      %3154 = vst.msk [vmem:[%s251 + $0x8] sm:$0xff] %vm1861, %v3090
      %3155 = vst.msk [vmem:[%s251 + $0x10] sm:$0xff] %vm1861, %v3091
      %3156 = vst.msk [vmem:[%s251 + $0x18] sm:$0xff] %vm1861, %v3092
      %3157 = vst.msk [vmem:[%s251 + $0x20] sm:$0xff] %vm1861, %v3093
      %3158 = vst.msk [vmem:[%s251 + $0x28] sm:$0xff] %vm1861, %v3094
      %3159 = vst.msk [vmem:[%s251 + $0x30] sm:$0xff] %vm1861, %v3095
      %3160 = vst.msk [vmem:[%s251 + $0x38] sm:$0xff] %vm1861, %v3096
      %3161 = vst.msk [vmem:[%s251 + $0x40] sm:$0xff] %vm1861, %v3097
      %3162 = vst.msk [vmem:[%s251 + $0x48] sm:$0xff] %vm1861, %v3098
      %3163 = vst.msk [vmem:[%s251 + $0x50] sm:$0xff] %vm1861, %v3099
      %3164 = vst.msk [vmem:[%s251 + $0x58] sm:$0xff] %vm1861, %v3100
      %3165 = vst.msk [vmem:[%s251 + $0x60] sm:$0xff] %vm1861, %v3101
      %3166 = vst.msk [vmem:[%s251 + $0x68] sm:$0xff] %vm1861, %v3102
      %3167 = vst.msk [vmem:[%s251 + $0x70] sm:$0xff] %vm1861, %v3103
      %3168 = vst.msk [vmem:[%s251 + $0x78] sm:$0xff] %vm1861, %v3104
      %3169 = vst.msk [vmem:[%s251 + $0x80] sm:$0xff] %vm1861, %v3105
      %3170 = vst.msk [vmem:[%s251 + $0x88] sm:$0xff] %vm1861, %v3106
      %3171 = vst.msk [vmem:[%s251 + $0x90] sm:$0xff] %vm1861, %v3107
      %3172 = vst.msk [vmem:[%s251 + $0x98] sm:$0xff] %vm1861, %v3108
      %3173 = vst.msk [vmem:[%s251 + $0xa0] sm:$0xff] %vm1861, %v3109
      %3174 = vst.msk [vmem:[%s251 + $0xa8] sm:$0xff] %vm1861, %v3110
      %3175 = vst.msk [vmem:[%s251 + $0xb0] sm:$0xff] %vm1861, %v3111
      %3176 = vst.msk [vmem:[%s251 + $0xb8] sm:$0xff] %vm1861, %v3112
      %3177 = vst.msk [vmem:[%s251 + $0xc0] sm:$0xff] %vm1861, %v3113
      %3178 = vst.msk [vmem:[%s251 + $0xc8] sm:$0xff] %vm1861, %v3114
      %3179 = vst.msk [vmem:[%s251 + $0xd0] sm:$0xff] %vm1861, %v3115
      %3180 = vst.msk [vmem:[%s251 + $0xd8] sm:$0xff] %vm1861, %v3116
      %3181 = vst.msk [vmem:[%s251 + $0xe0] sm:$0xff] %vm1861, %v3117
      %3182 = vst.msk [vmem:[%s251 + $0xe8] sm:$0xff] %vm1861, %v3118
      %3183 = vst.msk [vmem:[%s251 + $0xf0] sm:$0xff] %vm1861, %v3119
      %3184 = vst.msk [vmem:[%s251 + $0xf8] sm:$0xff] %vm1861, %v3120
      %3185 = vst.msk [vmem:[%s251 + $0x100] sm:$0xff] %vm1861, %v3121
      %3186 = vst.msk [vmem:[%s251 + $0x108] sm:$0xff] %vm1861, %v3122
      %3187 = vst.msk [vmem:[%s251 + $0x110] sm:$0xff] %vm1861, %v3123
      %3188 = vst.msk [vmem:[%s251 + $0x118] sm:$0xff] %vm1861, %v3124
      %3189 = vst.msk [vmem:[%s251 + $0x120] sm:$0xff] %vm1861, %v3125
      %3190 = vst.msk [vmem:[%s251 + $0x128] sm:$0xff] %vm1861, %v3126
      %3191 = vst.msk [vmem:[%s251 + $0x130] sm:$0xff] %vm1861, %v3127
      %3192 = vst.msk [vmem:[%s251 + $0x138] sm:$0xff] %vm1861, %v3128
      %3193 = vst.msk [vmem:[%s251 + $0x140] sm:$0xff] %vm1861, %v3129
      %3194 = vst.msk [vmem:[%s251 + $0x148] sm:$0xff] %vm1861, %v3130
      %3195 = vst.msk [vmem:[%s251 + $0x150] sm:$0xff] %vm1861, %v3131
      %3196 = vst.msk [vmem:[%s251 + $0x158] sm:$0xff] %vm1861, %v3132
      %3197 = vst.msk [vmem:[%s251 + $0x160] sm:$0xff] %vm1861, %v3133
      %3198 = vst.msk [vmem:[%s251 + $0x168] sm:$0xff] %vm1861, %v3134
      %3199 = vst.msk [vmem:[%s251 + $0x170] sm:$0xff] %vm1861, %v3135
      %3200 = vst.msk [vmem:[%s251 + $0x178] sm:$0xff] %vm1861, %v3136
      %3201 = vst.msk [vmem:[%s251 + $0x180] sm:$0xff] %vm1861, %v3137
      %3202 = vst.msk [vmem:[%s251 + $0x188] sm:$0xff] %vm1861, %v3138
      %3203 = vst.msk [vmem:[%s251 + $0x190] sm:$0xff] %vm1861, %v3139
      %3204 = vst.msk [vmem:[%s251 + $0x198] sm:$0xff] %vm1861, %v3140
      %3205 = vst.msk [vmem:[%s251 + $0x1a0] sm:$0xff] %vm1861, %v3141
      %3206 = vst.msk [vmem:[%s251 + $0x1a8] sm:$0xff] %vm1861, %v3142
      %3207 = vst.msk [vmem:[%s251 + $0x1b0] sm:$0xff] %vm1861, %v3143
      %3208 = vst.msk [vmem:[%s251 + $0x1b8] sm:$0xff] %vm1861, %v3144
      %3209 = vst.msk [vmem:[%s251 + $0x1c0] sm:$0xff] %vm1861, %v3145
      %3210 = vst.msk [vmem:[%s251 + $0x1c8] sm:$0xff] %vm1861, %v3146
      %3211 = vst.msk [vmem:[%s251 + $0x1d0] sm:$0xff] %vm1861, %v3147
      %3212 = vst.msk [vmem:[%s251 + $0x1d8] sm:$0xff] %vm1861, %v3148
      %3213 = vst.msk [vmem:[%s251 + $0x1e0] sm:$0xff] %vm1861, %v3149
      %3214 = vst.msk [vmem:[%s251 + $0x1e8] sm:$0xff] %vm1861, %v3150
      %3215 = vst.msk [vmem:[%s251 + $0x1f0] sm:$0xff] %vm1861, %v3151
      %3216 = vst.msk [vmem:[%s251 + $0x1f8] sm:$0xff] %vm1861, %v3152
      %p3217 = scmp.lt.s32.totalorder %s17, 1
      %s3218 = scalar_select %p3217, %s17, 1
      %s3219 = smul.addr %s3218, 64
      %s3220 = smul.addr %s3219, 8
      %s3221 = scalar_lea.vmem %s6, %s3220
      // Predicated region
      $region45: #{pyraconvblock_forward.10} parent=43 // pred_check
        %p3222 = pneg %p166
      $region46: #{pyraconvblock_forward.10} parent=43 // pred_check_branch
        %3224 = sbr.rel (%p3222) target = $region48
      $region47: #{pyraconvblock_forward.10} parent=43 // pred_region
        _
      $region48: #{pyraconvblock_forward.10} parent=43 // pred_fallthru
        _
    $region44: #{pyraconvblock_forward.10} parent=5 // pred_fallthru
      _
    %p3225 = scmp.le.s32.totalorder 2, %s12
    // Predicated region
    $region49: #{pyraconvblock_forward.10} parent=5 // pred_check
      %p3226 = pneg %p3225
    $region50: #{pyraconvblock_forward.10} parent=5 // pred_check_branch
      %3228 = sbr.rel (%p3226) target = $region52
    $region51: #{pyraconvblock_forward.10} parent=5 // pred_region
      %s3229 = ssub.s32 %s12, 2
      // Predicated region
      $region53: #{pyraconvblock_forward.10} parent=51 // pred_check
        %p3230 = pneg %p172
      $region54: #{pyraconvblock_forward.10} parent=51 // pred_check_branch
        %3232 = sbr.rel (%p3230) target = $region56
      $region55: #{pyraconvblock_forward.10} parent=51 // pred_region
        %p3233 = scmp.lt.s32.totalorder %s18, 1
        %s3234 = scalar_select %p3233, %s18, 1
        %s3235 = smul.addr %s3234, 64
        %s3236 = smul.addr %s3235, 8
        %s3237 = scalar_lea.vmem %s6, %s3236
      $region56: #{pyraconvblock_forward.10} parent=51 // pred_fallthru
        _
    $region52: #{pyraconvblock_forward.10} parent=5 // pred_fallthru
      _
  $region6: #{pyraconvblock_forward.10} parent=0 // loop_footer
    %s16 = sadd.s32 1, %s12
  $region7: #{pyraconvblock_forward.10} parent=0 // loop_footer_branch
    %11 = sbr.rel target = $region3
  $region8: #{pyraconvblock_forward.10} parent=0 // loop_exit
    _

</llo_original>
